<compile_context>
chip_gen: v6e
topology: v6e:2x2x1
jax: 0.10.0
libtpu: 0.0.40
codegen_flags: <defaults>
</compile_context>

<pallas_src>
import functools

import jax
import jax.numpy as jnp
from jax.experimental import pallas as pl
from jax.experimental.pallas import tpu as pltpu


# ---------------------------------------------------------------------------
# Helpers
# ---------------------------------------------------------------------------
def _round_up(v, m):
    return (v + m - 1) // m * m


_COMPILER_PARAMS = pltpu.CompilerParams(
    dimension_semantics=("parallel",),        # 1-D grids: shard across TCs (v7x)
    vmem_limit_bytes=32 * 1024 * 1024,        # explicit scoped-VMEM cap
)

_TM_MAX = 256  # max M tile (multiple of 16 for bf16 sublane packing)


def _pick_tm(m, tm_max=_TM_MAX):
    """Pick an M tile that is a multiple of 16 and minimizes padding."""
    mp = _round_up(m, 16)
    if mp <= tm_max:
        return mp, mp                          # single grid step, no extra pad
    for tm in range(tm_max, 15, -16):
        if mp % tm == 0:
            return tm, mp                      # divides exactly -> no padding
    return tm_max, _round_up(mp, tm_max)


# ---------------------------------------------------------------------------
# Pallas kernel 1: out = relu_opt(x @ w + b), tiled over M (used for conv1)
#   x: (TM, K) bf16   w: (K, N) bf16   b: (1, N) f32   out: (TM, N) out_dtype
# ---------------------------------------------------------------------------
def _mm_bias_kernel(x_ref, w_ref, b_ref, o_ref, *, relu):
    acc = jnp.dot(x_ref[...], w_ref[...], preferred_element_type=jnp.float32)
    acc = acc + b_ref[...]                     # (1, N) broadcast over rows, f32
    if relu:
        acc = jnp.maximum(acc, 0.0)
    o_ref[...] = acc.astype(o_ref.dtype)


def matmul_bias(x, w, b, *, relu, out_dtype=jnp.float32):
    """x: (M, K) bf16, w: (K, N) bf16, b: (1, N) f32 -> (M, N) out_dtype."""
    M, K = x.shape
    K2, N = w.shape
    assert K == K2 and b.shape == (1, N)

    tm, Mp = _pick_tm(M)
    if Mp != M:
        x = jnp.pad(x, ((0, Mp - M), (0, 0)))

    out = pl.pallas_call(
        functools.partial(_mm_bias_kernel, relu=relu),
        out_shape=jax.ShapeDtypeStruct((Mp, N), out_dtype),
        grid=(Mp // tm,),
        in_specs=[
            pl.BlockSpec((tm, K), lambda i: (i, 0)),   # x: tile M, full K
            pl.BlockSpec((K, N), lambda i: (0, 0)),    # w: resident
            pl.BlockSpec((1, N), lambda i: (0, 0)),    # b: resident
        ],
        out_specs=pl.BlockSpec((tm, N), lambda i: (i, 0)),
        compiler_params=_COMPILER_PARAMS,
    )(x, w, b)
    return out[:M] if Mp != M else out


# ---------------------------------------------------------------------------
# Pallas kernel 2: fused conv2 (4x4/s2, 32->64) + conv3 (3x3/s1, 64->64)
#   Per batch element:
#     p2:   (81, 512)  conv2 im2col patches (built in XLA from conv1 output)
#     h2  = relu(p2 @ w2 + b2)           -> (81, 64)   [9x9 spatial grid]
#     p3  = in-kernel im2col of h2       -> (49, 576)  [static slices only]
#     out = relu(p3 @ w3 + b3)           -> (49, 64)   [7x7 spatial grid]
# ---------------------------------------------------------------------------
def _conv23_kernel(p2_ref, w2_ref, b2_ref, w3_ref, b3_ref, o_ref,
                   h2_ref, patch_ref):
    # conv2: MXU matmul, f32 accumulation, bias + ReLU epilogue.
    h2 = jnp.dot(p2_ref[0], w2_ref[...], preferred_element_type=jnp.float32)
    h2_ref[...] = jnp.maximum(h2 + b2_ref[...], 0.0)      # (81, 64) f32 scratch

    # In-kernel im2col for the stride-1 3x3 conv3: only static, unstrided
    # slices of the VMEM scratch; column order (kh, kw, cin) matches w3.
    for oi in range(7):
        for di in range(3):
            for dj in range(3):
                r = (oi + di) * 9 + dj                     # h2 row of (oi+di, dj)
                c = 64 * (3 * di + dj)                     # patch column block
                patch_ref[7 * oi:7 * oi + 7, c:c + 64] = h2_ref[r:r + 7, :]

    # conv3: single (49,576)x(576,64) MXU matmul, bias + ReLU.
    h3 = jnp.dot(patch_ref[...].astype(jnp.bfloat16), w3_ref[...],
                 preferred_element_type=jnp.float32)
    o_ref[0] = jnp.maximum(h3 + b3_ref[...], 0.0).astype(o_ref.dtype)


def conv23_fused(p2, w2, b2, w3, b3):
    """p2: (B, 81, 512) bf16 -> (B, 49, 64) bf16 (NHWC channels-last)."""
    B = p2.shape[0]
    assert p2.shape[1:] == (81, 512)
    assert w2.shape == (512, 64) and w3.shape == (576, 64)

    return pl.pallas_call(
        _conv23_kernel,
        out_shape=jax.ShapeDtypeStruct((B, 49, 64), jnp.bfloat16),
        grid=(B,),
        in_specs=[
            pl.BlockSpec((1, 81, 512), lambda b: (b, 0, 0)),   # per-batch patches
            pl.BlockSpec((512, 64), lambda b: (0, 0)),          # w2 resident
            pl.BlockSpec((1, 64), lambda b: (0, 0)),            # b2 resident
            pl.BlockSpec((576, 64), lambda b: (0, 0)),          # w3 resident
            pl.BlockSpec((1, 64), lambda b: (0, 0)),            # b3 resident
        ],
        out_specs=pl.BlockSpec((1, 49, 64), lambda b: (b, 0, 0)),
        scratch_shapes=[
            pltpu.VMEM((81, 64), jnp.float32),     # conv2 activation (9x9x64)
            pltpu.VMEM((49, 576), jnp.float32),    # conv3 im2col patches
        ],
        compiler_params=_COMPILER_PARAMS,
    )(p2, w2, b2, w3, b3)


# ---------------------------------------------------------------------------
# Pallas kernel 3: fused fc head   out = relu(x @ w1 + b1) @ w2 + b2
# ---------------------------------------------------------------------------
def _fc_fused_kernel(x_ref, w1_ref, b1_ref, w2_ref, b2_ref, o_ref):
    h = jnp.dot(x_ref[...], w1_ref[...], preferred_element_type=jnp.float32)
    h = jnp.maximum(h + b1_ref[...], 0.0)
    o = jnp.dot(h.astype(w2_ref.dtype), w2_ref[...],
                preferred_element_type=jnp.float32)
    o_ref[...] = o + b2_ref[...]


def fc_head(x, w1, b1, w2, b2):
    """x: (M, K) bf16, w1: (K, H) bf16, w2: (H, A) bf16 -> (M, A) f32."""
    M, K = x.shape
    K2, H = w1.shape
    H2, A = w2.shape
    assert K == K2 and H == H2

    tm, Mp = _pick_tm(M)
    if Mp != M:
        x = jnp.pad(x, ((0, Mp - M), (0, 0)))

    out = pl.pallas_call(
        _fc_fused_kernel,
        out_shape=jax.ShapeDtypeStruct((Mp, A), jnp.float32),
        grid=(Mp // tm,),
        in_specs=[
            pl.BlockSpec((tm, K), lambda i: (i, 0)),
            pl.BlockSpec((K, H), lambda i: (0, 0)),
            pl.BlockSpec((1, H), lambda i: (0, 0)),
            pl.BlockSpec((H, A), lambda i: (0, 0)),
            pl.BlockSpec((1, A), lambda i: (0, 0)),
        ],
        out_specs=pl.BlockSpec((tm, A), lambda i: (i, 0)),
        compiler_params=_COMPILER_PARAMS,
    )(x, w1, b1, w2, b2)
    return out[:M] if Mp != M else out


# ---------------------------------------------------------------------------
# Channels-last im2col (XLA strided slices; column order = (kh, kw, cin))
# ---------------------------------------------------------------------------
def _im2col_nhwc(x_nhwc, kh, kw, stride):
    B, H, W, C = x_nhwc.shape
    Ho = (H - kh) // stride + 1
    Wo = (W - kw) // stride + 1
    cols = []
    for i in range(kh):
        for j in range(kw):
            cols.append(
                x_nhwc[:, i:i + stride * Ho:stride, j:j + stride * Wo:stride, :])
    patches = jnp.stack(cols, axis=3).reshape(B, Ho * Wo, kh * kw * C)
    return patches, Ho, Wo


# ---------------------------------------------------------------------------
# One-time parameter preparation (pad/transpose/cast hoisted out of forward)
# ---------------------------------------------------------------------------
def prepare_params(params):
    def conv_w(w):  # (Cout, Cin, kh, kw) -> (kh*kw*Cin, Cout) bf16
        Cout, Cin, kh, kw = w.shape
        return (w.transpose(2, 3, 1, 0)
                 .reshape(kh * kw * Cin, Cout).astype(jnp.bfloat16))

    def row(b):
        return b.reshape(1, -1).astype(jnp.float32)

    # fc1 expects NCHW-flattened (C,H,W) input in PyTorch; our activations are
    # NHWC-flattened (H,W,C) -> permute fc1's columns once so no transpose is
    # needed at runtime.
    C3, H3, W3 = 64, 7, 7
    fc1_w = params["fc1_w"].reshape(512, C3, H3, W3).transpose(0, 2, 3, 1)
    fc1_w = fc1_w.reshape(512, C3 * H3 * W3).T.astype(jnp.bfloat16)  # (3136, 512)

    return {
        "c1_w": conv_w(params["c1_w"]), "c1_b": row(params["c1_b"]),
        "c2_w": conv_w(params["c2_w"]), "c2_b": row(params["c2_b"]),
        "c3_w": conv_w(params["c3_w"]), "c3_b": row(params["c3_b"]),
        "fc1_w": fc1_w,                  "fc1_b": row(params["fc1_b"]),
        "fc2_w": params["fc2_w"].T.astype(jnp.bfloat16),
        "fc2_b": row(params["fc2_b"]),
    }


# ---------------------------------------------------------------------------
# Critic forward (takes prepared params and NCHW input like PyTorch)
# ---------------------------------------------------------------------------
def critic_forward(p, x):
    # NCHW (PyTorch convention) -> NHWC once; bf16 activations from here on.
    x = x.transpose(0, 2, 3, 1).astype(jnp.bfloat16)
    B = x.shape[0]

    # conv1: 8x8 s4, 4->32  (XLA im2col + Pallas MXU matmul, fused bias+ReLU)
    p1, Ho1, Wo1 = _im2col_nhwc(x, 8, 8, 4)
    h1 = matmul_bias(p1.reshape(B * Ho1 * Wo1, p1.shape[-1]),
                     p["c1_w"], p["c1_b"], relu=True, out_dtype=jnp.bfloat16)
    h1 = h1.reshape(B, Ho1, Wo1, 32)                       # (B, 20, 20, 32) NHWC

    # conv2 (4x4 s2) + conv3 (3x3 s1) fused in one Pallas call per batch element
    p2, _, _ = _im2col_nhwc(h1, 4, 4, 2)                   # (B, 81, 512)
    h3 = conv23_fused(p2, p["c2_w"], p["c2_b"], p["c3_w"], p["c3_b"])  # (B,49,64)

    # NHWC flatten (fc1_w was pre-permuted to match) + fused fc1/fc2 head.
    return fc_head(h3.reshape(B, -1),
                   p["fc1_w"], p["fc1_b"], p["fc2_w"], p["fc2_b"])


# ---------------------------------------------------------------------------
# Deterministic parameter init (PyTorch-style uniform +-1/sqrt(fan_in))
# ---------------------------------------------------------------------------
def init_params(key, n_actions):
    def uinit(key, shape, fan_in):
        bound = 1.0 / jnp.sqrt(fan_in)
        return jax.random.uniform(key, shape, jnp.float32, -bound, bound)

    ks = jax.random.split(key, 10)
    output_size = 64 * 7 * 7  # conv output for 84x84 input = 3136
    return {
        "c1_w": uinit(ks[0], (32, 4, 8, 8), 4 * 8 * 8),
        "c1_b": uinit(ks[1], (32,), 4 * 8 * 8),
        "c2_w": uinit(ks[2], (64, 32, 4, 4), 32 * 4 * 4),
        "c2_b": uinit(ks[3], (64,), 32 * 4 * 4),
        "c3_w": uinit(ks[4], (64, 64, 3, 3), 64 * 3 * 3),
        "c3_b": uinit(ks[5], (64,), 64 * 3 * 3),
        "fc1_w": uinit(ks[6], (512, output_size), output_size),
        "fc1_b": uinit(ks[7], (512,), output_size),
        "fc2_w": uinit(ks[8], (n_actions, 512), 512),
        "fc2_b": uinit(ks[9], (n_actions,), 512),
    }


# ---------------------------------------------------------------------------
# Pure-JAX f32 reference (for correctness check only)
# ---------------------------------------------------------------------------
def critic_reference(params, x):
    def conv(x, w, b, s):
        y = jax.lax.conv_general_dilated(
            x, w, window_strides=(s, s), padding="VALID",
            dimension_numbers=("NCHW", "OIHW", "NCHW"))
        return jax.nn.relu(y + b[None, :, None, None])

    x = conv(x, params["c1_w"], params["c1_b"], 4)
    x = conv(x, params["c2_w"], params["c2_b"], 2)
    x = conv(x, params["c3_w"], params["c3_b"], 1)
    x = x.reshape(x.shape[0], -1)
    x = jax.nn.relu(x @ params["fc1_w"].T + params["fc1_b"])
    return x @ params["fc2_w"].T + params["fc2_b"]


if __name__ == "__main__":
    key = jax.random.PRNGKey(0)
    k_param, k_x = jax.random.split(key)

    n_actions = 6
    batch = 2
    params = init_params(k_param, n_actions)
    # The module hard-wires output_size (3136) for 84x84 Atari frame stacks.
    x = jax.random.uniform(k_x, (batch, 4, 84, 84), jnp.float32)  # NCHW

    prepped = prepare_params(params)           # one-time weight prep
    fwd = jax.jit(critic_forward)

    out = jax.block_until_ready(fwd(prepped, x))
    assert out.shape == (batch, n_actions), out.shape

    ref = jax.block_until_ready(critic_reference(params, x))
    max_err = float(jnp.max(jnp.abs(out - ref)))
    # bf16 MXU operands with f32 accumulation -> slightly looser tolerance.
    assert jnp.allclose(out, ref, rtol=2e-2, atol=2e-2), max_err

    print("KERNEL_OK")
</pallas_src>

<mosaic_0001>
module attributes {stable_mosaic.version = 11 : i64} {
  func.func @_mm_bias_kernel(%arg0: i32, %arg1: memref<160x256xbf16, #tpu.memory_space<vmem>>, %arg2: memref<256x32xbf16, #tpu.memory_space<vmem>>, %arg3: memref<1x32xf32, #tpu.memory_space<vmem>>, %arg4: memref<160x32xbf16, #tpu.memory_space<vmem>>) attributes {dimension_semantics = [#tpu.dimension_semantics<parallel>], iteration_bounds = array<i64: 5>, scalar_prefetch = 0 : i64, scratch_operands = 0 : i64, tpu.core_type = #tpu.core_type<tc>, window_params = [{transform_indices = @transform_0, window_bounds = array<i64: 160, 256>}, {pipeline_mode = #tpu.pipeline_mode<synchronous>, transform_indices = @transform_1, window_bounds = array<i64: 256, 32>}, {pipeline_mode = #tpu.pipeline_mode<synchronous>, transform_indices = @transform_2, window_bounds = array<i64: 1, 32>}, {transform_indices = @transform_3, window_bounds = array<i64: 160, 32>}]} {
    %c0 = arith.constant 0 : index
    %c0_0 = arith.constant 0 : index
    %0 = vector.load %arg1[%c0, %c0_0] : memref<160x256xbf16, #tpu.memory_space<vmem>>, vector<160x256xbf16>
    %c0_1 = arith.constant 0 : index
    %c0_2 = arith.constant 0 : index
    %1 = vector.load %arg2[%c0_1, %c0_2] : memref<256x32xbf16, #tpu.memory_space<vmem>>, vector<256x32xbf16>
    %cst = arith.constant dense<0.000000e+00> : vector<160x32xf32>
    %2 = tpu.matmul %0, %1, %cst {dimension_numbers = #tpu.dot_dimension_numbers<[1], [0], [0], [1], [0, 0, 1, 1], [], []>} : vector<160x256xbf16>, vector<256x32xbf16>, vector<160x32xf32> -> vector<160x32xf32>
    %c0_3 = arith.constant 0 : index
    %c0_4 = arith.constant 0 : index
    %3 = vector.load %arg3[%c0_3, %c0_4] : memref<1x32xf32, #tpu.memory_space<vmem>>, vector<1x32xf32>
    %4 = vector.broadcast %3 : vector<1x32xf32> to vector<160x32xf32>
    %5 = arith.addf %2, %4 : vector<160x32xf32>
    %cst_5 = arith.constant 0.000000e+00 : f32
    %6 = vector.broadcast %cst_5 : f32 to vector<160x32xf32>
    %7 = arith.maximumf %5, %6 : vector<160x32xf32>
    %8 = arith.truncf %7 : vector<160x32xf32> to vector<160x32xbf16>
    %c0_6 = arith.constant 0 : index
    %c0_7 = arith.constant 0 : index
    %9 = vector.load %arg4[%c0_6, %c0_7] : memref<160x32xbf16, #tpu.memory_space<vmem>>, vector<160x32xbf16>
    tpu.vector_store %arg4[%c0_6, %c0_7], %8 {strides = array<i32>} : memref<160x32xbf16, #tpu.memory_space<vmem>>, vector<160x32xbf16>,
    return
  }
  func.func @transform_0(%arg0: i32) -> (i32, i32) {
    %c0_i32 = arith.constant 0 : i32
    %c0_i32_0 = arith.constant 0 : i32
    return %arg0, %c0_i32 : i32, i32
  }
  func.func @transform_1(%arg0: i32) -> (i32, i32) {
    %c0_i32 = arith.constant 0 : i32
    %c0_i32_0 = arith.constant 0 : i32
    %c0_i32_1 = arith.constant 0 : i32
    return %c0_i32, %c0_i32_0 : i32, i32
  }
  func.func @transform_2(%arg0: i32) -> (i32, i32) {
    %c0_i32 = arith.constant 0 : i32
    %c0_i32_0 = arith.constant 0 : i32
    %c0_i32_1 = arith.constant 0 : i32
    return %c0_i32, %c0_i32_0 : i32, i32
  }
  func.func @transform_3(%arg0: i32) -> (i32, i32) {
    %c0_i32 = arith.constant 0 : i32
    %c0_i32_0 = arith.constant 0 : i32
    return %arg0, %c0_i32 : i32, i32
  }
}

module attributes {stable_mosaic.version = 11 : i64} {
  func.func @_conv23_kernel(%arg0: i32, %arg1: memref<1x81x512xbf16, #tpu.memory_space<vmem>>, %arg2: memref<512x64xbf16, #tpu.memory_space<vmem>>, %arg3: memref<1x64xf32, #tpu.memory_space<vmem>>, %arg4: memref<576x64xbf16, #tpu.memory_space<vmem>>, %arg5: memref<1x64xf32, #tpu.memory_space<vmem>>, %arg6: memref<1x49x64xbf16, #tpu.memory_space<vmem>>, %arg7: memref<81x64xf32, #tpu.memory_space<vmem>>, %arg8: memref<49x576xf32, #tpu.memory_space<vmem>>) attributes {dimension_semantics = [#tpu.dimension_semantics<parallel>], iteration_bounds = array<i64: 2>, scalar_prefetch = 0 : i64, scratch_operands = 2 : i64, tpu.core_type = #tpu.core_type<tc>, window_params = [{transform_indices = @transform_0, window_bounds = array<i64: 1, 81, 512>}, {pipeline_mode = #tpu.pipeline_mode<synchronous>, transform_indices = @transform_1, window_bounds = array<i64: 512, 64>}, {pipeline_mode = #tpu.pipeline_mode<synchronous>, transform_indices = @transform_2, window_bounds = array<i64: 1, 64>}, {pipeline_mode = #tpu.pipeline_mode<synchronous>, transform_indices = @transform_3, window_bounds = array<i64: 576, 64>}, {pipeline_mode = #tpu.pipeline_mode<synchronous>, transform_indices = @transform_4, window_bounds = array<i64: 1, 64>}, {transform_indices = @transform_5, window_bounds = array<i64: 1, 49, 64>}]} {
    %c0 = arith.constant 0 : index
    %c0_0 = arith.constant 0 : index
    %c0_1 = arith.constant 0 : index
    %0 = vector.load %arg1[%c0, %c0_0, %c0_1] : memref<1x81x512xbf16, #tpu.memory_space<vmem>>, vector<1x81x512xbf16>
    %1 = vector.shape_cast %0 : vector<1x81x512xbf16> to vector<81x512xbf16>
    %c0_2 = arith.constant 0 : index
    %c0_3 = arith.constant 0 : index
    %2 = vector.load %arg2[%c0_2, %c0_3] : memref<512x64xbf16, #tpu.memory_space<vmem>>, vector<512x64xbf16>
    %cst = arith.constant dense<0.000000e+00> : vector<81x64xf32>
    %3 = tpu.matmul %1, %2, %cst {dimension_numbers = #tpu.dot_dimension_numbers<[1], [0], [0], [1], [0, 0, 1, 1], [], []>} : vector<81x512xbf16>, vector<512x64xbf16>, vector<81x64xf32> -> vector<81x64xf32>
    %c0_4 = arith.constant 0 : index
    %c0_5 = arith.constant 0 : index
    %4 = vector.load %arg3[%c0_4, %c0_5] : memref<1x64xf32, #tpu.memory_space<vmem>>, vector<1x64xf32>
    %5 = vector.broadcast %4 : vector<1x64xf32> to vector<81x64xf32>
    %6 = arith.addf %3, %5 : vector<81x64xf32>
    %cst_6 = arith.constant 0.000000e+00 : f32
    %7 = vector.broadcast %cst_6 : f32 to vector<81x64xf32>
    %8 = arith.maximumf %6, %7 : vector<81x64xf32>
    %c0_7 = arith.constant 0 : index
    %c0_8 = arith.constant 0 : index
    %9 = vector.load %arg7[%c0_7, %c0_8] : memref<81x64xf32, #tpu.memory_space<vmem>>, vector<81x64xf32>
    tpu.vector_store %arg7[%c0_7, %c0_8], %8 {strides = array<i32>} : memref<81x64xf32, #tpu.memory_space<vmem>>, vector<81x64xf32>,
    %c0_9 = arith.constant 0 : index
    %c0_10 = arith.constant 0 : index
    %10 = vector.load %arg7[%c0_9, %c0_10] : memref<81x64xf32, #tpu.memory_space<vmem>>, vector<7x64xf32>
    %c0_11 = arith.constant 0 : index
    %c0_12 = arith.constant 0 : index
    %11 = vector.load %arg8[%c0_11, %c0_12] : memref<49x576xf32, #tpu.memory_space<vmem>>, vector<7x64xf32>
    tpu.vector_store %arg8[%c0_11, %c0_12], %10 {strides = array<i32>} : memref<49x576xf32, #tpu.memory_space<vmem>>, vector<7x64xf32>,
    %c1 = arith.constant 1 : index
    %c0_13 = arith.constant 0 : index
    %12 = vector.load %arg7[%c1, %c0_13] : memref<81x64xf32, #tpu.memory_space<vmem>>, vector<7x64xf32>
    %c0_14 = arith.constant 0 : index
    %c64 = arith.constant 64 : index
    %13 = vector.load %arg8[%c0_14, %c64] : memref<49x576xf32, #tpu.memory_space<vmem>>, vector<7x64xf32>
    tpu.vector_store %arg8[%c0_14, %c64], %12 {strides = array<i32>} : memref<49x576xf32, #tpu.memory_space<vmem>>, vector<7x64xf32>,
    %c2 = arith.constant 2 : index
    %c0_15 = arith.constant 0 : index
    %14 = vector.load %arg7[%c2, %c0_15] : memref<81x64xf32, #tpu.memory_space<vmem>>, vector<7x64xf32>
    %c0_16 = arith.constant 0 : index
    %c128 = arith.constant 128 : index
    %15 = vector.load %arg8[%c0_16, %c128] : memref<49x576xf32, #tpu.memory_space<vmem>>, vector<7x64xf32>
    tpu.vector_store %arg8[%c0_16, %c128], %14 {strides = array<i32>} : memref<49x576xf32, #tpu.memory_space<vmem>>, vector<7x64xf32>,
    %c9 = arith.constant 9 : index
    %c0_17 = arith.constant 0 : index
    %16 = vector.load %arg7[%c9, %c0_17] : memref<81x64xf32, #tpu.memory_space<vmem>>, vector<7x64xf32>
    %c0_18 = arith.constant 0 : index
    %c192 = arith.constant 192 : index
    %17 = vector.load %arg8[%c0_18, %c192] : memref<49x576xf32, #tpu.memory_space<vmem>>, vector<7x64xf32>
    tpu.vector_store %arg8[%c0_18, %c192], %16 {strides = array<i32>} : memref<49x576xf32, #tpu.memory_space<vmem>>, vector<7x64xf32>,
    %c10 = arith.constant 10 : index
    %c0_19 = arith.constant 0 : index
    %18 = vector.load %arg7[%c10, %c0_19] : memref<81x64xf32, #tpu.memory_space<vmem>>, vector<7x64xf32>
    %c0_20 = arith.constant 0 : index
    %c256 = arith.constant 256 : index
    %19 = vector.load %arg8[%c0_20, %c256] : memref<49x576xf32, #tpu.memory_space<vmem>>, vector<7x64xf32>
    tpu.vector_store %arg8[%c0_20, %c256], %18 {strides = array<i32>} : memref<49x576xf32, #tpu.memory_space<vmem>>, vector<7x64xf32>,
    %c11 = arith.constant 11 : index
    %c0_21 = arith.constant 0 : index
    %20 = vector.load %arg7[%c11, %c0_21] : memref<81x64xf32, #tpu.memory_space<vmem>>, vector<7x64xf32>
    %c0_22 = arith.constant 0 : index
    %c320 = arith.constant 320 : index
    %21 = vector.load %arg8[%c0_22, %c320] : memref<49x576xf32, #tpu.memory_space<vmem>>, vector<7x64xf32>
    tpu.vector_store %arg8[%c0_22, %c320], %20 {strides = array<i32>} : memref<49x576xf32, #tpu.memory_space<vmem>>, vector<7x64xf32>,
    %c18 = arith.constant 18 : index
    %c0_23 = arith.constant 0 : index
    %22 = vector.load %arg7[%c18, %c0_23] : memref<81x64xf32, #tpu.memory_space<vmem>>, vector<7x64xf32>
    %c0_24 = arith.constant 0 : index
    %c384 = arith.constant 384 : index
    %23 = vector.load %arg8[%c0_24, %c384] : memref<49x576xf32, #tpu.memory_space<vmem>>, vector<7x64xf32>
    tpu.vector_store %arg8[%c0_24, %c384], %22 {strides = array<i32>} : memref<49x576xf32, #tpu.memory_space<vmem>>, vector<7x64xf32>,
    %c19 = arith.constant 19 : index
    %c0_25 = arith.constant 0 : index
    %24 = vector.load %arg7[%c19, %c0_25] : memref<81x64xf32, #tpu.memory_space<vmem>>, vector<7x64xf32>
    %c0_26 = arith.constant 0 : index
    %c448 = arith.constant 448 : index
    %25 = vector.load %arg8[%c0_26, %c448] : memref<49x576xf32, #tpu.memory_space<vmem>>, vector<7x64xf32>
    tpu.vector_store %arg8[%c0_26, %c448], %24 {strides = array<i32>} : memref<49x576xf32, #tpu.memory_space<vmem>>, vector<7x64xf32>,
    %c20 = arith.constant 20 : index
    %c0_27 = arith.constant 0 : index
    %26 = vector.load %arg7[%c20, %c0_27] : memref<81x64xf32, #tpu.memory_space<vmem>>, vector<7x64xf32>
    %c0_28 = arith.constant 0 : index
    %c512 = arith.constant 512 : index
    %27 = vector.load %arg8[%c0_28, %c512] : memref<49x576xf32, #tpu.memory_space<vmem>>, vector<7x64xf32>
    tpu.vector_store %arg8[%c0_28, %c512], %26 {strides = array<i32>} : memref<49x576xf32, #tpu.memory_space<vmem>>, vector<7x64xf32>,
    %c9_29 = arith.constant 9 : index
    %c0_30 = arith.constant 0 : index
    %28 = vector.load %arg7[%c9_29, %c0_30] : memref<81x64xf32, #tpu.memory_space<vmem>>, vector<7x64xf32>
    %c7 = arith.constant 7 : index
    %c0_31 = arith.constant 0 : index
    %29 = vector.load %arg8[%c7, %c0_31] : memref<49x576xf32, #tpu.memory_space<vmem>>, vector<7x64xf32>
    tpu.vector_store %arg8[%c7, %c0_31], %28 {strides = array<i32>} : memref<49x576xf32, #tpu.memory_space<vmem>>, vector<7x64xf32>,
    %c10_32 = arith.constant 10 : index
    %c0_33 = arith.constant 0 : index
    %30 = vector.load %arg7[%c10_32, %c0_33] : memref<81x64xf32, #tpu.memory_space<vmem>>, vector<7x64xf32>
    %c7_34 = arith.constant 7 : index
    %c64_35 = arith.constant 64 : index
    %31 = vector.load %arg8[%c7_34, %c64_35] : memref<49x576xf32, #tpu.memory_space<vmem>>, vector<7x64xf32>
    tpu.vector_store %arg8[%c7_34, %c64_35], %30 {strides = array<i32>} : memref<49x576xf32, #tpu.memory_space<vmem>>, vector<7x64xf32>,
    %c11_36 = arith.constant 11 : index
    %c0_37 = arith.constant 0 : index
    %32 = vector.load %arg7[%c11_36, %c0_37] : memref<81x64xf32, #tpu.memory_space<vmem>>, vector<7x64xf32>
    %c7_38 = arith.constant 7 : index
    %c128_39 = arith.constant 128 : index
    %33 = vector.load %arg8[%c7_38, %c128_39] : memref<49x576xf32, #tpu.memory_space<vmem>>, vector<7x64xf32>
    tpu.vector_store %arg8[%c7_38, %c128_39], %32 {strides = array<i32>} : memref<49x576xf32, #tpu.memory_space<vmem>>, vector<7x64xf32>,
    %c18_40 = arith.constant 18 : index
    %c0_41 = arith.constant 0 : index
    %34 = vector.load %arg7[%c18_40, %c0_41] : memref<81x64xf32, #tpu.memory_space<vmem>>, vector<7x64xf32>
    %c7_42 = arith.constant 7 : index
    %c192_43 = arith.constant 192 : index
    %35 = vector.load %arg8[%c7_42, %c192_43] : memref<49x576xf32, #tpu.memory_space<vmem>>, vector<7x64xf32>
    tpu.vector_store %arg8[%c7_42, %c192_43], %34 {strides = array<i32>} : memref<49x576xf32, #tpu.memory_space<vmem>>, vector<7x64xf32>,
    %c19_44 = arith.constant 19 : index
    %c0_45 = arith.constant 0 : index
    %36 = vector.load %arg7[%c19_44, %c0_45] : memref<81x64xf32, #tpu.memory_space<vmem>>, vector<7x64xf32>
    %c7_46 = arith.constant 7 : index
    %c256_47 = arith.constant 256 : index
    %37 = vector.load %arg8[%c7_46, %c256_47] : memref<49x576xf32, #tpu.memory_space<vmem>>, vector<7x64xf32>
    tpu.vector_store %arg8[%c7_46, %c256_47], %36 {strides = array<i32>} : memref<49x576xf32, #tpu.memory_space<vmem>>, vector<7x64xf32>,
    %c20_48 = arith.constant 20 : index
    %c0_49 = arith.constant 0 : index
    %38 = vector.load %arg7[%c20_48, %c0_49] : memref<81x64xf32, #tpu.memory_space<vmem>>, vector<7x64xf32>
    %c7_50 = arith.constant 7 : index
    %c320_51 = arith.constant 320 : index
    %39 = vector.load %arg8[%c7_50, %c320_51] : memref<49x576xf32, #tpu.memory_space<vmem>>, vector<7x64xf32>
    tpu.vector_store %arg8[%c7_50, %c320_51], %38 {strides = array<i32>} : memref<49x576xf32, #tpu.memory_space<vmem>>, vector<7x64xf32>,
    %c27 = arith.constant 27 : index
    %c0_52 = arith.constant 0 : index
    %40 = vector.load %arg7[%c27, %c0_52] : memref<81x64xf32, #tpu.memory_space<vmem>>, vector<7x64xf32>
    %c7_53 = arith.constant 7 : index
    %c384_54 = arith.constant 384 : index
    %41 = vector.load %arg8[%c7_53, %c384_54] : memref<49x576xf32, #tpu.memory_space<vmem>>, vector<7x64xf32>
    tpu.vector_store %arg8[%c7_53, %c384_54], %40 {strides = array<i32>} : memref<49x576xf32, #tpu.memory_space<vmem>>, vector<7x64xf32>,
    %c28 = arith.constant 28 : index
    %c0_55 = arith.constant 0 : index
    %42 = vector.load %arg7[%c28, %c0_55] : memref<81x64xf32, #tpu.memory_space<vmem>>, vector<7x64xf32>
    %c7_56 = arith.constant 7 : index
    %c448_57 = arith.constant 448 : index
    %43 = vector.load %arg8[%c7_56, %c448_57] : memref<49x576xf32, #tpu.memory_space<vmem>>, vector<7x64xf32>
    tpu.vector_store %arg8[%c7_56, %c448_57], %42 {strides = array<i32>} : memref<49x576xf32, #tpu.memory_space<vmem>>, vector<7x64xf32>,
    %c29 = arith.constant 29 : index
    %c0_58 = arith.constant 0 : index
    %44 = vector.load %arg7[%c29, %c0_58] : memref<81x64xf32, #tpu.memory_space<vmem>>, vector<7x64xf32>
    %c7_59 = arith.constant 7 : index
    %c512_60 = arith.constant 512 : index
    %45 = vector.load %arg8[%c7_59, %c512_60] : memref<49x576xf32, #tpu.memory_space<vmem>>, vector<7x64xf32>
    tpu.vector_store %arg8[%c7_59, %c512_60], %44 {strides = array<i32>} : memref<49x576xf32, #tpu.memory_space<vmem>>, vector<7x64xf32>,
    %c18_61 = arith.constant 18 : index
    %c0_62 = arith.constant 0 : index
    %46 = vector.load %arg7[%c18_61, %c0_62] : memref<81x64xf32, #tpu.memory_space<vmem>>, vector<7x64xf32>
    %c14 = arith.constant 14 : index
    %c0_63 = arith.constant 0 : index
    %47 = vector.load %arg8[%c14, %c0_63] : memref<49x576xf32, #tpu.memory_space<vmem>>, vector<7x64xf32>
    tpu.vector_store %arg8[%c14, %c0_63], %46 {strides = array<i32>} : memref<49x576xf32, #tpu.memory_space<vmem>>, vector<7x64xf32>,
    %c19_64 = arith.constant 19 : index
    %c0_65 = arith.constant 0 : index
    %48 = vector.load %arg7[%c19_64, %c0_65] : memref<81x64xf32, #tpu.memory_space<vmem>>, vector<7x64xf32>
    %c14_66 = arith.constant 14 : index
    %c64_67 = arith.constant 64 : index
    %49 = vector.load %arg8[%c14_66, %c64_67] : memref<49x576xf32, #tpu.memory_space<vmem>>, vector<7x64xf32>
    tpu.vector_store %arg8[%c14_66, %c64_67], %48 {strides = array<i32>} : memref<49x576xf32, #tpu.memory_space<vmem>>, vector<7x64xf32>,
    %c20_68 = arith.constant 20 : index
    %c0_69 = arith.constant 0 : index
    %50 = vector.load %arg7[%c20_68, %c0_69] : memref<81x64xf32, #tpu.memory_space<vmem>>, vector<7x64xf32>
    %c14_70 = arith.constant 14 : index
    %c128_71 = arith.constant 128 : index
    %51 = vector.load %arg8[%c14_70, %c128_71] : memref<49x576xf32, #tpu.memory_space<vmem>>, vector<7x64xf32>
    tpu.vector_store %arg8[%c14_70, %c128_71], %50 {strides = array<i32>} : memref<49x576xf32, #tpu.memory_space<vmem>>, vector<7x64xf32>,
    %c27_72 = arith.constant 27 : index
    %c0_73 = arith.constant 0 : index
    %52 = vector.load %arg7[%c27_72, %c0_73] : memref<81x64xf32, #tpu.memory_space<vmem>>, vector<7x64xf32>
    %c14_74 = arith.constant 14 : index
    %c192_75 = arith.constant 192 : index
    %53 = vector.load %arg8[%c14_74, %c192_75] : memref<49x576xf32, #tpu.memory_space<vmem>>, vector<7x64xf32>
    tpu.vector_store %arg8[%c14_74, %c192_75], %52 {strides = array<i32>} : memref<49x576xf32, #tpu.memory_space<vmem>>, vector<7x64xf32>,
    %c28_76 = arith.constant 28 : index
    %c0_77 = arith.constant 0 : index
    %54 = vector.load %arg7[%c28_76, %c0_77] : memref<81x64xf32, #tpu.memory_space<vmem>>, vector<7x64xf32>
    %c14_78 = arith.constant 14 : index
    %c256_79 = arith.constant 256 : index
    %55 = vector.load %arg8[%c14_78, %c256_79] : memref<49x576xf32, #tpu.memory_space<vmem>>, vector<7x64xf32>
    tpu.vector_store %arg8[%c14_78, %c256_79], %54 {strides = array<i32>} : memref<49x576xf32, #tpu.memory_space<vmem>>, vector<7x64xf32>,
    %c29_80 = arith.constant 29 : index
    %c0_81 = arith.constant 0 : index
    %56 = vector.load %arg7[%c29_80, %c0_81] : memref<81x64xf32, #tpu.memory_space<vmem>>, vector<7x64xf32>
    %c14_82 = arith.constant 14 : index
    %c320_83 = arith.constant 320 : index
    %57 = vector.load %arg8[%c14_82, %c320_83] : memref<49x576xf32, #tpu.memory_space<vmem>>, vector<7x64xf32>
    tpu.vector_store %arg8[%c14_82, %c320_83], %56 {strides = array<i32>} : memref<49x576xf32, #tpu.memory_space<vmem>>, vector<7x64xf32>,
    %c36 = arith.constant 36 : index
    %c0_84 = arith.constant 0 : index
    %58 = vector.load %arg7[%c36, %c0_84] : memref<81x64xf32, #tpu.memory_space<vmem>>, vector<7x64xf32>
    %c14_85 = arith.constant 14 : index
    %c384_86 = arith.constant 384 : index
    %59 = vector.load %arg8[%c14_85, %c384_86] : memref<49x576xf32, #tpu.memory_space<vmem>>, vector<7x64xf32>
    tpu.vector_store %arg8[%c14_85, %c384_86], %58 {strides = array<i32>} : memref<49x576xf32, #tpu.memory_space<vmem>>, vector<7x64xf32>,
    %c37 = arith.constant 37 : index
    %c0_87 = arith.constant 0 : index
    %60 = vector.load %arg7[%c37, %c0_87] : memref<81x64xf32, #tpu.memory_space<vmem>>, vector<7x64xf32>
    %c14_88 = arith.constant 14 : index
    %c448_89 = arith.constant 448 : index
    %61 = vector.load %arg8[%c14_88, %c448_89] : memref<49x576xf32, #tpu.memory_space<vmem>>, vector<7x64xf32>
    tpu.vector_store %arg8[%c14_88, %c448_89], %60 {strides = array<i32>} : memref<49x576xf32, #tpu.memory_space<vmem>>, vector<7x64xf32>,
    %c38 = arith.constant 38 : index
    %c0_90 = arith.constant 0 : index
    %62 = vector.load %arg7[%c38, %c0_90] : memref<81x64xf32, #tpu.memory_space<vmem>>, vector<7x64xf32>
    %c14_91 = arith.constant 14 : index
    %c512_92 = arith.constant 512 : index
    %63 = vector.load %arg8[%c14_91, %c512_92] : memref<49x576xf32, #tpu.memory_space<vmem>>, vector<7x64xf32>
    tpu.vector_store %arg8[%c14_91, %c512_92], %62 {strides = array<i32>} : memref<49x576xf32, #tpu.memory_space<vmem>>, vector<7x64xf32>,
    %c27_93 = arith.constant 27 : index
    %c0_94 = arith.constant 0 : index
    %64 = vector.load %arg7[%c27_93, %c0_94] : memref<81x64xf32, #tpu.memory_space<vmem>>, vector<7x64xf32>
    %c21 = arith.constant 21 : index
    %c0_95 = arith.constant 0 : index
    %65 = vector.load %arg8[%c21, %c0_95] : memref<49x576xf32, #tpu.memory_space<vmem>>, vector<7x64xf32>
    tpu.vector_store %arg8[%c21, %c0_95], %64 {strides = array<i32>} : memref<49x576xf32, #tpu.memory_space<vmem>>, vector<7x64xf32>,
    %c28_96 = arith.constant 28 : index
    %c0_97 = arith.constant 0 : index
    %66 = vector.load %arg7[%c28_96, %c0_97] : memref<81x64xf32, #tpu.memory_space<vmem>>, vector<7x64xf32>
    %c21_98 = arith.constant 21 : index
    %c64_99 = arith.constant 64 : index
    %67 = vector.load %arg8[%c21_98, %c64_99] : memref<49x576xf32, #tpu.memory_space<vmem>>, vector<7x64xf32>
    tpu.vector_store %arg8[%c21_98, %c64_99], %66 {strides = array<i32>} : memref<49x576xf32, #tpu.memory_space<vmem>>, vector<7x64xf32>,
    %c29_100 = arith.constant 29 : index
    %c0_101 = arith.constant 0 : index
    %68 = vector.load %arg7[%c29_100, %c0_101] : memref<81x64xf32, #tpu.memory_space<vmem>>, vector<7x64xf32>
    %c21_102 = arith.constant 21 : index
    %c128_103 = arith.constant 128 : index
    %69 = vector.load %arg8[%c21_102, %c128_103] : memref<49x576xf32, #tpu.memory_space<vmem>>, vector<7x64xf32>
    tpu.vector_store %arg8[%c21_102, %c128_103], %68 {strides = array<i32>} : memref<49x576xf32, #tpu.memory_space<vmem>>, vector<7x64xf32>,
    %c36_104 = arith.constant 36 : index
    %c0_105 = arith.constant 0 : index
    %70 = vector.load %arg7[%c36_104, %c0_105] : memref<81x64xf32, #tpu.memory_space<vmem>>, vector<7x64xf32>
    %c21_106 = arith.constant 21 : index
    %c192_107 = arith.constant 192 : index
    %71 = vector.load %arg8[%c21_106, %c192_107] : memref<49x576xf32, #tpu.memory_space<vmem>>, vector<7x64xf32>
    tpu.vector_store %arg8[%c21_106, %c192_107], %70 {strides = array<i32>} : memref<49x576xf32, #tpu.memory_space<vmem>>, vector<7x64xf32>,
    %c37_108 = arith.constant 37 : index
    %c0_109 = arith.constant 0 : index
    %72 = vector.load %arg7[%c37_108, %c0_109] : memref<81x64xf32, #tpu.memory_space<vmem>>, vector<7x64xf32>
    %c21_110 = arith.constant 21 : index
    %c256_111 = arith.constant 256 : index
    %73 = vector.load %arg8[%c21_110, %c256_111] : memref<49x576xf32, #tpu.memory_space<vmem>>, vector<7x64xf32>
    tpu.vector_store %arg8[%c21_110, %c256_111], %72 {strides = array<i32>} : memref<49x576xf32, #tpu.memory_space<vmem>>, vector<7x64xf32>,
    %c38_112 = arith.constant 38 : index
    %c0_113 = arith.constant 0 : index
    %74 = vector.load %arg7[%c38_112, %c0_113] : memref<81x64xf32, #tpu.memory_space<vmem>>, vector<7x64xf32>
    %c21_114 = arith.constant 21 : index
    %c320_115 = arith.constant 320 : index
    %75 = vector.load %arg8[%c21_114, %c320_115] : memref<49x576xf32, #tpu.memory_space<vmem>>, vector<7x64xf32>
    tpu.vector_store %arg8[%c21_114, %c320_115], %74 {strides = array<i32>} : memref<49x576xf32, #tpu.memory_space<vmem>>, vector<7x64xf32>,
    %c45 = arith.constant 45 : index
    %c0_116 = arith.constant 0 : index
    %76 = vector.load %arg7[%c45, %c0_116] : memref<81x64xf32, #tpu.memory_space<vmem>>, vector<7x64xf32>
    %c21_117 = arith.constant 21 : index
    %c384_118 = arith.constant 384 : index
    %77 = vector.load %arg8[%c21_117, %c384_118] : memref<49x576xf32, #tpu.memory_space<vmem>>, vector<7x64xf32>
    tpu.vector_store %arg8[%c21_117, %c384_118], %76 {strides = array<i32>} : memref<49x576xf32, #tpu.memory_space<vmem>>, vector<7x64xf32>,
    %c46 = arith.constant 46 : index
    %c0_119 = arith.constant 0 : index
    %78 = vector.load %arg7[%c46, %c0_119] : memref<81x64xf32, #tpu.memory_space<vmem>>, vector<7x64xf32>
    %c21_120 = arith.constant 21 : index
    %c448_121 = arith.constant 448 : index
    %79 = vector.load %arg8[%c21_120, %c448_121] : memref<49x576xf32, #tpu.memory_space<vmem>>, vector<7x64xf32>
    tpu.vector_store %arg8[%c21_120, %c448_121], %78 {strides = array<i32>} : memref<49x576xf32, #tpu.memory_space<vmem>>, vector<7x64xf32>,
    %c47 = arith.constant 47 : index
    %c0_122 = arith.constant 0 : index
    %80 = vector.load %arg7[%c47, %c0_122] : memref<81x64xf32, #tpu.memory_space<vmem>>, vector<7x64xf32>
    %c21_123 = arith.constant 21 : index
    %c512_124 = arith.constant 512 : index
    %81 = vector.load %arg8[%c21_123, %c512_124] : memref<49x576xf32, #tpu.memory_space<vmem>>, vector<7x64xf32>
    tpu.vector_store %arg8[%c21_123, %c512_124], %80 {strides = array<i32>} : memref<49x576xf32, #tpu.memory_space<vmem>>, vector<7x64xf32>,
    %c36_125 = arith.constant 36 : index
    %c0_126 = arith.constant 0 : index
    %82 = vector.load %arg7[%c36_125, %c0_126] : memref<81x64xf32, #tpu.memory_space<vmem>>, vector<7x64xf32>
    %c28_127 = arith.constant 28 : index
    %c0_128 = arith.constant 0 : index
    %83 = vector.load %arg8[%c28_127, %c0_128] : memref<49x576xf32, #tpu.memory_space<vmem>>, vector<7x64xf32>
    tpu.vector_store %arg8[%c28_127, %c0_128], %82 {strides = array<i32>} : memref<49x576xf32, #tpu.memory_space<vmem>>, vector<7x64xf32>,
    %c37_129 = arith.constant 37 : index
    %c0_130 = arith.constant 0 : index
    %84 = vector.load %arg7[%c37_129, %c0_130] : memref<81x64xf32, #tpu.memory_space<vmem>>, vector<7x64xf32>
    %c28_131 = arith.constant 28 : index
    %c64_132 = arith.constant 64 : index
    %85 = vector.load %arg8[%c28_131, %c64_132] : memref<49x576xf32, #tpu.memory_space<vmem>>, vector<7x64xf32>
    tpu.vector_store %arg8[%c28_131, %c64_132], %84 {strides = array<i32>} : memref<49x576xf32, #tpu.memory_space<vmem>>, vector<7x64xf32>,
    %c38_133 = arith.constant 38 : index
    %c0_134 = arith.constant 0 : index
    %86 = vector.load %arg7[%c38_133, %c0_134] : memref<81x64xf32, #tpu.memory_space<vmem>>, vector<7x64xf32>
    %c28_135 = arith.constant 28 : index
    %c128_136 = arith.constant 128 : index
    %87 = vector.load %arg8[%c28_135, %c128_136] : memref<49x576xf32, #tpu.memory_space<vmem>>, vector<7x64xf32>
    tpu.vector_store %arg8[%c28_135, %c128_136], %86 {strides = array<i32>} : memref<49x576xf32, #tpu.memory_space<vmem>>, vector<7x64xf32>,
    %c45_137 = arith.constant 45 : index
    %c0_138 = arith.constant 0 : index
    %88 = vector.load %arg7[%c45_137, %c0_138] : memref<81x64xf32, #tpu.memory_space<vmem>>, vector<7x64xf32>
    %c28_139 = arith.constant 28 : index
    %c192_140 = arith.constant 192 : index
    %89 = vector.load %arg8[%c28_139, %c192_140] : memref<49x576xf32, #tpu.memory_space<vmem>>, vector<7x64xf32>
    tpu.vector_store %arg8[%c28_139, %c192_140], %88 {strides = array<i32>} : memref<49x576xf32, #tpu.memory_space<vmem>>, vector<7x64xf32>,
    %c46_141 = arith.constant 46 : index
    %c0_142 = arith.constant 0 : index
    %90 = vector.load %arg7[%c46_141, %c0_142] : memref<81x64xf32, #tpu.memory_space<vmem>>, vector<7x64xf32>
    %c28_143 = arith.constant 28 : index
    %c256_144 = arith.constant 256 : index
    %91 = vector.load %arg8[%c28_143, %c256_144] : memref<49x576xf32, #tpu.memory_space<vmem>>, vector<7x64xf32>
    tpu.vector_store %arg8[%c28_143, %c256_144], %90 {strides = array<i32>} : memref<49x576xf32, #tpu.memory_space<vmem>>, vector<7x64xf32>,
    %c47_145 = arith.constant 47 : index
    %c0_146 = arith.constant 0 : index
    %92 = vector.load %arg7[%c47_145, %c0_146] : memref<81x64xf32, #tpu.memory_space<vmem>>, vector<7x64xf32>
    %c28_147 = arith.constant 28 : index
    %c320_148 = arith.constant 320 : index
    %93 = vector.load %arg8[%c28_147, %c320_148] : memref<49x576xf32, #tpu.memory_space<vmem>>, vector<7x64xf32>
    tpu.vector_store %arg8[%c28_147, %c320_148], %92 {strides = array<i32>} : memref<49x576xf32, #tpu.memory_space<vmem>>, vector<7x64xf32>,
    %c54 = arith.constant 54 : index
    %c0_149 = arith.constant 0 : index
    %94 = vector.load %arg7[%c54, %c0_149] : memref<81x64xf32, #tpu.memory_space<vmem>>, vector<7x64xf32>
    %c28_150 = arith.constant 28 : index
    %c384_151 = arith.constant 384 : index
    %95 = vector.load %arg8[%c28_150, %c384_151] : memref<49x576xf32, #tpu.memory_space<vmem>>, vector<7x64xf32>
    tpu.vector_store %arg8[%c28_150, %c384_151], %94 {strides = array<i32>} : memref<49x576xf32, #tpu.memory_space<vmem>>, vector<7x64xf32>,
    %c55 = arith.constant 55 : index
    %c0_152 = arith.constant 0 : index
    %96 = vector.load %arg7[%c55, %c0_152] : memref<81x64xf32, #tpu.memory_space<vmem>>, vector<7x64xf32>
    %c28_153 = arith.constant 28 : index
    %c448_154 = arith.constant 448 : index
    %97 = vector.load %arg8[%c28_153, %c448_154] : memref<49x576xf32, #tpu.memory_space<vmem>>, vector<7x64xf32>
    tpu.vector_store %arg8[%c28_153, %c448_154], %96 {strides = array<i32>} : memref<49x576xf32, #tpu.memory_space<vmem>>, vector<7x64xf32>,
    %c56 = arith.constant 56 : index
    %c0_155 = arith.constant 0 : index
    %98 = vector.load %arg7[%c56, %c0_155] : memref<81x64xf32, #tpu.memory_space<vmem>>, vector<7x64xf32>
    %c28_156 = arith.constant 28 : index
    %c512_157 = arith.constant 512 : index
    %99 = vector.load %arg8[%c28_156, %c512_157] : memref<49x576xf32, #tpu.memory_space<vmem>>, vector<7x64xf32>
    tpu.vector_store %arg8[%c28_156, %c512_157], %98 {strides = array<i32>} : memref<49x576xf32, #tpu.memory_space<vmem>>, vector<7x64xf32>,
    %c45_158 = arith.constant 45 : index
    %c0_159 = arith.constant 0 : index
    %100 = vector.load %arg7[%c45_158, %c0_159] : memref<81x64xf32, #tpu.memory_space<vmem>>, vector<7x64xf32>
    %c35 = arith.constant 35 : index
    %c0_160 = arith.constant 0 : index
    %101 = vector.load %arg8[%c35, %c0_160] : memref<49x576xf32, #tpu.memory_space<vmem>>, vector<7x64xf32>
    tpu.vector_store %arg8[%c35, %c0_160], %100 {strides = array<i32>} : memref<49x576xf32, #tpu.memory_space<vmem>>, vector<7x64xf32>,
    %c46_161 = arith.constant 46 : index
    %c0_162 = arith.constant 0 : index
    %102 = vector.load %arg7[%c46_161, %c0_162] : memref<81x64xf32, #tpu.memory_space<vmem>>, vector<7x64xf32>
    %c35_163 = arith.constant 35 : index
    %c64_164 = arith.constant 64 : index
    %103 = vector.load %arg8[%c35_163, %c64_164] : memref<49x576xf32, #tpu.memory_space<vmem>>, vector<7x64xf32>
    tpu.vector_store %arg8[%c35_163, %c64_164], %102 {strides = array<i32>} : memref<49x576xf32, #tpu.memory_space<vmem>>, vector<7x64xf32>,
    %c47_165 = arith.constant 47 : index
    %c0_166 = arith.constant 0 : index
    %104 = vector.load %arg7[%c47_165, %c0_166] : memref<81x64xf32, #tpu.memory_space<vmem>>, vector<7x64xf32>
    %c35_167 = arith.constant 35 : index
    %c128_168 = arith.constant 128 : index
    %105 = vector.load %arg8[%c35_167, %c128_168] : memref<49x576xf32, #tpu.memory_space<vmem>>, vector<7x64xf32>
    tpu.vector_store %arg8[%c35_167, %c128_168], %104 {strides = array<i32>} : memref<49x576xf32, #tpu.memory_space<vmem>>, vector<7x64xf32>,
    %c54_169 = arith.constant 54 : index
    %c0_170 = arith.constant 0 : index
    %106 = vector.load %arg7[%c54_169, %c0_170] : memref<81x64xf32, #tpu.memory_space<vmem>>, vector<7x64xf32>
    %c35_171 = arith.constant 35 : index
    %c192_172 = arith.constant 192 : index
    %107 = vector.load %arg8[%c35_171, %c192_172] : memref<49x576xf32, #tpu.memory_space<vmem>>, vector<7x64xf32>
    tpu.vector_store %arg8[%c35_171, %c192_172], %106 {strides = array<i32>} : memref<49x576xf32, #tpu.memory_space<vmem>>, vector<7x64xf32>,
    %c55_173 = arith.constant 55 : index
    %c0_174 = arith.constant 0 : index
    %108 = vector.load %arg7[%c55_173, %c0_174] : memref<81x64xf32, #tpu.memory_space<vmem>>, vector<7x64xf32>
    %c35_175 = arith.constant 35 : index
    %c256_176 = arith.constant 256 : index
    %109 = vector.load %arg8[%c35_175, %c256_176] : memref<49x576xf32, #tpu.memory_space<vmem>>, vector<7x64xf32>
    tpu.vector_store %arg8[%c35_175, %c256_176], %108 {strides = array<i32>} : memref<49x576xf32, #tpu.memory_space<vmem>>, vector<7x64xf32>,
    %c56_177 = arith.constant 56 : index
    %c0_178 = arith.constant 0 : index
    %110 = vector.load %arg7[%c56_177, %c0_178] : memref<81x64xf32, #tpu.memory_space<vmem>>, vector<7x64xf32>
    %c35_179 = arith.constant 35 : index
    %c320_180 = arith.constant 320 : index
    %111 = vector.load %arg8[%c35_179, %c320_180] : memref<49x576xf32, #tpu.memory_space<vmem>>, vector<7x64xf32>
    tpu.vector_store %arg8[%c35_179, %c320_180], %110 {strides = array<i32>} : memref<49x576xf32, #tpu.memory_space<vmem>>, vector<7x64xf32>,
    %c63 = arith.constant 63 : index
    %c0_181 = arith.constant 0 : index
    %112 = vector.load %arg7[%c63, %c0_181] : memref<81x64xf32, #tpu.memory_space<vmem>>, vector<7x64xf32>
    %c35_182 = arith.constant 35 : index
    %c384_183 = arith.constant 384 : index
    %113 = vector.load %arg8[%c35_182, %c384_183] : memref<49x576xf32, #tpu.memory_space<vmem>>, vector<7x64xf32>
    tpu.vector_store %arg8[%c35_182, %c384_183], %112 {strides = array<i32>} : memref<49x576xf32, #tpu.memory_space<vmem>>, vector<7x64xf32>,
    %c64_184 = arith.constant 64 : index
    %c0_185 = arith.constant 0 : index
    %114 = vector.load %arg7[%c64_184, %c0_185] : memref<81x64xf32, #tpu.memory_space<vmem>>, vector<7x64xf32>
    %c35_186 = arith.constant 35 : index
    %c448_187 = arith.constant 448 : index
    %115 = vector.load %arg8[%c35_186, %c448_187] : memref<49x576xf32, #tpu.memory_space<vmem>>, vector<7x64xf32>
    tpu.vector_store %arg8[%c35_186, %c448_187], %114 {strides = array<i32>} : memref<49x576xf32, #tpu.memory_space<vmem>>, vector<7x64xf32>,
    %c65 = arith.constant 65 : index
    %c0_188 = arith.constant 0 : index
    %116 = vector.load %arg7[%c65, %c0_188] : memref<81x64xf32, #tpu.memory_space<vmem>>, vector<7x64xf32>
    %c35_189 = arith.constant 35 : index
    %c512_190 = arith.constant 512 : index
    %117 = vector.load %arg8[%c35_189, %c512_190] : memref<49x576xf32, #tpu.memory_space<vmem>>, vector<7x64xf32>
    tpu.vector_store %arg8[%c35_189, %c512_190], %116 {strides = array<i32>} : memref<49x576xf32, #tpu.memory_space<vmem>>, vector<7x64xf32>,
    %c54_191 = arith.constant 54 : index
    %c0_192 = arith.constant 0 : index
    %118 = vector.load %arg7[%c54_191, %c0_192] : memref<81x64xf32, #tpu.memory_space<vmem>>, vector<7x64xf32>
    %c42 = arith.constant 42 : index
    %c0_193 = arith.constant 0 : index
    %119 = vector.load %arg8[%c42, %c0_193] : memref<49x576xf32, #tpu.memory_space<vmem>>, vector<7x64xf32>
    tpu.vector_store %arg8[%c42, %c0_193], %118 {strides = array<i32>} : memref<49x576xf32, #tpu.memory_space<vmem>>, vector<7x64xf32>,
    %c55_194 = arith.constant 55 : index
    %c0_195 = arith.constant 0 : index
    %120 = vector.load %arg7[%c55_194, %c0_195] : memref<81x64xf32, #tpu.memory_space<vmem>>, vector<7x64xf32>
    %c42_196 = arith.constant 42 : index
    %c64_197 = arith.constant 64 : index
    %121 = vector.load %arg8[%c42_196, %c64_197] : memref<49x576xf32, #tpu.memory_space<vmem>>, vector<7x64xf32>
    tpu.vector_store %arg8[%c42_196, %c64_197], %120 {strides = array<i32>} : memref<49x576xf32, #tpu.memory_space<vmem>>, vector<7x64xf32>,
    %c56_198 = arith.constant 56 : index
    %c0_199 = arith.constant 0 : index
    %122 = vector.load %arg7[%c56_198, %c0_199] : memref<81x64xf32, #tpu.memory_space<vmem>>, vector<7x64xf32>
    %c42_200 = arith.constant 42 : index
    %c128_201 = arith.constant 128 : index
    %123 = vector.load %arg8[%c42_200, %c128_201] : memref<49x576xf32, #tpu.memory_space<vmem>>, vector<7x64xf32>
    tpu.vector_store %arg8[%c42_200, %c128_201], %122 {strides = array<i32>} : memref<49x576xf32, #tpu.memory_space<vmem>>, vector<7x64xf32>,
    %c63_202 = arith.constant 63 : index
    %c0_203 = arith.constant 0 : index
    %124 = vector.load %arg7[%c63_202, %c0_203] : memref<81x64xf32, #tpu.memory_space<vmem>>, vector<7x64xf32>
    %c42_204 = arith.constant 42 : index
    %c192_205 = arith.constant 192 : index
    %125 = vector.load %arg8[%c42_204, %c192_205] : memref<49x576xf32, #tpu.memory_space<vmem>>, vector<7x64xf32>
    tpu.vector_store %arg8[%c42_204, %c192_205], %124 {strides = array<i32>} : memref<49x576xf32, #tpu.memory_space<vmem>>, vector<7x64xf32>,
    %c64_206 = arith.constant 64 : index
    %c0_207 = arith.constant 0 : index
    %126 = vector.load %arg7[%c64_206, %c0_207] : memref<81x64xf32, #tpu.memory_space<vmem>>, vector<7x64xf32>
    %c42_208 = arith.constant 42 : index
    %c256_209 = arith.constant 256 : index
    %127 = vector.load %arg8[%c42_208, %c256_209] : memref<49x576xf32, #tpu.memory_space<vmem>>, vector<7x64xf32>
    tpu.vector_store %arg8[%c42_208, %c256_209], %126 {strides = array<i32>} : memref<49x576xf32, #tpu.memory_space<vmem>>, vector<7x64xf32>,
    %c65_210 = arith.constant 65 : index
    %c0_211 = arith.constant 0 : index
    %128 = vector.load %arg7[%c65_210, %c0_211] : memref<81x64xf32, #tpu.memory_space<vmem>>, vector<7x64xf32>
    %c42_212 = arith.constant 42 : index
    %c320_213 = arith.constant 320 : index
    %129 = vector.load %arg8[%c42_212, %c320_213] : memref<49x576xf32, #tpu.memory_space<vmem>>, vector<7x64xf32>
    tpu.vector_store %arg8[%c42_212, %c320_213], %128 {strides = array<i32>} : memref<49x576xf32, #tpu.memory_space<vmem>>, vector<7x64xf32>,
    %c72 = arith.constant 72 : index
    %c0_214 = arith.constant 0 : index
    %130 = vector.load %arg7[%c72, %c0_214] : memref<81x64xf32, #tpu.memory_space<vmem>>, vector<7x64xf32>
    %c42_215 = arith.constant 42 : index
    %c384_216 = arith.constant 384 : index
    %131 = vector.load %arg8[%c42_215, %c384_216] : memref<49x576xf32, #tpu.memory_space<vmem>>, vector<7x64xf32>
    tpu.vector_store %arg8[%c42_215, %c384_216], %130 {strides = array<i32>} : memref<49x576xf32, #tpu.memory_space<vmem>>, vector<7x64xf32>,
    %c73 = arith.constant 73 : index
    %c0_217 = arith.constant 0 : index
    %132 = vector.load %arg7[%c73, %c0_217] : memref<81x64xf32, #tpu.memory_space<vmem>>, vector<7x64xf32>
    %c42_218 = arith.constant 42 : index
    %c448_219 = arith.constant 448 : index
    %133 = vector.load %arg8[%c42_218, %c448_219] : memref<49x576xf32, #tpu.memory_space<vmem>>, vector<7x64xf32>
    tpu.vector_store %arg8[%c42_218, %c448_219], %132 {strides = array<i32>} : memref<49x576xf32, #tpu.memory_space<vmem>>, vector<7x64xf32>,
    %c74 = arith.constant 74 : index
    %c0_220 = arith.constant 0 : index
    %134 = vector.load %arg7[%c74, %c0_220] : memref<81x64xf32, #tpu.memory_space<vmem>>, vector<7x64xf32>
    %c42_221 = arith.constant 42 : index
    %c512_222 = arith.constant 512 : index
    %135 = vector.load %arg8[%c42_221, %c512_222] : memref<49x576xf32, #tpu.memory_space<vmem>>, vector<7x64xf32>
    tpu.vector_store %arg8[%c42_221, %c512_222], %134 {strides = array<i32>} : memref<49x576xf32, #tpu.memory_space<vmem>>, vector<7x64xf32>,
    %c0_223 = arith.constant 0 : index
    %c0_224 = arith.constant 0 : index
    %136 = vector.load %arg8[%c0_223, %c0_224] : memref<49x576xf32, #tpu.memory_space<vmem>>, vector<49x576xf32>
    %137 = arith.truncf %136 : vector<49x576xf32> to vector<49x576xbf16>
    %c0_225 = arith.constant 0 : index
    %c0_226 = arith.constant 0 : index
    %138 = vector.load %arg4[%c0_225, %c0_226] : memref<576x64xbf16, #tpu.memory_space<vmem>>, vector<576x64xbf16>
    %cst_227 = arith.constant dense<0.000000e+00> : vector<49x64xf32>
    %139 = tpu.matmul %137, %138, %cst_227 {dimension_numbers = #tpu.dot_dimension_numbers<[1], [0], [0], [1], [0, 0, 1, 1], [], []>} : vector<49x576xbf16>, vector<576x64xbf16>, vector<49x64xf32> -> vector<49x64xf32>
    %c0_228 = arith.constant 0 : index
    %c0_229 = arith.constant 0 : index
    %140 = vector.load %arg5[%c0_228, %c0_229] : memref<1x64xf32, #tpu.memory_space<vmem>>, vector<1x64xf32>
    %141 = vector.broadcast %140 : vector<1x64xf32> to vector<49x64xf32>
    %142 = arith.addf %139, %141 : vector<49x64xf32>
    %cst_230 = arith.constant 0.000000e+00 : f32
    %143 = vector.broadcast %cst_230 : f32 to vector<49x64xf32>
    %144 = arith.maximumf %142, %143 : vector<49x64xf32>
    %145 = arith.truncf %144 : vector<49x64xf32> to vector<49x64xbf16>
    %c0_231 = arith.constant 0 : index
    %c0_232 = arith.constant 0 : index
    %c0_233 = arith.constant 0 : index
    %146 = vector.load %arg6[%c0_231, %c0_232, %c0_233] : memref<1x49x64xbf16, #tpu.memory_space<vmem>>, vector<1x49x64xbf16>
    %147 = vector.shape_cast %146 : vector<1x49x64xbf16> to vector<49x64xbf16>
    %148 = vector.shape_cast %145 : vector<49x64xbf16> to vector<1x49x64xbf16>
    tpu.vector_store %arg6[%c0_231, %c0_232, %c0_233], %148 {strides = array<i32>} : memref<1x49x64xbf16, #tpu.memory_space<vmem>>, vector<1x49x64xbf16>,
    return
  }
  func.func @transform_0(%arg0: i32) -> (i32, i32, i32) {
    %c0_i32 = arith.constant 0 : i32
    %c0_i32_0 = arith.constant 0 : i32
    %c0_i32_1 = arith.constant 0 : i32
    return %arg0, %c0_i32, %c0_i32_0 : i32, i32, i32
  }
  func.func @transform_1(%arg0: i32) -> (i32, i32) {
    %c0_i32 = arith.constant 0 : i32
    %c0_i32_0 = arith.constant 0 : i32
    %c0_i32_1 = arith.constant 0 : i32
    return %c0_i32, %c0_i32_0 : i32, i32
  }
  func.func @transform_2(%arg0: i32) -> (i32, i32) {
    %c0_i32 = arith.constant 0 : i32
    %c0_i32_0 = arith.constant 0 : i32
    %c0_i32_1 = arith.constant 0 : i32
    return %c0_i32, %c0_i32_0 : i32, i32
  }
  func.func @transform_3(%arg0: i32) -> (i32, i32) {
    %c0_i32 = arith.constant 0 : i32
    %c0_i32_0 = arith.constant 0 : i32
    %c0_i32_1 = arith.constant 0 : i32
    return %c0_i32, %c0_i32_0 : i32, i32
  }
  func.func @transform_4(%arg0: i32) -> (i32, i32) {
    %c0_i32 = arith.constant 0 : i32
    %c0_i32_0 = arith.constant 0 : i32
    %c0_i32_1 = arith.constant 0 : i32
    return %c0_i32, %c0_i32_0 : i32, i32
  }
  func.func @transform_5(%arg0: i32) -> (i32, i32, i32) {
    %c0_i32 = arith.constant 0 : i32
    %c0_i32_0 = arith.constant 0 : i32
    %c0_i32_1 = arith.constant 0 : i32
    return %arg0, %c0_i32, %c0_i32_0 : i32, i32, i32
  }
}

module attributes {stable_mosaic.version = 11 : i64} {
  func.func @_fc_fused_kernel(%arg0: i32, %arg1: memref<16x3136xbf16, #tpu.memory_space<vmem>>, %arg2: memref<3136x512xbf16, #tpu.memory_space<vmem>>, %arg3: memref<1x512xf32, #tpu.memory_space<vmem>>, %arg4: memref<512x6xbf16, #tpu.memory_space<vmem>>, %arg5: memref<1x6xf32, #tpu.memory_space<vmem>>, %arg6: memref<16x6xf32, #tpu.memory_space<vmem>>) attributes {dimension_semantics = [#tpu.dimension_semantics<parallel>], iteration_bounds = array<i64: 1>, scalar_prefetch = 0 : i64, scratch_operands = 0 : i64, tpu.core_type = #tpu.core_type<tc>, window_params = [{transform_indices = @transform_0, window_bounds = array<i64: 16, 3136>}, {pipeline_mode = #tpu.pipeline_mode<synchronous>, transform_indices = @transform_1, window_bounds = array<i64: 3136, 512>}, {pipeline_mode = #tpu.pipeline_mode<synchronous>, transform_indices = @transform_2, window_bounds = array<i64: 1, 512>}, {pipeline_mode = #tpu.pipeline_mode<synchronous>, transform_indices = @transform_3, window_bounds = array<i64: 512, 6>}, {pipeline_mode = #tpu.pipeline_mode<synchronous>, transform_indices = @transform_4, window_bounds = array<i64: 1, 6>}, {transform_indices = @transform_5, window_bounds = array<i64: 16, 6>}]} {
    %c0 = arith.constant 0 : index
    %c0_0 = arith.constant 0 : index
    %0 = vector.load %arg1[%c0, %c0_0] : memref<16x3136xbf16, #tpu.memory_space<vmem>>, vector<16x3136xbf16>
    %c0_1 = arith.constant 0 : index
    %c0_2 = arith.constant 0 : index
    %1 = vector.load %arg2[%c0_1, %c0_2] : memref<3136x512xbf16, #tpu.memory_space<vmem>>, vector<3136x512xbf16>
    %cst = arith.constant dense<0.000000e+00> : vector<16x512xf32>
    %2 = tpu.matmul %0, %1, %cst {dimension_numbers = #tpu.dot_dimension_numbers<[1], [0], [0], [1], [0, 0, 1, 1], [], []>} : vector<16x3136xbf16>, vector<3136x512xbf16>, vector<16x512xf32> -> vector<16x512xf32>
    %c0_3 = arith.constant 0 : index
    %c0_4 = arith.constant 0 : index
    %3 = vector.load %arg3[%c0_3, %c0_4] : memref<1x512xf32, #tpu.memory_space<vmem>>, vector<1x512xf32>
    %4 = vector.broadcast %3 : vector<1x512xf32> to vector<16x512xf32>
    %5 = arith.addf %2, %4 : vector<16x512xf32>
    %cst_5 = arith.constant 0.000000e+00 : f32
    %6 = vector.broadcast %cst_5 : f32 to vector<16x512xf32>
    %7 = arith.maximumf %5, %6 : vector<16x512xf32>
    %8 = arith.truncf %7 : vector<16x512xf32> to vector<16x512xbf16>
    %c0_6 = arith.constant 0 : index
    %c0_7 = arith.constant 0 : index
    %9 = vector.load %arg4[%c0_6, %c0_7] : memref<512x6xbf16, #tpu.memory_space<vmem>>, vector<512x6xbf16>
    %cst_8 = arith.constant dense<0.000000e+00> : vector<16x6xf32>
    %10 = tpu.matmul %8, %9, %cst_8 {dimension_numbers = #tpu.dot_dimension_numbers<[1], [0], [0], [1], [0, 0, 1, 1], [], []>} : vector<16x512xbf16>, vector<512x6xbf16>, vector<16x6xf32> -> vector<16x6xf32>
    %c0_9 = arith.constant 0 : index
    %c0_10 = arith.constant 0 : index
    %11 = vector.load %arg5[%c0_9, %c0_10] : memref<1x6xf32, #tpu.memory_space<vmem>>, vector<1x6xf32>
    %12 = vector.broadcast %11 : vector<1x6xf32> to vector<16x6xf32>
    %13 = arith.addf %10, %12 : vector<16x6xf32>
    %c0_11 = arith.constant 0 : index
    %c0_12 = arith.constant 0 : index
    %14 = vector.load %arg6[%c0_11, %c0_12] : memref<16x6xf32, #tpu.memory_space<vmem>>, vector<16x6xf32>
    tpu.vector_store %arg6[%c0_11, %c0_12], %13 {strides = array<i32>} : memref<16x6xf32, #tpu.memory_space<vmem>>, vector<16x6xf32>,
    return
  }
  func.func @transform_0(%arg0: i32) -> (i32, i32) {
    %c0_i32 = arith.constant 0 : i32
    %c0_i32_0 = arith.constant 0 : i32
    return %arg0, %c0_i32 : i32, i32
  }
  func.func @transform_1(%arg0: i32) -> (i32, i32) {
    %c0_i32 = arith.constant 0 : i32
    %c0_i32_0 = arith.constant 0 : i32
    %c0_i32_1 = arith.constant 0 : i32
    return %c0_i32, %c0_i32_0 : i32, i32
  }
  func.func @transform_2(%arg0: i32) -> (i32, i32) {
    %c0_i32 = arith.constant 0 : i32
    %c0_i32_0 = arith.constant 0 : i32
    %c0_i32_1 = arith.constant 0 : i32
    return %c0_i32, %c0_i32_0 : i32, i32
  }
  func.func @transform_3(%arg0: i32) -> (i32, i32) {
    %c0_i32 = arith.constant 0 : i32
    %c0_i32_0 = arith.constant 0 : i32
    %c0_i32_1 = arith.constant 0 : i32
    return %c0_i32, %c0_i32_0 : i32, i32
  }
  func.func @transform_4(%arg0: i32) -> (i32, i32) {
    %c0_i32 = arith.constant 0 : i32
    %c0_i32_0 = arith.constant 0 : i32
    %c0_i32_1 = arith.constant 0 : i32
    return %c0_i32, %c0_i32_0 : i32, i32
  }
  func.func @transform_5(%arg0: i32) -> (i32, i32) {
    %c0_i32 = arith.constant 0 : i32
    %c0_i32_0 = arith.constant 0 : i32
    return %arg0, %c0_i32 : i32, i32
  }
}

</mosaic_0001>

<llo_original>
// kernel: critic_forward.3
$region0: #{critic_forward.3}
  #allocation0 [shape = 'u32[]', space=smem, size = 0x4, offset = 0x4, fixed_abs, tag = 'smem constant byte address 0x4 - core index']
  #allocation1 [shape = 'u32[144,128]{1,0:T(1,128)}', space=vmem, size = 0x12000, scoped, tag = 'internal scratch']
  %s0 = inlined_call_operand.vmem [shape: bf16[800,256], index: 0, kind: input, shape index: {}]
  %s1 = inlined_call_operand.vmem [shape: bf16[256,32], index: 1, kind: input, shape index: {}]
  %s2 = inlined_call_operand.vmem [shape: f32[1,32], index: 2, kind: input, shape index: {}]
  %s3 = inlined_call_operand.vmem [shape: bf16[800,32], index: 3, kind: output, shape index: {}]
  %s4 = sld [smem:[#allocation0]]
  $region45: #{critic_forward.3} parent=0
    _
  %s6 = ssub.s32 1, %s4
  %s7 = scalar_select 0, %s6, %s4
  loop: start=0, step=1, limit=7
  $region2: #{critic_forward.3} parent=0 // loop_pre_header
    _
  $region3: #{critic_forward.3} parent=0 // loop_header
    %s9 = sphi 0, %s13
    %p10 = scmp.ge.s32.totalorder %s9, 7
    %s19 = sphi 0, %s21
    %s22 = sphi 0, %s19
    %s23 = sphi 0, %s22
    %s39 = sphi 0, %s23
    %s43 = sphi 0, %s43
    %s45 = sphi 0, %s43
    %s46 = sphi 0, %s45
    %s60 = sphi 0, %s46
    %s64 = sphi 0, %s64
    %s66 = sphi 0, %s64
    %s67 = sphi 0, %s66
    %s81 = sphi 0, %s67
    %s87 = sphi 0, %s89
    %s90 = sphi 0, %s87
    %s91 = sphi 0, %s90
    %s107 = sphi 0, %s91
  $region4: #{critic_forward.3} parent=0 // loop_header_branch
    %12 = sbr.rel (%p10) target = $region8
  $region5: #{critic_forward.3} parent=0 // loop_body
    %s14 = ssub.s32 %s9, 1
    %s15 = ssub.s32 %s9, 2
    %s16 = sadd.s32 %s9, 1
    %s17 = ssub.s32 %s9, %s16
    %p18 = scmp.eq.s32.totalorder %s17, 0
    %s20 = sadd.s32 %s19, 1
    %s21 = scalar_select %p18, %s19, %s20
    %p24 = pneg %p18
    %p25 = scmp.eq.s32.totalorder %s9, 4
    %p26 = por %p24, %p25
    %p27 = scmp.ne.s32.totalorder %s19, %s22
    %p28 = scmp.eq.s32.totalorder %s9, 0
    %p29 = por %p27, %p28
    %p30 = scmp.ne.s32.totalorder %s19, %s22
    %p31 = scmp.eq.s32.totalorder %s14, 4
    %p32 = por %p30, %p31
    %p33 = scmp.ne.s32.totalorder %s22, %s23
    %p34 = scmp.eq.s32.totalorder %s14, 0
    %p35 = por %p33, %p34
    %p36 = scmp.ne.s32.totalorder %s22, %s23
    %p37 = scmp.eq.s32.totalorder %s15, 4
    %p38 = por %p36, %p37
    %p40 = scmp.ne.s32.totalorder %s23, %s39
    %p41 = scmp.eq.s32.totalorder %s15, 0
    %p42 = por %p40, %p41
    %s44 = sadd.s32 %s43, 1
    %p47 = scmp.eq.s32.totalorder %s9, 4
    %p48 = scmp.ne.s32.totalorder %s43, %s45
    %p49 = scmp.eq.s32.totalorder %s9, 0
    %p50 = por %p48, %p49
    %p51 = scmp.ne.s32.totalorder %s43, %s45
    %p52 = scmp.eq.s32.totalorder %s14, 4
    %p53 = por %p51, %p52
    %p54 = scmp.ne.s32.totalorder %s45, %s46
    %p55 = scmp.eq.s32.totalorder %s14, 0
    %p56 = por %p54, %p55
    %p57 = scmp.ne.s32.totalorder %s45, %s46
    %p58 = scmp.eq.s32.totalorder %s15, 4
    %p59 = por %p57, %p58
    %p61 = scmp.ne.s32.totalorder %s46, %s60
    %p62 = scmp.eq.s32.totalorder %s15, 0
    %p63 = por %p61, %p62
    %s65 = sadd.s32 %s64, 1
    %p68 = scmp.eq.s32.totalorder %s9, 4
    %p69 = scmp.ne.s32.totalorder %s64, %s66
    %p70 = scmp.eq.s32.totalorder %s9, 0
    %p71 = por %p69, %p70
    %p72 = scmp.ne.s32.totalorder %s64, %s66
    %p73 = scmp.eq.s32.totalorder %s14, 4
    %p74 = por %p72, %p73
    %p75 = scmp.ne.s32.totalorder %s66, %s67
    %p76 = scmp.eq.s32.totalorder %s14, 0
    %p77 = por %p75, %p76
    %p78 = scmp.ne.s32.totalorder %s66, %s67
    %p79 = scmp.eq.s32.totalorder %s15, 4
    %p80 = por %p78, %p79
    %p82 = scmp.ne.s32.totalorder %s67, %s81
    %p83 = scmp.eq.s32.totalorder %s15, 0
    %p84 = por %p82, %p83
    %s85 = ssub.s32 %s9, %s16
    %p86 = scmp.eq.s32.totalorder %s85, 0
    %s88 = sadd.s32 %s87, 1
    %s89 = scalar_select %p86, %s87, %s88
    %p92 = pneg %p86
    %p93 = scmp.eq.s32.totalorder %s9, 4
    %p94 = por %p92, %p93
    %p95 = scmp.ne.s32.totalorder %s87, %s90
    %p96 = scmp.eq.s32.totalorder %s9, 0
    %p97 = por %p95, %p96
    %p98 = scmp.ne.s32.totalorder %s87, %s90
    %p99 = scmp.eq.s32.totalorder %s14, 4
    %p100 = por %p98, %p99
    %p101 = scmp.ne.s32.totalorder %s90, %s91
    %p102 = scmp.eq.s32.totalorder %s14, 0
    %p103 = por %p101, %p102
    %p104 = scmp.ne.s32.totalorder %s90, %s91
    %p105 = scmp.eq.s32.totalorder %s15, 4
    %p106 = por %p104, %p105
    %p108 = scmp.ne.s32.totalorder %s91, %s107
    %p109 = scmp.eq.s32.totalorder %s15, 0
    %p110 = por %p108, %p109
    %p111 = scmp.le.s32.totalorder 1, %s9
    %p112 = scmp.lt.s32.totalorder %s9, 6
    %p113 = pnand %p111, %p112
    %p114 = pneg %p113
    // Predicated region
    $region9: #{critic_forward.3} parent=5 // pred_check
      _
    $region10: #{critic_forward.3} parent=5 // pred_check_branch
      %116 = sbr.rel (%p113) target = $region12
    $region11: #{critic_forward.3} parent=5 // pred_region
      %s117 = ssub.s32 %s9, 1
      // Predicated region
      $region13: #{critic_forward.3} parent=11 // pred_check
        %p118 = pneg %p56
      $region14: #{critic_forward.3} parent=11 // pred_check_branch
        %120 = sbr.rel (%p118) target = $region16
      $region15: #{critic_forward.3} parent=11 // pred_region
        _
      $region16: #{critic_forward.3} parent=11 // pred_fallthru
        _
      // Predicated region
      $region17: #{critic_forward.3} parent=11 // pred_check
        %p121 = pneg %p77
      $region18: #{critic_forward.3} parent=11 // pred_check_branch
        %123 = sbr.rel (%p121) target = $region20
      $region19: #{critic_forward.3} parent=11 // pred_region
        _
      $region20: #{critic_forward.3} parent=11 // pred_fallthru
        _
    $region12: #{critic_forward.3} parent=5 // pred_fallthru
      _
    %p124 = scmp.lt.s32.totalorder %s9, 5
    // Predicated region
    $region21: #{critic_forward.3} parent=5 // pred_check
      %p125 = pneg %p124
    $region22: #{critic_forward.3} parent=5 // pred_check_branch
      %127 = sbr.rel (%p125) target = $region24
    $region23: #{critic_forward.3} parent=5 // pred_region
      // Predicated region
      $region25: #{critic_forward.3} parent=23 // pred_check
        %p128 = pneg %p29
      $region26: #{critic_forward.3} parent=23 // pred_check_branch
        %130 = sbr.rel (%p128) target = $region28
      $region27: #{critic_forward.3} parent=23 // pred_region
        %s131 = smul.u32 20, %s9
        %p132 = scmp.lt.s32.totalorder %s131, 99
        %s133 = scalar_select %p132, %s131, 99
        %s134 = smul.addr %s133, 2
        %s135 = smul.addr %s134, 4
        %s136 = scalar_lea.vmem %s0, %s135
        %s137 = smul.u32 20, %s9
      $region28: #{critic_forward.3} parent=23 // pred_fallthru
        _
    $region24: #{critic_forward.3} parent=5 // pred_fallthru
      _
    %p138 = scmp.le.s32.totalorder 1, %s9
    %p139 = scmp.lt.s32.totalorder %s9, 6
    %p140 = pnand %p138, %p139
    %p141 = pneg %p140
    // Predicated region
    $region29: #{critic_forward.3} parent=5 // pred_check
      _
    $region30: #{critic_forward.3} parent=5 // pred_check_branch
      %143 = sbr.rel (%p140) target = $region32
    $region31: #{critic_forward.3} parent=5 // pred_region
      %s144 = ssub.s32 %s9, 1
      %s145 = smul.u32 20, %s14
      %p146 = scmp.lt.s32.totalorder %s145, 99
      %s147 = scalar_select %p146, %s145, 99
      %s148 = smul.addr %s147, 2
      %s149 = smul.addr %s148, 4
      %s150 = scalar_lea.vmem %s0, %s149
      %p151 = pneg %p35
      %p152 = pneg %p32
      %p153 = pneg %p56
      %p154 = pneg %p53
      %p155 = pneg %p77
      %p156 = pneg %p74
      %p157 = pneg %p103
      %p158 = pneg %p100
      %s159 = smul.u32 20, %s14
      %p160 = scmp.lt.s32.totalorder %s159, 99
      %s161 = scalar_select %p160, %s159, 99
      %s162 = smul.addr %s161, 4
      %s163 = scalar_lea.vmem %s3, %s162
      %s164 = smul.u32 20, %s14
      %p165 = scmp.lt.s32.totalorder %s164, 99
      %s166 = scalar_select %p165, %s164, 99
      %s167 = smul.addr %s166, 2
      %s168 = smul.addr %s167, 4
      %s169 = scalar_lea.vmem %s0, %s168
      %s170 = smul.u32 20, %s14
      %s171 = smul.u32 20, %s14
      %p172 = scmp.lt.s32.totalorder %s171, 99
      %s173 = scalar_select %p172, %s171, 99
      %s174 = smul.addr %s173, 4
      %s175 = scalar_lea.vmem %s3, %s174
      %s176 = smul.u32 20, %s14
      %v178 = vld [vmem:[%s169] sm:$0xff]
      %v179 = vld [vmem:[%s169 + $0x8] sm:$0xff]
      %v180 = vld [vmem:[%s169 + $0x10] sm:$0xff]
      %v181 = vld [vmem:[%s169 + $0x18] sm:$0xff]
      %v182 = vld [vmem:[%s169 + $0x20] sm:$0xff]
      %v183 = vld [vmem:[%s169 + $0x28] sm:$0xff]
      %v184 = vld [vmem:[%s169 + $0x30] sm:$0xff]
      %v185 = vld [vmem:[%s169 + $0x38] sm:$0xff]
      %v186 = vld [vmem:[%s169 + $0x40] sm:$0xff]
      %v187 = vld [vmem:[%s169 + $0x48] sm:$0xff]
      %v188 = vld [vmem:[%s169 + $0x50] sm:$0xff]
      %v189 = vld [vmem:[%s169 + $0x58] sm:$0xff]
      %v190 = vld [vmem:[%s169 + $0x60] sm:$0xff]
      %v191 = vld [vmem:[%s169 + $0x68] sm:$0xff]
      %v192 = vld [vmem:[%s169 + $0x70] sm:$0xff]
      %v193 = vld [vmem:[%s169 + $0x78] sm:$0xff]
      %v194 = vld [vmem:[%s169 + $0x80] sm:$0xff]
      %v195 = vld [vmem:[%s169 + $0x88] sm:$0xff]
      %v196 = vld [vmem:[%s169 + $0x90] sm:$0xff]
      %v197 = vld [vmem:[%s169 + $0x98] sm:$0xff]
      %v198 = vld [vmem:[%s1] sm:$0xf]
      %v199 = vld [vmem:[%s1 + $0x4] sm:$0xf]
      %v200 = vld [vmem:[%s1 + $0x8] sm:$0xf]
      %v201 = vld [vmem:[%s1 + $0xc] sm:$0xf]
      %v202 = vld [vmem:[%s1 + $0x10] sm:$0xf]
      %v203 = vld [vmem:[%s1 + $0x14] sm:$0xf]
      %v204 = vld [vmem:[%s1 + $0x18] sm:$0xf]
      %v205 = vld [vmem:[%s1 + $0x1c] sm:$0xf]
      %v206 = vld [vmem:[%s1 + $0x20] sm:$0xf]
      %v207 = vld [vmem:[%s1 + $0x24] sm:$0xf]
      %v208 = vld [vmem:[%s1 + $0x28] sm:$0xf]
      %v209 = vld [vmem:[%s1 + $0x2c] sm:$0xf]
      %v210 = vld [vmem:[%s1 + $0x30] sm:$0xf]
      %v211 = vld [vmem:[%s1 + $0x34] sm:$0xf]
      %v212 = vld [vmem:[%s1 + $0x38] sm:$0xf]
      %v213 = vld [vmem:[%s1 + $0x3c] sm:$0xf]
      %v214 = vld [vmem:[%s1 + $0x40] sm:$0xf]
      %v215 = vld [vmem:[%s1 + $0x44] sm:$0xf]
      %v216 = vld [vmem:[%s1 + $0x48] sm:$0xf]
      %v217 = vld [vmem:[%s1 + $0x4c] sm:$0xf]
      %v218 = vld [vmem:[%s1 + $0x50] sm:$0xf]
      %v219 = vld [vmem:[%s1 + $0x54] sm:$0xf]
      %v220 = vld [vmem:[%s1 + $0x58] sm:$0xf]
      %v221 = vld [vmem:[%s1 + $0x5c] sm:$0xf]
      %v222 = vld [vmem:[%s1 + $0x60] sm:$0xf]
      %v223 = vld [vmem:[%s1 + $0x64] sm:$0xf]
      %v224 = vld [vmem:[%s1 + $0x68] sm:$0xf]
      %v225 = vld [vmem:[%s1 + $0x6c] sm:$0xf]
      %v226 = vld [vmem:[%s1 + $0x70] sm:$0xf]
      %v227 = vld [vmem:[%s1 + $0x74] sm:$0xf]
      %v228 = vld [vmem:[%s1 + $0x78] sm:$0xf]
      %v229 = vld [vmem:[%s1 + $0x7c] sm:$0xf]
      %v230 = vld [vmem:[%s2] sm:$0x1]
      %v232 = vlaneseq
      %v233 = vshrl.u32 %v232, 7
      %v234 = vsub.s32 0, %v233
      %v235 = vrot.slane %v230, %v234
      %v257 = vunpack.c.l.b16 %v178
      %v258 = vunpack.c.h.b16 %v178
      %v259 = vunpack.c.l.b16 %v179
      %v260 = vunpack.c.h.b16 %v179
      %v261 = vunpack.c.l.b16 %v180
      %v262 = vunpack.c.h.b16 %v180
      %v263 = vunpack.c.l.b16 %v181
      %v264 = vunpack.c.h.b16 %v181
      %v265 = vunpack.c.l.b16 %v182
      %v266 = vunpack.c.h.b16 %v182
      %v267 = vunpack.c.l.b16 %v183
      %v268 = vunpack.c.h.b16 %v183
      %v269 = vunpack.c.l.b16 %v184
      %v270 = vunpack.c.h.b16 %v184
      %v271 = vunpack.c.l.b16 %v185
      %v272 = vunpack.c.h.b16 %v185
      %v273 = vunpack.c.l.b16 %v186
      %v274 = vunpack.c.h.b16 %v186
      %v275 = vunpack.c.l.b16 %v187
      %v276 = vunpack.c.h.b16 %v187
      %v277 = vunpack.c.l.b16 %v188
      %v278 = vunpack.c.h.b16 %v188
      %v279 = vunpack.c.l.b16 %v189
      %v280 = vunpack.c.h.b16 %v189
      %v281 = vunpack.c.l.b16 %v190
      %v282 = vunpack.c.h.b16 %v190
      %v283 = vunpack.c.l.b16 %v191
      %v284 = vunpack.c.h.b16 %v191
      %v285 = vunpack.c.l.b16 %v192
      %v286 = vunpack.c.h.b16 %v192
      %v287 = vunpack.c.l.b16 %v193
      %v288 = vunpack.c.h.b16 %v193
      %v289 = vunpack.c.l.b16 %v194
      %v290 = vunpack.c.h.b16 %v194
      %v291 = vunpack.c.l.b16 %v195
      %v292 = vunpack.c.h.b16 %v195
      %v293 = vunpack.c.l.b16 %v196
      %v294 = vunpack.c.h.b16 %v196
      %v295 = vunpack.c.l.b16 %v197
      %v296 = vunpack.c.h.b16 %v197
      %v297 = vpack.c.b16 %v259, %v257
      %v298 = vpack.c.b16 %v260, %v258
      %v299 = vpack.c.b16 %v263, %v261
      %v300 = vpack.c.b16 %v264, %v262
      %v301 = vpack.c.b16 %v267, %v265
      %v302 = vpack.c.b16 %v268, %v266
      %v303 = vpack.c.b16 %v271, %v269
      %v304 = vpack.c.b16 %v272, %v270
      %v305 = vpack.c.b16 %v275, %v273
      %v306 = vpack.c.b16 %v276, %v274
      %v307 = vpack.c.b16 %v279, %v277
      %v308 = vpack.c.b16 %v280, %v278
      %v309 = vpack.c.b16 %v283, %v281
      %v310 = vpack.c.b16 %v284, %v282
      %v311 = vpack.c.b16 %v287, %v285
      %v312 = vpack.c.b16 %v288, %v286
      %v313 = vpack.c.b16 %v291, %v289
      %v314 = vpack.c.b16 %v292, %v290
      %v315 = vpack.c.b16 %v295, %v293
      %v316 = vpack.c.b16 %v296, %v294
      %v369 = vunpack.c.l.b16 %v198
      %v370 = vunpack.c.l.b16 %v199
      %v371 = vunpack.c.l.b16 %v200
      %v372 = vunpack.c.l.b16 %v201
      %v373 = vunpack.c.l.b16 %v202
      %v374 = vunpack.c.l.b16 %v203
      %v375 = vunpack.c.l.b16 %v204
      %v376 = vunpack.c.l.b16 %v205
      %v377 = vunpack.c.l.b16 %v206
      %v378 = vunpack.c.l.b16 %v207
      %v379 = vunpack.c.l.b16 %v208
      %v380 = vunpack.c.l.b16 %v209
      %v381 = vunpack.c.l.b16 %v210
      %v382 = vunpack.c.l.b16 %v211
      %v383 = vunpack.c.l.b16 %v212
      %v384 = vunpack.c.l.b16 %v213
      %v385 = vunpack.c.l.b16 %v214
      %v386 = vunpack.c.l.b16 %v215
      %v387 = vunpack.c.l.b16 %v216
      %v388 = vunpack.c.l.b16 %v217
      %v389 = vunpack.c.l.b16 %v218
      %v390 = vunpack.c.l.b16 %v219
      %v391 = vunpack.c.l.b16 %v220
      %v392 = vunpack.c.l.b16 %v221
      %v393 = vunpack.c.l.b16 %v222
      %v394 = vunpack.c.l.b16 %v223
      %v395 = vunpack.c.l.b16 %v224
      %v396 = vunpack.c.l.b16 %v225
      %v397 = vunpack.c.l.b16 %v226
      %v398 = vunpack.c.l.b16 %v227
      %v399 = vunpack.c.l.b16 %v228
      %v400 = vunpack.c.l.b16 %v229
      %v401 = vpack.c.b16 %v370, %v369
      %v402 = vpack.c.b16 %v372, %v371
      %v403 = vpack.c.b16 %v374, %v373
      %v404 = vpack.c.b16 %v376, %v375
      %v405 = vpack.c.b16 %v378, %v377
      %v406 = vpack.c.b16 %v380, %v379
      %v407 = vpack.c.b16 %v382, %v381
      %v408 = vpack.c.b16 %v384, %v383
      %v409 = vpack.c.b16 %v386, %v385
      %v410 = vpack.c.b16 %v388, %v387
      %v411 = vpack.c.b16 %v390, %v389
      %v412 = vpack.c.b16 %v392, %v391
      %v413 = vpack.c.b16 %v394, %v393
      %v414 = vpack.c.b16 %v396, %v395
      %v415 = vpack.c.b16 %v398, %v397
      %v416 = vpack.c.b16 %v400, %v399
      %433 = vmatprep.subr.bf16.mxu0 0
      %434 = vmatpush1.bf16.msra.mxu0 %v408
      %435 = vmatprep.subr.bf16.mxu0 0
      %436 = vmatpush1.bf16.msra.mxu0 %v407
      %437 = vmatprep.subr.bf16.mxu0 0
      %438 = vmatpush1.bf16.msra.mxu0 %v406
      %439 = vmatprep.subr.bf16.mxu0 0
      %440 = vmatpush1.bf16.msra.mxu0 %v405
      %441 = vmatprep.subr.bf16.mxu0 0
      %442 = vmatpush1.bf16.msra.mxu0 %v404
      %443 = vmatprep.subr.bf16.mxu0 0
      %444 = vmatpush1.bf16.msra.mxu0 %v403
      %445 = vmatprep.subr.bf16.mxu0 0
      %446 = vmatpush1.bf16.msra.mxu0 %v402
      %447 = vmatprep.subr.bf16.mxu0 0
      %448 = vmatpush1.bf16.msra.mxu0 %v401
      %449 = vmatprep.subr.bf16.mxu0 0
      %450 = vmatpush2.bf16.msra.mxu0 %v416
      %451 = vmatprep.subr.bf16.mxu0 0
      %452 = vmatpush2.bf16.msra.mxu0 %v415
      %453 = vmatprep.subr.bf16.mxu0 0
      %454 = vmatpush2.bf16.msra.mxu0 %v414
      %455 = vmatprep.subr.bf16.mxu0 0
      %456 = vmatpush2.bf16.msra.mxu0 %v413
      %457 = vmatprep.subr.bf16.mxu0 0
      %458 = vmatpush2.bf16.msra.mxu0 %v412
      %459 = vmatprep.subr.bf16.mxu0 0
      %460 = vmatpush2.bf16.msra.mxu0 %v411
      %461 = vmatprep.subr.bf16.mxu0 0
      %462 = vmatpush2.bf16.msra.mxu0 %v410
      %463 = vmatprep.subr.bf16.mxu0 0
      %464 = vmatpush2.bf16.msra.mxu0 %v409
      %465 = vmatprep.mubr.bf16.mxu0 %v298
      %466 = vmatmul.mubr.bf16.gmra.mxu0 %v297
      %v467 = vpop.f32.mrf.mxu0
      %v468 = vadd.f32 %v235, %v467
      %v469 = vpop.f32.mrf.mxu0
      %v470 = vpop.f32.mrf.mxu0
      %v471 = vadd.f32 %v235, %v470
      %v472 = vpop.f32.mrf.mxu0
      %473 = vmatprep.mubr.bf16.mxu0 %v300
      %474 = vmatmul.mubr.bf16.gmra.mxu0 %v299
      %v475 = vpop.f32.mrf.mxu0
      %v476 = vadd.f32 %v235, %v475
      %v477 = vpop.f32.mrf.mxu0
      %v478 = vpop.f32.mrf.mxu0
      %v479 = vadd.f32 %v235, %v478
      %v480 = vpop.f32.mrf.mxu0
      %481 = vmatprep.mubr.bf16.mxu0 %v302
      %482 = vmatmul.mubr.bf16.gmra.mxu0 %v301
      %v483 = vpop.f32.mrf.mxu0
      %v484 = vadd.f32 %v235, %v483
      %v485 = vpop.f32.mrf.mxu0
      %v486 = vpop.f32.mrf.mxu0
      %v487 = vadd.f32 %v235, %v486
      %v488 = vpop.f32.mrf.mxu0
      %489 = vmatprep.mubr.bf16.mxu0 %v304
      %490 = vmatmul.mubr.bf16.gmra.mxu0 %v303
      %v491 = vpop.f32.mrf.mxu0
      %v492 = vadd.f32 %v235, %v491
      %v493 = vpop.f32.mrf.mxu0
      %v494 = vpop.f32.mrf.mxu0
      %v495 = vadd.f32 %v235, %v494
      %v496 = vpop.f32.mrf.mxu0
      %497 = vmatprep.mubr.bf16.mxu0 %v306
      %498 = vmatmul.mubr.bf16.gmra.mxu0 %v305
      %v499 = vpop.f32.mrf.mxu0
      %v500 = vadd.f32 %v235, %v499
      %v501 = vpop.f32.mrf.mxu0
      %v502 = vpop.f32.mrf.mxu0
      %v503 = vadd.f32 %v235, %v502
      %v504 = vpop.f32.mrf.mxu0
      %505 = vmatprep.mubr.bf16.mxu0 %v308
      %506 = vmatmul.mubr.bf16.gmra.mxu0 %v307
      %v507 = vpop.f32.mrf.mxu0
      %v508 = vadd.f32 %v235, %v507
      %v509 = vpop.f32.mrf.mxu0
      %v510 = vpop.f32.mrf.mxu0
      %v511 = vadd.f32 %v235, %v510
      %v512 = vpop.f32.mrf.mxu0
      %513 = vmatprep.mubr.bf16.mxu0 %v310
      %514 = vmatmul.mubr.bf16.gmra.mxu0 %v309
      %v515 = vpop.f32.mrf.mxu0
      %v516 = vadd.f32 %v235, %v515
      %v517 = vpop.f32.mrf.mxu0
      %v518 = vpop.f32.mrf.mxu0
      %v519 = vadd.f32 %v235, %v518
      %v520 = vpop.f32.mrf.mxu0
      %521 = vmatprep.mubr.bf16.mxu0 %v312
      %522 = vmatmul.mubr.bf16.gmra.mxu0 %v311
      %v523 = vpop.f32.mrf.mxu0
      %v524 = vadd.f32 %v235, %v523
      %v525 = vpop.f32.mrf.mxu0
      %v526 = vpop.f32.mrf.mxu0
      %v527 = vadd.f32 %v235, %v526
      %v528 = vpop.f32.mrf.mxu0
      %529 = vmatprep.mubr.bf16.mxu0 %v314
      %530 = vmatmul.mubr.bf16.gmra.mxu0 %v313
      %v531 = vpop.f32.mrf.mxu0
      %v532 = vadd.f32 %v235, %v531
      %v533 = vpop.f32.mrf.mxu0
      %v534 = vpop.f32.mrf.mxu0
      %v535 = vadd.f32 %v235, %v534
      %v536 = vpop.f32.mrf.mxu0
      %537 = vmatprep.mubr.bf16.mxu0 %v316
      %538 = vmatmul.mubr.bf16.gmra.mxu0 %v315
      %v539 = vpop.f32.mrf.mxu0
      %v540 = vadd.f32 %v235, %v539
      %v541 = vpop.f32.mrf.mxu0
      %v542 = vpop.f32.mrf.mxu0
      %v543 = vadd.f32 %v235, %v542
      %v544 = vpop.f32.mrf.mxu0
      %545 = vdwg.mxu0
      %v546 = vmax.f32 %v468, 0.0
      %v547 = vmax.f32 %v471, 0.0
      %v548 = vmax.f32 %v476, 0.0
      %v549 = vmax.f32 %v479, 0.0
      %v550 = vmax.f32 %v484, 0.0
      %v551 = vmax.f32 %v487, 0.0
      %v552 = vmax.f32 %v492, 0.0
      %v553 = vmax.f32 %v495, 0.0
      %v554 = vmax.f32 %v500, 0.0
      %v555 = vmax.f32 %v503, 0.0
      %v556 = vmax.f32 %v508, 0.0
      %v557 = vmax.f32 %v511, 0.0
      %v558 = vmax.f32 %v516, 0.0
      %v559 = vmax.f32 %v519, 0.0
      %v560 = vmax.f32 %v524, 0.0
      %v561 = vmax.f32 %v527, 0.0
      %v562 = vmax.f32 %v532, 0.0
      %v563 = vmax.f32 %v535, 0.0
      %v564 = vmax.f32 %v540, 0.0
      %v565 = vmax.f32 %v543, 0.0
      %v566 = vpack.c.bf16 %v547, %v546
      %v567 = vpack.c.bf16 %v549, %v548
      %v568 = vpack.c.bf16 %v551, %v550
      %v569 = vpack.c.bf16 %v553, %v552
      %v570 = vpack.c.bf16 %v555, %v554
      %v571 = vpack.c.bf16 %v557, %v556
      %v572 = vpack.c.bf16 %v559, %v558
      %v573 = vpack.c.bf16 %v561, %v560
      %v574 = vpack.c.bf16 %v563, %v562
      %v575 = vpack.c.bf16 %v565, %v564
      %v586 = vunpack.c.l.b16 %v566
      %v587 = vunpack.c.h.b16 %v566
      %v588 = vunpack.c.l.b16 %v567
      %v589 = vunpack.c.h.b16 %v567
      %v590 = vunpack.c.l.b16 %v568
      %v591 = vunpack.c.h.b16 %v568
      %v592 = vunpack.c.l.b16 %v569
      %v593 = vunpack.c.h.b16 %v569
      %v594 = vunpack.c.l.b16 %v570
      %v595 = vunpack.c.h.b16 %v570
      %v596 = vunpack.c.l.b16 %v571
      %v597 = vunpack.c.h.b16 %v571
      %v598 = vunpack.c.l.b16 %v572
      %v599 = vunpack.c.h.b16 %v572
      %v600 = vunpack.c.l.b16 %v573
      %v601 = vunpack.c.h.b16 %v573
      %v602 = vunpack.c.l.b16 %v574
      %v603 = vunpack.c.h.b16 %v574
      %v604 = vunpack.c.l.b16 %v575
      %v605 = vunpack.c.h.b16 %v575
      %v606 = vpack.c.b16 %v586, %v586
      %v607 = vpack.c.b16 %v587, %v587
      %v608 = vpack.c.b16 %v588, %v588
      %v609 = vpack.c.b16 %v589, %v589
      %v610 = vpack.c.b16 %v590, %v590
      %v611 = vpack.c.b16 %v591, %v591
      %v612 = vpack.c.b16 %v592, %v592
      %v613 = vpack.c.b16 %v593, %v593
      %v614 = vpack.c.b16 %v594, %v594
      %v615 = vpack.c.b16 %v595, %v595
      %v616 = vpack.c.b16 %v596, %v596
      %v617 = vpack.c.b16 %v597, %v597
      %v618 = vpack.c.b16 %v598, %v598
      %v619 = vpack.c.b16 %v599, %v599
      %v620 = vpack.c.b16 %v600, %v600
      %v621 = vpack.c.b16 %v601, %v601
      %v622 = vpack.c.b16 %v602, %v602
      %v623 = vpack.c.b16 %v603, %v603
      %v624 = vpack.c.b16 %v604, %v604
      %v625 = vpack.c.b16 %v605, %v605
      %vm646 = vcmask 257024
      %647 = vst.msk [vmem:[%s175] sm:$0xf] %vm646, %v606
      %648 = vst.msk [vmem:[%s175 + $0x4] sm:$0xf] %vm646, %v607
      %649 = vst.msk [vmem:[%s175 + $0x8] sm:$0xf] %vm646, %v608
      %650 = vst.msk [vmem:[%s175 + $0xc] sm:$0xf] %vm646, %v609
      %651 = vst.msk [vmem:[%s175 + $0x10] sm:$0xf] %vm646, %v610
      %652 = vst.msk [vmem:[%s175 + $0x14] sm:$0xf] %vm646, %v611
      %653 = vst.msk [vmem:[%s175 + $0x18] sm:$0xf] %vm646, %v612
      %654 = vst.msk [vmem:[%s175 + $0x1c] sm:$0xf] %vm646, %v613
      %655 = vst.msk [vmem:[%s175 + $0x20] sm:$0xf] %vm646, %v614
      %656 = vst.msk [vmem:[%s175 + $0x24] sm:$0xf] %vm646, %v615
      %657 = vst.msk [vmem:[%s175 + $0x28] sm:$0xf] %vm646, %v616
      %658 = vst.msk [vmem:[%s175 + $0x2c] sm:$0xf] %vm646, %v617
      %659 = vst.msk [vmem:[%s175 + $0x30] sm:$0xf] %vm646, %v618
      %660 = vst.msk [vmem:[%s175 + $0x34] sm:$0xf] %vm646, %v619
      %661 = vst.msk [vmem:[%s175 + $0x38] sm:$0xf] %vm646, %v620
      %662 = vst.msk [vmem:[%s175 + $0x3c] sm:$0xf] %vm646, %v621
      %663 = vst.msk [vmem:[%s175 + $0x40] sm:$0xf] %vm646, %v622
      %664 = vst.msk [vmem:[%s175 + $0x44] sm:$0xf] %vm646, %v623
      %665 = vst.msk [vmem:[%s175 + $0x48] sm:$0xf] %vm646, %v624
      %666 = vst.msk [vmem:[%s175 + $0x4c] sm:$0xf] %vm646, %v625
      %s667 = smul.u32 20, %s14
      %p668 = scmp.lt.s32.totalorder %s667, 99
      %s669 = scalar_select %p668, %s667, 99
      %s670 = smul.addr %s669, 4
      %s671 = scalar_lea.vmem %s3, %s670
      // Predicated region
      $region33: #{critic_forward.3} parent=31 // pred_check
        %p672 = pneg %p100
      $region34: #{critic_forward.3} parent=31 // pred_check_branch
        %674 = sbr.rel (%p672) target = $region36
      $region35: #{critic_forward.3} parent=31 // pred_region
        %s675 = smul.u32 20, %s14
      $region36: #{critic_forward.3} parent=31 // pred_fallthru
        _
    $region32: #{critic_forward.3} parent=5 // pred_fallthru
      _
    %p676 = scmp.le.s32.totalorder 2, %s9
    // Predicated region
    $region37: #{critic_forward.3} parent=5 // pred_check
      %p677 = pneg %p676
    $region38: #{critic_forward.3} parent=5 // pred_check_branch
      %679 = sbr.rel (%p677) target = $region40
    $region39: #{critic_forward.3} parent=5 // pred_region
      %s680 = ssub.s32 %s9, 2
      // Predicated region
      $region41: #{critic_forward.3} parent=39 // pred_check
        %p681 = pneg %p106
      $region42: #{critic_forward.3} parent=39 // pred_check_branch
        %683 = sbr.rel (%p681) target = $region44
      $region43: #{critic_forward.3} parent=39 // pred_region
        %s684 = smul.u32 20, %s15
        %p685 = scmp.lt.s32.totalorder %s684, 99
        %s686 = scalar_select %p685, %s684, 99
        %s687 = smul.addr %s686, 4
        %s688 = scalar_lea.vmem %s3, %s687
      $region44: #{critic_forward.3} parent=39 // pred_fallthru
        _
    $region40: #{critic_forward.3} parent=5 // pred_fallthru
      _
  $region6: #{critic_forward.3} parent=0 // loop_footer
    %s13 = sadd.s32 1, %s9
  $region7: #{critic_forward.3} parent=0 // loop_footer_branch
    %8 = sbr.rel target = $region3
  $region8: #{critic_forward.3} parent=0 // loop_exit
    _

// kernel: critic_forward.4
$region0: #{critic_forward.4}
  #allocation0 [shape = 'u32[]', space=smem, size = 0x4, offset = 0x4, fixed_abs, tag = 'smem constant byte address 0x4 - core index']
  #allocation1 [shape = 'u32[144,128]{1,0:T(1,128)}', space=vmem, size = 0x12000, scoped, tag = 'internal scratch']
  #allocation2 [shape = 'f32[81,64]{1,0:T(8,128)}', space=vmem, size = 0xb000, scoped, tag = 'scratch operand']
  #allocation3 [shape = 'f32[49,576]{1,0:T(8,128)}', space=vmem, size = 0x23000, scoped, tag = 'scratch operand']
  %s0 = inlined_call_operand.vmem [shape: bf16[2,81,512], index: 0, kind: input, shape index: {}]
  %s1 = inlined_call_operand.vmem [shape: bf16[512,64], index: 1, kind: input, shape index: {}]
  %s2 = inlined_call_operand.vmem [shape: f32[1,64], index: 2, kind: input, shape index: {}]
  %s3 = inlined_call_operand.vmem [shape: bf16[576,64], index: 3, kind: input, shape index: {}]
  %s4 = inlined_call_operand.vmem [shape: f32[1,64], index: 4, kind: input, shape index: {}]
  %s5 = inlined_call_operand.vmem [shape: bf16[2,49,64], index: 5, kind: output, shape index: {}]
  %s6 = sld [smem:[#allocation0]]
  $region53: #{critic_forward.4} parent=0
    _
  %s8 = ssub.s32 1, %s6
  %s9 = scalar_select 0, %s8, %s6
  loop: start=0, step=1, limit=4
  $region2: #{critic_forward.4} parent=0 // loop_pre_header
    _
  $region3: #{critic_forward.4} parent=0 // loop_header
    %s11 = sphi 0, %s15
    %p12 = scmp.ge.s32.totalorder %s11, 4
    %s21 = sphi 0, %s23
    %s24 = sphi 0, %s21
    %s25 = sphi 0, %s24
    %s41 = sphi 0, %s25
    %s45 = sphi 0, %s45
    %s47 = sphi 0, %s45
    %s48 = sphi 0, %s47
    %s62 = sphi 0, %s48
    %s66 = sphi 0, %s66
    %s68 = sphi 0, %s66
    %s69 = sphi 0, %s68
    %s83 = sphi 0, %s69
    %s87 = sphi 0, %s87
    %s89 = sphi 0, %s87
    %s90 = sphi 0, %s89
    %s104 = sphi 0, %s90
    %s108 = sphi 0, %s108
    %s110 = sphi 0, %s108
    %s111 = sphi 0, %s110
    %s125 = sphi 0, %s111
    %s131 = sphi 0, %s133
    %s134 = sphi 0, %s131
    %s135 = sphi 0, %s134
    %s151 = sphi 0, %s135
  $region4: #{critic_forward.4} parent=0 // loop_header_branch
    %14 = sbr.rel (%p12) target = $region8
  $region5: #{critic_forward.4} parent=0 // loop_body
    %s16 = ssub.s32 %s11, 1
    %s17 = ssub.s32 %s11, 2
    %s18 = sadd.s32 %s11, 1
    %s19 = ssub.s32 %s11, %s18
    %p20 = scmp.eq.s32.totalorder %s19, 0
    %s22 = sadd.s32 %s21, 1
    %s23 = scalar_select %p20, %s21, %s22
    %p26 = pneg %p20
    %p27 = scmp.eq.s32.totalorder %s11, 1
    %p28 = por %p26, %p27
    %p29 = scmp.ne.s32.totalorder %s21, %s24
    %p30 = scmp.eq.s32.totalorder %s11, 0
    %p31 = por %p29, %p30
    %p32 = scmp.ne.s32.totalorder %s21, %s24
    %p33 = scmp.eq.s32.totalorder %s16, 1
    %p34 = por %p32, %p33
    %p35 = scmp.ne.s32.totalorder %s24, %s25
    %p36 = scmp.eq.s32.totalorder %s16, 0
    %p37 = por %p35, %p36
    %p38 = scmp.ne.s32.totalorder %s24, %s25
    %p39 = scmp.eq.s32.totalorder %s17, 1
    %p40 = por %p38, %p39
    %p42 = scmp.ne.s32.totalorder %s25, %s41
    %p43 = scmp.eq.s32.totalorder %s17, 0
    %p44 = por %p42, %p43
    %s46 = sadd.s32 %s45, 1
    %p49 = scmp.eq.s32.totalorder %s11, 1
    %p50 = scmp.ne.s32.totalorder %s45, %s47
    %p51 = scmp.eq.s32.totalorder %s11, 0
    %p52 = por %p50, %p51
    %p53 = scmp.ne.s32.totalorder %s45, %s47
    %p54 = scmp.eq.s32.totalorder %s16, 1
    %p55 = por %p53, %p54
    %p56 = scmp.ne.s32.totalorder %s47, %s48
    %p57 = scmp.eq.s32.totalorder %s16, 0
    %p58 = por %p56, %p57
    %p59 = scmp.ne.s32.totalorder %s47, %s48
    %p60 = scmp.eq.s32.totalorder %s17, 1
    %p61 = por %p59, %p60
    %p63 = scmp.ne.s32.totalorder %s48, %s62
    %p64 = scmp.eq.s32.totalorder %s17, 0
    %p65 = por %p63, %p64
    %s67 = sadd.s32 %s66, 1
    %p70 = scmp.eq.s32.totalorder %s11, 1
    %p71 = scmp.ne.s32.totalorder %s66, %s68
    %p72 = scmp.eq.s32.totalorder %s11, 0
    %p73 = por %p71, %p72
    %p74 = scmp.ne.s32.totalorder %s66, %s68
    %p75 = scmp.eq.s32.totalorder %s16, 1
    %p76 = por %p74, %p75
    %p77 = scmp.ne.s32.totalorder %s68, %s69
    %p78 = scmp.eq.s32.totalorder %s16, 0
    %p79 = por %p77, %p78
    %p80 = scmp.ne.s32.totalorder %s68, %s69
    %p81 = scmp.eq.s32.totalorder %s17, 1
    %p82 = por %p80, %p81
    %p84 = scmp.ne.s32.totalorder %s69, %s83
    %p85 = scmp.eq.s32.totalorder %s17, 0
    %p86 = por %p84, %p85
    %s88 = sadd.s32 %s87, 1
    %p91 = scmp.eq.s32.totalorder %s11, 1
    %p92 = scmp.ne.s32.totalorder %s87, %s89
    %p93 = scmp.eq.s32.totalorder %s11, 0
    %p94 = por %p92, %p93
    %p95 = scmp.ne.s32.totalorder %s87, %s89
    %p96 = scmp.eq.s32.totalorder %s16, 1
    %p97 = por %p95, %p96
    %p98 = scmp.ne.s32.totalorder %s89, %s90
    %p99 = scmp.eq.s32.totalorder %s16, 0
    %p100 = por %p98, %p99
    %p101 = scmp.ne.s32.totalorder %s89, %s90
    %p102 = scmp.eq.s32.totalorder %s17, 1
    %p103 = por %p101, %p102
    %p105 = scmp.ne.s32.totalorder %s90, %s104
    %p106 = scmp.eq.s32.totalorder %s17, 0
    %p107 = por %p105, %p106
    %s109 = sadd.s32 %s108, 1
    %p112 = scmp.eq.s32.totalorder %s11, 1
    %p113 = scmp.ne.s32.totalorder %s108, %s110
    %p114 = scmp.eq.s32.totalorder %s11, 0
    %p115 = por %p113, %p114
    %p116 = scmp.ne.s32.totalorder %s108, %s110
    %p117 = scmp.eq.s32.totalorder %s16, 1
    %p118 = por %p116, %p117
    %p119 = scmp.ne.s32.totalorder %s110, %s111
    %p120 = scmp.eq.s32.totalorder %s16, 0
    %p121 = por %p119, %p120
    %p122 = scmp.ne.s32.totalorder %s110, %s111
    %p123 = scmp.eq.s32.totalorder %s17, 1
    %p124 = por %p122, %p123
    %p126 = scmp.ne.s32.totalorder %s111, %s125
    %p127 = scmp.eq.s32.totalorder %s17, 0
    %p128 = por %p126, %p127
    %s129 = ssub.s32 %s11, %s18
    %p130 = scmp.eq.s32.totalorder %s129, 0
    %s132 = sadd.s32 %s131, 1
    %s133 = scalar_select %p130, %s131, %s132
    %p136 = pneg %p130
    %p137 = scmp.eq.s32.totalorder %s11, 1
    %p138 = por %p136, %p137
    %p139 = scmp.ne.s32.totalorder %s131, %s134
    %p140 = scmp.eq.s32.totalorder %s11, 0
    %p141 = por %p139, %p140
    %p142 = scmp.ne.s32.totalorder %s131, %s134
    %p143 = scmp.eq.s32.totalorder %s16, 1
    %p144 = por %p142, %p143
    %p145 = scmp.ne.s32.totalorder %s134, %s135
    %p146 = scmp.eq.s32.totalorder %s16, 0
    %p147 = por %p145, %p146
    %p148 = scmp.ne.s32.totalorder %s134, %s135
    %p149 = scmp.eq.s32.totalorder %s17, 1
    %p150 = por %p148, %p149
    %p152 = scmp.ne.s32.totalorder %s135, %s151
    %p153 = scmp.eq.s32.totalorder %s17, 0
    %p154 = por %p152, %p153
    %p155 = scmp.le.s32.totalorder 1, %s11
    %p156 = scmp.lt.s32.totalorder %s11, 3
    %p157 = pnand %p155, %p156
    %p158 = pneg %p157
    // Predicated region
    $region9: #{critic_forward.4} parent=5 // pred_check
      _
    $region10: #{critic_forward.4} parent=5 // pred_check_branch
      %160 = sbr.rel (%p157) target = $region12
    $region11: #{critic_forward.4} parent=5 // pred_region
      %s161 = ssub.s32 %s11, 1
      // Predicated region
      $region13: #{critic_forward.4} parent=11 // pred_check
        %p162 = pneg %p58
      $region14: #{critic_forward.4} parent=11 // pred_check_branch
        %164 = sbr.rel (%p162) target = $region16
      $region15: #{critic_forward.4} parent=11 // pred_region
        _
      $region16: #{critic_forward.4} parent=11 // pred_fallthru
        _
      // Predicated region
      $region17: #{critic_forward.4} parent=11 // pred_check
        %p165 = pneg %p79
      $region18: #{critic_forward.4} parent=11 // pred_check_branch
        %167 = sbr.rel (%p165) target = $region20
      $region19: #{critic_forward.4} parent=11 // pred_region
        _
      $region20: #{critic_forward.4} parent=11 // pred_fallthru
        _
      // Predicated region
      $region21: #{critic_forward.4} parent=11 // pred_check
        %p168 = pneg %p100
      $region22: #{critic_forward.4} parent=11 // pred_check_branch
        %170 = sbr.rel (%p168) target = $region24
      $region23: #{critic_forward.4} parent=11 // pred_region
        _
      $region24: #{critic_forward.4} parent=11 // pred_fallthru
        _
      // Predicated region
      $region25: #{critic_forward.4} parent=11 // pred_check
        %p171 = pneg %p121
      $region26: #{critic_forward.4} parent=11 // pred_check_branch
        %173 = sbr.rel (%p171) target = $region28
      $region27: #{critic_forward.4} parent=11 // pred_region
        _
      $region28: #{critic_forward.4} parent=11 // pred_fallthru
        _
    $region12: #{critic_forward.4} parent=5 // pred_fallthru
      _
    %p174 = scmp.lt.s32.totalorder %s11, 2
    // Predicated region
    $region29: #{critic_forward.4} parent=5 // pred_check
      %p175 = pneg %p174
    $region30: #{critic_forward.4} parent=5 // pred_check_branch
      %177 = sbr.rel (%p175) target = $region32
    $region31: #{critic_forward.4} parent=5 // pred_region
      // Predicated region
      $region33: #{critic_forward.4} parent=31 // pred_check
        %p178 = pneg %p31
      $region34: #{critic_forward.4} parent=31 // pred_check_branch
        %180 = sbr.rel (%p178) target = $region36
      $region35: #{critic_forward.4} parent=31 // pred_region
        %p181 = scmp.lt.s32.totalorder %s11, 1
        %s182 = scalar_select %p181, %s11, 1
        %s183 = smul.addr %s182, 44
        %s184 = smul.addr %s183, 4
        %s185 = scalar_lea.vmem %s0, %s184
      $region36: #{critic_forward.4} parent=31 // pred_fallthru
        _
    $region32: #{critic_forward.4} parent=5 // pred_fallthru
      _
    %p186 = scmp.le.s32.totalorder 1, %s11
    %p187 = scmp.lt.s32.totalorder %s11, 3
    %p188 = pnand %p186, %p187
    %p189 = pneg %p188
    // Predicated region
    $region37: #{critic_forward.4} parent=5 // pred_check
      _
    $region38: #{critic_forward.4} parent=5 // pred_check_branch
      %191 = sbr.rel (%p188) target = $region40
    $region39: #{critic_forward.4} parent=5 // pred_region
      %s192 = ssub.s32 %s11, 1
      %p193 = scmp.lt.s32.totalorder %s16, 1
      %s194 = scalar_select %p193, %s16, 1
      %s195 = smul.addr %s194, 44
      %s196 = smul.addr %s195, 4
      %s197 = scalar_lea.vmem %s0, %s196
      %p198 = pneg %p37
      %p199 = pneg %p34
      %p200 = pneg %p58
      %p201 = pneg %p55
      %p202 = pneg %p79
      %p203 = pneg %p76
      %p204 = pneg %p100
      %p205 = pneg %p97
      %p206 = pneg %p121
      %p207 = pneg %p118
      %p208 = pneg %p147
      %p209 = pneg %p144
      %p210 = scmp.lt.s32.totalorder %s16, 1
      %s211 = scalar_select %p210, %s16, 1
      %s212 = smul.addr %s211, 7
      %s213 = smul.addr %s212, 4
      %s214 = scalar_lea.vmem %s5, %s213
      %p215 = scmp.lt.s32.totalorder %s16, 1
      %s216 = scalar_select %p215, %s16, 1
      %s217 = smul.addr %s216, 44
      %s218 = smul.addr %s217, 4
      %s219 = scalar_lea.vmem %s0, %s218
      %p220 = scmp.lt.s32.totalorder %s16, 1
      %s221 = scalar_select %p220, %s16, 1
      %s222 = smul.addr %s221, 7
      %s223 = smul.addr %s222, 4
      %s224 = scalar_lea.vmem %s5, %s223
      %v226 = vld [vmem:[%s219] sm:$0xff]
      %v227 = vld [vmem:[%s219 + $0x8] sm:$0xff]
      %v228 = vld [vmem:[%s219 + $0x10] sm:$0xff]
      %v229 = vld [vmem:[%s219 + $0x18] sm:$0xff]
      %v230 = vld [vmem:[%s219 + $0x20] sm:$0xff]
      %v231 = vld [vmem:[%s219 + $0x28] sm:$0xff]
      %v232 = vld [vmem:[%s219 + $0x30] sm:$0xff]
      %v233 = vld [vmem:[%s219 + $0x38] sm:$0xff]
      %v234 = vld [vmem:[%s219 + $0x40] sm:$0xff]
      %v235 = vld [vmem:[%s219 + $0x48] sm:$0xff]
      %v236 = vld [vmem:[%s219 + $0x50] sm:$0xff]
      %v237 = vld [vmem:[%s219 + $0x58] sm:$0xff]
      %v238 = vld [vmem:[%s219 + $0x60] sm:$0xff]
      %v239 = vld [vmem:[%s219 + $0x68] sm:$0xff]
      %v240 = vld [vmem:[%s219 + $0x70] sm:$0xff]
      %v241 = vld [vmem:[%s219 + $0x78] sm:$0xff]
      %v242 = vld [vmem:[%s219 + $0x80] sm:$0xff]
      %v243 = vld [vmem:[%s219 + $0x88] sm:$0xff]
      %v244 = vld [vmem:[%s219 + $0x90] sm:$0xff]
      %v245 = vld [vmem:[%s219 + $0x98] sm:$0xff]
      %v246 = vld [vmem:[%s219 + $0xa0] sm:$0x11]
      %v247 = vld [vmem:[%s219 + $0xa8] sm:$0x11]
      %v248 = vld [vmem:[%s1] sm:$0xf]
      %v249 = vld [vmem:[%s1 + $0x4] sm:$0xf]
      %v250 = vld [vmem:[%s1 + $0x8] sm:$0xf]
      %v251 = vld [vmem:[%s1 + $0xc] sm:$0xf]
      %v252 = vld [vmem:[%s1 + $0x10] sm:$0xf]
      %v253 = vld [vmem:[%s1 + $0x14] sm:$0xf]
      %v254 = vld [vmem:[%s1 + $0x18] sm:$0xf]
      %v255 = vld [vmem:[%s1 + $0x1c] sm:$0xf]
      %v256 = vld [vmem:[%s1 + $0x20] sm:$0xf]
      %v257 = vld [vmem:[%s1 + $0x24] sm:$0xf]
      %v258 = vld [vmem:[%s1 + $0x28] sm:$0xf]
      %v259 = vld [vmem:[%s1 + $0x2c] sm:$0xf]
      %v260 = vld [vmem:[%s1 + $0x30] sm:$0xf]
      %v261 = vld [vmem:[%s1 + $0x34] sm:$0xf]
      %v262 = vld [vmem:[%s1 + $0x38] sm:$0xf]
      %v263 = vld [vmem:[%s1 + $0x3c] sm:$0xf]
      %v264 = vld [vmem:[%s1 + $0x40] sm:$0xf]
      %v265 = vld [vmem:[%s1 + $0x44] sm:$0xf]
      %v266 = vld [vmem:[%s1 + $0x48] sm:$0xf]
      %v267 = vld [vmem:[%s1 + $0x4c] sm:$0xf]
      %v268 = vld [vmem:[%s1 + $0x50] sm:$0xf]
      %v269 = vld [vmem:[%s1 + $0x54] sm:$0xf]
      %v270 = vld [vmem:[%s1 + $0x58] sm:$0xf]
      %v271 = vld [vmem:[%s1 + $0x5c] sm:$0xf]
      %v272 = vld [vmem:[%s1 + $0x60] sm:$0xf]
      %v273 = vld [vmem:[%s1 + $0x64] sm:$0xf]
      %v274 = vld [vmem:[%s1 + $0x68] sm:$0xf]
      %v275 = vld [vmem:[%s1 + $0x6c] sm:$0xf]
      %v276 = vld [vmem:[%s1 + $0x70] sm:$0xf]
      %v277 = vld [vmem:[%s1 + $0x74] sm:$0xf]
      %v278 = vld [vmem:[%s1 + $0x78] sm:$0xf]
      %v279 = vld [vmem:[%s1 + $0x7c] sm:$0xf]
      %v280 = vld [vmem:[%s1 + $0x80] sm:$0xf]
      %v281 = vld [vmem:[%s1 + $0x84] sm:$0xf]
      %v282 = vld [vmem:[%s1 + $0x88] sm:$0xf]
      %v283 = vld [vmem:[%s1 + $0x8c] sm:$0xf]
      %v284 = vld [vmem:[%s1 + $0x90] sm:$0xf]
      %v285 = vld [vmem:[%s1 + $0x94] sm:$0xf]
      %v286 = vld [vmem:[%s1 + $0x98] sm:$0xf]
      %v287 = vld [vmem:[%s1 + $0x9c] sm:$0xf]
      %v288 = vld [vmem:[%s1 + $0xa0] sm:$0xf]
      %v289 = vld [vmem:[%s1 + $0xa4] sm:$0xf]
      %v290 = vld [vmem:[%s1 + $0xa8] sm:$0xf]
      %v291 = vld [vmem:[%s1 + $0xac] sm:$0xf]
      %v292 = vld [vmem:[%s1 + $0xb0] sm:$0xf]
      %v293 = vld [vmem:[%s1 + $0xb4] sm:$0xf]
      %v294 = vld [vmem:[%s1 + $0xb8] sm:$0xf]
      %v295 = vld [vmem:[%s1 + $0xbc] sm:$0xf]
      %v296 = vld [vmem:[%s1 + $0xc0] sm:$0xf]
      %v297 = vld [vmem:[%s1 + $0xc4] sm:$0xf]
      %v298 = vld [vmem:[%s1 + $0xc8] sm:$0xf]
      %v299 = vld [vmem:[%s1 + $0xcc] sm:$0xf]
      %v300 = vld [vmem:[%s1 + $0xd0] sm:$0xf]
      %v301 = vld [vmem:[%s1 + $0xd4] sm:$0xf]
      %v302 = vld [vmem:[%s1 + $0xd8] sm:$0xf]
      %v303 = vld [vmem:[%s1 + $0xdc] sm:$0xf]
      %v304 = vld [vmem:[%s1 + $0xe0] sm:$0xf]
      %v305 = vld [vmem:[%s1 + $0xe4] sm:$0xf]
      %v306 = vld [vmem:[%s1 + $0xe8] sm:$0xf]
      %v307 = vld [vmem:[%s1 + $0xec] sm:$0xf]
      %v308 = vld [vmem:[%s1 + $0xf0] sm:$0xf]
      %v309 = vld [vmem:[%s1 + $0xf4] sm:$0xf]
      %v310 = vld [vmem:[%s1 + $0xf8] sm:$0xf]
      %v311 = vld [vmem:[%s1 + $0xfc] sm:$0xf]
      %v312 = vld [vmem:[%s2] sm:$0x1]
      %v314 = vlaneseq
      %v315 = vshrl.u32 %v314, 7
      %v316 = vsub.s32 0, %v315
      %v317 = vrot.slane %v312, %v316
      %v341 = vunpack.c.l.b16 %v226
      %v342 = vunpack.c.h.b16 %v226
      %v343 = vunpack.c.l.b16 %v227
      %v344 = vunpack.c.h.b16 %v227
      %v345 = vunpack.c.l.b16 %v228
      %v346 = vunpack.c.h.b16 %v228
      %v347 = vunpack.c.l.b16 %v229
      %v348 = vunpack.c.h.b16 %v229
      %v349 = vunpack.c.l.b16 %v230
      %v350 = vunpack.c.h.b16 %v230
      %v351 = vunpack.c.l.b16 %v231
      %v352 = vunpack.c.h.b16 %v231
      %v353 = vunpack.c.l.b16 %v232
      %v354 = vunpack.c.h.b16 %v232
      %v355 = vunpack.c.l.b16 %v233
      %v356 = vunpack.c.h.b16 %v233
      %v357 = vunpack.c.l.b16 %v234
      %v358 = vunpack.c.h.b16 %v234
      %v359 = vunpack.c.l.b16 %v235
      %v360 = vunpack.c.h.b16 %v235
      %v361 = vunpack.c.l.b16 %v236
      %v362 = vunpack.c.h.b16 %v236
      %v363 = vunpack.c.l.b16 %v237
      %v364 = vunpack.c.h.b16 %v237
      %v365 = vunpack.c.l.b16 %v238
      %v366 = vunpack.c.h.b16 %v238
      %v367 = vunpack.c.l.b16 %v239
      %v368 = vunpack.c.h.b16 %v239
      %v369 = vunpack.c.l.b16 %v240
      %v370 = vunpack.c.h.b16 %v240
      %v371 = vunpack.c.l.b16 %v241
      %v372 = vunpack.c.h.b16 %v241
      %v373 = vunpack.c.l.b16 %v242
      %v374 = vunpack.c.h.b16 %v242
      %v375 = vunpack.c.l.b16 %v243
      %v376 = vunpack.c.h.b16 %v243
      %v377 = vunpack.c.l.b16 %v244
      %v378 = vunpack.c.h.b16 %v244
      %v379 = vunpack.c.l.b16 %v245
      %v380 = vunpack.c.h.b16 %v245
      %v381 = vunpack.c.l.b16 %v246
      %v382 = vunpack.c.h.b16 %v246
      %v383 = vunpack.c.l.b16 %v247
      %v384 = vunpack.c.h.b16 %v247
      %v385 = vpack.c.b16 %v345, %v341
      %v386 = vpack.c.b16 %v346, %v342
      %v387 = vpack.c.b16 %v347, %v343
      %v388 = vpack.c.b16 %v348, %v344
      %v389 = vpack.c.b16 %v353, %v349
      %v390 = vpack.c.b16 %v354, %v350
      %v391 = vpack.c.b16 %v355, %v351
      %v392 = vpack.c.b16 %v356, %v352
      %v393 = vpack.c.b16 %v361, %v357
      %v394 = vpack.c.b16 %v362, %v358
      %v395 = vpack.c.b16 %v363, %v359
      %v396 = vpack.c.b16 %v364, %v360
      %v397 = vpack.c.b16 %v369, %v365
      %v398 = vpack.c.b16 %v370, %v366
      %v399 = vpack.c.b16 %v371, %v367
      %v400 = vpack.c.b16 %v372, %v368
      %v401 = vpack.c.b16 %v377, %v373
      %v402 = vpack.c.b16 %v378, %v374
      %v403 = vpack.c.b16 %v379, %v375
      %v404 = vpack.c.b16 %v380, %v376
      %v405 = vpack.c.b16 %v381, %v381
      %v406 = vpack.c.b16 %v382, %v382
      %v407 = vpack.c.b16 %v383, %v383
      %v408 = vpack.c.b16 %v384, %v384
      %v497 = vunpack.c.l.b16 %v248
      %v498 = vunpack.c.l.b16 %v249
      %v499 = vunpack.c.l.b16 %v250
      %v500 = vunpack.c.l.b16 %v251
      %v501 = vunpack.c.l.b16 %v252
      %v502 = vunpack.c.l.b16 %v253
      %v503 = vunpack.c.l.b16 %v254
      %v504 = vunpack.c.l.b16 %v255
      %v505 = vunpack.c.l.b16 %v256
      %v506 = vunpack.c.l.b16 %v257
      %v507 = vunpack.c.l.b16 %v258
      %v508 = vunpack.c.l.b16 %v259
      %v509 = vunpack.c.l.b16 %v260
      %v510 = vunpack.c.l.b16 %v261
      %v511 = vunpack.c.l.b16 %v262
      %v512 = vunpack.c.l.b16 %v263
      %v513 = vunpack.c.l.b16 %v264
      %v514 = vunpack.c.l.b16 %v265
      %v515 = vunpack.c.l.b16 %v266
      %v516 = vunpack.c.l.b16 %v267
      %v517 = vunpack.c.l.b16 %v268
      %v518 = vunpack.c.l.b16 %v269
      %v519 = vunpack.c.l.b16 %v270
      %v520 = vunpack.c.l.b16 %v271
      %v521 = vunpack.c.l.b16 %v272
      %v522 = vunpack.c.l.b16 %v273
      %v523 = vunpack.c.l.b16 %v274
      %v524 = vunpack.c.l.b16 %v275
      %v525 = vunpack.c.l.b16 %v276
      %v526 = vunpack.c.l.b16 %v277
      %v527 = vunpack.c.l.b16 %v278
      %v528 = vunpack.c.l.b16 %v279
      %v529 = vunpack.c.l.b16 %v280
      %v530 = vunpack.c.l.b16 %v281
      %v531 = vunpack.c.l.b16 %v282
      %v532 = vunpack.c.l.b16 %v283
      %v533 = vunpack.c.l.b16 %v284
      %v534 = vunpack.c.l.b16 %v285
      %v535 = vunpack.c.l.b16 %v286
      %v536 = vunpack.c.l.b16 %v287
      %v537 = vunpack.c.l.b16 %v288
      %v538 = vunpack.c.l.b16 %v289
      %v539 = vunpack.c.l.b16 %v290
      %v540 = vunpack.c.l.b16 %v291
      %v541 = vunpack.c.l.b16 %v292
      %v542 = vunpack.c.l.b16 %v293
      %v543 = vunpack.c.l.b16 %v294
      %v544 = vunpack.c.l.b16 %v295
      %v545 = vunpack.c.l.b16 %v296
      %v546 = vunpack.c.l.b16 %v297
      %v547 = vunpack.c.l.b16 %v298
      %v548 = vunpack.c.l.b16 %v299
      %v549 = vunpack.c.l.b16 %v300
      %v550 = vunpack.c.l.b16 %v301
      %v551 = vunpack.c.l.b16 %v302
      %v552 = vunpack.c.l.b16 %v303
      %v553 = vunpack.c.l.b16 %v304
      %v554 = vunpack.c.l.b16 %v305
      %v555 = vunpack.c.l.b16 %v306
      %v556 = vunpack.c.l.b16 %v307
      %v557 = vunpack.c.l.b16 %v308
      %v558 = vunpack.c.l.b16 %v309
      %v559 = vunpack.c.l.b16 %v310
      %v560 = vunpack.c.l.b16 %v311
      %v561 = vpack.c.b16 %v498, %v497
      %v562 = vpack.c.b16 %v500, %v499
      %v563 = vpack.c.b16 %v502, %v501
      %v564 = vpack.c.b16 %v504, %v503
      %v565 = vpack.c.b16 %v506, %v505
      %v566 = vpack.c.b16 %v508, %v507
      %v567 = vpack.c.b16 %v510, %v509
      %v568 = vpack.c.b16 %v512, %v511
      %v569 = vpack.c.b16 %v514, %v513
      %v570 = vpack.c.b16 %v516, %v515
      %v571 = vpack.c.b16 %v518, %v517
      %v572 = vpack.c.b16 %v520, %v519
      %v573 = vpack.c.b16 %v522, %v521
      %v574 = vpack.c.b16 %v524, %v523
      %v575 = vpack.c.b16 %v526, %v525
      %v576 = vpack.c.b16 %v528, %v527
      %v577 = vpack.c.b16 %v530, %v529
      %v578 = vpack.c.b16 %v532, %v531
      %v579 = vpack.c.b16 %v534, %v533
      %v580 = vpack.c.b16 %v536, %v535
      %v581 = vpack.c.b16 %v538, %v537
      %v582 = vpack.c.b16 %v540, %v539
      %v583 = vpack.c.b16 %v542, %v541
      %v584 = vpack.c.b16 %v544, %v543
      %v585 = vpack.c.b16 %v546, %v545
      %v586 = vpack.c.b16 %v548, %v547
      %v587 = vpack.c.b16 %v550, %v549
      %v588 = vpack.c.b16 %v552, %v551
      %v589 = vpack.c.b16 %v554, %v553
      %v590 = vpack.c.b16 %v556, %v555
      %v591 = vpack.c.b16 %v558, %v557
      %v592 = vpack.c.b16 %v560, %v559
      %625 = vmatprep.subr.bf16.mxu0 0
      %626 = vmatpush1.bf16.msra.mxu0 %v568
      %627 = vmatprep.subr.bf16.mxu0 0
      %628 = vmatpush1.bf16.msra.mxu0 %v567
      %629 = vmatprep.subr.bf16.mxu0 0
      %630 = vmatpush1.bf16.msra.mxu0 %v566
      %631 = vmatprep.subr.bf16.mxu0 0
      %632 = vmatpush1.bf16.msra.mxu0 %v565
      %633 = vmatprep.subr.bf16.mxu0 0
      %634 = vmatpush1.bf16.msra.mxu0 %v564
      %635 = vmatprep.subr.bf16.mxu0 0
      %636 = vmatpush1.bf16.msra.mxu0 %v563
      %637 = vmatprep.subr.bf16.mxu0 0
      %638 = vmatpush1.bf16.msra.mxu0 %v562
      %639 = vmatprep.subr.bf16.mxu0 0
      %640 = vmatpush1.bf16.msra.mxu0 %v561
      %641 = vmatprep.subr.bf16.mxu0 0
      %642 = vmatpush2.bf16.msra.mxu0 %v576
      %643 = vmatprep.subr.bf16.mxu0 0
      %644 = vmatpush2.bf16.msra.mxu0 %v575
      %645 = vmatprep.subr.bf16.mxu0 0
      %646 = vmatpush2.bf16.msra.mxu0 %v574
      %647 = vmatprep.subr.bf16.mxu0 0
      %648 = vmatpush2.bf16.msra.mxu0 %v573
      %649 = vmatprep.subr.bf16.mxu0 0
      %650 = vmatpush2.bf16.msra.mxu0 %v572
      %651 = vmatprep.subr.bf16.mxu0 0
      %652 = vmatpush2.bf16.msra.mxu0 %v571
      %653 = vmatprep.subr.bf16.mxu0 0
      %654 = vmatpush2.bf16.msra.mxu0 %v570
      %655 = vmatprep.subr.bf16.mxu0 0
      %656 = vmatpush2.bf16.msra.mxu0 %v569
      %657 = vmatprep.mubr.bf16.mxu0 %v386
      %658 = vmatmul.mubr.bf16.gmra.mxu0 %v385
      %v659 = vpop.f32.mrf.mxu0
      %v660 = vadd.f32 %v317, %v659
      %v661 = vpop.f32.mrf.mxu0
      %v662 = vpop.f32.mrf.mxu0
      %v663 = vadd.f32 %v317, %v662
      %v664 = vpop.f32.mrf.mxu0
      %665 = vmatprep.mubr.bf16.mxu0 %v390
      %666 = vmatmul.mubr.bf16.gmra.mxu0 %v389
      %v667 = vpop.f32.mrf.mxu0
      %v668 = vadd.f32 %v317, %v667
      %v669 = vpop.f32.mrf.mxu0
      %v670 = vpop.f32.mrf.mxu0
      %v671 = vadd.f32 %v317, %v670
      %v672 = vpop.f32.mrf.mxu0
      %673 = vmatprep.mubr.bf16.mxu0 %v394
      %674 = vmatmul.mubr.bf16.gmra.mxu0 %v393
      %v675 = vpop.f32.mrf.mxu0
      %v676 = vadd.f32 %v317, %v675
      %v677 = vpop.f32.mrf.mxu0
      %v678 = vpop.f32.mrf.mxu0
      %v679 = vadd.f32 %v317, %v678
      %v680 = vpop.f32.mrf.mxu0
      %681 = vmatprep.mubr.bf16.mxu0 %v398
      %682 = vmatmul.mubr.bf16.gmra.mxu0 %v397
      %v683 = vpop.f32.mrf.mxu0
      %v684 = vadd.f32 %v317, %v683
      %v685 = vpop.f32.mrf.mxu0
      %v686 = vpop.f32.mrf.mxu0
      %v687 = vadd.f32 %v317, %v686
      %v688 = vpop.f32.mrf.mxu0
      %689 = vmatprep.mubr.bf16.mxu0 %v402
      %690 = vmatmul.mubr.bf16.gmra.mxu0 %v401
      %v691 = vpop.f32.mrf.mxu0
      %v692 = vadd.f32 %v317, %v691
      %v693 = vpop.f32.mrf.mxu0
      %v694 = vpop.f32.mrf.mxu0
      %v695 = vadd.f32 %v317, %v694
      %v696 = vpop.f32.mrf.mxu0
      %697 = vmatprep.mubr.bf16.mxu0 %v406
      %698 = vmatmul.mubr.bf16.gmra.mxu0 %v405
      %v699 = vpop.f32.mrf.mxu0
      %v700 = vadd.f32 %v317, %v699
      %v701 = vpop.f32.mrf.mxu0
      %v702 = vpop.f32.mrf.mxu0
      %v703 = vpop.f32.mrf.mxu0
      %704 = vdwg.mxu0
      %705 = vmatprep.subr.bf16.mxu0 0
      %706 = vmatpush1.bf16.msra.mxu0 %v584
      %707 = vmatprep.subr.bf16.mxu0 0
      %708 = vmatpush1.bf16.msra.mxu0 %v583
      %709 = vmatprep.subr.bf16.mxu0 0
      %710 = vmatpush1.bf16.msra.mxu0 %v582
      %711 = vmatprep.subr.bf16.mxu0 0
      %712 = vmatpush1.bf16.msra.mxu0 %v581
      %713 = vmatprep.subr.bf16.mxu0 0
      %714 = vmatpush1.bf16.msra.mxu0 %v580
      %715 = vmatprep.subr.bf16.mxu0 0
      %716 = vmatpush1.bf16.msra.mxu0 %v579
      %717 = vmatprep.subr.bf16.mxu0 0
      %718 = vmatpush1.bf16.msra.mxu0 %v578
      %719 = vmatprep.subr.bf16.mxu0 0
      %720 = vmatpush1.bf16.msra.mxu0 %v577
      %721 = vmatprep.subr.bf16.mxu0 0
      %722 = vmatpush2.bf16.msra.mxu0 %v592
      %723 = vmatprep.subr.bf16.mxu0 0
      %724 = vmatpush2.bf16.msra.mxu0 %v591
      %725 = vmatprep.subr.bf16.mxu0 0
      %726 = vmatpush2.bf16.msra.mxu0 %v590
      %727 = vmatprep.subr.bf16.mxu0 0
      %728 = vmatpush2.bf16.msra.mxu0 %v589
      %729 = vmatprep.subr.bf16.mxu0 0
      %730 = vmatpush2.bf16.msra.mxu0 %v588
      %731 = vmatprep.subr.bf16.mxu0 0
      %732 = vmatpush2.bf16.msra.mxu0 %v587
      %733 = vmatprep.subr.bf16.mxu0 0
      %734 = vmatpush2.bf16.msra.mxu0 %v586
      %735 = vmatprep.subr.bf16.mxu0 0
      %736 = vmatpush2.bf16.msra.mxu0 %v585
      %737 = vmatprep.mubr.bf16.mxu0 %v388
      %738 = vmatmul.mubr.bf16.gmra.mxu0 %v387
      %v739 = vpop.f32.mrf.mxu0
      %v740 = vadd.f32 %v660, %v739
      %v741 = vpop.f32.mrf.mxu0
      %v742 = vpop.f32.mrf.mxu0
      %v743 = vadd.f32 %v663, %v742
      %v744 = vpop.f32.mrf.mxu0
      %745 = vmatprep.mubr.bf16.mxu0 %v392
      %746 = vmatmul.mubr.bf16.gmra.mxu0 %v391
      %v747 = vpop.f32.mrf.mxu0
      %v748 = vadd.f32 %v668, %v747
      %v749 = vpop.f32.mrf.mxu0
      %v750 = vpop.f32.mrf.mxu0
      %v751 = vadd.f32 %v671, %v750
      %v752 = vpop.f32.mrf.mxu0
      %753 = vmatprep.mubr.bf16.mxu0 %v396
      %754 = vmatmul.mubr.bf16.gmra.mxu0 %v395
      %v755 = vpop.f32.mrf.mxu0
      %v756 = vadd.f32 %v676, %v755
      %v757 = vpop.f32.mrf.mxu0
      %v758 = vpop.f32.mrf.mxu0
      %v759 = vadd.f32 %v679, %v758
      %v760 = vpop.f32.mrf.mxu0
      %761 = vmatprep.mubr.bf16.mxu0 %v400
      %762 = vmatmul.mubr.bf16.gmra.mxu0 %v399
      %v763 = vpop.f32.mrf.mxu0
      %v764 = vadd.f32 %v684, %v763
      %v765 = vpop.f32.mrf.mxu0
      %v766 = vpop.f32.mrf.mxu0
      %v767 = vadd.f32 %v687, %v766
      %v768 = vpop.f32.mrf.mxu0
      %769 = vmatprep.mubr.bf16.mxu0 %v404
      %770 = vmatmul.mubr.bf16.gmra.mxu0 %v403
      %v771 = vpop.f32.mrf.mxu0
      %v772 = vadd.f32 %v692, %v771
      %v773 = vpop.f32.mrf.mxu0
      %v774 = vpop.f32.mrf.mxu0
      %v775 = vadd.f32 %v695, %v774
      %v776 = vpop.f32.mrf.mxu0
      %777 = vmatprep.mubr.bf16.mxu0 %v408
      %778 = vmatmul.mubr.bf16.gmra.mxu0 %v407
      %v779 = vpop.f32.mrf.mxu0
      %v780 = vadd.f32 %v700, %v779
      %v781 = vpop.f32.mrf.mxu0
      %v782 = vpop.f32.mrf.mxu0
      %v783 = vpop.f32.mrf.mxu0
      %784 = vdwg.mxu0
      %v785 = vmax.f32 %v740, 0.0
      %v786 = vmax.f32 %v743, 0.0
      %v787 = vmax.f32 %v748, 0.0
      %v788 = vmax.f32 %v751, 0.0
      %v789 = vmax.f32 %v756, 0.0
      %v790 = vmax.f32 %v759, 0.0
      %v791 = vmax.f32 %v764, 0.0
      %v792 = vmax.f32 %v767, 0.0
      %v793 = vmax.f32 %v772, 0.0
      %v794 = vmax.f32 %v775, 0.0
      %v795 = vmax.f32 %v780, 0.0
      %vm796 = vcmask 523264
      %797 = vst.msk [vmem:[#allocation2] sm:$0xff] %vm796, %v785
      %798 = vst.msk [vmem:[#allocation2 + $0x8] sm:$0xff] %vm796, %v786
      %799 = vst.msk [vmem:[#allocation2 + $0x10] sm:$0xff] %vm796, %v787
      %800 = vst.msk [vmem:[#allocation2 + $0x18] sm:$0xff] %vm796, %v788
      %801 = vst.msk [vmem:[#allocation2 + $0x20] sm:$0xff] %vm796, %v789
      %802 = vst.msk [vmem:[#allocation2 + $0x28] sm:$0xff] %vm796, %v790
      %803 = vst.msk [vmem:[#allocation2 + $0x30] sm:$0xff] %vm796, %v791
      %804 = vst.msk [vmem:[#allocation2 + $0x38] sm:$0xff] %vm796, %v792
      %805 = vst.msk [vmem:[#allocation2 + $0x40] sm:$0xff] %vm796, %v793
      %806 = vst.msk [vmem:[#allocation2 + $0x48] sm:$0xff] %vm796, %v794
      %vm807 = vcmask 516096
      %808 = vst.msk [vmem:[#allocation2 + $0x50] sm:$0x1] %vm807, %v795
      %v809 = vld [vmem:[#allocation2] sm:$0x7f]
      %vm810 = vcmask 522240
      %811 = vst.msk [vmem:[#allocation3] sm:$0x7f] %vm810, %v809
      %v812 = vld [vmem:[#allocation2 + $0x1] sm:$0x7f]
      %814 = vrot.lane.b32.xlu0 %v812, 64
      %v815 = vpop.permute.xlu0 %814
      %vm817 = vcmask 1047040
      %818 = vst.msk [vmem:[#allocation3] sm:$0x7f] %vm817, %v815
      %v819 = vld [vmem:[#allocation2 + $0x2] sm:$0x7f]
      %820 = vst.msk [vmem:[#allocation3 + $0x8] sm:$0x7f] %vm810, %v819
      %v821 = vld [vmem:[#allocation2 + $0x9] sm:$0x7f]
      %823 = vrot.lane.b32.xlu0 %v821, 64
      %v824 = vpop.permute.xlu0 %823
      %826 = vst.msk [vmem:[#allocation3 + $0x8] sm:$0x7f] %vm817, %v824
      %v827 = vld [vmem:[#allocation2 + $0xa] sm:$0x7f]
      %828 = vst.msk [vmem:[#allocation3 + $0x10] sm:$0x7f] %vm810, %v827
      %v829 = vld [vmem:[#allocation2 + $0xb] sm:$0x7f]
      %831 = vrot.lane.b32.xlu0 %v829, 64
      %v832 = vpop.permute.xlu0 %831
      %834 = vst.msk [vmem:[#allocation3 + $0x10] sm:$0x7f] %vm817, %v832
      %v835 = vld [vmem:[#allocation2 + $0x12] sm:$0x7f]
      %836 = vst.msk [vmem:[#allocation3 + $0x18] sm:$0x7f] %vm810, %v835
      %v837 = vld [vmem:[#allocation2 + $0x13] sm:$0x7f]
      %839 = vrot.lane.b32.xlu0 %v837, 64
      %v840 = vpop.permute.xlu0 %839
      %842 = vst.msk [vmem:[#allocation3 + $0x18] sm:$0x7f] %vm817, %v840
      %v843 = vld [vmem:[#allocation2 + $0x14] sm:$0x7f]
      %844 = vst.msk [vmem:[#allocation3 + $0x20] sm:$0x7f] %vm810, %v843
      %v845 = vld [vmem:[#allocation2 + $0x9] sm:$0x7f]
      %v847 = vrot.slane %v845, 1
      %vm849 = vcmask 523271
      %850 = vst.msk [vmem:[#allocation3] sm:$0x80] %vm849, %v847
      %vm851 = vcmask 521216
      %852 = vst.msk [vmem:[#allocation3 + $0x28] sm:$0x3f] %vm851, %v847
      %v853 = vld [vmem:[#allocation2 + $0xa] sm:$0x7f]
      %v855 = vrot.slane %v853, 1
      %856 = vrot.lane.b32.xlu0 %v855, 64
      %v857 = vpop.permute.xlu0 %856
      %vm859 = vcmask 1048071
      %860 = vst.msk [vmem:[#allocation3] sm:$0x80] %vm859, %v857
      %vm861 = vcmask 1046016
      %862 = vst.msk [vmem:[#allocation3 + $0x28] sm:$0x3f] %vm861, %v857
      %v863 = vld [vmem:[#allocation2 + $0xb] sm:$0x7f]
      %v865 = vrot.slane %v863, 1
      %867 = vst.msk [vmem:[#allocation3 + $0x8] sm:$0x80] %vm849, %v865
      %868 = vst.msk [vmem:[#allocation3 + $0x30] sm:$0x3f] %vm851, %v865
      %v869 = vld [vmem:[#allocation2 + $0x12] sm:$0x7f]
      %v871 = vrot.slane %v869, 1
      %872 = vrot.lane.b32.xlu0 %v871, 64
      %v873 = vpop.permute.xlu0 %872
      %875 = vst.msk [vmem:[#allocation3 + $0x8] sm:$0x80] %vm859, %v873
      %876 = vst.msk [vmem:[#allocation3 + $0x30] sm:$0x3f] %vm861, %v873
      %v877 = vld [vmem:[#allocation2 + $0x13] sm:$0x7f]
      %v879 = vrot.slane %v877, 1
      %881 = vst.msk [vmem:[#allocation3 + $0x10] sm:$0x80] %vm849, %v879
      %882 = vst.msk [vmem:[#allocation3 + $0x38] sm:$0x3f] %vm851, %v879
      %v883 = vld [vmem:[#allocation2 + $0x14] sm:$0x7f]
      %v885 = vrot.slane %v883, 1
      %886 = vrot.lane.b32.xlu0 %v885, 64
      %v887 = vpop.permute.xlu0 %886
      %889 = vst.msk [vmem:[#allocation3 + $0x10] sm:$0x80] %vm859, %v887
      %890 = vst.msk [vmem:[#allocation3 + $0x38] sm:$0x3f] %vm861, %v887
      %v891 = vld [vmem:[#allocation2 + $0x1b] sm:$0x7f]
      %v893 = vrot.slane %v891, 1
      %895 = vst.msk [vmem:[#allocation3 + $0x18] sm:$0x80] %vm849, %v893
      %896 = vst.msk [vmem:[#allocation3 + $0x40] sm:$0x3f] %vm851, %v893
      %v897 = vld [vmem:[#allocation2 + $0x1c] sm:$0x7f]
      %v899 = vrot.slane %v897, 1
      %900 = vrot.lane.b32.xlu0 %v899, 64
      %v901 = vpop.permute.xlu0 %900
      %903 = vst.msk [vmem:[#allocation3 + $0x18] sm:$0x80] %vm859, %v901
      %904 = vst.msk [vmem:[#allocation3 + $0x40] sm:$0x3f] %vm861, %v901
      %v905 = vld [vmem:[#allocation2 + $0x1d] sm:$0x7f]
      %v907 = vrot.slane %v905, 1
      %909 = vst.msk [vmem:[#allocation3 + $0x20] sm:$0x80] %vm849, %v907
      %910 = vst.msk [vmem:[#allocation3 + $0x48] sm:$0x3f] %vm851, %v907
      %v911 = vld [vmem:[#allocation2 + $0x12] sm:$0x7f]
      %v913 = vrot.slane %v911, 2
      %vm915 = vcmask 523270
      %916 = vst.msk [vmem:[#allocation3 + $0x28] sm:$0xc0] %vm915, %v913
      %vm917 = vcmask 520192
      %918 = vst.msk [vmem:[#allocation3 + $0x50] sm:$0x1f] %vm917, %v913
      %v919 = vld [vmem:[#allocation2 + $0x13] sm:$0x7f]
      %v921 = vrot.slane %v919, 2
      %922 = vrot.lane.b32.xlu0 %v921, 64
      %v923 = vpop.permute.xlu0 %922
      %vm925 = vcmask 1048070
      %926 = vst.msk [vmem:[#allocation3 + $0x28] sm:$0xc0] %vm925, %v923
      %vm927 = vcmask 1044992
      %928 = vst.msk [vmem:[#allocation3 + $0x50] sm:$0x1f] %vm927, %v923
      %v929 = vld [vmem:[#allocation2 + $0x14] sm:$0x7f]
      %v931 = vrot.slane %v929, 2
      %933 = vst.msk [vmem:[#allocation3 + $0x30] sm:$0xc0] %vm915, %v931
      %934 = vst.msk [vmem:[#allocation3 + $0x58] sm:$0x1f] %vm917, %v931
      %v935 = vld [vmem:[#allocation2 + $0x1b] sm:$0x7f]
      %v937 = vrot.slane %v935, 2
      %938 = vrot.lane.b32.xlu0 %v937, 64
      %v939 = vpop.permute.xlu0 %938
      %941 = vst.msk [vmem:[#allocation3 + $0x30] sm:$0xc0] %vm925, %v939
      %942 = vst.msk [vmem:[#allocation3 + $0x58] sm:$0x1f] %vm927, %v939
      %v943 = vld [vmem:[#allocation2 + $0x1c] sm:$0x7f]
      %v945 = vrot.slane %v943, 2
      %947 = vst.msk [vmem:[#allocation3 + $0x38] sm:$0xc0] %vm915, %v945
      %948 = vst.msk [vmem:[#allocation3 + $0x60] sm:$0x1f] %vm917, %v945
      %v949 = vld [vmem:[#allocation2 + $0x1d] sm:$0x7f]
      %v951 = vrot.slane %v949, 2
      %952 = vrot.lane.b32.xlu0 %v951, 64
      %v953 = vpop.permute.xlu0 %952
      %955 = vst.msk [vmem:[#allocation3 + $0x38] sm:$0xc0] %vm925, %v953
      %956 = vst.msk [vmem:[#allocation3 + $0x60] sm:$0x1f] %vm927, %v953
      %v957 = vld [vmem:[#allocation2 + $0x24] sm:$0x7f]
      %v959 = vrot.slane %v957, 2
      %961 = vst.msk [vmem:[#allocation3 + $0x40] sm:$0xc0] %vm915, %v959
      %962 = vst.msk [vmem:[#allocation3 + $0x68] sm:$0x1f] %vm917, %v959
      %v963 = vld [vmem:[#allocation2 + $0x25] sm:$0x7f]
      %v965 = vrot.slane %v963, 2
      %966 = vrot.lane.b32.xlu0 %v965, 64
      %v967 = vpop.permute.xlu0 %966
      %969 = vst.msk [vmem:[#allocation3 + $0x40] sm:$0xc0] %vm925, %v967
      %970 = vst.msk [vmem:[#allocation3 + $0x68] sm:$0x1f] %vm927, %v967
      %v971 = vld [vmem:[#allocation2 + $0x26] sm:$0x7f]
      %v973 = vrot.slane %v971, 2
      %975 = vst.msk [vmem:[#allocation3 + $0x48] sm:$0xc0] %vm915, %v973
      %976 = vst.msk [vmem:[#allocation3 + $0x70] sm:$0x1f] %vm917, %v973
      %v977 = vld [vmem:[#allocation2 + $0x1b] sm:$0x7f]
      %v979 = vrot.slane %v977, 3
      %vm981 = vcmask 523269
      %982 = vst.msk [vmem:[#allocation3 + $0x50] sm:$0xe0] %vm981, %v979
      %vm983 = vcmask 519168
      %984 = vst.msk [vmem:[#allocation3 + $0x78] sm:$0xf] %vm983, %v979
      %v985 = vld [vmem:[#allocation2 + $0x1c] sm:$0x7f]
      %v987 = vrot.slane %v985, 3
      %988 = vrot.lane.b32.xlu0 %v987, 64
      %v989 = vpop.permute.xlu0 %988
      %vm991 = vcmask 1048069
      %992 = vst.msk [vmem:[#allocation3 + $0x50] sm:$0xe0] %vm991, %v989
      %vm993 = vcmask 1043968
      %994 = vst.msk [vmem:[#allocation3 + $0x78] sm:$0xf] %vm993, %v989
      %v995 = vld [vmem:[#allocation2 + $0x1d] sm:$0x7f]
      %v997 = vrot.slane %v995, 3
      %999 = vst.msk [vmem:[#allocation3 + $0x58] sm:$0xe0] %vm981, %v997
      %1000 = vst.msk [vmem:[#allocation3 + $0x80] sm:$0xf] %vm983, %v997
      %v1001 = vld [vmem:[#allocation2 + $0x24] sm:$0x7f]
      %v1003 = vrot.slane %v1001, 3
      %1004 = vrot.lane.b32.xlu0 %v1003, 64
      %v1005 = vpop.permute.xlu0 %1004
      %1007 = vst.msk [vmem:[#allocation3 + $0x58] sm:$0xe0] %vm991, %v1005
      %1008 = vst.msk [vmem:[#allocation3 + $0x80] sm:$0xf] %vm993, %v1005
      %v1009 = vld [vmem:[#allocation2 + $0x25] sm:$0x7f]
      %v1011 = vrot.slane %v1009, 3
      %1013 = vst.msk [vmem:[#allocation3 + $0x60] sm:$0xe0] %vm981, %v1011
      %1014 = vst.msk [vmem:[#allocation3 + $0x88] sm:$0xf] %vm983, %v1011
      %v1015 = vld [vmem:[#allocation2 + $0x26] sm:$0x7f]
      %v1017 = vrot.slane %v1015, 3
      %1018 = vrot.lane.b32.xlu0 %v1017, 64
      %v1019 = vpop.permute.xlu0 %1018
      %1021 = vst.msk [vmem:[#allocation3 + $0x60] sm:$0xe0] %vm991, %v1019
      %1022 = vst.msk [vmem:[#allocation3 + $0x88] sm:$0xf] %vm993, %v1019
      %v1023 = vld [vmem:[#allocation2 + $0x2d] sm:$0x7f]
      %v1025 = vrot.slane %v1023, 3
      %1027 = vst.msk [vmem:[#allocation3 + $0x68] sm:$0xe0] %vm981, %v1025
      %1028 = vst.msk [vmem:[#allocation3 + $0x90] sm:$0xf] %vm983, %v1025
      %v1029 = vld [vmem:[#allocation2 + $0x2e] sm:$0x7f]
      %v1031 = vrot.slane %v1029, 3
      %1032 = vrot.lane.b32.xlu0 %v1031, 64
      %v1033 = vpop.permute.xlu0 %1032
      %1035 = vst.msk [vmem:[#allocation3 + $0x68] sm:$0xe0] %vm991, %v1033
      %1036 = vst.msk [vmem:[#allocation3 + $0x90] sm:$0xf] %vm993, %v1033
      %v1037 = vld [vmem:[#allocation2 + $0x2f] sm:$0x7f]
      %v1039 = vrot.slane %v1037, 3
      %1041 = vst.msk [vmem:[#allocation3 + $0x70] sm:$0xe0] %vm981, %v1039
      %1042 = vst.msk [vmem:[#allocation3 + $0x98] sm:$0xf] %vm983, %v1039
      %v1043 = vld [vmem:[#allocation2 + $0x24] sm:$0x7f]
      %v1045 = vrot.slane %v1043, 4
      %vm1047 = vcmask 523268
      %1048 = vst.msk [vmem:[#allocation3 + $0x78] sm:$0xf0] %vm1047, %v1045
      %vm1049 = vcmask 518144
      %1050 = vst.msk [vmem:[#allocation3 + $0xa0] sm:$0x7] %vm1049, %v1045
      %v1051 = vld [vmem:[#allocation2 + $0x25] sm:$0x7f]
      %v1053 = vrot.slane %v1051, 4
      %1054 = vrot.lane.b32.xlu0 %v1053, 64
      %v1055 = vpop.permute.xlu0 %1054
      %vm1057 = vcmask 1048068
      %1058 = vst.msk [vmem:[#allocation3 + $0x78] sm:$0xf0] %vm1057, %v1055
      %vm1059 = vcmask 1042944
      %1060 = vst.msk [vmem:[#allocation3 + $0xa0] sm:$0x7] %vm1059, %v1055
      %v1061 = vld [vmem:[#allocation2 + $0x26] sm:$0x7f]
      %v1063 = vrot.slane %v1061, 4
      %1065 = vst.msk [vmem:[#allocation3 + $0x80] sm:$0xf0] %vm1047, %v1063
      %1066 = vst.msk [vmem:[#allocation3 + $0xa8] sm:$0x7] %vm1049, %v1063
      %v1067 = vld [vmem:[#allocation2 + $0x2d] sm:$0x7f]
      %v1069 = vrot.slane %v1067, 4
      %1070 = vrot.lane.b32.xlu0 %v1069, 64
      %v1071 = vpop.permute.xlu0 %1070
      %1073 = vst.msk [vmem:[#allocation3 + $0x80] sm:$0xf0] %vm1057, %v1071
      %1074 = vst.msk [vmem:[#allocation3 + $0xa8] sm:$0x7] %vm1059, %v1071
      %v1075 = vld [vmem:[#allocation2 + $0x2e] sm:$0x7f]
      %v1077 = vrot.slane %v1075, 4
      %1079 = vst.msk [vmem:[#allocation3 + $0x88] sm:$0xf0] %vm1047, %v1077
      %1080 = vst.msk [vmem:[#allocation3 + $0xb0] sm:$0x7] %vm1049, %v1077
      %v1081 = vld [vmem:[#allocation2 + $0x2f] sm:$0x7f]
      %v1083 = vrot.slane %v1081, 4
      %1084 = vrot.lane.b32.xlu0 %v1083, 64
      %v1085 = vpop.permute.xlu0 %1084
      %1087 = vst.msk [vmem:[#allocation3 + $0x88] sm:$0xf0] %vm1057, %v1085
      %1088 = vst.msk [vmem:[#allocation3 + $0xb0] sm:$0x7] %vm1059, %v1085
      %v1089 = vld [vmem:[#allocation2 + $0x36] sm:$0x7f]
      %v1091 = vrot.slane %v1089, 4
      %1093 = vst.msk [vmem:[#allocation3 + $0x90] sm:$0xf0] %vm1047, %v1091
      %1094 = vst.msk [vmem:[#allocation3 + $0xb8] sm:$0x7] %vm1049, %v1091
      %v1095 = vld [vmem:[#allocation2 + $0x37] sm:$0x7f]
      %v1097 = vrot.slane %v1095, 4
      %1098 = vrot.lane.b32.xlu0 %v1097, 64
      %v1099 = vpop.permute.xlu0 %1098
      %1101 = vst.msk [vmem:[#allocation3 + $0x90] sm:$0xf0] %vm1057, %v1099
      %1102 = vst.msk [vmem:[#allocation3 + $0xb8] sm:$0x7] %vm1059, %v1099
      %v1103 = vld [vmem:[#allocation2 + $0x38] sm:$0x7f]
      %v1105 = vrot.slane %v1103, 4
      %1107 = vst.msk [vmem:[#allocation3 + $0x98] sm:$0xf0] %vm1047, %v1105
      %1108 = vst.msk [vmem:[#allocation3 + $0xc0] sm:$0x7] %vm1049, %v1105
      %v1109 = vld [vmem:[#allocation2 + $0x2d] sm:$0x7f]
      %v1111 = vrot.slane %v1109, 5
      %vm1113 = vcmask 523267
      %1114 = vst.msk [vmem:[#allocation3 + $0xa0] sm:$0xf8] %vm1113, %v1111
      %vm1115 = vcmask 517120
      %1116 = vst.msk [vmem:[#allocation3 + $0xc8] sm:$0x3] %vm1115, %v1111
      %v1117 = vld [vmem:[#allocation2 + $0x2e] sm:$0x7f]
      %v1119 = vrot.slane %v1117, 5
      %1120 = vrot.lane.b32.xlu0 %v1119, 64
      %v1121 = vpop.permute.xlu0 %1120
      %vm1123 = vcmask 1048067
      %1124 = vst.msk [vmem:[#allocation3 + $0xa0] sm:$0xf8] %vm1123, %v1121
      %vm1125 = vcmask 1041920
      %1126 = vst.msk [vmem:[#allocation3 + $0xc8] sm:$0x3] %vm1125, %v1121
      %v1127 = vld [vmem:[#allocation2 + $0x2f] sm:$0x7f]
      %v1129 = vrot.slane %v1127, 5
      %1131 = vst.msk [vmem:[#allocation3 + $0xa8] sm:$0xf8] %vm1113, %v1129
      %1132 = vst.msk [vmem:[#allocation3 + $0xd0] sm:$0x3] %vm1115, %v1129
      %v1133 = vld [vmem:[#allocation2 + $0x36] sm:$0x7f]
      %v1135 = vrot.slane %v1133, 5
      %1136 = vrot.lane.b32.xlu0 %v1135, 64
      %v1137 = vpop.permute.xlu0 %1136
      %1139 = vst.msk [vmem:[#allocation3 + $0xa8] sm:$0xf8] %vm1123, %v1137
      %1140 = vst.msk [vmem:[#allocation3 + $0xd0] sm:$0x3] %vm1125, %v1137
      %v1141 = vld [vmem:[#allocation2 + $0x37] sm:$0x7f]
      %v1143 = vrot.slane %v1141, 5
      %1145 = vst.msk [vmem:[#allocation3 + $0xb0] sm:$0xf8] %vm1113, %v1143
      %1146 = vst.msk [vmem:[#allocation3 + $0xd8] sm:$0x3] %vm1115, %v1143
      %v1147 = vld [vmem:[#allocation2 + $0x38] sm:$0x7f]
      %v1149 = vrot.slane %v1147, 5
      %1150 = vrot.lane.b32.xlu0 %v1149, 64
      %v1151 = vpop.permute.xlu0 %1150
      %1153 = vst.msk [vmem:[#allocation3 + $0xb0] sm:$0xf8] %vm1123, %v1151
      %1154 = vst.msk [vmem:[#allocation3 + $0xd8] sm:$0x3] %vm1125, %v1151
      %v1155 = vld [vmem:[#allocation2 + $0x3f] sm:$0x7f]
      %v1157 = vrot.slane %v1155, 5
      %1159 = vst.msk [vmem:[#allocation3 + $0xb8] sm:$0xf8] %vm1113, %v1157
      %1160 = vst.msk [vmem:[#allocation3 + $0xe0] sm:$0x3] %vm1115, %v1157
      %v1161 = vld [vmem:[#allocation2 + $0x40] sm:$0x7f]
      %v1163 = vrot.slane %v1161, 5
      %1164 = vrot.lane.b32.xlu0 %v1163, 64
      %v1165 = vpop.permute.xlu0 %1164
      %1167 = vst.msk [vmem:[#allocation3 + $0xb8] sm:$0xf8] %vm1123, %v1165
      %1168 = vst.msk [vmem:[#allocation3 + $0xe0] sm:$0x3] %vm1125, %v1165
      %v1169 = vld [vmem:[#allocation2 + $0x41] sm:$0x7f]
      %v1171 = vrot.slane %v1169, 5
      %1173 = vst.msk [vmem:[#allocation3 + $0xc0] sm:$0xf8] %vm1113, %v1171
      %1174 = vst.msk [vmem:[#allocation3 + $0xe8] sm:$0x3] %vm1115, %v1171
      %v1175 = vld [vmem:[#allocation2 + $0x36] sm:$0x7f]
      %v1177 = vrot.slane %v1175, 6
      %vm1179 = vcmask 523266
      %1180 = vst.msk [vmem:[#allocation3 + $0xc8] sm:$0xfc] %vm1179, %v1177
      %1181 = vst.msk [vmem:[#allocation3 + $0xf0] sm:$0x1] %vm807, %v1177
      %v1182 = vld [vmem:[#allocation2 + $0x37] sm:$0x7f]
      %v1184 = vrot.slane %v1182, 6
      %1185 = vrot.lane.b32.xlu0 %v1184, 64
      %v1186 = vpop.permute.xlu0 %1185
      %vm1188 = vcmask 1048066
      %1189 = vst.msk [vmem:[#allocation3 + $0xc8] sm:$0xfc] %vm1188, %v1186
      %vm1190 = vcmask 1040896
      %1191 = vst.msk [vmem:[#allocation3 + $0xf0] sm:$0x1] %vm1190, %v1186
      %v1192 = vld [vmem:[#allocation2 + $0x38] sm:$0x7f]
      %v1194 = vrot.slane %v1192, 6
      %1196 = vst.msk [vmem:[#allocation3 + $0xd0] sm:$0xfc] %vm1179, %v1194
      %1197 = vst.msk [vmem:[#allocation3 + $0xf8] sm:$0x1] %vm807, %v1194
      %v1198 = vld [vmem:[#allocation2 + $0x3f] sm:$0x7f]
      %v1200 = vrot.slane %v1198, 6
      %1201 = vrot.lane.b32.xlu0 %v1200, 64
      %v1202 = vpop.permute.xlu0 %1201
      %1204 = vst.msk [vmem:[#allocation3 + $0xd0] sm:$0xfc] %vm1188, %v1202
      %1205 = vst.msk [vmem:[#allocation3 + $0xf8] sm:$0x1] %vm1190, %v1202
      %v1206 = vld [vmem:[#allocation2 + $0x40] sm:$0x7f]
      %v1208 = vrot.slane %v1206, 6
      %1210 = vst.msk [vmem:[#allocation3 + $0xd8] sm:$0xfc] %vm1179, %v1208
      %1211 = vst.msk [vmem:[#allocation3 + $0x100] sm:$0x1] %vm807, %v1208
      %v1212 = vld [vmem:[#allocation2 + $0x41] sm:$0x7f]
      %v1214 = vrot.slane %v1212, 6
      %1215 = vrot.lane.b32.xlu0 %v1214, 64
      %v1216 = vpop.permute.xlu0 %1215
      %1218 = vst.msk [vmem:[#allocation3 + $0xd8] sm:$0xfc] %vm1188, %v1216
      %1219 = vst.msk [vmem:[#allocation3 + $0x100] sm:$0x1] %vm1190, %v1216
      %v1220 = vld [vmem:[#allocation2 + $0x48] sm:$0x7f]
      %v1222 = vrot.slane %v1220, 6
      %1224 = vst.msk [vmem:[#allocation3 + $0xe0] sm:$0xfc] %vm1179, %v1222
      %1225 = vst.msk [vmem:[#allocation3 + $0x108] sm:$0x1] %vm807, %v1222
      %v1226 = vld [vmem:[#allocation2 + $0x49] sm:$0x7f]
      %v1228 = vrot.slane %v1226, 6
      %1229 = vrot.lane.b32.xlu0 %v1228, 64
      %v1230 = vpop.permute.xlu0 %1229
      %1232 = vst.msk [vmem:[#allocation3 + $0xe0] sm:$0xfc] %vm1188, %v1230
      %1233 = vst.msk [vmem:[#allocation3 + $0x108] sm:$0x1] %vm1190, %v1230
      %v1234 = vld [vmem:[#allocation2 + $0x4a] sm:$0x7f]
      %v1236 = vrot.slane %v1234, 6
      %1238 = vst.msk [vmem:[#allocation3 + $0xe8] sm:$0xfc] %vm1179, %v1236
      %1239 = vst.msk [vmem:[#allocation3 + $0x110] sm:$0x1] %vm807, %v1236
      %v1240 = vld [vmem:[#allocation3] sm:$0xff]
      %v1241 = vld [vmem:[#allocation3 + $0x8] sm:$0xff]
      %v1242 = vld [vmem:[#allocation3 + $0x10] sm:$0xff]
      %v1243 = vld [vmem:[#allocation3 + $0x18] sm:$0xff]
      %v1244 = vld [vmem:[#allocation3 + $0x20] sm:$0xff]
      %v1245 = vld [vmem:[#allocation3 + $0x28] sm:$0xff]
      %v1246 = vld [vmem:[#allocation3 + $0x30] sm:$0xff]
      %v1247 = vld [vmem:[#allocation3 + $0x38] sm:$0xff]
      %v1248 = vld [vmem:[#allocation3 + $0x40] sm:$0xff]
      %v1249 = vld [vmem:[#allocation3 + $0x48] sm:$0xff]
      %v1250 = vld [vmem:[#allocation3 + $0x50] sm:$0xff]
      %v1251 = vld [vmem:[#allocation3 + $0x58] sm:$0xff]
      %v1252 = vld [vmem:[#allocation3 + $0x60] sm:$0xff]
      %v1253 = vld [vmem:[#allocation3 + $0x68] sm:$0xff]
      %v1254 = vld [vmem:[#allocation3 + $0x70] sm:$0xff]
      %v1255 = vld [vmem:[#allocation3 + $0x78] sm:$0xff]
      %v1256 = vld [vmem:[#allocation3 + $0x80] sm:$0xff]
      %v1257 = vld [vmem:[#allocation3 + $0x88] sm:$0xff]
      %v1258 = vld [vmem:[#allocation3 + $0x90] sm:$0xff]
      %v1259 = vld [vmem:[#allocation3 + $0x98] sm:$0xff]
      %v1260 = vld [vmem:[#allocation3 + $0xa0] sm:$0xff]
      %v1261 = vld [vmem:[#allocation3 + $0xa8] sm:$0xff]
      %v1262 = vld [vmem:[#allocation3 + $0xb0] sm:$0xff]
      %v1263 = vld [vmem:[#allocation3 + $0xb8] sm:$0xff]
      %v1264 = vld [vmem:[#allocation3 + $0xc0] sm:$0xff]
      %v1265 = vld [vmem:[#allocation3 + $0xc8] sm:$0xff]
      %v1266 = vld [vmem:[#allocation3 + $0xd0] sm:$0xff]
      %v1267 = vld [vmem:[#allocation3 + $0xd8] sm:$0xff]
      %v1268 = vld [vmem:[#allocation3 + $0xe0] sm:$0xff]
      %v1269 = vld [vmem:[#allocation3 + $0xe8] sm:$0xff]
      %v1270 = vld [vmem:[#allocation3 + $0xf0] sm:$0x1]
      %v1271 = vld [vmem:[#allocation3 + $0xf8] sm:$0x1]
      %v1272 = vld [vmem:[#allocation3 + $0x100] sm:$0x1]
      %v1273 = vld [vmem:[#allocation3 + $0x108] sm:$0x1]
      %v1274 = vld [vmem:[#allocation3 + $0x110] sm:$0x1]
      %v1275 = vpack.c.bf16 %v1245, %v1240
      %v1276 = vpack.c.bf16 %v1246, %v1241
      %v1277 = vpack.c.bf16 %v1247, %v1242
      %v1278 = vpack.c.bf16 %v1248, %v1243
      %v1279 = vpack.c.bf16 %v1249, %v1244
      %v1280 = vpack.c.bf16 %v1255, %v1250
      %v1281 = vpack.c.bf16 %v1256, %v1251
      %v1282 = vpack.c.bf16 %v1257, %v1252
      %v1283 = vpack.c.bf16 %v1258, %v1253
      %v1284 = vpack.c.bf16 %v1259, %v1254
      %v1285 = vpack.c.bf16 %v1265, %v1260
      %v1286 = vpack.c.bf16 %v1266, %v1261
      %v1287 = vpack.c.bf16 %v1267, %v1262
      %v1288 = vpack.c.bf16 %v1268, %v1263
      %v1289 = vpack.c.bf16 %v1269, %v1264
      %v1290 = vpack.c.bf16 %v1270, %v1270
      %v1291 = vpack.c.bf16 %v1271, %v1271
      %v1292 = vpack.c.bf16 %v1272, %v1272
      %v1293 = vpack.c.bf16 %v1273, %v1273
      %v1294 = vpack.c.bf16 %v1274, %v1274
      %v1295 = vld [vmem:[%s3] sm:$0xf]
      %v1296 = vld [vmem:[%s3 + $0x4] sm:$0xf]
      %v1297 = vld [vmem:[%s3 + $0x8] sm:$0xf]
      %v1298 = vld [vmem:[%s3 + $0xc] sm:$0xf]
      %v1299 = vld [vmem:[%s3 + $0x10] sm:$0xf]
      %v1300 = vld [vmem:[%s3 + $0x14] sm:$0xf]
      %v1301 = vld [vmem:[%s3 + $0x18] sm:$0xf]
      %v1302 = vld [vmem:[%s3 + $0x1c] sm:$0xf]
      %v1303 = vld [vmem:[%s3 + $0x20] sm:$0xf]
      %v1304 = vld [vmem:[%s3 + $0x24] sm:$0xf]
      %v1305 = vld [vmem:[%s3 + $0x28] sm:$0xf]
      %v1306 = vld [vmem:[%s3 + $0x2c] sm:$0xf]
      %v1307 = vld [vmem:[%s3 + $0x30] sm:$0xf]
      %v1308 = vld [vmem:[%s3 + $0x34] sm:$0xf]
      %v1309 = vld [vmem:[%s3 + $0x38] sm:$0xf]
      %v1310 = vld [vmem:[%s3 + $0x3c] sm:$0xf]
      %v1311 = vld [vmem:[%s3 + $0x40] sm:$0xf]
      %v1312 = vld [vmem:[%s3 + $0x44] sm:$0xf]
      %v1313 = vld [vmem:[%s3 + $0x48] sm:$0xf]
      %v1314 = vld [vmem:[%s3 + $0x4c] sm:$0xf]
      %v1315 = vld [vmem:[%s3 + $0x50] sm:$0xf]
      %v1316 = vld [vmem:[%s3 + $0x54] sm:$0xf]
      %v1317 = vld [vmem:[%s3 + $0x58] sm:$0xf]
      %v1318 = vld [vmem:[%s3 + $0x5c] sm:$0xf]
      %v1319 = vld [vmem:[%s3 + $0x60] sm:$0xf]
      %v1320 = vld [vmem:[%s3 + $0x64] sm:$0xf]
      %v1321 = vld [vmem:[%s3 + $0x68] sm:$0xf]
      %v1322 = vld [vmem:[%s3 + $0x6c] sm:$0xf]
      %v1323 = vld [vmem:[%s3 + $0x70] sm:$0xf]
      %v1324 = vld [vmem:[%s3 + $0x74] sm:$0xf]
      %v1325 = vld [vmem:[%s3 + $0x78] sm:$0xf]
      %v1326 = vld [vmem:[%s3 + $0x7c] sm:$0xf]
      %v1327 = vld [vmem:[%s3 + $0x80] sm:$0xf]
      %v1328 = vld [vmem:[%s3 + $0x84] sm:$0xf]
      %v1329 = vld [vmem:[%s3 + $0x88] sm:$0xf]
      %v1330 = vld [vmem:[%s3 + $0x8c] sm:$0xf]
      %v1331 = vld [vmem:[%s3 + $0x90] sm:$0xf]
      %v1332 = vld [vmem:[%s3 + $0x94] sm:$0xf]
      %v1333 = vld [vmem:[%s3 + $0x98] sm:$0xf]
      %v1334 = vld [vmem:[%s3 + $0x9c] sm:$0xf]
      %v1335 = vld [vmem:[%s3 + $0xa0] sm:$0xf]
      %v1336 = vld [vmem:[%s3 + $0xa4] sm:$0xf]
      %v1337 = vld [vmem:[%s3 + $0xa8] sm:$0xf]
      %v1338 = vld [vmem:[%s3 + $0xac] sm:$0xf]
      %v1339 = vld [vmem:[%s3 + $0xb0] sm:$0xf]
      %v1340 = vld [vmem:[%s3 + $0xb4] sm:$0xf]
      %v1341 = vld [vmem:[%s3 + $0xb8] sm:$0xf]
      %v1342 = vld [vmem:[%s3 + $0xbc] sm:$0xf]
      %v1343 = vld [vmem:[%s3 + $0xc0] sm:$0xf]
      %v1344 = vld [vmem:[%s3 + $0xc4] sm:$0xf]
      %v1345 = vld [vmem:[%s3 + $0xc8] sm:$0xf]
      %v1346 = vld [vmem:[%s3 + $0xcc] sm:$0xf]
      %v1347 = vld [vmem:[%s3 + $0xd0] sm:$0xf]
      %v1348 = vld [vmem:[%s3 + $0xd4] sm:$0xf]
      %v1349 = vld [vmem:[%s3 + $0xd8] sm:$0xf]
      %v1350 = vld [vmem:[%s3 + $0xdc] sm:$0xf]
      %v1351 = vld [vmem:[%s3 + $0xe0] sm:$0xf]
      %v1352 = vld [vmem:[%s3 + $0xe4] sm:$0xf]
      %v1353 = vld [vmem:[%s3 + $0xe8] sm:$0xf]
      %v1354 = vld [vmem:[%s3 + $0xec] sm:$0xf]
      %v1355 = vld [vmem:[%s3 + $0xf0] sm:$0xf]
      %v1356 = vld [vmem:[%s3 + $0xf4] sm:$0xf]
      %v1357 = vld [vmem:[%s3 + $0xf8] sm:$0xf]
      %v1358 = vld [vmem:[%s3 + $0xfc] sm:$0xf]
      %v1359 = vld [vmem:[%s3 + $0x100] sm:$0xf]
      %v1360 = vld [vmem:[%s3 + $0x104] sm:$0xf]
      %v1361 = vld [vmem:[%s3 + $0x108] sm:$0xf]
      %v1362 = vld [vmem:[%s3 + $0x10c] sm:$0xf]
      %v1363 = vld [vmem:[%s3 + $0x110] sm:$0xf]
      %v1364 = vld [vmem:[%s3 + $0x114] sm:$0xf]
      %v1365 = vld [vmem:[%s3 + $0x118] sm:$0xf]
      %v1366 = vld [vmem:[%s3 + $0x11c] sm:$0xf]
      %v1367 = vld [vmem:[%s4] sm:$0x1]
      %v1369 = vlaneseq
      %v1370 = vshrl.u32 %v1369, 7
      %v1371 = vsub.s32 0, %v1370
      %v1372 = vrot.slane %v1367, %v1371
      %v1446 = vunpack.c.l.b16 %v1295
      %v1447 = vunpack.c.l.b16 %v1296
      %v1448 = vunpack.c.l.b16 %v1297
      %v1449 = vunpack.c.l.b16 %v1298
      %v1450 = vunpack.c.l.b16 %v1299
      %v1451 = vunpack.c.l.b16 %v1300
      %v1452 = vunpack.c.l.b16 %v1301
      %v1453 = vunpack.c.l.b16 %v1302
      %v1454 = vunpack.c.l.b16 %v1303
      %v1455 = vunpack.c.l.b16 %v1304
      %v1456 = vunpack.c.l.b16 %v1305
      %v1457 = vunpack.c.l.b16 %v1306
      %v1458 = vunpack.c.l.b16 %v1307
      %v1459 = vunpack.c.l.b16 %v1308
      %v1460 = vunpack.c.l.b16 %v1309
      %v1461 = vunpack.c.l.b16 %v1310
      %v1462 = vunpack.c.l.b16 %v1311
      %v1463 = vunpack.c.l.b16 %v1312
      %v1464 = vunpack.c.l.b16 %v1313
      %v1465 = vunpack.c.l.b16 %v1314
      %v1466 = vunpack.c.l.b16 %v1315
      %v1467 = vunpack.c.l.b16 %v1316
      %v1468 = vunpack.c.l.b16 %v1317
      %v1469 = vunpack.c.l.b16 %v1318
      %v1470 = vunpack.c.l.b16 %v1319
      %v1471 = vunpack.c.l.b16 %v1320
      %v1472 = vunpack.c.l.b16 %v1321
      %v1473 = vunpack.c.l.b16 %v1322
      %v1474 = vunpack.c.l.b16 %v1323
      %v1475 = vunpack.c.l.b16 %v1324
      %v1476 = vunpack.c.l.b16 %v1325
      %v1477 = vunpack.c.l.b16 %v1326
      %v1478 = vunpack.c.l.b16 %v1327
      %v1479 = vunpack.c.l.b16 %v1328
      %v1480 = vunpack.c.l.b16 %v1329
      %v1481 = vunpack.c.l.b16 %v1330
      %v1482 = vunpack.c.l.b16 %v1331
      %v1483 = vunpack.c.l.b16 %v1332
      %v1484 = vunpack.c.l.b16 %v1333
      %v1485 = vunpack.c.l.b16 %v1334
      %v1486 = vunpack.c.l.b16 %v1335
      %v1487 = vunpack.c.l.b16 %v1336
      %v1488 = vunpack.c.l.b16 %v1337
      %v1489 = vunpack.c.l.b16 %v1338
      %v1490 = vunpack.c.l.b16 %v1339
      %v1491 = vunpack.c.l.b16 %v1340
      %v1492 = vunpack.c.l.b16 %v1341
      %v1493 = vunpack.c.l.b16 %v1342
      %v1494 = vunpack.c.l.b16 %v1343
      %v1495 = vunpack.c.l.b16 %v1344
      %v1496 = vunpack.c.l.b16 %v1345
      %v1497 = vunpack.c.l.b16 %v1346
      %v1498 = vunpack.c.l.b16 %v1347
      %v1499 = vunpack.c.l.b16 %v1348
      %v1500 = vunpack.c.l.b16 %v1349
      %v1501 = vunpack.c.l.b16 %v1350
      %v1502 = vunpack.c.l.b16 %v1351
      %v1503 = vunpack.c.l.b16 %v1352
      %v1504 = vunpack.c.l.b16 %v1353
      %v1505 = vunpack.c.l.b16 %v1354
      %v1506 = vunpack.c.l.b16 %v1355
      %v1507 = vunpack.c.l.b16 %v1356
      %v1508 = vunpack.c.l.b16 %v1357
      %v1509 = vunpack.c.l.b16 %v1358
      %v1510 = vunpack.c.l.b16 %v1359
      %v1511 = vunpack.c.l.b16 %v1360
      %v1512 = vunpack.c.l.b16 %v1361
      %v1513 = vunpack.c.l.b16 %v1362
      %v1514 = vunpack.c.l.b16 %v1363
      %v1515 = vunpack.c.l.b16 %v1364
      %v1516 = vunpack.c.l.b16 %v1365
      %v1517 = vunpack.c.l.b16 %v1366
      %v1518 = vpack.c.b16 %v1447, %v1446
      %v1519 = vpack.c.b16 %v1449, %v1448
      %v1520 = vpack.c.b16 %v1451, %v1450
      %v1521 = vpack.c.b16 %v1453, %v1452
      %v1522 = vpack.c.b16 %v1455, %v1454
      %v1523 = vpack.c.b16 %v1457, %v1456
      %v1524 = vpack.c.b16 %v1459, %v1458
      %v1525 = vpack.c.b16 %v1461, %v1460
      %v1526 = vpack.c.b16 %v1463, %v1462
      %v1527 = vpack.c.b16 %v1465, %v1464
      %v1528 = vpack.c.b16 %v1467, %v1466
      %v1529 = vpack.c.b16 %v1469, %v1468
      %v1530 = vpack.c.b16 %v1471, %v1470
      %v1531 = vpack.c.b16 %v1473, %v1472
      %v1532 = vpack.c.b16 %v1475, %v1474
      %v1533 = vpack.c.b16 %v1477, %v1476
      %v1534 = vpack.c.b16 %v1479, %v1478
      %v1535 = vpack.c.b16 %v1481, %v1480
      %v1536 = vpack.c.b16 %v1483, %v1482
      %v1537 = vpack.c.b16 %v1485, %v1484
      %v1538 = vpack.c.b16 %v1487, %v1486
      %v1539 = vpack.c.b16 %v1489, %v1488
      %v1540 = vpack.c.b16 %v1491, %v1490
      %v1541 = vpack.c.b16 %v1493, %v1492
      %v1542 = vpack.c.b16 %v1495, %v1494
      %v1543 = vpack.c.b16 %v1497, %v1496
      %v1544 = vpack.c.b16 %v1499, %v1498
      %v1545 = vpack.c.b16 %v1501, %v1500
      %v1546 = vpack.c.b16 %v1503, %v1502
      %v1547 = vpack.c.b16 %v1505, %v1504
      %v1548 = vpack.c.b16 %v1507, %v1506
      %v1549 = vpack.c.b16 %v1509, %v1508
      %v1550 = vpack.c.b16 %v1511, %v1510
      %v1551 = vpack.c.b16 %v1513, %v1512
      %v1552 = vpack.c.b16 %v1515, %v1514
      %v1553 = vpack.c.b16 %v1517, %v1516
      %v1591 = vsel %vm796, %v1279, 0
      %v1594 = vsel %vm796, %v1284, 0
      %v1597 = vsel %vm796, %v1289, 0
      %v1600 = vsel %vm796, %v1294, 0
      %1602 = vmatprep.subr.bf16.mxu0 0
      %1603 = vmatpush1.bf16.msra.mxu0 %v1525
      %1604 = vmatprep.subr.bf16.mxu0 0
      %1605 = vmatpush1.bf16.msra.mxu0 %v1524
      %1606 = vmatprep.subr.bf16.mxu0 0
      %1607 = vmatpush1.bf16.msra.mxu0 %v1523
      %1608 = vmatprep.subr.bf16.mxu0 0
      %1609 = vmatpush1.bf16.msra.mxu0 %v1522
      %1610 = vmatprep.subr.bf16.mxu0 0
      %1611 = vmatpush1.bf16.msra.mxu0 %v1521
      %1612 = vmatprep.subr.bf16.mxu0 0
      %1613 = vmatpush1.bf16.msra.mxu0 %v1520
      %1614 = vmatprep.subr.bf16.mxu0 0
      %1615 = vmatpush1.bf16.msra.mxu0 %v1519
      %1616 = vmatprep.subr.bf16.mxu0 0
      %1617 = vmatpush1.bf16.msra.mxu0 %v1518
      %1618 = vmatprep.subr.bf16.mxu0 0
      %1619 = vmatpush2.bf16.msra.mxu0 %v1533
      %1620 = vmatprep.subr.bf16.mxu0 0
      %1621 = vmatpush2.bf16.msra.mxu0 %v1532
      %1622 = vmatprep.subr.bf16.mxu0 0
      %1623 = vmatpush2.bf16.msra.mxu0 %v1531
      %1624 = vmatprep.subr.bf16.mxu0 0
      %1625 = vmatpush2.bf16.msra.mxu0 %v1530
      %1626 = vmatprep.subr.bf16.mxu0 0
      %1627 = vmatpush2.bf16.msra.mxu0 %v1529
      %1628 = vmatprep.subr.bf16.mxu0 0
      %1629 = vmatpush2.bf16.msra.mxu0 %v1528
      %1630 = vmatprep.subr.bf16.mxu0 0
      %1631 = vmatpush2.bf16.msra.mxu0 %v1527
      %1632 = vmatprep.subr.bf16.mxu0 0
      %1633 = vmatpush2.bf16.msra.mxu0 %v1526
      %1634 = vmatprep.mubr.bf16.mxu0 %v1276
      %1635 = vmatmul.mubr.bf16.gmra.mxu0 %v1275
      %v1636 = vpop.f32.mrf.mxu0
      %v1637 = vadd.f32 %v1372, %v1636
      %v1638 = vpop.f32.mrf.mxu0
      %v1639 = vpop.f32.mrf.mxu0
      %v1640 = vadd.f32 %v1372, %v1639
      %v1641 = vpop.f32.mrf.mxu0
      %1642 = vmatprep.mubr.bf16.mxu0 %v1281
      %1643 = vmatmul.mubr.bf16.gmra.mxu0 %v1280
      %v1644 = vpop.f32.mrf.mxu0
      %v1645 = vadd.f32 %v1372, %v1644
      %v1646 = vpop.f32.mrf.mxu0
      %v1647 = vpop.f32.mrf.mxu0
      %v1648 = vadd.f32 %v1372, %v1647
      %v1649 = vpop.f32.mrf.mxu0
      %1650 = vmatprep.mubr.bf16.mxu0 %v1286
      %1651 = vmatmul.mubr.bf16.gmra.mxu0 %v1285
      %v1652 = vpop.f32.mrf.mxu0
      %v1653 = vadd.f32 %v1372, %v1652
      %v1654 = vpop.f32.mrf.mxu0
      %v1655 = vpop.f32.mrf.mxu0
      %v1656 = vadd.f32 %v1372, %v1655
      %v1657 = vpop.f32.mrf.mxu0
      %1658 = vmatprep.mubr.bf16.mxu0 %v1291
      %1659 = vmatmul.mubr.bf16.gmra.mxu0 %v1290
      %v1660 = vpop.f32.mrf.mxu0
      %v1661 = vadd.f32 %v1372, %v1660
      %v1662 = vpop.f32.mrf.mxu0
      %v1663 = vpop.f32.mrf.mxu0
      %v1664 = vpop.f32.mrf.mxu0
      %1665 = vdwg.mxu0
      %1666 = vmatprep.subr.bf16.mxu0 0
      %1667 = vmatpush1.bf16.msra.mxu0 %v1541
      %1668 = vmatprep.subr.bf16.mxu0 0
      %1669 = vmatpush1.bf16.msra.mxu0 %v1540
      %1670 = vmatprep.subr.bf16.mxu0 0
      %1671 = vmatpush1.bf16.msra.mxu0 %v1539
      %1672 = vmatprep.subr.bf16.mxu0 0
      %1673 = vmatpush1.bf16.msra.mxu0 %v1538
      %1674 = vmatprep.subr.bf16.mxu0 0
      %1675 = vmatpush1.bf16.msra.mxu0 %v1537
      %1676 = vmatprep.subr.bf16.mxu0 0
      %1677 = vmatpush1.bf16.msra.mxu0 %v1536
      %1678 = vmatprep.subr.bf16.mxu0 0
      %1679 = vmatpush1.bf16.msra.mxu0 %v1535
      %1680 = vmatprep.subr.bf16.mxu0 0
      %1681 = vmatpush1.bf16.msra.mxu0 %v1534
      %1682 = vmatprep.subr.bf16.mxu0 0
      %1683 = vmatpush2.bf16.msra.mxu0 %v1549
      %1684 = vmatprep.subr.bf16.mxu0 0
      %1685 = vmatpush2.bf16.msra.mxu0 %v1548
      %1686 = vmatprep.subr.bf16.mxu0 0
      %1687 = vmatpush2.bf16.msra.mxu0 %v1547
      %1688 = vmatprep.subr.bf16.mxu0 0
      %1689 = vmatpush2.bf16.msra.mxu0 %v1546
      %1690 = vmatprep.subr.bf16.mxu0 0
      %1691 = vmatpush2.bf16.msra.mxu0 %v1545
      %1692 = vmatprep.subr.bf16.mxu0 0
      %1693 = vmatpush2.bf16.msra.mxu0 %v1544
      %1694 = vmatprep.subr.bf16.mxu0 0
      %1695 = vmatpush2.bf16.msra.mxu0 %v1543
      %1696 = vmatprep.subr.bf16.mxu0 0
      %1697 = vmatpush2.bf16.msra.mxu0 %v1542
      %1698 = vmatprep.mubr.bf16.mxu0 %v1278
      %1699 = vmatmul.mubr.bf16.gmra.mxu0 %v1277
      %v1700 = vpop.f32.mrf.mxu0
      %v1701 = vadd.f32 %v1637, %v1700
      %v1702 = vpop.f32.mrf.mxu0
      %v1703 = vpop.f32.mrf.mxu0
      %v1704 = vadd.f32 %v1640, %v1703
      %v1705 = vpop.f32.mrf.mxu0
      %1706 = vmatprep.mubr.bf16.mxu0 %v1283
      %1707 = vmatmul.mubr.bf16.gmra.mxu0 %v1282
      %v1708 = vpop.f32.mrf.mxu0
      %v1709 = vadd.f32 %v1645, %v1708
      %v1710 = vpop.f32.mrf.mxu0
      %v1711 = vpop.f32.mrf.mxu0
      %v1712 = vadd.f32 %v1648, %v1711
      %v1713 = vpop.f32.mrf.mxu0
      %1714 = vmatprep.mubr.bf16.mxu0 %v1288
      %1715 = vmatmul.mubr.bf16.gmra.mxu0 %v1287
      %v1716 = vpop.f32.mrf.mxu0
      %v1717 = vadd.f32 %v1653, %v1716
      %v1718 = vpop.f32.mrf.mxu0
      %v1719 = vpop.f32.mrf.mxu0
      %v1720 = vadd.f32 %v1656, %v1719
      %v1721 = vpop.f32.mrf.mxu0
      %1722 = vmatprep.mubr.bf16.mxu0 %v1293
      %1723 = vmatmul.mubr.bf16.gmra.mxu0 %v1292
      %v1724 = vpop.f32.mrf.mxu0
      %v1725 = vadd.f32 %v1661, %v1724
      %v1726 = vpop.f32.mrf.mxu0
      %v1727 = vpop.f32.mrf.mxu0
      %v1728 = vpop.f32.mrf.mxu0
      %1729 = vdwg.mxu0
      %1730 = vmatprep.subr.bf16.mxu0 0
      %1731 = vmatpush1.bf16.msra.mxu0 0
      %1732 = vmatprep.subr.bf16.mxu0 0
      %1733 = vmatpush1.bf16.msra.mxu0 0
      %1734 = vmatprep.subr.bf16.mxu0 0
      %1735 = vmatpush1.bf16.msra.mxu0 0
      %1736 = vmatprep.subr.bf16.mxu0 0
      %1737 = vmatpush1.bf16.msra.mxu0 0
      %1738 = vmatprep.subr.bf16.mxu0 0
      %1739 = vmatpush1.bf16.msra.mxu0 %v1553
      %1740 = vmatprep.subr.bf16.mxu0 0
      %1741 = vmatpush1.bf16.msra.mxu0 %v1552
      %1742 = vmatprep.subr.bf16.mxu0 0
      %1743 = vmatpush1.bf16.msra.mxu0 %v1551
      %1744 = vmatprep.subr.bf16.mxu0 0
      %1745 = vmatpush1.bf16.msra.mxu0 %v1550
      %1746 = vmatprep.subr.bf16.mxu0 0
      %1747 = vmatpush2.bf16.msra.mxu0 0
      %1748 = vmatprep.subr.bf16.mxu0 0
      %1749 = vmatpush2.bf16.msra.mxu0 0
      %1750 = vmatprep.subr.bf16.mxu0 0
      %1751 = vmatpush2.bf16.msra.mxu0 0
      %1752 = vmatprep.subr.bf16.mxu0 0
      %1753 = vmatpush2.bf16.msra.mxu0 0
      %1754 = vmatprep.subr.bf16.mxu0 0
      %1755 = vmatpush2.bf16.msra.mxu0 0
      %1756 = vmatprep.subr.bf16.mxu0 0
      %1757 = vmatpush2.bf16.msra.mxu0 0
      %1758 = vmatprep.subr.bf16.mxu0 0
      %1759 = vmatpush2.bf16.msra.mxu0 0
      %1760 = vmatprep.subr.bf16.mxu0 0
      %1761 = vmatpush2.bf16.msra.mxu0 0
      %1762 = vmatprep.mubr.bf16.mxu0 0
      %1763 = vmatmul.mubr.bf16.gmra.mxu0 %v1591
      %v1764 = vpop.f32.mrf.mxu0
      %v1765 = vadd.f32 %v1701, %v1764
      %v1766 = vpop.f32.mrf.mxu0
      %v1767 = vpop.f32.mrf.mxu0
      %v1768 = vadd.f32 %v1704, %v1767
      %v1769 = vpop.f32.mrf.mxu0
      %1770 = vmatprep.mubr.bf16.mxu0 0
      %1771 = vmatmul.mubr.bf16.gmra.mxu0 %v1594
      %v1772 = vpop.f32.mrf.mxu0
      %v1773 = vadd.f32 %v1709, %v1772
      %v1774 = vpop.f32.mrf.mxu0
      %v1775 = vpop.f32.mrf.mxu0
      %v1776 = vadd.f32 %v1712, %v1775
      %v1777 = vpop.f32.mrf.mxu0
      %1778 = vmatprep.mubr.bf16.mxu0 0
      %1779 = vmatmul.mubr.bf16.gmra.mxu0 %v1597
      %v1780 = vpop.f32.mrf.mxu0
      %v1781 = vadd.f32 %v1717, %v1780
      %v1782 = vpop.f32.mrf.mxu0
      %v1783 = vpop.f32.mrf.mxu0
      %v1784 = vadd.f32 %v1720, %v1783
      %v1785 = vpop.f32.mrf.mxu0
      %1786 = vmatprep.mubr.bf16.mxu0 0
      %1787 = vmatmul.mubr.bf16.gmra.mxu0 %v1600
      %v1788 = vpop.f32.mrf.mxu0
      %v1789 = vadd.f32 %v1725, %v1788
      %v1790 = vpop.f32.mrf.mxu0
      %v1791 = vpop.f32.mrf.mxu0
      %v1792 = vpop.f32.mrf.mxu0
      %1793 = vdwg.mxu0
      %v1794 = vmax.f32 %v1765, 0.0
      %v1795 = vmax.f32 %v1768, 0.0
      %v1796 = vmax.f32 %v1773, 0.0
      %v1797 = vmax.f32 %v1776, 0.0
      %v1798 = vmax.f32 %v1781, 0.0
      %v1799 = vmax.f32 %v1784, 0.0
      %v1800 = vmax.f32 %v1789, 0.0
      %v1801 = vpack.c.bf16 %v1795, %v1794
      %v1802 = vpack.c.bf16 %v1797, %v1796
      %v1803 = vpack.c.bf16 %v1799, %v1798
      %v1804 = vpack.c.bf16 %v1800, %v1800
      %v1809 = vunpack.c.l.b16 %v1801
      %v1810 = vunpack.c.h.b16 %v1801
      %v1811 = vunpack.c.l.b16 %v1802
      %v1812 = vunpack.c.h.b16 %v1802
      %v1813 = vunpack.c.l.b16 %v1803
      %v1814 = vunpack.c.h.b16 %v1803
      %v1815 = vunpack.c.l.b16 %v1804
      %v1816 = vpack.c.b16 %v1809, %v1809
      %v1817 = vpack.c.b16 %v1810, %v1810
      %v1818 = vpack.c.b16 %v1811, %v1811
      %v1819 = vpack.c.b16 %v1812, %v1812
      %v1820 = vpack.c.b16 %v1813, %v1813
      %v1821 = vpack.c.b16 %v1814, %v1814
      %v1822 = vpack.c.b16 %v1815, %v1815
      %1830 = vst.msk [vmem:[%s224] sm:$0xf] %vm983, %v1816
      %1831 = vst.msk [vmem:[%s224 + $0x4] sm:$0xf] %vm983, %v1817
      %1832 = vst.msk [vmem:[%s224 + $0x8] sm:$0xf] %vm983, %v1818
      %1833 = vst.msk [vmem:[%s224 + $0xc] sm:$0xf] %vm983, %v1819
      %1834 = vst.msk [vmem:[%s224 + $0x10] sm:$0xf] %vm983, %v1820
      %1835 = vst.msk [vmem:[%s224 + $0x14] sm:$0xf] %vm983, %v1821
      %vm1836 = vcmask 516096
      %vm1837 = vsmask.f32 256
      %vm1838 = vmand %vm1836, %vm1837
      %v1839 = vld [vmem:[%s224 + $0x18] sm:$0x1]
      %v1840 = vsel %vm1838, %v1822, %v1839
      %1841 = vst [vmem:[%s224 + $0x18] sm:$0x1] %v1840
      %p1842 = scmp.lt.s32.totalorder %s16, 1
      %s1843 = scalar_select %p1842, %s16, 1
      %s1844 = smul.addr %s1843, 7
      %s1845 = smul.addr %s1844, 4
      %s1846 = scalar_lea.vmem %s5, %s1845
      // Predicated region
      $region41: #{critic_forward.4} parent=39 // pred_check
        %p1847 = pneg %p144
      $region42: #{critic_forward.4} parent=39 // pred_check_branch
        %1849 = sbr.rel (%p1847) target = $region44
      $region43: #{critic_forward.4} parent=39 // pred_region
        _
      $region44: #{critic_forward.4} parent=39 // pred_fallthru
        _
    $region40: #{critic_forward.4} parent=5 // pred_fallthru
      _
    %p1850 = scmp.le.s32.totalorder 2, %s11
    // Predicated region
    $region45: #{critic_forward.4} parent=5 // pred_check
      %p1851 = pneg %p1850
    $region46: #{critic_forward.4} parent=5 // pred_check_branch
      %1853 = sbr.rel (%p1851) target = $region48
    $region47: #{critic_forward.4} parent=5 // pred_region
      %s1854 = ssub.s32 %s11, 2
      // Predicated region
      $region49: #{critic_forward.4} parent=47 // pred_check
        %p1855 = pneg %p150
      $region50: #{critic_forward.4} parent=47 // pred_check_branch
        %1857 = sbr.rel (%p1855) target = $region52
      $region51: #{critic_forward.4} parent=47 // pred_region
        %p1858 = scmp.lt.s32.totalorder %s17, 1
        %s1859 = scalar_select %p1858, %s17, 1
        %s1860 = smul.addr %s1859, 7
        %s1861 = smul.addr %s1860, 4
        %s1862 = scalar_lea.vmem %s5, %s1861
      $region52: #{critic_forward.4} parent=47 // pred_fallthru
        _
    $region48: #{critic_forward.4} parent=5 // pred_fallthru
      _
  $region6: #{critic_forward.4} parent=0 // loop_footer
    %s15 = sadd.s32 1, %s11
  $region7: #{critic_forward.4} parent=0 // loop_footer_branch
    %10 = sbr.rel target = $region3
  $region8: #{critic_forward.4} parent=0 // loop_exit
    _

// kernel: critic_forward.5
$region0: #{critic_forward.5}
  #allocation0 [shape = 'u32[]', space=smem, size = 0x4, offset = 0x4, fixed_abs, tag = 'smem constant byte address 0x4 - core index']
  #allocation1 [shape = 'u32[144,128]{1,0:T(1,128)}', space=vmem, size = 0x12000, scoped, tag = 'internal scratch']
  %s0 = inlined_call_operand.vmem [shape: bf16[16,3136], index: 0, kind: input, shape index: {}]
  %s1 = inlined_call_operand.vmem [shape: bf16[3136,512], index: 1, kind: input, shape index: {}]
  %s2 = inlined_call_operand.vmem [shape: f32[1,512], index: 2, kind: input, shape index: {}]
  %s3 = inlined_call_operand.vmem [shape: bf16[512,6], index: 3, kind: input, shape index: {}]
  %s4 = inlined_call_operand.vmem [shape: f32[1,6], index: 4, kind: input, shape index: {}]
  %s5 = inlined_call_operand.vmem [shape: f32[16,6], index: 5, kind: output, shape index: {}]
  %s6 = sld [smem:[#allocation0]]
  $region30: #{critic_forward.5} parent=0
    _
  %s8 = ssub.s32 1, %s6
  %s9 = scalar_select 0, %s8, %s6
  // Predicated region
  $region2: #{critic_forward.5} parent=0 // pred_check
    _
  $region3: #{critic_forward.5} parent=0 // pred_check_branch
    %11 = sbr.rel (0) target = $region5
  $region4: #{critic_forward.5} parent=0 // pred_region
    _
  $region5: #{critic_forward.5} parent=0 // pred_fallthru
    _
  // Predicated region
  $region6: #{critic_forward.5} parent=0 // pred_check
    _
  $region7: #{critic_forward.5} parent=0 // pred_check_branch
    %13 = sbr.rel (0) target = $region9
  $region8: #{critic_forward.5} parent=0 // pred_region
    _
  $region9: #{critic_forward.5} parent=0 // pred_fallthru
    _
  // Predicated region
  $region10: #{critic_forward.5} parent=0 // pred_check
    _
  $region11: #{critic_forward.5} parent=0 // pred_check_branch
    %15 = sbr.rel (0) target = $region13
  $region12: #{critic_forward.5} parent=0 // pred_region
    _
  $region13: #{critic_forward.5} parent=0 // pred_fallthru
    _
  // Predicated region
  $region14: #{critic_forward.5} parent=0 // pred_check
    _
  $region15: #{critic_forward.5} parent=0 // pred_check_branch
    %17 = sbr.rel (0) target = $region17
  $region16: #{critic_forward.5} parent=0 // pred_region
    _
  $region17: #{critic_forward.5} parent=0 // pred_fallthru
    _
  // Predicated region
  $region18: #{critic_forward.5} parent=0 // pred_check
    _
  $region19: #{critic_forward.5} parent=0 // pred_check_branch
    %19 = sbr.rel (0) target = $region21
  $region20: #{critic_forward.5} parent=0 // pred_region
    _
  $region21: #{critic_forward.5} parent=0 // pred_fallthru
    _
  %v21 = vld [vmem:[%s0] sm:$0xff]
  %v22 = vld [vmem:[%s0 + $0x8] sm:$0xff]
  %v23 = vld [vmem:[%s0 + $0x10] sm:$0xff]
  %v24 = vld [vmem:[%s0 + $0x18] sm:$0xff]
  %v25 = vld [vmem:[%s0 + $0x20] sm:$0xff]
  %v26 = vld [vmem:[%s0 + $0x28] sm:$0xff]
  %v27 = vld [vmem:[%s0 + $0x30] sm:$0xff]
  %v28 = vld [vmem:[%s0 + $0x38] sm:$0xff]
  %v29 = vld [vmem:[%s0 + $0x40] sm:$0xff]
  %v30 = vld [vmem:[%s0 + $0x48] sm:$0xff]
  %v31 = vld [vmem:[%s0 + $0x50] sm:$0xff]
  %v32 = vld [vmem:[%s0 + $0x58] sm:$0xff]
  %v33 = vld [vmem:[%s0 + $0x60] sm:$0xf]
  %v34 = vld [vmem:[%s0 + $0x64] sm:$0xff]
  %v35 = vld [vmem:[%s0 + $0x6c] sm:$0xff]
  %v36 = vld [vmem:[%s0 + $0x74] sm:$0xff]
  %v37 = vld [vmem:[%s0 + $0x7c] sm:$0xff]
  %v38 = vld [vmem:[%s0 + $0x84] sm:$0xff]
  %v39 = vld [vmem:[%s0 + $0x8c] sm:$0xff]
  %v40 = vld [vmem:[%s0 + $0x94] sm:$0xff]
  %v41 = vld [vmem:[%s0 + $0x9c] sm:$0xff]
  %v42 = vld [vmem:[%s0 + $0xa4] sm:$0xff]
  %v43 = vld [vmem:[%s0 + $0xac] sm:$0xff]
  %v44 = vld [vmem:[%s0 + $0xb4] sm:$0xff]
  %v45 = vld [vmem:[%s0 + $0xbc] sm:$0xff]
  %v46 = vld [vmem:[%s0 + $0xc4] sm:$0xf]
  %v47 = vld [vmem:[%s1] sm:$0xff]
  %v48 = vld [vmem:[%s1 + $0x8] sm:$0xff]
  %v49 = vld [vmem:[%s1 + $0x10] sm:$0xff]
  %v50 = vld [vmem:[%s1 + $0x18] sm:$0xff]
  %v51 = vld [vmem:[%s1 + $0x20] sm:$0xff]
  %v52 = vld [vmem:[%s1 + $0x28] sm:$0xff]
  %v53 = vld [vmem:[%s1 + $0x30] sm:$0xff]
  %v54 = vld [vmem:[%s1 + $0x38] sm:$0xff]
  %v55 = vld [vmem:[%s1 + $0x40] sm:$0xff]
  %v56 = vld [vmem:[%s1 + $0x48] sm:$0xff]
  %v57 = vld [vmem:[%s1 + $0x50] sm:$0xff]
  %v58 = vld [vmem:[%s1 + $0x58] sm:$0xff]
  %v59 = vld [vmem:[%s1 + $0x60] sm:$0xff]
  %v60 = vld [vmem:[%s1 + $0x68] sm:$0xff]
  %v61 = vld [vmem:[%s1 + $0x70] sm:$0xff]
  %v62 = vld [vmem:[%s1 + $0x78] sm:$0xff]
  %v63 = vld [vmem:[%s1 + $0x80] sm:$0xff]
  %v64 = vld [vmem:[%s1 + $0x88] sm:$0xff]
  %v65 = vld [vmem:[%s1 + $0x90] sm:$0xff]
  %v66 = vld [vmem:[%s1 + $0x98] sm:$0xff]
  %v67 = vld [vmem:[%s1 + $0xa0] sm:$0xff]
  %v68 = vld [vmem:[%s1 + $0xa8] sm:$0xff]
  %v69 = vld [vmem:[%s1 + $0xb0] sm:$0xff]
  %v70 = vld [vmem:[%s1 + $0xb8] sm:$0xff]
  %v71 = vld [vmem:[%s1 + $0xc0] sm:$0xff]
  %v72 = vld [vmem:[%s1 + $0xc8] sm:$0xff]
  %v73 = vld [vmem:[%s1 + $0xd0] sm:$0xff]
  %v74 = vld [vmem:[%s1 + $0xd8] sm:$0xff]
  %v75 = vld [vmem:[%s1 + $0xe0] sm:$0xff]
  %v76 = vld [vmem:[%s1 + $0xe8] sm:$0xff]
  %v77 = vld [vmem:[%s1 + $0xf0] sm:$0xff]
  %v78 = vld [vmem:[%s1 + $0xf8] sm:$0xff]
  %v79 = vld [vmem:[%s1 + $0x100] sm:$0xff]
  %v80 = vld [vmem:[%s1 + $0x108] sm:$0xff]
  %v81 = vld [vmem:[%s1 + $0x110] sm:$0xff]
  %v82 = vld [vmem:[%s1 + $0x118] sm:$0xff]
  %v83 = vld [vmem:[%s1 + $0x120] sm:$0xff]
  %v84 = vld [vmem:[%s1 + $0x128] sm:$0xff]
  %v85 = vld [vmem:[%s1 + $0x130] sm:$0xff]
  %v86 = vld [vmem:[%s1 + $0x138] sm:$0xff]
  %v87 = vld [vmem:[%s1 + $0x140] sm:$0xff]
  %v88 = vld [vmem:[%s1 + $0x148] sm:$0xff]
  %v89 = vld [vmem:[%s1 + $0x150] sm:$0xff]
  %v90 = vld [vmem:[%s1 + $0x158] sm:$0xff]
  %v91 = vld [vmem:[%s1 + $0x160] sm:$0xff]
  %v92 = vld [vmem:[%s1 + $0x168] sm:$0xff]
  %v93 = vld [vmem:[%s1 + $0x170] sm:$0xff]
  %v94 = vld [vmem:[%s1 + $0x178] sm:$0xff]
  %v95 = vld [vmem:[%s1 + $0x180] sm:$0xff]
  %v96 = vld [vmem:[%s1 + $0x188] sm:$0xff]
  %v97 = vld [vmem:[%s1 + $0x190] sm:$0xff]
  %v98 = vld [vmem:[%s1 + $0x198] sm:$0xff]
  %v99 = vld [vmem:[%s1 + $0x1a0] sm:$0xff]
  %v100 = vld [vmem:[%s1 + $0x1a8] sm:$0xff]
  %v101 = vld [vmem:[%s1 + $0x1b0] sm:$0xff]
  %v102 = vld [vmem:[%s1 + $0x1b8] sm:$0xff]
  %v103 = vld [vmem:[%s1 + $0x1c0] sm:$0xff]
  %v104 = vld [vmem:[%s1 + $0x1c8] sm:$0xff]
  %v105 = vld [vmem:[%s1 + $0x1d0] sm:$0xff]
  %v106 = vld [vmem:[%s1 + $0x1d8] sm:$0xff]
  %v107 = vld [vmem:[%s1 + $0x1e0] sm:$0xff]
  %v108 = vld [vmem:[%s1 + $0x1e8] sm:$0xff]
  %v109 = vld [vmem:[%s1 + $0x1f0] sm:$0xff]
  %v110 = vld [vmem:[%s1 + $0x1f8] sm:$0xff]
  %v111 = vld [vmem:[%s1 + $0x200] sm:$0xff]
  %v112 = vld [vmem:[%s1 + $0x208] sm:$0xff]
  %v113 = vld [vmem:[%s1 + $0x210] sm:$0xff]
  %v114 = vld [vmem:[%s1 + $0x218] sm:$0xff]
  %v115 = vld [vmem:[%s1 + $0x220] sm:$0xff]
  %v116 = vld [vmem:[%s1 + $0x228] sm:$0xff]
  %v117 = vld [vmem:[%s1 + $0x230] sm:$0xff]
  %v118 = vld [vmem:[%s1 + $0x238] sm:$0xff]
  %v119 = vld [vmem:[%s1 + $0x240] sm:$0xff]
  %v120 = vld [vmem:[%s1 + $0x248] sm:$0xff]
  %v121 = vld [vmem:[%s1 + $0x250] sm:$0xff]
  %v122 = vld [vmem:[%s1 + $0x258] sm:$0xff]
  %v123 = vld [vmem:[%s1 + $0x260] sm:$0xff]
  %v124 = vld [vmem:[%s1 + $0x268] sm:$0xff]
  %v125 = vld [vmem:[%s1 + $0x270] sm:$0xff]
  %v126 = vld [vmem:[%s1 + $0x278] sm:$0xff]
  %v127 = vld [vmem:[%s1 + $0x280] sm:$0xff]
  %v128 = vld [vmem:[%s1 + $0x288] sm:$0xff]
  %v129 = vld [vmem:[%s1 + $0x290] sm:$0xff]
  %v130 = vld [vmem:[%s1 + $0x298] sm:$0xff]
  %v131 = vld [vmem:[%s1 + $0x2a0] sm:$0xff]
  %v132 = vld [vmem:[%s1 + $0x2a8] sm:$0xff]
  %v133 = vld [vmem:[%s1 + $0x2b0] sm:$0xff]
  %v134 = vld [vmem:[%s1 + $0x2b8] sm:$0xff]
  %v135 = vld [vmem:[%s1 + $0x2c0] sm:$0xff]
  %v136 = vld [vmem:[%s1 + $0x2c8] sm:$0xff]
  %v137 = vld [vmem:[%s1 + $0x2d0] sm:$0xff]
  %v138 = vld [vmem:[%s1 + $0x2d8] sm:$0xff]
  %v139 = vld [vmem:[%s1 + $0x2e0] sm:$0xff]
  %v140 = vld [vmem:[%s1 + $0x2e8] sm:$0xff]
  %v141 = vld [vmem:[%s1 + $0x2f0] sm:$0xff]
  %v142 = vld [vmem:[%s1 + $0x2f8] sm:$0xff]
  %v143 = vld [vmem:[%s1 + $0x300] sm:$0xff]
  %v144 = vld [vmem:[%s1 + $0x308] sm:$0xff]
  %v145 = vld [vmem:[%s1 + $0x310] sm:$0xff]
  %v146 = vld [vmem:[%s1 + $0x318] sm:$0xff]
  %v147 = vld [vmem:[%s1 + $0x320] sm:$0xff]
  %v148 = vld [vmem:[%s1 + $0x328] sm:$0xff]
  %v149 = vld [vmem:[%s1 + $0x330] sm:$0xff]
  %v150 = vld [vmem:[%s1 + $0x338] sm:$0xff]
  %v151 = vld [vmem:[%s1 + $0x340] sm:$0xff]
  %v152 = vld [vmem:[%s1 + $0x348] sm:$0xff]
  %v153 = vld [vmem:[%s1 + $0x350] sm:$0xff]
  %v154 = vld [vmem:[%s1 + $0x358] sm:$0xff]
  %v155 = vld [vmem:[%s1 + $0x360] sm:$0xff]
  %v156 = vld [vmem:[%s1 + $0x368] sm:$0xff]
  %v157 = vld [vmem:[%s1 + $0x370] sm:$0xff]
  %v158 = vld [vmem:[%s1 + $0x378] sm:$0xff]
  %v159 = vld [vmem:[%s1 + $0x380] sm:$0xff]
  %v160 = vld [vmem:[%s1 + $0x388] sm:$0xff]
  %v161 = vld [vmem:[%s1 + $0x390] sm:$0xff]
  %v162 = vld [vmem:[%s1 + $0x398] sm:$0xff]
  %v163 = vld [vmem:[%s1 + $0x3a0] sm:$0xff]
  %v164 = vld [vmem:[%s1 + $0x3a8] sm:$0xff]
  %v165 = vld [vmem:[%s1 + $0x3b0] sm:$0xff]
  %v166 = vld [vmem:[%s1 + $0x3b8] sm:$0xff]
  %v167 = vld [vmem:[%s1 + $0x3c0] sm:$0xff]
  %v168 = vld [vmem:[%s1 + $0x3c8] sm:$0xff]
  %v169 = vld [vmem:[%s1 + $0x3d0] sm:$0xff]
  %v170 = vld [vmem:[%s1 + $0x3d8] sm:$0xff]
  %v171 = vld [vmem:[%s1 + $0x3e0] sm:$0xff]
  %v172 = vld [vmem:[%s1 + $0x3e8] sm:$0xff]
  %v173 = vld [vmem:[%s1 + $0x3f0] sm:$0xff]
  %v174 = vld [vmem:[%s1 + $0x3f8] sm:$0xff]
  %v175 = vld [vmem:[%s1 + $0x400] sm:$0xff]
  %v176 = vld [vmem:[%s1 + $0x408] sm:$0xff]
  %v177 = vld [vmem:[%s1 + $0x410] sm:$0xff]
  %v178 = vld [vmem:[%s1 + $0x418] sm:$0xff]
  %v179 = vld [vmem:[%s1 + $0x420] sm:$0xff]
  %v180 = vld [vmem:[%s1 + $0x428] sm:$0xff]
  %v181 = vld [vmem:[%s1 + $0x430] sm:$0xff]
  %v182 = vld [vmem:[%s1 + $0x438] sm:$0xff]
  %v183 = vld [vmem:[%s1 + $0x440] sm:$0xff]
  %v184 = vld [vmem:[%s1 + $0x448] sm:$0xff]
  %v185 = vld [vmem:[%s1 + $0x450] sm:$0xff]
  %v186 = vld [vmem:[%s1 + $0x458] sm:$0xff]
  %v187 = vld [vmem:[%s1 + $0x460] sm:$0xff]
  %v188 = vld [vmem:[%s1 + $0x468] sm:$0xff]
  %v189 = vld [vmem:[%s1 + $0x470] sm:$0xff]
  %v190 = vld [vmem:[%s1 + $0x478] sm:$0xff]
  %v191 = vld [vmem:[%s1 + $0x480] sm:$0xff]
  %v192 = vld [vmem:[%s1 + $0x488] sm:$0xff]
  %v193 = vld [vmem:[%s1 + $0x490] sm:$0xff]
  %v194 = vld [vmem:[%s1 + $0x498] sm:$0xff]
  %v195 = vld [vmem:[%s1 + $0x4a0] sm:$0xff]
  %v196 = vld [vmem:[%s1 + $0x4a8] sm:$0xff]
  %v197 = vld [vmem:[%s1 + $0x4b0] sm:$0xff]
  %v198 = vld [vmem:[%s1 + $0x4b8] sm:$0xff]
  %v199 = vld [vmem:[%s1 + $0x4c0] sm:$0xff]
  %v200 = vld [vmem:[%s1 + $0x4c8] sm:$0xff]
  %v201 = vld [vmem:[%s1 + $0x4d0] sm:$0xff]
  %v202 = vld [vmem:[%s1 + $0x4d8] sm:$0xff]
  %v203 = vld [vmem:[%s1 + $0x4e0] sm:$0xff]
  %v204 = vld [vmem:[%s1 + $0x4e8] sm:$0xff]
  %v205 = vld [vmem:[%s1 + $0x4f0] sm:$0xff]
  %v206 = vld [vmem:[%s1 + $0x4f8] sm:$0xff]
  %v207 = vld [vmem:[%s1 + $0x500] sm:$0xff]
  %v208 = vld [vmem:[%s1 + $0x508] sm:$0xff]
  %v209 = vld [vmem:[%s1 + $0x510] sm:$0xff]
  %v210 = vld [vmem:[%s1 + $0x518] sm:$0xff]
  %v211 = vld [vmem:[%s1 + $0x520] sm:$0xff]
  %v212 = vld [vmem:[%s1 + $0x528] sm:$0xff]
  %v213 = vld [vmem:[%s1 + $0x530] sm:$0xff]
  %v214 = vld [vmem:[%s1 + $0x538] sm:$0xff]
  %v215 = vld [vmem:[%s1 + $0x540] sm:$0xff]
  %v216 = vld [vmem:[%s1 + $0x548] sm:$0xff]
  %v217 = vld [vmem:[%s1 + $0x550] sm:$0xff]
  %v218 = vld [vmem:[%s1 + $0x558] sm:$0xff]
  %v219 = vld [vmem:[%s1 + $0x560] sm:$0xff]
  %v220 = vld [vmem:[%s1 + $0x568] sm:$0xff]
  %v221 = vld [vmem:[%s1 + $0x570] sm:$0xff]
  %v222 = vld [vmem:[%s1 + $0x578] sm:$0xff]
  %v223 = vld [vmem:[%s1 + $0x580] sm:$0xff]
  %v224 = vld [vmem:[%s1 + $0x588] sm:$0xff]
  %v225 = vld [vmem:[%s1 + $0x590] sm:$0xff]
  %v226 = vld [vmem:[%s1 + $0x598] sm:$0xff]
  %v227 = vld [vmem:[%s1 + $0x5a0] sm:$0xff]
  %v228 = vld [vmem:[%s1 + $0x5a8] sm:$0xff]
  %v229 = vld [vmem:[%s1 + $0x5b0] sm:$0xff]
  %v230 = vld [vmem:[%s1 + $0x5b8] sm:$0xff]
  %v231 = vld [vmem:[%s1 + $0x5c0] sm:$0xff]
  %v232 = vld [vmem:[%s1 + $0x5c8] sm:$0xff]
  %v233 = vld [vmem:[%s1 + $0x5d0] sm:$0xff]
  %v234 = vld [vmem:[%s1 + $0x5d8] sm:$0xff]
  %v235 = vld [vmem:[%s1 + $0x5e0] sm:$0xff]
  %v236 = vld [vmem:[%s1 + $0x5e8] sm:$0xff]
  %v237 = vld [vmem:[%s1 + $0x5f0] sm:$0xff]
  %v238 = vld [vmem:[%s1 + $0x5f8] sm:$0xff]
  %v239 = vld [vmem:[%s1 + $0x600] sm:$0xff]
  %v240 = vld [vmem:[%s1 + $0x608] sm:$0xff]
  %v241 = vld [vmem:[%s1 + $0x610] sm:$0xff]
  %v242 = vld [vmem:[%s1 + $0x618] sm:$0xff]
  %v243 = vld [vmem:[%s1 + $0x620] sm:$0xff]
  %v244 = vld [vmem:[%s1 + $0x628] sm:$0xff]
  %v245 = vld [vmem:[%s1 + $0x630] sm:$0xff]
  %v246 = vld [vmem:[%s1 + $0x638] sm:$0xff]
  %v247 = vld [vmem:[%s1 + $0x640] sm:$0xff]
  %v248 = vld [vmem:[%s1 + $0x648] sm:$0xff]
  %v249 = vld [vmem:[%s1 + $0x650] sm:$0xff]
  %v250 = vld [vmem:[%s1 + $0x658] sm:$0xff]
  %v251 = vld [vmem:[%s1 + $0x660] sm:$0xff]
  %v252 = vld [vmem:[%s1 + $0x668] sm:$0xff]
  %v253 = vld [vmem:[%s1 + $0x670] sm:$0xff]
  %v254 = vld [vmem:[%s1 + $0x678] sm:$0xff]
  %v255 = vld [vmem:[%s1 + $0x680] sm:$0xff]
  %v256 = vld [vmem:[%s1 + $0x688] sm:$0xff]
  %v257 = vld [vmem:[%s1 + $0x690] sm:$0xff]
  %v258 = vld [vmem:[%s1 + $0x698] sm:$0xff]
  %v259 = vld [vmem:[%s1 + $0x6a0] sm:$0xff]
  %v260 = vld [vmem:[%s1 + $0x6a8] sm:$0xff]
  %v261 = vld [vmem:[%s1 + $0x6b0] sm:$0xff]
  %v262 = vld [vmem:[%s1 + $0x6b8] sm:$0xff]
  %v263 = vld [vmem:[%s1 + $0x6c0] sm:$0xff]
  %v264 = vld [vmem:[%s1 + $0x6c8] sm:$0xff]
  %v265 = vld [vmem:[%s1 + $0x6d0] sm:$0xff]
  %v266 = vld [vmem:[%s1 + $0x6d8] sm:$0xff]
  %v267 = vld [vmem:[%s1 + $0x6e0] sm:$0xff]
  %v268 = vld [vmem:[%s1 + $0x6e8] sm:$0xff]
  %v269 = vld [vmem:[%s1 + $0x6f0] sm:$0xff]
  %v270 = vld [vmem:[%s1 + $0x6f8] sm:$0xff]
  %v271 = vld [vmem:[%s1 + $0x700] sm:$0xff]
  %v272 = vld [vmem:[%s1 + $0x708] sm:$0xff]
  %v273 = vld [vmem:[%s1 + $0x710] sm:$0xff]
  %v274 = vld [vmem:[%s1 + $0x718] sm:$0xff]
  %v275 = vld [vmem:[%s1 + $0x720] sm:$0xff]
  %v276 = vld [vmem:[%s1 + $0x728] sm:$0xff]
  %v277 = vld [vmem:[%s1 + $0x730] sm:$0xff]
  %v278 = vld [vmem:[%s1 + $0x738] sm:$0xff]
  %v279 = vld [vmem:[%s1 + $0x740] sm:$0xff]
  %v280 = vld [vmem:[%s1 + $0x748] sm:$0xff]
  %v281 = vld [vmem:[%s1 + $0x750] sm:$0xff]
  %v282 = vld [vmem:[%s1 + $0x758] sm:$0xff]
  %v283 = vld [vmem:[%s1 + $0x760] sm:$0xff]
  %v284 = vld [vmem:[%s1 + $0x768] sm:$0xff]
  %v285 = vld [vmem:[%s1 + $0x770] sm:$0xff]
  %v286 = vld [vmem:[%s1 + $0x778] sm:$0xff]
  %v287 = vld [vmem:[%s1 + $0x780] sm:$0xff]
  %v288 = vld [vmem:[%s1 + $0x788] sm:$0xff]
  %v289 = vld [vmem:[%s1 + $0x790] sm:$0xff]
  %v290 = vld [vmem:[%s1 + $0x798] sm:$0xff]
  %v291 = vld [vmem:[%s1 + $0x7a0] sm:$0xff]
  %v292 = vld [vmem:[%s1 + $0x7a8] sm:$0xff]
  %v293 = vld [vmem:[%s1 + $0x7b0] sm:$0xff]
  %v294 = vld [vmem:[%s1 + $0x7b8] sm:$0xff]
  %v295 = vld [vmem:[%s1 + $0x7c0] sm:$0xff]
  %v296 = vld [vmem:[%s1 + $0x7c8] sm:$0xff]
  %v297 = vld [vmem:[%s1 + $0x7d0] sm:$0xff]
  %v298 = vld [vmem:[%s1 + $0x7d8] sm:$0xff]
  %v299 = vld [vmem:[%s1 + $0x7e0] sm:$0xff]
  %v300 = vld [vmem:[%s1 + $0x7e8] sm:$0xff]
  %v301 = vld [vmem:[%s1 + $0x7f0] sm:$0xff]
  %v302 = vld [vmem:[%s1 + $0x7f8] sm:$0xff]
  %v303 = vld [vmem:[%s1 + $0x800] sm:$0xff]
  %v304 = vld [vmem:[%s1 + $0x808] sm:$0xff]
  %v305 = vld [vmem:[%s1 + $0x810] sm:$0xff]
  %v306 = vld [vmem:[%s1 + $0x818] sm:$0xff]
  %v307 = vld [vmem:[%s1 + $0x820] sm:$0xff]
  %v308 = vld [vmem:[%s1 + $0x828] sm:$0xff]
  %v309 = vld [vmem:[%s1 + $0x830] sm:$0xff]
  %v310 = vld [vmem:[%s1 + $0x838] sm:$0xff]
  %v311 = vld [vmem:[%s1 + $0x840] sm:$0xff]
  %v312 = vld [vmem:[%s1 + $0x848] sm:$0xff]
  %v313 = vld [vmem:[%s1 + $0x850] sm:$0xff]
  %v314 = vld [vmem:[%s1 + $0x858] sm:$0xff]
  %v315 = vld [vmem:[%s1 + $0x860] sm:$0xff]
  %v316 = vld [vmem:[%s1 + $0x868] sm:$0xff]
  %v317 = vld [vmem:[%s1 + $0x870] sm:$0xff]
  %v318 = vld [vmem:[%s1 + $0x878] sm:$0xff]
  %v319 = vld [vmem:[%s1 + $0x880] sm:$0xff]
  %v320 = vld [vmem:[%s1 + $0x888] sm:$0xff]
  %v321 = vld [vmem:[%s1 + $0x890] sm:$0xff]
  %v322 = vld [vmem:[%s1 + $0x898] sm:$0xff]
  %v323 = vld [vmem:[%s1 + $0x8a0] sm:$0xff]
  %v324 = vld [vmem:[%s1 + $0x8a8] sm:$0xff]
  %v325 = vld [vmem:[%s1 + $0x8b0] sm:$0xff]
  %v326 = vld [vmem:[%s1 + $0x8b8] sm:$0xff]
  %v327 = vld [vmem:[%s1 + $0x8c0] sm:$0xff]
  %v328 = vld [vmem:[%s1 + $0x8c8] sm:$0xff]
  %v329 = vld [vmem:[%s1 + $0x8d0] sm:$0xff]
  %v330 = vld [vmem:[%s1 + $0x8d8] sm:$0xff]
  %v331 = vld [vmem:[%s1 + $0x8e0] sm:$0xff]
  %v332 = vld [vmem:[%s1 + $0x8e8] sm:$0xff]
  %v333 = vld [vmem:[%s1 + $0x8f0] sm:$0xff]
  %v334 = vld [vmem:[%s1 + $0x8f8] sm:$0xff]
  %v335 = vld [vmem:[%s1 + $0x900] sm:$0xff]
  %v336 = vld [vmem:[%s1 + $0x908] sm:$0xff]
  %v337 = vld [vmem:[%s1 + $0x910] sm:$0xff]
  %v338 = vld [vmem:[%s1 + $0x918] sm:$0xff]
  %v339 = vld [vmem:[%s1 + $0x920] sm:$0xff]
  %v340 = vld [vmem:[%s1 + $0x928] sm:$0xff]
  %v341 = vld [vmem:[%s1 + $0x930] sm:$0xff]
  %v342 = vld [vmem:[%s1 + $0x938] sm:$0xff]
  %v343 = vld [vmem:[%s1 + $0x940] sm:$0xff]
  %v344 = vld [vmem:[%s1 + $0x948] sm:$0xff]
  %v345 = vld [vmem:[%s1 + $0x950] sm:$0xff]
  %v346 = vld [vmem:[%s1 + $0x958] sm:$0xff]
  %v347 = vld [vmem:[%s1 + $0x960] sm:$0xff]
  %v348 = vld [vmem:[%s1 + $0x968] sm:$0xff]
  %v349 = vld [vmem:[%s1 + $0x970] sm:$0xff]
  %v350 = vld [vmem:[%s1 + $0x978] sm:$0xff]
  %v351 = vld [vmem:[%s1 + $0x980] sm:$0xff]
  %v352 = vld [vmem:[%s1 + $0x988] sm:$0xff]
  %v353 = vld [vmem:[%s1 + $0x990] sm:$0xff]
  %v354 = vld [vmem:[%s1 + $0x998] sm:$0xff]
  %v355 = vld [vmem:[%s1 + $0x9a0] sm:$0xff]
  %v356 = vld [vmem:[%s1 + $0x9a8] sm:$0xff]
  %v357 = vld [vmem:[%s1 + $0x9b0] sm:$0xff]
  %v358 = vld [vmem:[%s1 + $0x9b8] sm:$0xff]
  %v359 = vld [vmem:[%s1 + $0x9c0] sm:$0xff]
  %v360 = vld [vmem:[%s1 + $0x9c8] sm:$0xff]
  %v361 = vld [vmem:[%s1 + $0x9d0] sm:$0xff]
  %v362 = vld [vmem:[%s1 + $0x9d8] sm:$0xff]
  %v363 = vld [vmem:[%s1 + $0x9e0] sm:$0xff]
  %v364 = vld [vmem:[%s1 + $0x9e8] sm:$0xff]
  %v365 = vld [vmem:[%s1 + $0x9f0] sm:$0xff]
  %v366 = vld [vmem:[%s1 + $0x9f8] sm:$0xff]
  %v367 = vld [vmem:[%s1 + $0xa00] sm:$0xff]
  %v368 = vld [vmem:[%s1 + $0xa08] sm:$0xff]
  %v369 = vld [vmem:[%s1 + $0xa10] sm:$0xff]
  %v370 = vld [vmem:[%s1 + $0xa18] sm:$0xff]
  %v371 = vld [vmem:[%s1 + $0xa20] sm:$0xff]
  %v372 = vld [vmem:[%s1 + $0xa28] sm:$0xff]
  %v373 = vld [vmem:[%s1 + $0xa30] sm:$0xff]
  %v374 = vld [vmem:[%s1 + $0xa38] sm:$0xff]
  %v375 = vld [vmem:[%s1 + $0xa40] sm:$0xff]
  %v376 = vld [vmem:[%s1 + $0xa48] sm:$0xff]
  %v377 = vld [vmem:[%s1 + $0xa50] sm:$0xff]
  %v378 = vld [vmem:[%s1 + $0xa58] sm:$0xff]
  %v379 = vld [vmem:[%s1 + $0xa60] sm:$0xff]
  %v380 = vld [vmem:[%s1 + $0xa68] sm:$0xff]
  %v381 = vld [vmem:[%s1 + $0xa70] sm:$0xff]
  %v382 = vld [vmem:[%s1 + $0xa78] sm:$0xff]
  %v383 = vld [vmem:[%s1 + $0xa80] sm:$0xff]
  %v384 = vld [vmem:[%s1 + $0xa88] sm:$0xff]
  %v385 = vld [vmem:[%s1 + $0xa90] sm:$0xff]
  %v386 = vld [vmem:[%s1 + $0xa98] sm:$0xff]
  %v387 = vld [vmem:[%s1 + $0xaa0] sm:$0xff]
  %v388 = vld [vmem:[%s1 + $0xaa8] sm:$0xff]
  %v389 = vld [vmem:[%s1 + $0xab0] sm:$0xff]
  %v390 = vld [vmem:[%s1 + $0xab8] sm:$0xff]
  %v391 = vld [vmem:[%s1 + $0xac0] sm:$0xff]
  %v392 = vld [vmem:[%s1 + $0xac8] sm:$0xff]
  %v393 = vld [vmem:[%s1 + $0xad0] sm:$0xff]
  %v394 = vld [vmem:[%s1 + $0xad8] sm:$0xff]
  %v395 = vld [vmem:[%s1 + $0xae0] sm:$0xff]
  %v396 = vld [vmem:[%s1 + $0xae8] sm:$0xff]
  %v397 = vld [vmem:[%s1 + $0xaf0] sm:$0xff]
  %v398 = vld [vmem:[%s1 + $0xaf8] sm:$0xff]
  %v399 = vld [vmem:[%s1 + $0xb00] sm:$0xff]
  %v400 = vld [vmem:[%s1 + $0xb08] sm:$0xff]
  %v401 = vld [vmem:[%s1 + $0xb10] sm:$0xff]
  %v402 = vld [vmem:[%s1 + $0xb18] sm:$0xff]
  %v403 = vld [vmem:[%s1 + $0xb20] sm:$0xff]
  %v404 = vld [vmem:[%s1 + $0xb28] sm:$0xff]
  %v405 = vld [vmem:[%s1 + $0xb30] sm:$0xff]
  %v406 = vld [vmem:[%s1 + $0xb38] sm:$0xff]
  %v407 = vld [vmem:[%s1 + $0xb40] sm:$0xff]
  %v408 = vld [vmem:[%s1 + $0xb48] sm:$0xff]
  %v409 = vld [vmem:[%s1 + $0xb50] sm:$0xff]
  %v410 = vld [vmem:[%s1 + $0xb58] sm:$0xff]
  %v411 = vld [vmem:[%s1 + $0xb60] sm:$0xff]
  %v412 = vld [vmem:[%s1 + $0xb68] sm:$0xff]
  %v413 = vld [vmem:[%s1 + $0xb70] sm:$0xff]
  %v414 = vld [vmem:[%s1 + $0xb78] sm:$0xff]
  %v415 = vld [vmem:[%s1 + $0xb80] sm:$0xff]
  %v416 = vld [vmem:[%s1 + $0xb88] sm:$0xff]
  %v417 = vld [vmem:[%s1 + $0xb90] sm:$0xff]
  %v418 = vld [vmem:[%s1 + $0xb98] sm:$0xff]
  %v419 = vld [vmem:[%s1 + $0xba0] sm:$0xff]
  %v420 = vld [vmem:[%s1 + $0xba8] sm:$0xff]
  %v421 = vld [vmem:[%s1 + $0xbb0] sm:$0xff]
  %v422 = vld [vmem:[%s1 + $0xbb8] sm:$0xff]
  %v423 = vld [vmem:[%s1 + $0xbc0] sm:$0xff]
  %v424 = vld [vmem:[%s1 + $0xbc8] sm:$0xff]
  %v425 = vld [vmem:[%s1 + $0xbd0] sm:$0xff]
  %v426 = vld [vmem:[%s1 + $0xbd8] sm:$0xff]
  %v427 = vld [vmem:[%s1 + $0xbe0] sm:$0xff]
  %v428 = vld [vmem:[%s1 + $0xbe8] sm:$0xff]
  %v429 = vld [vmem:[%s1 + $0xbf0] sm:$0xff]
  %v430 = vld [vmem:[%s1 + $0xbf8] sm:$0xff]
  %v431 = vld [vmem:[%s1 + $0xc00] sm:$0xff]
  %v432 = vld [vmem:[%s1 + $0xc08] sm:$0xff]
  %v433 = vld [vmem:[%s1 + $0xc10] sm:$0xff]
  %v434 = vld [vmem:[%s1 + $0xc18] sm:$0xff]
  %v435 = vld [vmem:[%s1 + $0xc20] sm:$0xff]
  %v436 = vld [vmem:[%s1 + $0xc28] sm:$0xff]
  %v437 = vld [vmem:[%s1 + $0xc30] sm:$0xff]
  %v438 = vld [vmem:[%s1 + $0xc38] sm:$0xff]
  %v439 = vld [vmem:[%s1 + $0xc40] sm:$0xff]
  %v440 = vld [vmem:[%s1 + $0xc48] sm:$0xff]
  %v441 = vld [vmem:[%s1 + $0xc50] sm:$0xff]
  %v442 = vld [vmem:[%s1 + $0xc58] sm:$0xff]
  %v443 = vld [vmem:[%s1 + $0xc60] sm:$0xff]
  %v444 = vld [vmem:[%s1 + $0xc68] sm:$0xff]
  %v445 = vld [vmem:[%s1 + $0xc70] sm:$0xff]
  %v446 = vld [vmem:[%s1 + $0xc78] sm:$0xff]
  %v447 = vld [vmem:[%s1 + $0xc80] sm:$0xff]
  %v448 = vld [vmem:[%s1 + $0xc88] sm:$0xff]
  %v449 = vld [vmem:[%s1 + $0xc90] sm:$0xff]
  %v450 = vld [vmem:[%s1 + $0xc98] sm:$0xff]
  %v451 = vld [vmem:[%s1 + $0xca0] sm:$0xff]
  %v452 = vld [vmem:[%s1 + $0xca8] sm:$0xff]
  %v453 = vld [vmem:[%s1 + $0xcb0] sm:$0xff]
  %v454 = vld [vmem:[%s1 + $0xcb8] sm:$0xff]
  %v455 = vld [vmem:[%s1 + $0xcc0] sm:$0xff]
  %v456 = vld [vmem:[%s1 + $0xcc8] sm:$0xff]
  %v457 = vld [vmem:[%s1 + $0xcd0] sm:$0xff]
  %v458 = vld [vmem:[%s1 + $0xcd8] sm:$0xff]
  %v459 = vld [vmem:[%s1 + $0xce0] sm:$0xff]
  %v460 = vld [vmem:[%s1 + $0xce8] sm:$0xff]
  %v461 = vld [vmem:[%s1 + $0xcf0] sm:$0xff]
  %v462 = vld [vmem:[%s1 + $0xcf8] sm:$0xff]
  %v463 = vld [vmem:[%s1 + $0xd00] sm:$0xff]
  %v464 = vld [vmem:[%s1 + $0xd08] sm:$0xff]
  %v465 = vld [vmem:[%s1 + $0xd10] sm:$0xff]
  %v466 = vld [vmem:[%s1 + $0xd18] sm:$0xff]
  %v467 = vld [vmem:[%s1 + $0xd20] sm:$0xff]
  %v468 = vld [vmem:[%s1 + $0xd28] sm:$0xff]
  %v469 = vld [vmem:[%s1 + $0xd30] sm:$0xff]
  %v470 = vld [vmem:[%s1 + $0xd38] sm:$0xff]
  %v471 = vld [vmem:[%s1 + $0xd40] sm:$0xff]
  %v472 = vld [vmem:[%s1 + $0xd48] sm:$0xff]
  %v473 = vld [vmem:[%s1 + $0xd50] sm:$0xff]
  %v474 = vld [vmem:[%s1 + $0xd58] sm:$0xff]
  %v475 = vld [vmem:[%s1 + $0xd60] sm:$0xff]
  %v476 = vld [vmem:[%s1 + $0xd68] sm:$0xff]
  %v477 = vld [vmem:[%s1 + $0xd70] sm:$0xff]
  %v478 = vld [vmem:[%s1 + $0xd78] sm:$0xff]
  %v479 = vld [vmem:[%s1 + $0xd80] sm:$0xff]
  %v480 = vld [vmem:[%s1 + $0xd88] sm:$0xff]
  %v481 = vld [vmem:[%s1 + $0xd90] sm:$0xff]
  %v482 = vld [vmem:[%s1 + $0xd98] sm:$0xff]
  %v483 = vld [vmem:[%s1 + $0xda0] sm:$0xff]
  %v484 = vld [vmem:[%s1 + $0xda8] sm:$0xff]
  %v485 = vld [vmem:[%s1 + $0xdb0] sm:$0xff]
  %v486 = vld [vmem:[%s1 + $0xdb8] sm:$0xff]
  %v487 = vld [vmem:[%s1 + $0xdc0] sm:$0xff]
  %v488 = vld [vmem:[%s1 + $0xdc8] sm:$0xff]
  %v489 = vld [vmem:[%s1 + $0xdd0] sm:$0xff]
  %v490 = vld [vmem:[%s1 + $0xdd8] sm:$0xff]
  %v491 = vld [vmem:[%s1 + $0xde0] sm:$0xff]
  %v492 = vld [vmem:[%s1 + $0xde8] sm:$0xff]
  %v493 = vld [vmem:[%s1 + $0xdf0] sm:$0xff]
  %v494 = vld [vmem:[%s1 + $0xdf8] sm:$0xff]
  %v495 = vld [vmem:[%s1 + $0xe00] sm:$0xff]
  %v496 = vld [vmem:[%s1 + $0xe08] sm:$0xff]
  %v497 = vld [vmem:[%s1 + $0xe10] sm:$0xff]
  %v498 = vld [vmem:[%s1 + $0xe18] sm:$0xff]
  %v499 = vld [vmem:[%s1 + $0xe20] sm:$0xff]
  %v500 = vld [vmem:[%s1 + $0xe28] sm:$0xff]
  %v501 = vld [vmem:[%s1 + $0xe30] sm:$0xff]
  %v502 = vld [vmem:[%s1 + $0xe38] sm:$0xff]
  %v503 = vld [vmem:[%s1 + $0xe40] sm:$0xff]
  %v504 = vld [vmem:[%s1 + $0xe48] sm:$0xff]
  %v505 = vld [vmem:[%s1 + $0xe50] sm:$0xff]
  %v506 = vld [vmem:[%s1 + $0xe58] sm:$0xff]
  %v507 = vld [vmem:[%s1 + $0xe60] sm:$0xff]
  %v508 = vld [vmem:[%s1 + $0xe68] sm:$0xff]
  %v509 = vld [vmem:[%s1 + $0xe70] sm:$0xff]
  %v510 = vld [vmem:[%s1 + $0xe78] sm:$0xff]
  %v511 = vld [vmem:[%s1 + $0xe80] sm:$0xff]
  %v512 = vld [vmem:[%s1 + $0xe88] sm:$0xff]
  %v513 = vld [vmem:[%s1 + $0xe90] sm:$0xff]
  %v514 = vld [vmem:[%s1 + $0xe98] sm:$0xff]
  %v515 = vld [vmem:[%s1 + $0xea0] sm:$0xff]
  %v516 = vld [vmem:[%s1 + $0xea8] sm:$0xff]
  %v517 = vld [vmem:[%s1 + $0xeb0] sm:$0xff]
  %v518 = vld [vmem:[%s1 + $0xeb8] sm:$0xff]
  %v519 = vld [vmem:[%s1 + $0xec0] sm:$0xff]
  %v520 = vld [vmem:[%s1 + $0xec8] sm:$0xff]
  %v521 = vld [vmem:[%s1 + $0xed0] sm:$0xff]
  %v522 = vld [vmem:[%s1 + $0xed8] sm:$0xff]
  %v523 = vld [vmem:[%s1 + $0xee0] sm:$0xff]
  %v524 = vld [vmem:[%s1 + $0xee8] sm:$0xff]
  %v525 = vld [vmem:[%s1 + $0xef0] sm:$0xff]
  %v526 = vld [vmem:[%s1 + $0xef8] sm:$0xff]
  %v527 = vld [vmem:[%s1 + $0xf00] sm:$0xff]
  %v528 = vld [vmem:[%s1 + $0xf08] sm:$0xff]
  %v529 = vld [vmem:[%s1 + $0xf10] sm:$0xff]
  %v530 = vld [vmem:[%s1 + $0xf18] sm:$0xff]
  %v531 = vld [vmem:[%s1 + $0xf20] sm:$0xff]
  %v532 = vld [vmem:[%s1 + $0xf28] sm:$0xff]
  %v533 = vld [vmem:[%s1 + $0xf30] sm:$0xff]
  %v534 = vld [vmem:[%s1 + $0xf38] sm:$0xff]
  %v535 = vld [vmem:[%s1 + $0xf40] sm:$0xff]
  %v536 = vld [vmem:[%s1 + $0xf48] sm:$0xff]
  %v537 = vld [vmem:[%s1 + $0xf50] sm:$0xff]
  %v538 = vld [vmem:[%s1 + $0xf58] sm:$0xff]
  %v539 = vld [vmem:[%s1 + $0xf60] sm:$0xff]
  %v540 = vld [vmem:[%s1 + $0xf68] sm:$0xff]
  %v541 = vld [vmem:[%s1 + $0xf70] sm:$0xff]
  %v542 = vld [vmem:[%s1 + $0xf78] sm:$0xff]
  %v543 = vld [vmem:[%s1 + $0xf80] sm:$0xff]
  %v544 = vld [vmem:[%s1 + $0xf88] sm:$0xff]
  %v545 = vld [vmem:[%s1 + $0xf90] sm:$0xff]
  %v546 = vld [vmem:[%s1 + $0xf98] sm:$0xff]
  %v547 = vld [vmem:[%s1 + $0xfa0] sm:$0xff]
  %v548 = vld [vmem:[%s1 + $0xfa8] sm:$0xff]
  %v549 = vld [vmem:[%s1 + $0xfb0] sm:$0xff]
  %v550 = vld [vmem:[%s1 + $0xfb8] sm:$0xff]
  %v551 = vld [vmem:[%s1 + $0xfc0] sm:$0xff]
  %v552 = vld [vmem:[%s1 + $0xfc8] sm:$0xff]
  %v553 = vld [vmem:[%s1 + $0xfd0] sm:$0xff]
  %v554 = vld [vmem:[%s1 + $0xfd8] sm:$0xff]
  %v555 = vld [vmem:[%s1 + $0xfe0] sm:$0xff]
  %v556 = vld [vmem:[%s1 + $0xfe8] sm:$0xff]
  %v557 = vld [vmem:[%s1 + $0xff0] sm:$0xff]
  %v558 = vld [vmem:[%s1 + $0xff8] sm:$0xff]
  %v559 = vld [vmem:[%s1 + $0x1000] sm:$0xff]
  %v560 = vld [vmem:[%s1 + $0x1008] sm:$0xff]
  %v561 = vld [vmem:[%s1 + $0x1010] sm:$0xff]
  %v562 = vld [vmem:[%s1 + $0x1018] sm:$0xff]
  %v563 = vld [vmem:[%s1 + $0x1020] sm:$0xff]
  %v564 = vld [vmem:[%s1 + $0x1028] sm:$0xff]
  %v565 = vld [vmem:[%s1 + $0x1030] sm:$0xff]
  %v566 = vld [vmem:[%s1 + $0x1038] sm:$0xff]
  %v567 = vld [vmem:[%s1 + $0x1040] sm:$0xff]
  %v568 = vld [vmem:[%s1 + $0x1048] sm:$0xff]
  %v569 = vld [vmem:[%s1 + $0x1050] sm:$0xff]
  %v570 = vld [vmem:[%s1 + $0x1058] sm:$0xff]
  %v571 = vld [vmem:[%s1 + $0x1060] sm:$0xff]
  %v572 = vld [vmem:[%s1 + $0x1068] sm:$0xff]
  %v573 = vld [vmem:[%s1 + $0x1070] sm:$0xff]
  %v574 = vld [vmem:[%s1 + $0x1078] sm:$0xff]
  %v575 = vld [vmem:[%s1 + $0x1080] sm:$0xff]
  %v576 = vld [vmem:[%s1 + $0x1088] sm:$0xff]
  %v577 = vld [vmem:[%s1 + $0x1090] sm:$0xff]
  %v578 = vld [vmem:[%s1 + $0x1098] sm:$0xff]
  %v579 = vld [vmem:[%s1 + $0x10a0] sm:$0xff]
  %v580 = vld [vmem:[%s1 + $0x10a8] sm:$0xff]
  %v581 = vld [vmem:[%s1 + $0x10b0] sm:$0xff]
  %v582 = vld [vmem:[%s1 + $0x10b8] sm:$0xff]
  %v583 = vld [vmem:[%s1 + $0x10c0] sm:$0xff]
  %v584 = vld [vmem:[%s1 + $0x10c8] sm:$0xff]
  %v585 = vld [vmem:[%s1 + $0x10d0] sm:$0xff]
  %v586 = vld [vmem:[%s1 + $0x10d8] sm:$0xff]
  %v587 = vld [vmem:[%s1 + $0x10e0] sm:$0xff]
  %v588 = vld [vmem:[%s1 + $0x10e8] sm:$0xff]
  %v589 = vld [vmem:[%s1 + $0x10f0] sm:$0xff]
  %v590 = vld [vmem:[%s1 + $0x10f8] sm:$0xff]
  %v591 = vld [vmem:[%s1 + $0x1100] sm:$0xff]
  %v592 = vld [vmem:[%s1 + $0x1108] sm:$0xff]
  %v593 = vld [vmem:[%s1 + $0x1110] sm:$0xff]
  %v594 = vld [vmem:[%s1 + $0x1118] sm:$0xff]
  %v595 = vld [vmem:[%s1 + $0x1120] sm:$0xff]
  %v596 = vld [vmem:[%s1 + $0x1128] sm:$0xff]
  %v597 = vld [vmem:[%s1 + $0x1130] sm:$0xff]
  %v598 = vld [vmem:[%s1 + $0x1138] sm:$0xff]
  %v599 = vld [vmem:[%s1 + $0x1140] sm:$0xff]
  %v600 = vld [vmem:[%s1 + $0x1148] sm:$0xff]
  %v601 = vld [vmem:[%s1 + $0x1150] sm:$0xff]
  %v602 = vld [vmem:[%s1 + $0x1158] sm:$0xff]
  %v603 = vld [vmem:[%s1 + $0x1160] sm:$0xff]
  %v604 = vld [vmem:[%s1 + $0x1168] sm:$0xff]
  %v605 = vld [vmem:[%s1 + $0x1170] sm:$0xff]
  %v606 = vld [vmem:[%s1 + $0x1178] sm:$0xff]
  %v607 = vld [vmem:[%s1 + $0x1180] sm:$0xff]
  %v608 = vld [vmem:[%s1 + $0x1188] sm:$0xff]
  %v609 = vld [vmem:[%s1 + $0x1190] sm:$0xff]
  %v610 = vld [vmem:[%s1 + $0x1198] sm:$0xff]
  %v611 = vld [vmem:[%s1 + $0x11a0] sm:$0xff]
  %v612 = vld [vmem:[%s1 + $0x11a8] sm:$0xff]
  %v613 = vld [vmem:[%s1 + $0x11b0] sm:$0xff]
  %v614 = vld [vmem:[%s1 + $0x11b8] sm:$0xff]
  %v615 = vld [vmem:[%s1 + $0x11c0] sm:$0xff]
  %v616 = vld [vmem:[%s1 + $0x11c8] sm:$0xff]
  %v617 = vld [vmem:[%s1 + $0x11d0] sm:$0xff]
  %v618 = vld [vmem:[%s1 + $0x11d8] sm:$0xff]
  %v619 = vld [vmem:[%s1 + $0x11e0] sm:$0xff]
  %v620 = vld [vmem:[%s1 + $0x11e8] sm:$0xff]
  %v621 = vld [vmem:[%s1 + $0x11f0] sm:$0xff]
  %v622 = vld [vmem:[%s1 + $0x11f8] sm:$0xff]
  %v623 = vld [vmem:[%s1 + $0x1200] sm:$0xff]
  %v624 = vld [vmem:[%s1 + $0x1208] sm:$0xff]
  %v625 = vld [vmem:[%s1 + $0x1210] sm:$0xff]
  %v626 = vld [vmem:[%s1 + $0x1218] sm:$0xff]
  %v627 = vld [vmem:[%s1 + $0x1220] sm:$0xff]
  %v628 = vld [vmem:[%s1 + $0x1228] sm:$0xff]
  %v629 = vld [vmem:[%s1 + $0x1230] sm:$0xff]
  %v630 = vld [vmem:[%s1 + $0x1238] sm:$0xff]
  %v631 = vld [vmem:[%s1 + $0x1240] sm:$0xff]
  %v632 = vld [vmem:[%s1 + $0x1248] sm:$0xff]
  %v633 = vld [vmem:[%s1 + $0x1250] sm:$0xff]
  %v634 = vld [vmem:[%s1 + $0x1258] sm:$0xff]
  %v635 = vld [vmem:[%s1 + $0x1260] sm:$0xff]
  %v636 = vld [vmem:[%s1 + $0x1268] sm:$0xff]
  %v637 = vld [vmem:[%s1 + $0x1270] sm:$0xff]
  %v638 = vld [vmem:[%s1 + $0x1278] sm:$0xff]
  %v639 = vld [vmem:[%s1 + $0x1280] sm:$0xff]
  %v640 = vld [vmem:[%s1 + $0x1288] sm:$0xff]
  %v641 = vld [vmem:[%s1 + $0x1290] sm:$0xff]
  %v642 = vld [vmem:[%s1 + $0x1298] sm:$0xff]
  %v643 = vld [vmem:[%s1 + $0x12a0] sm:$0xff]
  %v644 = vld [vmem:[%s1 + $0x12a8] sm:$0xff]
  %v645 = vld [vmem:[%s1 + $0x12b0] sm:$0xff]
  %v646 = vld [vmem:[%s1 + $0x12b8] sm:$0xff]
  %v647 = vld [vmem:[%s1 + $0x12c0] sm:$0xff]
  %v648 = vld [vmem:[%s1 + $0x12c8] sm:$0xff]
  %v649 = vld [vmem:[%s1 + $0x12d0] sm:$0xff]
  %v650 = vld [vmem:[%s1 + $0x12d8] sm:$0xff]
  %v651 = vld [vmem:[%s1 + $0x12e0] sm:$0xff]
  %v652 = vld [vmem:[%s1 + $0x12e8] sm:$0xff]
  %v653 = vld [vmem:[%s1 + $0x12f0] sm:$0xff]
  %v654 = vld [vmem:[%s1 + $0x12f8] sm:$0xff]
  %v655 = vld [vmem:[%s1 + $0x1300] sm:$0xff]
  %v656 = vld [vmem:[%s1 + $0x1308] sm:$0xff]
  %v657 = vld [vmem:[%s1 + $0x1310] sm:$0xff]
  %v658 = vld [vmem:[%s1 + $0x1318] sm:$0xff]
  %v659 = vld [vmem:[%s1 + $0x1320] sm:$0xff]
  %v660 = vld [vmem:[%s1 + $0x1328] sm:$0xff]
  %v661 = vld [vmem:[%s1 + $0x1330] sm:$0xff]
  %v662 = vld [vmem:[%s1 + $0x1338] sm:$0xff]
  %v663 = vld [vmem:[%s1 + $0x1340] sm:$0xff]
  %v664 = vld [vmem:[%s1 + $0x1348] sm:$0xff]
  %v665 = vld [vmem:[%s1 + $0x1350] sm:$0xff]
  %v666 = vld [vmem:[%s1 + $0x1358] sm:$0xff]
  %v667 = vld [vmem:[%s1 + $0x1360] sm:$0xff]
  %v668 = vld [vmem:[%s1 + $0x1368] sm:$0xff]
  %v669 = vld [vmem:[%s1 + $0x1370] sm:$0xff]
  %v670 = vld [vmem:[%s1 + $0x1378] sm:$0xff]
  %v671 = vld [vmem:[%s1 + $0x1380] sm:$0xff]
  %v672 = vld [vmem:[%s1 + $0x1388] sm:$0xff]
  %v673 = vld [vmem:[%s1 + $0x1390] sm:$0xff]
  %v674 = vld [vmem:[%s1 + $0x1398] sm:$0xff]
  %v675 = vld [vmem:[%s1 + $0x13a0] sm:$0xff]
  %v676 = vld [vmem:[%s1 + $0x13a8] sm:$0xff]
  %v677 = vld [vmem:[%s1 + $0x13b0] sm:$0xff]
  %v678 = vld [vmem:[%s1 + $0x13b8] sm:$0xff]
  %v679 = vld [vmem:[%s1 + $0x13c0] sm:$0xff]
  %v680 = vld [vmem:[%s1 + $0x13c8] sm:$0xff]
  %v681 = vld [vmem:[%s1 + $0x13d0] sm:$0xff]
  %v682 = vld [vmem:[%s1 + $0x13d8] sm:$0xff]
  %v683 = vld [vmem:[%s1 + $0x13e0] sm:$0xff]
  %v684 = vld [vmem:[%s1 + $0x13e8] sm:$0xff]
  %v685 = vld [vmem:[%s1 + $0x13f0] sm:$0xff]
  %v686 = vld [vmem:[%s1 + $0x13f8] sm:$0xff]
  %v687 = vld [vmem:[%s1 + $0x1400] sm:$0xff]
  %v688 = vld [vmem:[%s1 + $0x1408] sm:$0xff]
  %v689 = vld [vmem:[%s1 + $0x1410] sm:$0xff]
  %v690 = vld [vmem:[%s1 + $0x1418] sm:$0xff]
  %v691 = vld [vmem:[%s1 + $0x1420] sm:$0xff]
  %v692 = vld [vmem:[%s1 + $0x1428] sm:$0xff]
  %v693 = vld [vmem:[%s1 + $0x1430] sm:$0xff]
  %v694 = vld [vmem:[%s1 + $0x1438] sm:$0xff]
  %v695 = vld [vmem:[%s1 + $0x1440] sm:$0xff]
  %v696 = vld [vmem:[%s1 + $0x1448] sm:$0xff]
  %v697 = vld [vmem:[%s1 + $0x1450] sm:$0xff]
  %v698 = vld [vmem:[%s1 + $0x1458] sm:$0xff]
  %v699 = vld [vmem:[%s1 + $0x1460] sm:$0xff]
  %v700 = vld [vmem:[%s1 + $0x1468] sm:$0xff]
  %v701 = vld [vmem:[%s1 + $0x1470] sm:$0xff]
  %v702 = vld [vmem:[%s1 + $0x1478] sm:$0xff]
  %v703 = vld [vmem:[%s1 + $0x1480] sm:$0xff]
  %v704 = vld [vmem:[%s1 + $0x1488] sm:$0xff]
  %v705 = vld [vmem:[%s1 + $0x1490] sm:$0xff]
  %v706 = vld [vmem:[%s1 + $0x1498] sm:$0xff]
  %v707 = vld [vmem:[%s1 + $0x14a0] sm:$0xff]
  %v708 = vld [vmem:[%s1 + $0x14a8] sm:$0xff]
  %v709 = vld [vmem:[%s1 + $0x14b0] sm:$0xff]
  %v710 = vld [vmem:[%s1 + $0x14b8] sm:$0xff]
  %v711 = vld [vmem:[%s1 + $0x14c0] sm:$0xff]
  %v712 = vld [vmem:[%s1 + $0x14c8] sm:$0xff]
  %v713 = vld [vmem:[%s1 + $0x14d0] sm:$0xff]
  %v714 = vld [vmem:[%s1 + $0x14d8] sm:$0xff]
  %v715 = vld [vmem:[%s1 + $0x14e0] sm:$0xff]
  %v716 = vld [vmem:[%s1 + $0x14e8] sm:$0xff]
  %v717 = vld [vmem:[%s1 + $0x14f0] sm:$0xff]
  %v718 = vld [vmem:[%s1 + $0x14f8] sm:$0xff]
  %v719 = vld [vmem:[%s1 + $0x1500] sm:$0xff]
  %v720 = vld [vmem:[%s1 + $0x1508] sm:$0xff]
  %v721 = vld [vmem:[%s1 + $0x1510] sm:$0xff]
  %v722 = vld [vmem:[%s1 + $0x1518] sm:$0xff]
  %v723 = vld [vmem:[%s1 + $0x1520] sm:$0xff]
  %v724 = vld [vmem:[%s1 + $0x1528] sm:$0xff]
  %v725 = vld [vmem:[%s1 + $0x1530] sm:$0xff]
  %v726 = vld [vmem:[%s1 + $0x1538] sm:$0xff]
  %v727 = vld [vmem:[%s1 + $0x1540] sm:$0xff]
  %v728 = vld [vmem:[%s1 + $0x1548] sm:$0xff]
  %v729 = vld [vmem:[%s1 + $0x1550] sm:$0xff]
  %v730 = vld [vmem:[%s1 + $0x1558] sm:$0xff]
  %v731 = vld [vmem:[%s1 + $0x1560] sm:$0xff]
  %v732 = vld [vmem:[%s1 + $0x1568] sm:$0xff]
  %v733 = vld [vmem:[%s1 + $0x1570] sm:$0xff]
  %v734 = vld [vmem:[%s1 + $0x1578] sm:$0xff]
  %v735 = vld [vmem:[%s1 + $0x1580] sm:$0xff]
  %v736 = vld [vmem:[%s1 + $0x1588] sm:$0xff]
  %v737 = vld [vmem:[%s1 + $0x1590] sm:$0xff]
  %v738 = vld [vmem:[%s1 + $0x1598] sm:$0xff]
  %v739 = vld [vmem:[%s1 + $0x15a0] sm:$0xff]
  %v740 = vld [vmem:[%s1 + $0x15a8] sm:$0xff]
  %v741 = vld [vmem:[%s1 + $0x15b0] sm:$0xff]
  %v742 = vld [vmem:[%s1 + $0x15b8] sm:$0xff]
  %v743 = vld [vmem:[%s1 + $0x15c0] sm:$0xff]
  %v744 = vld [vmem:[%s1 + $0x15c8] sm:$0xff]
  %v745 = vld [vmem:[%s1 + $0x15d0] sm:$0xff]
  %v746 = vld [vmem:[%s1 + $0x15d8] sm:$0xff]
  %v747 = vld [vmem:[%s1 + $0x15e0] sm:$0xff]
  %v748 = vld [vmem:[%s1 + $0x15e8] sm:$0xff]
  %v749 = vld [vmem:[%s1 + $0x15f0] sm:$0xff]
  %v750 = vld [vmem:[%s1 + $0x15f8] sm:$0xff]
  %v751 = vld [vmem:[%s1 + $0x1600] sm:$0xff]
  %v752 = vld [vmem:[%s1 + $0x1608] sm:$0xff]
  %v753 = vld [vmem:[%s1 + $0x1610] sm:$0xff]
  %v754 = vld [vmem:[%s1 + $0x1618] sm:$0xff]
  %v755 = vld [vmem:[%s1 + $0x1620] sm:$0xff]
  %v756 = vld [vmem:[%s1 + $0x1628] sm:$0xff]
  %v757 = vld [vmem:[%s1 + $0x1630] sm:$0xff]
  %v758 = vld [vmem:[%s1 + $0x1638] sm:$0xff]
  %v759 = vld [vmem:[%s1 + $0x1640] sm:$0xff]
  %v760 = vld [vmem:[%s1 + $0x1648] sm:$0xff]
  %v761 = vld [vmem:[%s1 + $0x1650] sm:$0xff]
  %v762 = vld [vmem:[%s1 + $0x1658] sm:$0xff]
  %v763 = vld [vmem:[%s1 + $0x1660] sm:$0xff]
  %v764 = vld [vmem:[%s1 + $0x1668] sm:$0xff]
  %v765 = vld [vmem:[%s1 + $0x1670] sm:$0xff]
  %v766 = vld [vmem:[%s1 + $0x1678] sm:$0xff]
  %v767 = vld [vmem:[%s1 + $0x1680] sm:$0xff]
  %v768 = vld [vmem:[%s1 + $0x1688] sm:$0xff]
  %v769 = vld [vmem:[%s1 + $0x1690] sm:$0xff]
  %v770 = vld [vmem:[%s1 + $0x1698] sm:$0xff]
  %v771 = vld [vmem:[%s1 + $0x16a0] sm:$0xff]
  %v772 = vld [vmem:[%s1 + $0x16a8] sm:$0xff]
  %v773 = vld [vmem:[%s1 + $0x16b0] sm:$0xff]
  %v774 = vld [vmem:[%s1 + $0x16b8] sm:$0xff]
  %v775 = vld [vmem:[%s1 + $0x16c0] sm:$0xff]
  %v776 = vld [vmem:[%s1 + $0x16c8] sm:$0xff]
  %v777 = vld [vmem:[%s1 + $0x16d0] sm:$0xff]
  %v778 = vld [vmem:[%s1 + $0x16d8] sm:$0xff]
  %v779 = vld [vmem:[%s1 + $0x16e0] sm:$0xff]
  %v780 = vld [vmem:[%s1 + $0x16e8] sm:$0xff]
  %v781 = vld [vmem:[%s1 + $0x16f0] sm:$0xff]
  %v782 = vld [vmem:[%s1 + $0x16f8] sm:$0xff]
  %v783 = vld [vmem:[%s1 + $0x1700] sm:$0xff]
  %v784 = vld [vmem:[%s1 + $0x1708] sm:$0xff]
  %v785 = vld [vmem:[%s1 + $0x1710] sm:$0xff]
  %v786 = vld [vmem:[%s1 + $0x1718] sm:$0xff]
  %v787 = vld [vmem:[%s1 + $0x1720] sm:$0xff]
  %v788 = vld [vmem:[%s1 + $0x1728] sm:$0xff]
  %v789 = vld [vmem:[%s1 + $0x1730] sm:$0xff]
  %v790 = vld [vmem:[%s1 + $0x1738] sm:$0xff]
  %v791 = vld [vmem:[%s1 + $0x1740] sm:$0xff]
  %v792 = vld [vmem:[%s1 + $0x1748] sm:$0xff]
  %v793 = vld [vmem:[%s1 + $0x1750] sm:$0xff]
  %v794 = vld [vmem:[%s1 + $0x1758] sm:$0xff]
  %v795 = vld [vmem:[%s1 + $0x1760] sm:$0xff]
  %v796 = vld [vmem:[%s1 + $0x1768] sm:$0xff]
  %v797 = vld [vmem:[%s1 + $0x1770] sm:$0xff]
  %v798 = vld [vmem:[%s1 + $0x1778] sm:$0xff]
  %v799 = vld [vmem:[%s1 + $0x1780] sm:$0xff]
  %v800 = vld [vmem:[%s1 + $0x1788] sm:$0xff]
  %v801 = vld [vmem:[%s1 + $0x1790] sm:$0xff]
  %v802 = vld [vmem:[%s1 + $0x1798] sm:$0xff]
  %v803 = vld [vmem:[%s1 + $0x17a0] sm:$0xff]
  %v804 = vld [vmem:[%s1 + $0x17a8] sm:$0xff]
  %v805 = vld [vmem:[%s1 + $0x17b0] sm:$0xff]
  %v806 = vld [vmem:[%s1 + $0x17b8] sm:$0xff]
  %v807 = vld [vmem:[%s1 + $0x17c0] sm:$0xff]
  %v808 = vld [vmem:[%s1 + $0x17c8] sm:$0xff]
  %v809 = vld [vmem:[%s1 + $0x17d0] sm:$0xff]
  %v810 = vld [vmem:[%s1 + $0x17d8] sm:$0xff]
  %v811 = vld [vmem:[%s1 + $0x17e0] sm:$0xff]
  %v812 = vld [vmem:[%s1 + $0x17e8] sm:$0xff]
  %v813 = vld [vmem:[%s1 + $0x17f0] sm:$0xff]
  %v814 = vld [vmem:[%s1 + $0x17f8] sm:$0xff]
  %v815 = vld [vmem:[%s1 + $0x1800] sm:$0xff]
  %v816 = vld [vmem:[%s1 + $0x1808] sm:$0xff]
  %v817 = vld [vmem:[%s1 + $0x1810] sm:$0xff]
  %v818 = vld [vmem:[%s1 + $0x1818] sm:$0xff]
  %v819 = vld [vmem:[%s1 + $0x1820] sm:$0xff]
  %v820 = vld [vmem:[%s1 + $0x1828] sm:$0xff]
  %v821 = vld [vmem:[%s1 + $0x1830] sm:$0xff]
  %v822 = vld [vmem:[%s1 + $0x1838] sm:$0xff]
  %v823 = vld [vmem:[%s1 + $0x1840] sm:$0xff]
  %v824 = vld [vmem:[%s1 + $0x1848] sm:$0xff]
  %v825 = vld [vmem:[%s1 + $0x1850] sm:$0xff]
  %v826 = vld [vmem:[%s1 + $0x1858] sm:$0xff]
  %v827 = vld [vmem:[%s1 + $0x1860] sm:$0xff]
  %v828 = vld [vmem:[%s1 + $0x1868] sm:$0xff]
  %v829 = vld [vmem:[%s1 + $0x1870] sm:$0xff]
  %v830 = vld [vmem:[%s1 + $0x1878] sm:$0xff]
  %v831 = vld [vmem:[%s2] sm:$0xf]
  %v833 = vlaneseq
  %v834 = vshrl.u32 %v833, 7
  %v835 = vsub.s32 0, %v834
  %v836 = vrot.slane %v831, %v835
  %v837 = vlaneseq
  %v838 = vshrl.u32 %v837, 7
  %v839 = vsub.s32 1, %v838
  %v840 = vrot.slane %v831, %v839
  %v841 = vlaneseq
  %v842 = vshrl.u32 %v841, 7
  %v843 = vsub.s32 2, %v842
  %v844 = vrot.slane %v831, %v843
  %v845 = vlaneseq
  %v846 = vshrl.u32 %v845, 7
  %v847 = vsub.s32 3, %v846
  %v848 = vrot.slane %v831, %v847
  %v879 = vunpack.c.l.b16 %v21
  %v880 = vunpack.c.h.b16 %v21
  %v881 = vunpack.c.l.b16 %v22
  %v882 = vunpack.c.h.b16 %v22
  %v883 = vunpack.c.l.b16 %v23
  %v884 = vunpack.c.h.b16 %v23
  %v885 = vunpack.c.l.b16 %v24
  %v886 = vunpack.c.h.b16 %v24
  %v887 = vunpack.c.l.b16 %v25
  %v888 = vunpack.c.h.b16 %v25
  %v889 = vunpack.c.l.b16 %v26
  %v890 = vunpack.c.h.b16 %v26
  %v891 = vunpack.c.l.b16 %v27
  %v892 = vunpack.c.h.b16 %v27
  %v893 = vunpack.c.l.b16 %v28
  %v894 = vunpack.c.h.b16 %v28
  %v895 = vunpack.c.l.b16 %v29
  %v896 = vunpack.c.h.b16 %v29
  %v897 = vunpack.c.l.b16 %v30
  %v898 = vunpack.c.h.b16 %v30
  %v899 = vunpack.c.l.b16 %v31
  %v900 = vunpack.c.h.b16 %v31
  %v901 = vunpack.c.l.b16 %v32
  %v902 = vunpack.c.h.b16 %v32
  %v903 = vunpack.c.l.b16 %v33
  %v904 = vunpack.c.l.b16 %v34
  %v905 = vunpack.c.h.b16 %v34
  %v906 = vunpack.c.l.b16 %v35
  %v907 = vunpack.c.h.b16 %v35
  %v908 = vunpack.c.l.b16 %v36
  %v909 = vunpack.c.h.b16 %v36
  %v910 = vunpack.c.l.b16 %v37
  %v911 = vunpack.c.h.b16 %v37
  %v912 = vunpack.c.l.b16 %v38
  %v913 = vunpack.c.h.b16 %v38
  %v914 = vunpack.c.l.b16 %v39
  %v915 = vunpack.c.h.b16 %v39
  %v916 = vunpack.c.l.b16 %v40
  %v917 = vunpack.c.h.b16 %v40
  %v918 = vunpack.c.l.b16 %v41
  %v919 = vunpack.c.h.b16 %v41
  %v920 = vunpack.c.l.b16 %v42
  %v921 = vunpack.c.h.b16 %v42
  %v922 = vunpack.c.l.b16 %v43
  %v923 = vunpack.c.h.b16 %v43
  %v924 = vunpack.c.l.b16 %v44
  %v925 = vunpack.c.h.b16 %v44
  %v926 = vunpack.c.l.b16 %v45
  %v927 = vunpack.c.h.b16 %v45
  %v928 = vunpack.c.l.b16 %v46
  %v929 = vpack.c.b16 %v904, %v879
  %v930 = vpack.c.b16 %v905, %v880
  %v931 = vpack.c.b16 %v906, %v881
  %v932 = vpack.c.b16 %v907, %v882
  %v933 = vpack.c.b16 %v908, %v883
  %v934 = vpack.c.b16 %v909, %v884
  %v935 = vpack.c.b16 %v910, %v885
  %v936 = vpack.c.b16 %v911, %v886
  %v937 = vpack.c.b16 %v912, %v887
  %v938 = vpack.c.b16 %v913, %v888
  %v939 = vpack.c.b16 %v914, %v889
  %v940 = vpack.c.b16 %v915, %v890
  %v941 = vpack.c.b16 %v916, %v891
  %v942 = vpack.c.b16 %v917, %v892
  %v943 = vpack.c.b16 %v918, %v893
  %v944 = vpack.c.b16 %v919, %v894
  %v945 = vpack.c.b16 %v920, %v895
  %v946 = vpack.c.b16 %v921, %v896
  %v947 = vpack.c.b16 %v922, %v897
  %v948 = vpack.c.b16 %v923, %v898
  %v949 = vpack.c.b16 %v924, %v899
  %v950 = vpack.c.b16 %v925, %v900
  %v951 = vpack.c.b16 %v926, %v901
  %v952 = vpack.c.b16 %v927, %v902
  %v953 = vpack.c.b16 %v928, %v903
  %v1762 = vunpack.c.l.b16 %v47
  %v1763 = vunpack.c.h.b16 %v47
  %v1764 = vunpack.c.l.b16 %v48
  %v1765 = vunpack.c.h.b16 %v48
  %v1766 = vunpack.c.l.b16 %v49
  %v1767 = vunpack.c.h.b16 %v49
  %v1768 = vunpack.c.l.b16 %v50
  %v1769 = vunpack.c.h.b16 %v50
  %v1770 = vunpack.c.l.b16 %v51
  %v1771 = vunpack.c.h.b16 %v51
  %v1772 = vunpack.c.l.b16 %v52
  %v1773 = vunpack.c.h.b16 %v52
  %v1774 = vunpack.c.l.b16 %v53
  %v1775 = vunpack.c.h.b16 %v53
  %v1776 = vunpack.c.l.b16 %v54
  %v1777 = vunpack.c.h.b16 %v54
  %v1778 = vunpack.c.l.b16 %v55
  %v1779 = vunpack.c.h.b16 %v55
  %v1780 = vunpack.c.l.b16 %v56
  %v1781 = vunpack.c.h.b16 %v56
  %v1782 = vunpack.c.l.b16 %v57
  %v1783 = vunpack.c.h.b16 %v57
  %v1784 = vunpack.c.l.b16 %v58
  %v1785 = vunpack.c.h.b16 %v58
  %v1786 = vunpack.c.l.b16 %v59
  %v1787 = vunpack.c.h.b16 %v59
  %v1788 = vunpack.c.l.b16 %v60
  %v1789 = vunpack.c.h.b16 %v60
  %v1790 = vunpack.c.l.b16 %v61
  %v1791 = vunpack.c.h.b16 %v61
  %v1792 = vunpack.c.l.b16 %v62
  %v1793 = vunpack.c.h.b16 %v62
  %v1794 = vunpack.c.l.b16 %v63
  %v1795 = vunpack.c.h.b16 %v63
  %v1796 = vunpack.c.l.b16 %v64
  %v1797 = vunpack.c.h.b16 %v64
  %v1798 = vunpack.c.l.b16 %v65
  %v1799 = vunpack.c.h.b16 %v65
  %v1800 = vunpack.c.l.b16 %v66
  %v1801 = vunpack.c.h.b16 %v66
  %v1802 = vunpack.c.l.b16 %v67
  %v1803 = vunpack.c.h.b16 %v67
  %v1804 = vunpack.c.l.b16 %v68
  %v1805 = vunpack.c.h.b16 %v68
  %v1806 = vunpack.c.l.b16 %v69
  %v1807 = vunpack.c.h.b16 %v69
  %v1808 = vunpack.c.l.b16 %v70
  %v1809 = vunpack.c.h.b16 %v70
  %v1810 = vunpack.c.l.b16 %v71
  %v1811 = vunpack.c.h.b16 %v71
  %v1812 = vunpack.c.l.b16 %v72
  %v1813 = vunpack.c.h.b16 %v72
  %v1814 = vunpack.c.l.b16 %v73
  %v1815 = vunpack.c.h.b16 %v73
  %v1816 = vunpack.c.l.b16 %v74
  %v1817 = vunpack.c.h.b16 %v74
  %v1818 = vunpack.c.l.b16 %v75
  %v1819 = vunpack.c.h.b16 %v75
  %v1820 = vunpack.c.l.b16 %v76
  %v1821 = vunpack.c.h.b16 %v76
  %v1822 = vunpack.c.l.b16 %v77
  %v1823 = vunpack.c.h.b16 %v77
  %v1824 = vunpack.c.l.b16 %v78
  %v1825 = vunpack.c.h.b16 %v78
  %v1826 = vunpack.c.l.b16 %v79
  %v1827 = vunpack.c.h.b16 %v79
  %v1828 = vunpack.c.l.b16 %v80
  %v1829 = vunpack.c.h.b16 %v80
  %v1830 = vunpack.c.l.b16 %v81
  %v1831 = vunpack.c.h.b16 %v81
  %v1832 = vunpack.c.l.b16 %v82
  %v1833 = vunpack.c.h.b16 %v82
  %v1834 = vunpack.c.l.b16 %v83
  %v1835 = vunpack.c.h.b16 %v83
  %v1836 = vunpack.c.l.b16 %v84
  %v1837 = vunpack.c.h.b16 %v84
  %v1838 = vunpack.c.l.b16 %v85
  %v1839 = vunpack.c.h.b16 %v85
  %v1840 = vunpack.c.l.b16 %v86
  %v1841 = vunpack.c.h.b16 %v86
  %v1842 = vunpack.c.l.b16 %v87
  %v1843 = vunpack.c.h.b16 %v87
  %v1844 = vunpack.c.l.b16 %v88
  %v1845 = vunpack.c.h.b16 %v88
  %v1846 = vunpack.c.l.b16 %v89
  %v1847 = vunpack.c.h.b16 %v89
  %v1848 = vunpack.c.l.b16 %v90
  %v1849 = vunpack.c.h.b16 %v90
  %v1850 = vunpack.c.l.b16 %v91
  %v1851 = vunpack.c.h.b16 %v91
  %v1852 = vunpack.c.l.b16 %v92
  %v1853 = vunpack.c.h.b16 %v92
  %v1854 = vunpack.c.l.b16 %v93
  %v1855 = vunpack.c.h.b16 %v93
  %v1856 = vunpack.c.l.b16 %v94
  %v1857 = vunpack.c.h.b16 %v94
  %v1858 = vunpack.c.l.b16 %v95
  %v1859 = vunpack.c.h.b16 %v95
  %v1860 = vunpack.c.l.b16 %v96
  %v1861 = vunpack.c.h.b16 %v96
  %v1862 = vunpack.c.l.b16 %v97
  %v1863 = vunpack.c.h.b16 %v97
  %v1864 = vunpack.c.l.b16 %v98
  %v1865 = vunpack.c.h.b16 %v98
  %v1866 = vunpack.c.l.b16 %v99
  %v1867 = vunpack.c.h.b16 %v99
  %v1868 = vunpack.c.l.b16 %v100
  %v1869 = vunpack.c.h.b16 %v100
  %v1870 = vunpack.c.l.b16 %v101
  %v1871 = vunpack.c.h.b16 %v101
  %v1872 = vunpack.c.l.b16 %v102
  %v1873 = vunpack.c.h.b16 %v102
  %v1874 = vunpack.c.l.b16 %v103
  %v1875 = vunpack.c.h.b16 %v103
  %v1876 = vunpack.c.l.b16 %v104
  %v1877 = vunpack.c.h.b16 %v104
  %v1878 = vunpack.c.l.b16 %v105
  %v1879 = vunpack.c.h.b16 %v105
  %v1880 = vunpack.c.l.b16 %v106
  %v1881 = vunpack.c.h.b16 %v106
  %v1882 = vunpack.c.l.b16 %v107
  %v1883 = vunpack.c.h.b16 %v107
  %v1884 = vunpack.c.l.b16 %v108
  %v1885 = vunpack.c.h.b16 %v108
  %v1886 = vunpack.c.l.b16 %v109
  %v1887 = vunpack.c.h.b16 %v109
  %v1888 = vunpack.c.l.b16 %v110
  %v1889 = vunpack.c.h.b16 %v110
  %v1890 = vunpack.c.l.b16 %v111
  %v1891 = vunpack.c.h.b16 %v111
  %v1892 = vunpack.c.l.b16 %v112
  %v1893 = vunpack.c.h.b16 %v112
  %v1894 = vunpack.c.l.b16 %v113
  %v1895 = vunpack.c.h.b16 %v113
  %v1896 = vunpack.c.l.b16 %v114
  %v1897 = vunpack.c.h.b16 %v114
  %v1898 = vunpack.c.l.b16 %v115
  %v1899 = vunpack.c.h.b16 %v115
  %v1900 = vunpack.c.l.b16 %v116
  %v1901 = vunpack.c.h.b16 %v116
  %v1902 = vunpack.c.l.b16 %v117
  %v1903 = vunpack.c.h.b16 %v117
  %v1904 = vunpack.c.l.b16 %v118
  %v1905 = vunpack.c.h.b16 %v118
  %v1906 = vunpack.c.l.b16 %v119
  %v1907 = vunpack.c.h.b16 %v119
  %v1908 = vunpack.c.l.b16 %v120
  %v1909 = vunpack.c.h.b16 %v120
  %v1910 = vunpack.c.l.b16 %v121
  %v1911 = vunpack.c.h.b16 %v121
  %v1912 = vunpack.c.l.b16 %v122
  %v1913 = vunpack.c.h.b16 %v122
  %v1914 = vunpack.c.l.b16 %v123
  %v1915 = vunpack.c.h.b16 %v123
  %v1916 = vunpack.c.l.b16 %v124
  %v1917 = vunpack.c.h.b16 %v124
  %v1918 = vunpack.c.l.b16 %v125
  %v1919 = vunpack.c.h.b16 %v125
  %v1920 = vunpack.c.l.b16 %v126
  %v1921 = vunpack.c.h.b16 %v126
  %v1922 = vunpack.c.l.b16 %v127
  %v1923 = vunpack.c.h.b16 %v127
  %v1924 = vunpack.c.l.b16 %v128
  %v1925 = vunpack.c.h.b16 %v128
  %v1926 = vunpack.c.l.b16 %v129
  %v1927 = vunpack.c.h.b16 %v129
  %v1928 = vunpack.c.l.b16 %v130
  %v1929 = vunpack.c.h.b16 %v130
  %v1930 = vunpack.c.l.b16 %v131
  %v1931 = vunpack.c.h.b16 %v131
  %v1932 = vunpack.c.l.b16 %v132
  %v1933 = vunpack.c.h.b16 %v132
  %v1934 = vunpack.c.l.b16 %v133
  %v1935 = vunpack.c.h.b16 %v133
  %v1936 = vunpack.c.l.b16 %v134
  %v1937 = vunpack.c.h.b16 %v134
  %v1938 = vunpack.c.l.b16 %v135
  %v1939 = vunpack.c.h.b16 %v135
  %v1940 = vunpack.c.l.b16 %v136
  %v1941 = vunpack.c.h.b16 %v136
  %v1942 = vunpack.c.l.b16 %v137
  %v1943 = vunpack.c.h.b16 %v137
  %v1944 = vunpack.c.l.b16 %v138
  %v1945 = vunpack.c.h.b16 %v138
  %v1946 = vunpack.c.l.b16 %v139
  %v1947 = vunpack.c.h.b16 %v139
  %v1948 = vunpack.c.l.b16 %v140
  %v1949 = vunpack.c.h.b16 %v140
  %v1950 = vunpack.c.l.b16 %v141
  %v1951 = vunpack.c.h.b16 %v141
  %v1952 = vunpack.c.l.b16 %v142
  %v1953 = vunpack.c.h.b16 %v142
  %v1954 = vunpack.c.l.b16 %v143
  %v1955 = vunpack.c.h.b16 %v143
  %v1956 = vunpack.c.l.b16 %v144
  %v1957 = vunpack.c.h.b16 %v144
  %v1958 = vunpack.c.l.b16 %v145
  %v1959 = vunpack.c.h.b16 %v145
  %v1960 = vunpack.c.l.b16 %v146
  %v1961 = vunpack.c.h.b16 %v146
  %v1962 = vunpack.c.l.b16 %v147
  %v1963 = vunpack.c.h.b16 %v147
  %v1964 = vunpack.c.l.b16 %v148
  %v1965 = vunpack.c.h.b16 %v148
  %v1966 = vunpack.c.l.b16 %v149
  %v1967 = vunpack.c.h.b16 %v149
  %v1968 = vunpack.c.l.b16 %v150
  %v1969 = vunpack.c.h.b16 %v150
  %v1970 = vunpack.c.l.b16 %v151
  %v1971 = vunpack.c.h.b16 %v151
  %v1972 = vunpack.c.l.b16 %v152
  %v1973 = vunpack.c.h.b16 %v152
  %v1974 = vunpack.c.l.b16 %v153
  %v1975 = vunpack.c.h.b16 %v153
  %v1976 = vunpack.c.l.b16 %v154
  %v1977 = vunpack.c.h.b16 %v154
  %v1978 = vunpack.c.l.b16 %v155
  %v1979 = vunpack.c.h.b16 %v155
  %v1980 = vunpack.c.l.b16 %v156
  %v1981 = vunpack.c.h.b16 %v156
  %v1982 = vunpack.c.l.b16 %v157
  %v1983 = vunpack.c.h.b16 %v157
  %v1984 = vunpack.c.l.b16 %v158
  %v1985 = vunpack.c.h.b16 %v158
  %v1986 = vunpack.c.l.b16 %v159
  %v1987 = vunpack.c.h.b16 %v159
  %v1988 = vunpack.c.l.b16 %v160
  %v1989 = vunpack.c.h.b16 %v160
  %v1990 = vunpack.c.l.b16 %v161
  %v1991 = vunpack.c.h.b16 %v161
  %v1992 = vunpack.c.l.b16 %v162
  %v1993 = vunpack.c.h.b16 %v162
  %v1994 = vunpack.c.l.b16 %v163
  %v1995 = vunpack.c.h.b16 %v163
  %v1996 = vunpack.c.l.b16 %v164
  %v1997 = vunpack.c.h.b16 %v164
  %v1998 = vunpack.c.l.b16 %v165
  %v1999 = vunpack.c.h.b16 %v165
  %v2000 = vunpack.c.l.b16 %v166
  %v2001 = vunpack.c.h.b16 %v166
  %v2002 = vunpack.c.l.b16 %v167
  %v2003 = vunpack.c.h.b16 %v167
  %v2004 = vunpack.c.l.b16 %v168
  %v2005 = vunpack.c.h.b16 %v168
  %v2006 = vunpack.c.l.b16 %v169
  %v2007 = vunpack.c.h.b16 %v169
  %v2008 = vunpack.c.l.b16 %v170
  %v2009 = vunpack.c.h.b16 %v170
  %v2010 = vunpack.c.l.b16 %v171
  %v2011 = vunpack.c.h.b16 %v171
  %v2012 = vunpack.c.l.b16 %v172
  %v2013 = vunpack.c.h.b16 %v172
  %v2014 = vunpack.c.l.b16 %v173
  %v2015 = vunpack.c.h.b16 %v173
  %v2016 = vunpack.c.l.b16 %v174
  %v2017 = vunpack.c.h.b16 %v174
  %v2018 = vunpack.c.l.b16 %v175
  %v2019 = vunpack.c.h.b16 %v175
  %v2020 = vunpack.c.l.b16 %v176
  %v2021 = vunpack.c.h.b16 %v176
  %v2022 = vunpack.c.l.b16 %v177
  %v2023 = vunpack.c.h.b16 %v177
  %v2024 = vunpack.c.l.b16 %v178
  %v2025 = vunpack.c.h.b16 %v178
  %v2026 = vunpack.c.l.b16 %v179
  %v2027 = vunpack.c.h.b16 %v179
  %v2028 = vunpack.c.l.b16 %v180
  %v2029 = vunpack.c.h.b16 %v180
  %v2030 = vunpack.c.l.b16 %v181
  %v2031 = vunpack.c.h.b16 %v181
  %v2032 = vunpack.c.l.b16 %v182
  %v2033 = vunpack.c.h.b16 %v182
  %v2034 = vunpack.c.l.b16 %v183
  %v2035 = vunpack.c.h.b16 %v183
  %v2036 = vunpack.c.l.b16 %v184
  %v2037 = vunpack.c.h.b16 %v184
  %v2038 = vunpack.c.l.b16 %v185
  %v2039 = vunpack.c.h.b16 %v185
  %v2040 = vunpack.c.l.b16 %v186
  %v2041 = vunpack.c.h.b16 %v186
  %v2042 = vunpack.c.l.b16 %v187
  %v2043 = vunpack.c.h.b16 %v187
  %v2044 = vunpack.c.l.b16 %v188
  %v2045 = vunpack.c.h.b16 %v188
  %v2046 = vunpack.c.l.b16 %v189
  %v2047 = vunpack.c.h.b16 %v189
  %v2048 = vunpack.c.l.b16 %v190
  %v2049 = vunpack.c.h.b16 %v190
  %v2050 = vunpack.c.l.b16 %v191
  %v2051 = vunpack.c.h.b16 %v191
  %v2052 = vunpack.c.l.b16 %v192
  %v2053 = vunpack.c.h.b16 %v192
  %v2054 = vunpack.c.l.b16 %v193
  %v2055 = vunpack.c.h.b16 %v193
  %v2056 = vunpack.c.l.b16 %v194
  %v2057 = vunpack.c.h.b16 %v194
  %v2058 = vunpack.c.l.b16 %v195
  %v2059 = vunpack.c.h.b16 %v195
  %v2060 = vunpack.c.l.b16 %v196
  %v2061 = vunpack.c.h.b16 %v196
  %v2062 = vunpack.c.l.b16 %v197
  %v2063 = vunpack.c.h.b16 %v197
  %v2064 = vunpack.c.l.b16 %v198
  %v2065 = vunpack.c.h.b16 %v198
  %v2066 = vunpack.c.l.b16 %v199
  %v2067 = vunpack.c.h.b16 %v199
  %v2068 = vunpack.c.l.b16 %v200
  %v2069 = vunpack.c.h.b16 %v200
  %v2070 = vunpack.c.l.b16 %v201
  %v2071 = vunpack.c.h.b16 %v201
  %v2072 = vunpack.c.l.b16 %v202
  %v2073 = vunpack.c.h.b16 %v202
  %v2074 = vunpack.c.l.b16 %v203
  %v2075 = vunpack.c.h.b16 %v203
  %v2076 = vunpack.c.l.b16 %v204
  %v2077 = vunpack.c.h.b16 %v204
  %v2078 = vunpack.c.l.b16 %v205
  %v2079 = vunpack.c.h.b16 %v205
  %v2080 = vunpack.c.l.b16 %v206
  %v2081 = vunpack.c.h.b16 %v206
  %v2082 = vunpack.c.l.b16 %v207
  %v2083 = vunpack.c.h.b16 %v207
  %v2084 = vunpack.c.l.b16 %v208
  %v2085 = vunpack.c.h.b16 %v208
  %v2086 = vunpack.c.l.b16 %v209
  %v2087 = vunpack.c.h.b16 %v209
  %v2088 = vunpack.c.l.b16 %v210
  %v2089 = vunpack.c.h.b16 %v210
  %v2090 = vunpack.c.l.b16 %v211
  %v2091 = vunpack.c.h.b16 %v211
  %v2092 = vunpack.c.l.b16 %v212
  %v2093 = vunpack.c.h.b16 %v212
  %v2094 = vunpack.c.l.b16 %v213
  %v2095 = vunpack.c.h.b16 %v213
  %v2096 = vunpack.c.l.b16 %v214
  %v2097 = vunpack.c.h.b16 %v214
  %v2098 = vunpack.c.l.b16 %v215
  %v2099 = vunpack.c.h.b16 %v215
  %v2100 = vunpack.c.l.b16 %v216
  %v2101 = vunpack.c.h.b16 %v216
  %v2102 = vunpack.c.l.b16 %v217
  %v2103 = vunpack.c.h.b16 %v217
  %v2104 = vunpack.c.l.b16 %v218
  %v2105 = vunpack.c.h.b16 %v218
  %v2106 = vunpack.c.l.b16 %v219
  %v2107 = vunpack.c.h.b16 %v219
  %v2108 = vunpack.c.l.b16 %v220
  %v2109 = vunpack.c.h.b16 %v220
  %v2110 = vunpack.c.l.b16 %v221
  %v2111 = vunpack.c.h.b16 %v221
  %v2112 = vunpack.c.l.b16 %v222
  %v2113 = vunpack.c.h.b16 %v222
  %v2114 = vunpack.c.l.b16 %v223
  %v2115 = vunpack.c.h.b16 %v223
  %v2116 = vunpack.c.l.b16 %v224
  %v2117 = vunpack.c.h.b16 %v224
  %v2118 = vunpack.c.l.b16 %v225
  %v2119 = vunpack.c.h.b16 %v225
  %v2120 = vunpack.c.l.b16 %v226
  %v2121 = vunpack.c.h.b16 %v226
  %v2122 = vunpack.c.l.b16 %v227
  %v2123 = vunpack.c.h.b16 %v227
  %v2124 = vunpack.c.l.b16 %v228
  %v2125 = vunpack.c.h.b16 %v228
  %v2126 = vunpack.c.l.b16 %v229
  %v2127 = vunpack.c.h.b16 %v229
  %v2128 = vunpack.c.l.b16 %v230
  %v2129 = vunpack.c.h.b16 %v230
  %v2130 = vunpack.c.l.b16 %v231
  %v2131 = vunpack.c.h.b16 %v231
  %v2132 = vunpack.c.l.b16 %v232
  %v2133 = vunpack.c.h.b16 %v232
  %v2134 = vunpack.c.l.b16 %v233
  %v2135 = vunpack.c.h.b16 %v233
  %v2136 = vunpack.c.l.b16 %v234
  %v2137 = vunpack.c.h.b16 %v234
  %v2138 = vunpack.c.l.b16 %v235
  %v2139 = vunpack.c.h.b16 %v235
  %v2140 = vunpack.c.l.b16 %v236
  %v2141 = vunpack.c.h.b16 %v236
  %v2142 = vunpack.c.l.b16 %v237
  %v2143 = vunpack.c.h.b16 %v237
  %v2144 = vunpack.c.l.b16 %v238
  %v2145 = vunpack.c.h.b16 %v238
  %v2146 = vunpack.c.l.b16 %v239
  %v2147 = vunpack.c.h.b16 %v239
  %v2148 = vunpack.c.l.b16 %v240
  %v2149 = vunpack.c.h.b16 %v240
  %v2150 = vunpack.c.l.b16 %v241
  %v2151 = vunpack.c.h.b16 %v241
  %v2152 = vunpack.c.l.b16 %v242
  %v2153 = vunpack.c.h.b16 %v242
  %v2154 = vunpack.c.l.b16 %v243
  %v2155 = vunpack.c.h.b16 %v243
  %v2156 = vunpack.c.l.b16 %v244
  %v2157 = vunpack.c.h.b16 %v244
  %v2158 = vunpack.c.l.b16 %v245
  %v2159 = vunpack.c.h.b16 %v245
  %v2160 = vunpack.c.l.b16 %v246
  %v2161 = vunpack.c.h.b16 %v246
  %v2162 = vunpack.c.l.b16 %v247
  %v2163 = vunpack.c.h.b16 %v247
  %v2164 = vunpack.c.l.b16 %v248
  %v2165 = vunpack.c.h.b16 %v248
  %v2166 = vunpack.c.l.b16 %v249
  %v2167 = vunpack.c.h.b16 %v249
  %v2168 = vunpack.c.l.b16 %v250
  %v2169 = vunpack.c.h.b16 %v250
  %v2170 = vunpack.c.l.b16 %v251
  %v2171 = vunpack.c.h.b16 %v251
  %v2172 = vunpack.c.l.b16 %v252
  %v2173 = vunpack.c.h.b16 %v252
  %v2174 = vunpack.c.l.b16 %v253
  %v2175 = vunpack.c.h.b16 %v253
  %v2176 = vunpack.c.l.b16 %v254
  %v2177 = vunpack.c.h.b16 %v254
  %v2178 = vunpack.c.l.b16 %v255
  %v2179 = vunpack.c.h.b16 %v255
  %v2180 = vunpack.c.l.b16 %v256
  %v2181 = vunpack.c.h.b16 %v256
  %v2182 = vunpack.c.l.b16 %v257
  %v2183 = vunpack.c.h.b16 %v257
  %v2184 = vunpack.c.l.b16 %v258
  %v2185 = vunpack.c.h.b16 %v258
  %v2186 = vunpack.c.l.b16 %v259
  %v2187 = vunpack.c.h.b16 %v259
  %v2188 = vunpack.c.l.b16 %v260
  %v2189 = vunpack.c.h.b16 %v260
  %v2190 = vunpack.c.l.b16 %v261
  %v2191 = vunpack.c.h.b16 %v261
  %v2192 = vunpack.c.l.b16 %v262
  %v2193 = vunpack.c.h.b16 %v262
  %v2194 = vunpack.c.l.b16 %v263
  %v2195 = vunpack.c.h.b16 %v263
  %v2196 = vunpack.c.l.b16 %v264
  %v2197 = vunpack.c.h.b16 %v264
  %v2198 = vunpack.c.l.b16 %v265
  %v2199 = vunpack.c.h.b16 %v265
  %v2200 = vunpack.c.l.b16 %v266
  %v2201 = vunpack.c.h.b16 %v266
  %v2202 = vunpack.c.l.b16 %v267
  %v2203 = vunpack.c.h.b16 %v267
  %v2204 = vunpack.c.l.b16 %v268
  %v2205 = vunpack.c.h.b16 %v268
  %v2206 = vunpack.c.l.b16 %v269
  %v2207 = vunpack.c.h.b16 %v269
  %v2208 = vunpack.c.l.b16 %v270
  %v2209 = vunpack.c.h.b16 %v270
  %v2210 = vunpack.c.l.b16 %v271
  %v2211 = vunpack.c.h.b16 %v271
  %v2212 = vunpack.c.l.b16 %v272
  %v2213 = vunpack.c.h.b16 %v272
  %v2214 = vunpack.c.l.b16 %v273
  %v2215 = vunpack.c.h.b16 %v273
  %v2216 = vunpack.c.l.b16 %v274
  %v2217 = vunpack.c.h.b16 %v274
  %v2218 = vunpack.c.l.b16 %v275
  %v2219 = vunpack.c.h.b16 %v275
  %v2220 = vunpack.c.l.b16 %v276
  %v2221 = vunpack.c.h.b16 %v276
  %v2222 = vunpack.c.l.b16 %v277
  %v2223 = vunpack.c.h.b16 %v277
  %v2224 = vunpack.c.l.b16 %v278
  %v2225 = vunpack.c.h.b16 %v278
  %v2226 = vunpack.c.l.b16 %v279
  %v2227 = vunpack.c.h.b16 %v279
  %v2228 = vunpack.c.l.b16 %v280
  %v2229 = vunpack.c.h.b16 %v280
  %v2230 = vunpack.c.l.b16 %v281
  %v2231 = vunpack.c.h.b16 %v281
  %v2232 = vunpack.c.l.b16 %v282
  %v2233 = vunpack.c.h.b16 %v282
  %v2234 = vunpack.c.l.b16 %v283
  %v2235 = vunpack.c.h.b16 %v283
  %v2236 = vunpack.c.l.b16 %v284
  %v2237 = vunpack.c.h.b16 %v284
  %v2238 = vunpack.c.l.b16 %v285
  %v2239 = vunpack.c.h.b16 %v285
  %v2240 = vunpack.c.l.b16 %v286
  %v2241 = vunpack.c.h.b16 %v286
  %v2242 = vunpack.c.l.b16 %v287
  %v2243 = vunpack.c.h.b16 %v287
  %v2244 = vunpack.c.l.b16 %v288
  %v2245 = vunpack.c.h.b16 %v288
  %v2246 = vunpack.c.l.b16 %v289
  %v2247 = vunpack.c.h.b16 %v289
  %v2248 = vunpack.c.l.b16 %v290
  %v2249 = vunpack.c.h.b16 %v290
  %v2250 = vunpack.c.l.b16 %v291
  %v2251 = vunpack.c.h.b16 %v291
  %v2252 = vunpack.c.l.b16 %v292
  %v2253 = vunpack.c.h.b16 %v292
  %v2254 = vunpack.c.l.b16 %v293
  %v2255 = vunpack.c.h.b16 %v293
  %v2256 = vunpack.c.l.b16 %v294
  %v2257 = vunpack.c.h.b16 %v294
  %v2258 = vunpack.c.l.b16 %v295
  %v2259 = vunpack.c.h.b16 %v295
  %v2260 = vunpack.c.l.b16 %v296
  %v2261 = vunpack.c.h.b16 %v296
  %v2262 = vunpack.c.l.b16 %v297
  %v2263 = vunpack.c.h.b16 %v297
  %v2264 = vunpack.c.l.b16 %v298
  %v2265 = vunpack.c.h.b16 %v298
  %v2266 = vunpack.c.l.b16 %v299
  %v2267 = vunpack.c.h.b16 %v299
  %v2268 = vunpack.c.l.b16 %v300
  %v2269 = vunpack.c.h.b16 %v300
  %v2270 = vunpack.c.l.b16 %v301
  %v2271 = vunpack.c.h.b16 %v301
  %v2272 = vunpack.c.l.b16 %v302
  %v2273 = vunpack.c.h.b16 %v302
  %v2274 = vunpack.c.l.b16 %v303
  %v2275 = vunpack.c.h.b16 %v303
  %v2276 = vunpack.c.l.b16 %v304
  %v2277 = vunpack.c.h.b16 %v304
  %v2278 = vunpack.c.l.b16 %v305
  %v2279 = vunpack.c.h.b16 %v305
  %v2280 = vunpack.c.l.b16 %v306
  %v2281 = vunpack.c.h.b16 %v306
  %v2282 = vunpack.c.l.b16 %v307
  %v2283 = vunpack.c.h.b16 %v307
  %v2284 = vunpack.c.l.b16 %v308
  %v2285 = vunpack.c.h.b16 %v308
  %v2286 = vunpack.c.l.b16 %v309
  %v2287 = vunpack.c.h.b16 %v309
  %v2288 = vunpack.c.l.b16 %v310
  %v2289 = vunpack.c.h.b16 %v310
  %v2290 = vunpack.c.l.b16 %v311
  %v2291 = vunpack.c.h.b16 %v311
  %v2292 = vunpack.c.l.b16 %v312
  %v2293 = vunpack.c.h.b16 %v312
  %v2294 = vunpack.c.l.b16 %v313
  %v2295 = vunpack.c.h.b16 %v313
  %v2296 = vunpack.c.l.b16 %v314
  %v2297 = vunpack.c.h.b16 %v314
  %v2298 = vunpack.c.l.b16 %v315
  %v2299 = vunpack.c.h.b16 %v315
  %v2300 = vunpack.c.l.b16 %v316
  %v2301 = vunpack.c.h.b16 %v316
  %v2302 = vunpack.c.l.b16 %v317
  %v2303 = vunpack.c.h.b16 %v317
  %v2304 = vunpack.c.l.b16 %v318
  %v2305 = vunpack.c.h.b16 %v318
  %v2306 = vunpack.c.l.b16 %v319
  %v2307 = vunpack.c.h.b16 %v319
  %v2308 = vunpack.c.l.b16 %v320
  %v2309 = vunpack.c.h.b16 %v320
  %v2310 = vunpack.c.l.b16 %v321
  %v2311 = vunpack.c.h.b16 %v321
  %v2312 = vunpack.c.l.b16 %v322
  %v2313 = vunpack.c.h.b16 %v322
  %v2314 = vunpack.c.l.b16 %v323
  %v2315 = vunpack.c.h.b16 %v323
  %v2316 = vunpack.c.l.b16 %v324
  %v2317 = vunpack.c.h.b16 %v324
  %v2318 = vunpack.c.l.b16 %v325
  %v2319 = vunpack.c.h.b16 %v325
  %v2320 = vunpack.c.l.b16 %v326
  %v2321 = vunpack.c.h.b16 %v326
  %v2322 = vunpack.c.l.b16 %v327
  %v2323 = vunpack.c.h.b16 %v327
  %v2324 = vunpack.c.l.b16 %v328
  %v2325 = vunpack.c.h.b16 %v328
  %v2326 = vunpack.c.l.b16 %v329
  %v2327 = vunpack.c.h.b16 %v329
  %v2328 = vunpack.c.l.b16 %v330
  %v2329 = vunpack.c.h.b16 %v330
  %v2330 = vunpack.c.l.b16 %v331
  %v2331 = vunpack.c.h.b16 %v331
  %v2332 = vunpack.c.l.b16 %v332
  %v2333 = vunpack.c.h.b16 %v332
  %v2334 = vunpack.c.l.b16 %v333
  %v2335 = vunpack.c.h.b16 %v333
  %v2336 = vunpack.c.l.b16 %v334
  %v2337 = vunpack.c.h.b16 %v334
  %v2338 = vunpack.c.l.b16 %v335
  %v2339 = vunpack.c.h.b16 %v335
  %v2340 = vunpack.c.l.b16 %v336
  %v2341 = vunpack.c.h.b16 %v336
  %v2342 = vunpack.c.l.b16 %v337
  %v2343 = vunpack.c.h.b16 %v337
  %v2344 = vunpack.c.l.b16 %v338
  %v2345 = vunpack.c.h.b16 %v338
  %v2346 = vunpack.c.l.b16 %v339
  %v2347 = vunpack.c.h.b16 %v339
  %v2348 = vunpack.c.l.b16 %v340
  %v2349 = vunpack.c.h.b16 %v340
  %v2350 = vunpack.c.l.b16 %v341
  %v2351 = vunpack.c.h.b16 %v341
  %v2352 = vunpack.c.l.b16 %v342
  %v2353 = vunpack.c.h.b16 %v342
  %v2354 = vunpack.c.l.b16 %v343
  %v2355 = vunpack.c.h.b16 %v343
  %v2356 = vunpack.c.l.b16 %v344
  %v2357 = vunpack.c.h.b16 %v344
  %v2358 = vunpack.c.l.b16 %v345
  %v2359 = vunpack.c.h.b16 %v345
  %v2360 = vunpack.c.l.b16 %v346
  %v2361 = vunpack.c.h.b16 %v346
  %v2362 = vunpack.c.l.b16 %v347
  %v2363 = vunpack.c.h.b16 %v347
  %v2364 = vunpack.c.l.b16 %v348
  %v2365 = vunpack.c.h.b16 %v348
  %v2366 = vunpack.c.l.b16 %v349
  %v2367 = vunpack.c.h.b16 %v349
  %v2368 = vunpack.c.l.b16 %v350
  %v2369 = vunpack.c.h.b16 %v350
  %v2370 = vunpack.c.l.b16 %v351
  %v2371 = vunpack.c.h.b16 %v351
  %v2372 = vunpack.c.l.b16 %v352
  %v2373 = vunpack.c.h.b16 %v352
  %v2374 = vunpack.c.l.b16 %v353
  %v2375 = vunpack.c.h.b16 %v353
  %v2376 = vunpack.c.l.b16 %v354
  %v2377 = vunpack.c.h.b16 %v354
  %v2378 = vunpack.c.l.b16 %v355
  %v2379 = vunpack.c.h.b16 %v355
  %v2380 = vunpack.c.l.b16 %v356
  %v2381 = vunpack.c.h.b16 %v356
  %v2382 = vunpack.c.l.b16 %v357
  %v2383 = vunpack.c.h.b16 %v357
  %v2384 = vunpack.c.l.b16 %v358
  %v2385 = vunpack.c.h.b16 %v358
  %v2386 = vunpack.c.l.b16 %v359
  %v2387 = vunpack.c.h.b16 %v359
  %v2388 = vunpack.c.l.b16 %v360
  %v2389 = vunpack.c.h.b16 %v360
  %v2390 = vunpack.c.l.b16 %v361
  %v2391 = vunpack.c.h.b16 %v361
  %v2392 = vunpack.c.l.b16 %v362
  %v2393 = vunpack.c.h.b16 %v362
  %v2394 = vunpack.c.l.b16 %v363
  %v2395 = vunpack.c.h.b16 %v363
  %v2396 = vunpack.c.l.b16 %v364
  %v2397 = vunpack.c.h.b16 %v364
  %v2398 = vunpack.c.l.b16 %v365
  %v2399 = vunpack.c.h.b16 %v365
  %v2400 = vunpack.c.l.b16 %v366
  %v2401 = vunpack.c.h.b16 %v366
  %v2402 = vunpack.c.l.b16 %v367
  %v2403 = vunpack.c.h.b16 %v367
  %v2404 = vunpack.c.l.b16 %v368
  %v2405 = vunpack.c.h.b16 %v368
  %v2406 = vunpack.c.l.b16 %v369
  %v2407 = vunpack.c.h.b16 %v369
  %v2408 = vunpack.c.l.b16 %v370
  %v2409 = vunpack.c.h.b16 %v370
  %v2410 = vunpack.c.l.b16 %v371
  %v2411 = vunpack.c.h.b16 %v371
  %v2412 = vunpack.c.l.b16 %v372
  %v2413 = vunpack.c.h.b16 %v372
  %v2414 = vunpack.c.l.b16 %v373
  %v2415 = vunpack.c.h.b16 %v373
  %v2416 = vunpack.c.l.b16 %v374
  %v2417 = vunpack.c.h.b16 %v374
  %v2418 = vunpack.c.l.b16 %v375
  %v2419 = vunpack.c.h.b16 %v375
  %v2420 = vunpack.c.l.b16 %v376
  %v2421 = vunpack.c.h.b16 %v376
  %v2422 = vunpack.c.l.b16 %v377
  %v2423 = vunpack.c.h.b16 %v377
  %v2424 = vunpack.c.l.b16 %v378
  %v2425 = vunpack.c.h.b16 %v378
  %v2426 = vunpack.c.l.b16 %v379
  %v2427 = vunpack.c.h.b16 %v379
  %v2428 = vunpack.c.l.b16 %v380
  %v2429 = vunpack.c.h.b16 %v380
  %v2430 = vunpack.c.l.b16 %v381
  %v2431 = vunpack.c.h.b16 %v381
  %v2432 = vunpack.c.l.b16 %v382
  %v2433 = vunpack.c.h.b16 %v382
  %v2434 = vunpack.c.l.b16 %v383
  %v2435 = vunpack.c.h.b16 %v383
  %v2436 = vunpack.c.l.b16 %v384
  %v2437 = vunpack.c.h.b16 %v384
  %v2438 = vunpack.c.l.b16 %v385
  %v2439 = vunpack.c.h.b16 %v385
  %v2440 = vunpack.c.l.b16 %v386
  %v2441 = vunpack.c.h.b16 %v386
  %v2442 = vunpack.c.l.b16 %v387
  %v2443 = vunpack.c.h.b16 %v387
  %v2444 = vunpack.c.l.b16 %v388
  %v2445 = vunpack.c.h.b16 %v388
  %v2446 = vunpack.c.l.b16 %v389
  %v2447 = vunpack.c.h.b16 %v389
  %v2448 = vunpack.c.l.b16 %v390
  %v2449 = vunpack.c.h.b16 %v390
  %v2450 = vunpack.c.l.b16 %v391
  %v2451 = vunpack.c.h.b16 %v391
  %v2452 = vunpack.c.l.b16 %v392
  %v2453 = vunpack.c.h.b16 %v392
  %v2454 = vunpack.c.l.b16 %v393
  %v2455 = vunpack.c.h.b16 %v393
  %v2456 = vunpack.c.l.b16 %v394
  %v2457 = vunpack.c.h.b16 %v394
  %v2458 = vunpack.c.l.b16 %v395
  %v2459 = vunpack.c.h.b16 %v395
  %v2460 = vunpack.c.l.b16 %v396
  %v2461 = vunpack.c.h.b16 %v396
  %v2462 = vunpack.c.l.b16 %v397
  %v2463 = vunpack.c.h.b16 %v397
  %v2464 = vunpack.c.l.b16 %v398
  %v2465 = vunpack.c.h.b16 %v398
  %v2466 = vunpack.c.l.b16 %v399
  %v2467 = vunpack.c.h.b16 %v399
  %v2468 = vunpack.c.l.b16 %v400
  %v2469 = vunpack.c.h.b16 %v400
  %v2470 = vunpack.c.l.b16 %v401
  %v2471 = vunpack.c.h.b16 %v401
  %v2472 = vunpack.c.l.b16 %v402
  %v2473 = vunpack.c.h.b16 %v402
  %v2474 = vunpack.c.l.b16 %v403
  %v2475 = vunpack.c.h.b16 %v403
  %v2476 = vunpack.c.l.b16 %v404
  %v2477 = vunpack.c.h.b16 %v404
  %v2478 = vunpack.c.l.b16 %v405
  %v2479 = vunpack.c.h.b16 %v405
  %v2480 = vunpack.c.l.b16 %v406
  %v2481 = vunpack.c.h.b16 %v406
  %v2482 = vunpack.c.l.b16 %v407
  %v2483 = vunpack.c.h.b16 %v407
  %v2484 = vunpack.c.l.b16 %v408
  %v2485 = vunpack.c.h.b16 %v408
  %v2486 = vunpack.c.l.b16 %v409
  %v2487 = vunpack.c.h.b16 %v409
  %v2488 = vunpack.c.l.b16 %v410
  %v2489 = vunpack.c.h.b16 %v410
  %v2490 = vunpack.c.l.b16 %v411
  %v2491 = vunpack.c.h.b16 %v411
  %v2492 = vunpack.c.l.b16 %v412
  %v2493 = vunpack.c.h.b16 %v412
  %v2494 = vunpack.c.l.b16 %v413
  %v2495 = vunpack.c.h.b16 %v413
  %v2496 = vunpack.c.l.b16 %v414
  %v2497 = vunpack.c.h.b16 %v414
  %v2498 = vunpack.c.l.b16 %v415
  %v2499 = vunpack.c.h.b16 %v415
  %v2500 = vunpack.c.l.b16 %v416
  %v2501 = vunpack.c.h.b16 %v416
  %v2502 = vunpack.c.l.b16 %v417
  %v2503 = vunpack.c.h.b16 %v417
  %v2504 = vunpack.c.l.b16 %v418
  %v2505 = vunpack.c.h.b16 %v418
  %v2506 = vunpack.c.l.b16 %v419
  %v2507 = vunpack.c.h.b16 %v419
  %v2508 = vunpack.c.l.b16 %v420
  %v2509 = vunpack.c.h.b16 %v420
  %v2510 = vunpack.c.l.b16 %v421
  %v2511 = vunpack.c.h.b16 %v421
  %v2512 = vunpack.c.l.b16 %v422
  %v2513 = vunpack.c.h.b16 %v422
  %v2514 = vunpack.c.l.b16 %v423
  %v2515 = vunpack.c.h.b16 %v423
  %v2516 = vunpack.c.l.b16 %v424
  %v2517 = vunpack.c.h.b16 %v424
  %v2518 = vunpack.c.l.b16 %v425
  %v2519 = vunpack.c.h.b16 %v425
  %v2520 = vunpack.c.l.b16 %v426
  %v2521 = vunpack.c.h.b16 %v426
  %v2522 = vunpack.c.l.b16 %v427
  %v2523 = vunpack.c.h.b16 %v427
  %v2524 = vunpack.c.l.b16 %v428
  %v2525 = vunpack.c.h.b16 %v428
  %v2526 = vunpack.c.l.b16 %v429
  %v2527 = vunpack.c.h.b16 %v429
  %v2528 = vunpack.c.l.b16 %v430
  %v2529 = vunpack.c.h.b16 %v430
  %v2530 = vunpack.c.l.b16 %v431
  %v2531 = vunpack.c.h.b16 %v431
  %v2532 = vunpack.c.l.b16 %v432
  %v2533 = vunpack.c.h.b16 %v432
  %v2534 = vunpack.c.l.b16 %v433
  %v2535 = vunpack.c.h.b16 %v433
  %v2536 = vunpack.c.l.b16 %v434
  %v2537 = vunpack.c.h.b16 %v434
  %v2538 = vunpack.c.l.b16 %v435
  %v2539 = vunpack.c.h.b16 %v435
  %v2540 = vunpack.c.l.b16 %v436
  %v2541 = vunpack.c.h.b16 %v436
  %v2542 = vunpack.c.l.b16 %v437
  %v2543 = vunpack.c.h.b16 %v437
  %v2544 = vunpack.c.l.b16 %v438
  %v2545 = vunpack.c.h.b16 %v438
  %v2546 = vunpack.c.l.b16 %v439
  %v2547 = vunpack.c.h.b16 %v439
  %v2548 = vunpack.c.l.b16 %v440
  %v2549 = vunpack.c.h.b16 %v440
  %v2550 = vunpack.c.l.b16 %v441
  %v2551 = vunpack.c.h.b16 %v441
  %v2552 = vunpack.c.l.b16 %v442
  %v2553 = vunpack.c.h.b16 %v442
  %v2554 = vunpack.c.l.b16 %v443
  %v2555 = vunpack.c.h.b16 %v443
  %v2556 = vunpack.c.l.b16 %v444
  %v2557 = vunpack.c.h.b16 %v444
  %v2558 = vunpack.c.l.b16 %v445
  %v2559 = vunpack.c.h.b16 %v445
  %v2560 = vunpack.c.l.b16 %v446
  %v2561 = vunpack.c.h.b16 %v446
  %v2562 = vunpack.c.l.b16 %v447
  %v2563 = vunpack.c.h.b16 %v447
  %v2564 = vunpack.c.l.b16 %v448
  %v2565 = vunpack.c.h.b16 %v448
  %v2566 = vunpack.c.l.b16 %v449
  %v2567 = vunpack.c.h.b16 %v449
  %v2568 = vunpack.c.l.b16 %v450
  %v2569 = vunpack.c.h.b16 %v450
  %v2570 = vunpack.c.l.b16 %v451
  %v2571 = vunpack.c.h.b16 %v451
  %v2572 = vunpack.c.l.b16 %v452
  %v2573 = vunpack.c.h.b16 %v452
  %v2574 = vunpack.c.l.b16 %v453
  %v2575 = vunpack.c.h.b16 %v453
  %v2576 = vunpack.c.l.b16 %v454
  %v2577 = vunpack.c.h.b16 %v454
  %v2578 = vunpack.c.l.b16 %v455
  %v2579 = vunpack.c.h.b16 %v455
  %v2580 = vunpack.c.l.b16 %v456
  %v2581 = vunpack.c.h.b16 %v456
  %v2582 = vunpack.c.l.b16 %v457
  %v2583 = vunpack.c.h.b16 %v457
  %v2584 = vunpack.c.l.b16 %v458
  %v2585 = vunpack.c.h.b16 %v458
  %v2586 = vunpack.c.l.b16 %v459
  %v2587 = vunpack.c.h.b16 %v459
  %v2588 = vunpack.c.l.b16 %v460
  %v2589 = vunpack.c.h.b16 %v460
  %v2590 = vunpack.c.l.b16 %v461
  %v2591 = vunpack.c.h.b16 %v461
  %v2592 = vunpack.c.l.b16 %v462
  %v2593 = vunpack.c.h.b16 %v462
  %v2594 = vunpack.c.l.b16 %v463
  %v2595 = vunpack.c.h.b16 %v463
  %v2596 = vunpack.c.l.b16 %v464
  %v2597 = vunpack.c.h.b16 %v464
  %v2598 = vunpack.c.l.b16 %v465
  %v2599 = vunpack.c.h.b16 %v465
  %v2600 = vunpack.c.l.b16 %v466
  %v2601 = vunpack.c.h.b16 %v466
  %v2602 = vunpack.c.l.b16 %v467
  %v2603 = vunpack.c.h.b16 %v467
  %v2604 = vunpack.c.l.b16 %v468
  %v2605 = vunpack.c.h.b16 %v468
  %v2606 = vunpack.c.l.b16 %v469
  %v2607 = vunpack.c.h.b16 %v469
  %v2608 = vunpack.c.l.b16 %v470
  %v2609 = vunpack.c.h.b16 %v470
  %v2610 = vunpack.c.l.b16 %v471
  %v2611 = vunpack.c.h.b16 %v471
  %v2612 = vunpack.c.l.b16 %v472
  %v2613 = vunpack.c.h.b16 %v472
  %v2614 = vunpack.c.l.b16 %v473
  %v2615 = vunpack.c.h.b16 %v473
  %v2616 = vunpack.c.l.b16 %v474
  %v2617 = vunpack.c.h.b16 %v474
  %v2618 = vunpack.c.l.b16 %v475
  %v2619 = vunpack.c.h.b16 %v475
  %v2620 = vunpack.c.l.b16 %v476
  %v2621 = vunpack.c.h.b16 %v476
  %v2622 = vunpack.c.l.b16 %v477
  %v2623 = vunpack.c.h.b16 %v477
  %v2624 = vunpack.c.l.b16 %v478
  %v2625 = vunpack.c.h.b16 %v478
  %v2626 = vunpack.c.l.b16 %v479
  %v2627 = vunpack.c.h.b16 %v479
  %v2628 = vunpack.c.l.b16 %v480
  %v2629 = vunpack.c.h.b16 %v480
  %v2630 = vunpack.c.l.b16 %v481
  %v2631 = vunpack.c.h.b16 %v481
  %v2632 = vunpack.c.l.b16 %v482
  %v2633 = vunpack.c.h.b16 %v482
  %v2634 = vunpack.c.l.b16 %v483
  %v2635 = vunpack.c.h.b16 %v483
  %v2636 = vunpack.c.l.b16 %v484
  %v2637 = vunpack.c.h.b16 %v484
  %v2638 = vunpack.c.l.b16 %v485
  %v2639 = vunpack.c.h.b16 %v485
  %v2640 = vunpack.c.l.b16 %v486
  %v2641 = vunpack.c.h.b16 %v486
  %v2642 = vunpack.c.l.b16 %v487
  %v2643 = vunpack.c.h.b16 %v487
  %v2644 = vunpack.c.l.b16 %v488
  %v2645 = vunpack.c.h.b16 %v488
  %v2646 = vunpack.c.l.b16 %v489
  %v2647 = vunpack.c.h.b16 %v489
  %v2648 = vunpack.c.l.b16 %v490
  %v2649 = vunpack.c.h.b16 %v490
  %v2650 = vunpack.c.l.b16 %v491
  %v2651 = vunpack.c.h.b16 %v491
  %v2652 = vunpack.c.l.b16 %v492
  %v2653 = vunpack.c.h.b16 %v492
  %v2654 = vunpack.c.l.b16 %v493
  %v2655 = vunpack.c.h.b16 %v493
  %v2656 = vunpack.c.l.b16 %v494
  %v2657 = vunpack.c.h.b16 %v494
  %v2658 = vunpack.c.l.b16 %v495
  %v2659 = vunpack.c.h.b16 %v495
  %v2660 = vunpack.c.l.b16 %v496
  %v2661 = vunpack.c.h.b16 %v496
  %v2662 = vunpack.c.l.b16 %v497
  %v2663 = vunpack.c.h.b16 %v497
  %v2664 = vunpack.c.l.b16 %v498
  %v2665 = vunpack.c.h.b16 %v498
  %v2666 = vunpack.c.l.b16 %v499
  %v2667 = vunpack.c.h.b16 %v499
  %v2668 = vunpack.c.l.b16 %v500
  %v2669 = vunpack.c.h.b16 %v500
  %v2670 = vunpack.c.l.b16 %v501
  %v2671 = vunpack.c.h.b16 %v501
  %v2672 = vunpack.c.l.b16 %v502
  %v2673 = vunpack.c.h.b16 %v502
  %v2674 = vunpack.c.l.b16 %v503
  %v2675 = vunpack.c.h.b16 %v503
  %v2676 = vunpack.c.l.b16 %v504
  %v2677 = vunpack.c.h.b16 %v504
  %v2678 = vunpack.c.l.b16 %v505
  %v2679 = vunpack.c.h.b16 %v505
  %v2680 = vunpack.c.l.b16 %v506
  %v2681 = vunpack.c.h.b16 %v506
  %v2682 = vunpack.c.l.b16 %v507
  %v2683 = vunpack.c.h.b16 %v507
  %v2684 = vunpack.c.l.b16 %v508
  %v2685 = vunpack.c.h.b16 %v508
  %v2686 = vunpack.c.l.b16 %v509
  %v2687 = vunpack.c.h.b16 %v509
  %v2688 = vunpack.c.l.b16 %v510
  %v2689 = vunpack.c.h.b16 %v510
  %v2690 = vunpack.c.l.b16 %v511
  %v2691 = vunpack.c.h.b16 %v511
  %v2692 = vunpack.c.l.b16 %v512
  %v2693 = vunpack.c.h.b16 %v512
  %v2694 = vunpack.c.l.b16 %v513
  %v2695 = vunpack.c.h.b16 %v513
  %v2696 = vunpack.c.l.b16 %v514
  %v2697 = vunpack.c.h.b16 %v514
  %v2698 = vunpack.c.l.b16 %v515
  %v2699 = vunpack.c.h.b16 %v515
  %v2700 = vunpack.c.l.b16 %v516
  %v2701 = vunpack.c.h.b16 %v516
  %v2702 = vunpack.c.l.b16 %v517
  %v2703 = vunpack.c.h.b16 %v517
  %v2704 = vunpack.c.l.b16 %v518
  %v2705 = vunpack.c.h.b16 %v518
  %v2706 = vunpack.c.l.b16 %v519
  %v2707 = vunpack.c.h.b16 %v519
  %v2708 = vunpack.c.l.b16 %v520
  %v2709 = vunpack.c.h.b16 %v520
  %v2710 = vunpack.c.l.b16 %v521
  %v2711 = vunpack.c.h.b16 %v521
  %v2712 = vunpack.c.l.b16 %v522
  %v2713 = vunpack.c.h.b16 %v522
  %v2714 = vunpack.c.l.b16 %v523
  %v2715 = vunpack.c.h.b16 %v523
  %v2716 = vunpack.c.l.b16 %v524
  %v2717 = vunpack.c.h.b16 %v524
  %v2718 = vunpack.c.l.b16 %v525
  %v2719 = vunpack.c.h.b16 %v525
  %v2720 = vunpack.c.l.b16 %v526
  %v2721 = vunpack.c.h.b16 %v526
  %v2722 = vunpack.c.l.b16 %v527
  %v2723 = vunpack.c.h.b16 %v527
  %v2724 = vunpack.c.l.b16 %v528
  %v2725 = vunpack.c.h.b16 %v528
  %v2726 = vunpack.c.l.b16 %v529
  %v2727 = vunpack.c.h.b16 %v529
  %v2728 = vunpack.c.l.b16 %v530
  %v2729 = vunpack.c.h.b16 %v530
  %v2730 = vunpack.c.l.b16 %v531
  %v2731 = vunpack.c.h.b16 %v531
  %v2732 = vunpack.c.l.b16 %v532
  %v2733 = vunpack.c.h.b16 %v532
  %v2734 = vunpack.c.l.b16 %v533
  %v2735 = vunpack.c.h.b16 %v533
  %v2736 = vunpack.c.l.b16 %v534
  %v2737 = vunpack.c.h.b16 %v534
  %v2738 = vunpack.c.l.b16 %v535
  %v2739 = vunpack.c.h.b16 %v535
  %v2740 = vunpack.c.l.b16 %v536
  %v2741 = vunpack.c.h.b16 %v536
  %v2742 = vunpack.c.l.b16 %v537
  %v2743 = vunpack.c.h.b16 %v537
  %v2744 = vunpack.c.l.b16 %v538
  %v2745 = vunpack.c.h.b16 %v538
  %v2746 = vunpack.c.l.b16 %v539
  %v2747 = vunpack.c.h.b16 %v539
  %v2748 = vunpack.c.l.b16 %v540
  %v2749 = vunpack.c.h.b16 %v540
  %v2750 = vunpack.c.l.b16 %v541
  %v2751 = vunpack.c.h.b16 %v541
  %v2752 = vunpack.c.l.b16 %v542
  %v2753 = vunpack.c.h.b16 %v542
  %v2754 = vunpack.c.l.b16 %v543
  %v2755 = vunpack.c.h.b16 %v543
  %v2756 = vunpack.c.l.b16 %v544
  %v2757 = vunpack.c.h.b16 %v544
  %v2758 = vunpack.c.l.b16 %v545
  %v2759 = vunpack.c.h.b16 %v545
  %v2760 = vunpack.c.l.b16 %v546
  %v2761 = vunpack.c.h.b16 %v546
  %v2762 = vunpack.c.l.b16 %v547
  %v2763 = vunpack.c.h.b16 %v547
  %v2764 = vunpack.c.l.b16 %v548
  %v2765 = vunpack.c.h.b16 %v548
  %v2766 = vunpack.c.l.b16 %v549
  %v2767 = vunpack.c.h.b16 %v549
  %v2768 = vunpack.c.l.b16 %v550
  %v2769 = vunpack.c.h.b16 %v550
  %v2770 = vunpack.c.l.b16 %v551
  %v2771 = vunpack.c.h.b16 %v551
  %v2772 = vunpack.c.l.b16 %v552
  %v2773 = vunpack.c.h.b16 %v552
  %v2774 = vunpack.c.l.b16 %v553
  %v2775 = vunpack.c.h.b16 %v553
  %v2776 = vunpack.c.l.b16 %v554
  %v2777 = vunpack.c.h.b16 %v554
  %v2778 = vunpack.c.l.b16 %v555
  %v2779 = vunpack.c.h.b16 %v555
  %v2780 = vunpack.c.l.b16 %v556
  %v2781 = vunpack.c.h.b16 %v556
  %v2782 = vunpack.c.l.b16 %v557
  %v2783 = vunpack.c.h.b16 %v557
  %v2784 = vunpack.c.l.b16 %v558
  %v2785 = vunpack.c.h.b16 %v558
  %v2786 = vunpack.c.l.b16 %v559
  %v2787 = vunpack.c.h.b16 %v559
  %v2788 = vunpack.c.l.b16 %v560
  %v2789 = vunpack.c.h.b16 %v560
  %v2790 = vunpack.c.l.b16 %v561
  %v2791 = vunpack.c.h.b16 %v561
  %v2792 = vunpack.c.l.b16 %v562
  %v2793 = vunpack.c.h.b16 %v562
  %v2794 = vunpack.c.l.b16 %v563
  %v2795 = vunpack.c.h.b16 %v563
  %v2796 = vunpack.c.l.b16 %v564
  %v2797 = vunpack.c.h.b16 %v564
  %v2798 = vunpack.c.l.b16 %v565
  %v2799 = vunpack.c.h.b16 %v565
  %v2800 = vunpack.c.l.b16 %v566
  %v2801 = vunpack.c.h.b16 %v566
  %v2802 = vunpack.c.l.b16 %v567
  %v2803 = vunpack.c.h.b16 %v567
  %v2804 = vunpack.c.l.b16 %v568
  %v2805 = vunpack.c.h.b16 %v568
  %v2806 = vunpack.c.l.b16 %v569
  %v2807 = vunpack.c.h.b16 %v569
  %v2808 = vunpack.c.l.b16 %v570
  %v2809 = vunpack.c.h.b16 %v570
  %v2810 = vunpack.c.l.b16 %v571
  %v2811 = vunpack.c.h.b16 %v571
  %v2812 = vunpack.c.l.b16 %v572
  %v2813 = vunpack.c.h.b16 %v572
  %v2814 = vunpack.c.l.b16 %v573
  %v2815 = vunpack.c.h.b16 %v573
  %v2816 = vunpack.c.l.b16 %v574
  %v2817 = vunpack.c.h.b16 %v574
  %v2818 = vunpack.c.l.b16 %v575
  %v2819 = vunpack.c.h.b16 %v575
  %v2820 = vunpack.c.l.b16 %v576
  %v2821 = vunpack.c.h.b16 %v576
  %v2822 = vunpack.c.l.b16 %v577
  %v2823 = vunpack.c.h.b16 %v577
  %v2824 = vunpack.c.l.b16 %v578
  %v2825 = vunpack.c.h.b16 %v578
  %v2826 = vunpack.c.l.b16 %v579
  %v2827 = vunpack.c.h.b16 %v579
  %v2828 = vunpack.c.l.b16 %v580
  %v2829 = vunpack.c.h.b16 %v580
  %v2830 = vunpack.c.l.b16 %v581
  %v2831 = vunpack.c.h.b16 %v581
  %v2832 = vunpack.c.l.b16 %v582
  %v2833 = vunpack.c.h.b16 %v582
  %v2834 = vunpack.c.l.b16 %v583
  %v2835 = vunpack.c.h.b16 %v583
  %v2836 = vunpack.c.l.b16 %v584
  %v2837 = vunpack.c.h.b16 %v584
  %v2838 = vunpack.c.l.b16 %v585
  %v2839 = vunpack.c.h.b16 %v585
  %v2840 = vunpack.c.l.b16 %v586
  %v2841 = vunpack.c.h.b16 %v586
  %v2842 = vunpack.c.l.b16 %v587
  %v2843 = vunpack.c.h.b16 %v587
  %v2844 = vunpack.c.l.b16 %v588
  %v2845 = vunpack.c.h.b16 %v588
  %v2846 = vunpack.c.l.b16 %v589
  %v2847 = vunpack.c.h.b16 %v589
  %v2848 = vunpack.c.l.b16 %v590
  %v2849 = vunpack.c.h.b16 %v590
  %v2850 = vunpack.c.l.b16 %v591
  %v2851 = vunpack.c.h.b16 %v591
  %v2852 = vunpack.c.l.b16 %v592
  %v2853 = vunpack.c.h.b16 %v592
  %v2854 = vunpack.c.l.b16 %v593
  %v2855 = vunpack.c.h.b16 %v593
  %v2856 = vunpack.c.l.b16 %v594
  %v2857 = vunpack.c.h.b16 %v594
  %v2858 = vunpack.c.l.b16 %v595
  %v2859 = vunpack.c.h.b16 %v595
  %v2860 = vunpack.c.l.b16 %v596
  %v2861 = vunpack.c.h.b16 %v596
  %v2862 = vunpack.c.l.b16 %v597
  %v2863 = vunpack.c.h.b16 %v597
  %v2864 = vunpack.c.l.b16 %v598
  %v2865 = vunpack.c.h.b16 %v598
  %v2866 = vunpack.c.l.b16 %v599
  %v2867 = vunpack.c.h.b16 %v599
  %v2868 = vunpack.c.l.b16 %v600
  %v2869 = vunpack.c.h.b16 %v600
  %v2870 = vunpack.c.l.b16 %v601
  %v2871 = vunpack.c.h.b16 %v601
  %v2872 = vunpack.c.l.b16 %v602
  %v2873 = vunpack.c.h.b16 %v602
  %v2874 = vunpack.c.l.b16 %v603
  %v2875 = vunpack.c.h.b16 %v603
  %v2876 = vunpack.c.l.b16 %v604
  %v2877 = vunpack.c.h.b16 %v604
  %v2878 = vunpack.c.l.b16 %v605
  %v2879 = vunpack.c.h.b16 %v605
  %v2880 = vunpack.c.l.b16 %v606
  %v2881 = vunpack.c.h.b16 %v606
  %v2882 = vunpack.c.l.b16 %v607
  %v2883 = vunpack.c.h.b16 %v607
  %v2884 = vunpack.c.l.b16 %v608
  %v2885 = vunpack.c.h.b16 %v608
  %v2886 = vunpack.c.l.b16 %v609
  %v2887 = vunpack.c.h.b16 %v609
  %v2888 = vunpack.c.l.b16 %v610
  %v2889 = vunpack.c.h.b16 %v610
  %v2890 = vunpack.c.l.b16 %v611
  %v2891 = vunpack.c.h.b16 %v611
  %v2892 = vunpack.c.l.b16 %v612
  %v2893 = vunpack.c.h.b16 %v612
  %v2894 = vunpack.c.l.b16 %v613
  %v2895 = vunpack.c.h.b16 %v613
  %v2896 = vunpack.c.l.b16 %v614
  %v2897 = vunpack.c.h.b16 %v614
  %v2898 = vunpack.c.l.b16 %v615
  %v2899 = vunpack.c.h.b16 %v615
  %v2900 = vunpack.c.l.b16 %v616
  %v2901 = vunpack.c.h.b16 %v616
  %v2902 = vunpack.c.l.b16 %v617
  %v2903 = vunpack.c.h.b16 %v617
  %v2904 = vunpack.c.l.b16 %v618
  %v2905 = vunpack.c.h.b16 %v618
  %v2906 = vunpack.c.l.b16 %v619
  %v2907 = vunpack.c.h.b16 %v619
  %v2908 = vunpack.c.l.b16 %v620
  %v2909 = vunpack.c.h.b16 %v620
  %v2910 = vunpack.c.l.b16 %v621
  %v2911 = vunpack.c.h.b16 %v621
  %v2912 = vunpack.c.l.b16 %v622
  %v2913 = vunpack.c.h.b16 %v622
  %v2914 = vunpack.c.l.b16 %v623
  %v2915 = vunpack.c.h.b16 %v623
  %v2916 = vunpack.c.l.b16 %v624
  %v2917 = vunpack.c.h.b16 %v624
  %v2918 = vunpack.c.l.b16 %v625
  %v2919 = vunpack.c.h.b16 %v625
  %v2920 = vunpack.c.l.b16 %v626
  %v2921 = vunpack.c.h.b16 %v626
  %v2922 = vunpack.c.l.b16 %v627
  %v2923 = vunpack.c.h.b16 %v627
  %v2924 = vunpack.c.l.b16 %v628
  %v2925 = vunpack.c.h.b16 %v628
  %v2926 = vunpack.c.l.b16 %v629
  %v2927 = vunpack.c.h.b16 %v629
  %v2928 = vunpack.c.l.b16 %v630
  %v2929 = vunpack.c.h.b16 %v630
  %v2930 = vunpack.c.l.b16 %v631
  %v2931 = vunpack.c.h.b16 %v631
  %v2932 = vunpack.c.l.b16 %v632
  %v2933 = vunpack.c.h.b16 %v632
  %v2934 = vunpack.c.l.b16 %v633
  %v2935 = vunpack.c.h.b16 %v633
  %v2936 = vunpack.c.l.b16 %v634
  %v2937 = vunpack.c.h.b16 %v634
  %v2938 = vunpack.c.l.b16 %v635
  %v2939 = vunpack.c.h.b16 %v635
  %v2940 = vunpack.c.l.b16 %v636
  %v2941 = vunpack.c.h.b16 %v636
  %v2942 = vunpack.c.l.b16 %v637
  %v2943 = vunpack.c.h.b16 %v637
  %v2944 = vunpack.c.l.b16 %v638
  %v2945 = vunpack.c.h.b16 %v638
  %v2946 = vunpack.c.l.b16 %v639
  %v2947 = vunpack.c.h.b16 %v639
  %v2948 = vunpack.c.l.b16 %v640
  %v2949 = vunpack.c.h.b16 %v640
  %v2950 = vunpack.c.l.b16 %v641
  %v2951 = vunpack.c.h.b16 %v641
  %v2952 = vunpack.c.l.b16 %v642
  %v2953 = vunpack.c.h.b16 %v642
  %v2954 = vunpack.c.l.b16 %v643
  %v2955 = vunpack.c.h.b16 %v643
  %v2956 = vunpack.c.l.b16 %v644
  %v2957 = vunpack.c.h.b16 %v644
  %v2958 = vunpack.c.l.b16 %v645
  %v2959 = vunpack.c.h.b16 %v645
  %v2960 = vunpack.c.l.b16 %v646
  %v2961 = vunpack.c.h.b16 %v646
  %v2962 = vunpack.c.l.b16 %v647
  %v2963 = vunpack.c.h.b16 %v647
  %v2964 = vunpack.c.l.b16 %v648
  %v2965 = vunpack.c.h.b16 %v648
  %v2966 = vunpack.c.l.b16 %v649
  %v2967 = vunpack.c.h.b16 %v649
  %v2968 = vunpack.c.l.b16 %v650
  %v2969 = vunpack.c.h.b16 %v650
  %v2970 = vunpack.c.l.b16 %v651
  %v2971 = vunpack.c.h.b16 %v651
  %v2972 = vunpack.c.l.b16 %v652
  %v2973 = vunpack.c.h.b16 %v652
  %v2974 = vunpack.c.l.b16 %v653
  %v2975 = vunpack.c.h.b16 %v653
  %v2976 = vunpack.c.l.b16 %v654
  %v2977 = vunpack.c.h.b16 %v654
  %v2978 = vunpack.c.l.b16 %v655
  %v2979 = vunpack.c.h.b16 %v655
  %v2980 = vunpack.c.l.b16 %v656
  %v2981 = vunpack.c.h.b16 %v656
  %v2982 = vunpack.c.l.b16 %v657
  %v2983 = vunpack.c.h.b16 %v657
  %v2984 = vunpack.c.l.b16 %v658
  %v2985 = vunpack.c.h.b16 %v658
  %v2986 = vunpack.c.l.b16 %v659
  %v2987 = vunpack.c.h.b16 %v659
  %v2988 = vunpack.c.l.b16 %v660
  %v2989 = vunpack.c.h.b16 %v660
  %v2990 = vunpack.c.l.b16 %v661
  %v2991 = vunpack.c.h.b16 %v661
  %v2992 = vunpack.c.l.b16 %v662
  %v2993 = vunpack.c.h.b16 %v662
  %v2994 = vunpack.c.l.b16 %v663
  %v2995 = vunpack.c.h.b16 %v663
  %v2996 = vunpack.c.l.b16 %v664
  %v2997 = vunpack.c.h.b16 %v664
  %v2998 = vunpack.c.l.b16 %v665
  %v2999 = vunpack.c.h.b16 %v665
  %v3000 = vunpack.c.l.b16 %v666
  %v3001 = vunpack.c.h.b16 %v666
  %v3002 = vunpack.c.l.b16 %v667
  %v3003 = vunpack.c.h.b16 %v667
  %v3004 = vunpack.c.l.b16 %v668
  %v3005 = vunpack.c.h.b16 %v668
  %v3006 = vunpack.c.l.b16 %v669
  %v3007 = vunpack.c.h.b16 %v669
  %v3008 = vunpack.c.l.b16 %v670
  %v3009 = vunpack.c.h.b16 %v670
  %v3010 = vunpack.c.l.b16 %v671
  %v3011 = vunpack.c.h.b16 %v671
  %v3012 = vunpack.c.l.b16 %v672
  %v3013 = vunpack.c.h.b16 %v672
  %v3014 = vunpack.c.l.b16 %v673
  %v3015 = vunpack.c.h.b16 %v673
  %v3016 = vunpack.c.l.b16 %v674
  %v3017 = vunpack.c.h.b16 %v674
  %v3018 = vunpack.c.l.b16 %v675
  %v3019 = vunpack.c.h.b16 %v675
  %v3020 = vunpack.c.l.b16 %v676
  %v3021 = vunpack.c.h.b16 %v676
  %v3022 = vunpack.c.l.b16 %v677
  %v3023 = vunpack.c.h.b16 %v677
  %v3024 = vunpack.c.l.b16 %v678
  %v3025 = vunpack.c.h.b16 %v678
  %v3026 = vunpack.c.l.b16 %v679
  %v3027 = vunpack.c.h.b16 %v679
  %v3028 = vunpack.c.l.b16 %v680
  %v3029 = vunpack.c.h.b16 %v680
  %v3030 = vunpack.c.l.b16 %v681
  %v3031 = vunpack.c.h.b16 %v681
  %v3032 = vunpack.c.l.b16 %v682
  %v3033 = vunpack.c.h.b16 %v682
  %v3034 = vunpack.c.l.b16 %v683
  %v3035 = vunpack.c.h.b16 %v683
  %v3036 = vunpack.c.l.b16 %v684
  %v3037 = vunpack.c.h.b16 %v684
  %v3038 = vunpack.c.l.b16 %v685
  %v3039 = vunpack.c.h.b16 %v685
  %v3040 = vunpack.c.l.b16 %v686
  %v3041 = vunpack.c.h.b16 %v686
  %v3042 = vunpack.c.l.b16 %v687
  %v3043 = vunpack.c.h.b16 %v687
  %v3044 = vunpack.c.l.b16 %v688
  %v3045 = vunpack.c.h.b16 %v688
  %v3046 = vunpack.c.l.b16 %v689
  %v3047 = vunpack.c.h.b16 %v689
  %v3048 = vunpack.c.l.b16 %v690
  %v3049 = vunpack.c.h.b16 %v690
  %v3050 = vunpack.c.l.b16 %v691
  %v3051 = vunpack.c.h.b16 %v691
  %v3052 = vunpack.c.l.b16 %v692
  %v3053 = vunpack.c.h.b16 %v692
  %v3054 = vunpack.c.l.b16 %v693
  %v3055 = vunpack.c.h.b16 %v693
  %v3056 = vunpack.c.l.b16 %v694
  %v3057 = vunpack.c.h.b16 %v694
  %v3058 = vunpack.c.l.b16 %v695
  %v3059 = vunpack.c.h.b16 %v695
  %v3060 = vunpack.c.l.b16 %v696
  %v3061 = vunpack.c.h.b16 %v696
  %v3062 = vunpack.c.l.b16 %v697
  %v3063 = vunpack.c.h.b16 %v697
  %v3064 = vunpack.c.l.b16 %v698
  %v3065 = vunpack.c.h.b16 %v698
  %v3066 = vunpack.c.l.b16 %v699
  %v3067 = vunpack.c.h.b16 %v699
  %v3068 = vunpack.c.l.b16 %v700
  %v3069 = vunpack.c.h.b16 %v700
  %v3070 = vunpack.c.l.b16 %v701
  %v3071 = vunpack.c.h.b16 %v701
  %v3072 = vunpack.c.l.b16 %v702
  %v3073 = vunpack.c.h.b16 %v702
  %v3074 = vunpack.c.l.b16 %v703
  %v3075 = vunpack.c.h.b16 %v703
  %v3076 = vunpack.c.l.b16 %v704
  %v3077 = vunpack.c.h.b16 %v704
  %v3078 = vunpack.c.l.b16 %v705
  %v3079 = vunpack.c.h.b16 %v705
  %v3080 = vunpack.c.l.b16 %v706
  %v3081 = vunpack.c.h.b16 %v706
  %v3082 = vunpack.c.l.b16 %v707
  %v3083 = vunpack.c.h.b16 %v707
  %v3084 = vunpack.c.l.b16 %v708
  %v3085 = vunpack.c.h.b16 %v708
  %v3086 = vunpack.c.l.b16 %v709
  %v3087 = vunpack.c.h.b16 %v709
  %v3088 = vunpack.c.l.b16 %v710
  %v3089 = vunpack.c.h.b16 %v710
  %v3090 = vunpack.c.l.b16 %v711
  %v3091 = vunpack.c.h.b16 %v711
  %v3092 = vunpack.c.l.b16 %v712
  %v3093 = vunpack.c.h.b16 %v712
  %v3094 = vunpack.c.l.b16 %v713
  %v3095 = vunpack.c.h.b16 %v713
  %v3096 = vunpack.c.l.b16 %v714
  %v3097 = vunpack.c.h.b16 %v714
  %v3098 = vunpack.c.l.b16 %v715
  %v3099 = vunpack.c.h.b16 %v715
  %v3100 = vunpack.c.l.b16 %v716
  %v3101 = vunpack.c.h.b16 %v716
  %v3102 = vunpack.c.l.b16 %v717
  %v3103 = vunpack.c.h.b16 %v717
  %v3104 = vunpack.c.l.b16 %v718
  %v3105 = vunpack.c.h.b16 %v718
  %v3106 = vunpack.c.l.b16 %v719
  %v3107 = vunpack.c.h.b16 %v719
  %v3108 = vunpack.c.l.b16 %v720
  %v3109 = vunpack.c.h.b16 %v720
  %v3110 = vunpack.c.l.b16 %v721
  %v3111 = vunpack.c.h.b16 %v721
  %v3112 = vunpack.c.l.b16 %v722
  %v3113 = vunpack.c.h.b16 %v722
  %v3114 = vunpack.c.l.b16 %v723
  %v3115 = vunpack.c.h.b16 %v723
  %v3116 = vunpack.c.l.b16 %v724
  %v3117 = vunpack.c.h.b16 %v724
  %v3118 = vunpack.c.l.b16 %v725
  %v3119 = vunpack.c.h.b16 %v725
  %v3120 = vunpack.c.l.b16 %v726
  %v3121 = vunpack.c.h.b16 %v726
  %v3122 = vunpack.c.l.b16 %v727
  %v3123 = vunpack.c.h.b16 %v727
  %v3124 = vunpack.c.l.b16 %v728
  %v3125 = vunpack.c.h.b16 %v728
  %v3126 = vunpack.c.l.b16 %v729
  %v3127 = vunpack.c.h.b16 %v729
  %v3128 = vunpack.c.l.b16 %v730
  %v3129 = vunpack.c.h.b16 %v730
  %v3130 = vunpack.c.l.b16 %v731
  %v3131 = vunpack.c.h.b16 %v731
  %v3132 = vunpack.c.l.b16 %v732
  %v3133 = vunpack.c.h.b16 %v732
  %v3134 = vunpack.c.l.b16 %v733
  %v3135 = vunpack.c.h.b16 %v733
  %v3136 = vunpack.c.l.b16 %v734
  %v3137 = vunpack.c.h.b16 %v734
  %v3138 = vunpack.c.l.b16 %v735
  %v3139 = vunpack.c.h.b16 %v735
  %v3140 = vunpack.c.l.b16 %v736
  %v3141 = vunpack.c.h.b16 %v736
  %v3142 = vunpack.c.l.b16 %v737
  %v3143 = vunpack.c.h.b16 %v737
  %v3144 = vunpack.c.l.b16 %v738
  %v3145 = vunpack.c.h.b16 %v738
  %v3146 = vunpack.c.l.b16 %v739
  %v3147 = vunpack.c.h.b16 %v739
  %v3148 = vunpack.c.l.b16 %v740
  %v3149 = vunpack.c.h.b16 %v740
  %v3150 = vunpack.c.l.b16 %v741
  %v3151 = vunpack.c.h.b16 %v741
  %v3152 = vunpack.c.l.b16 %v742
  %v3153 = vunpack.c.h.b16 %v742
  %v3154 = vunpack.c.l.b16 %v743
  %v3155 = vunpack.c.h.b16 %v743
  %v3156 = vunpack.c.l.b16 %v744
  %v3157 = vunpack.c.h.b16 %v744
  %v3158 = vunpack.c.l.b16 %v745
  %v3159 = vunpack.c.h.b16 %v745
  %v3160 = vunpack.c.l.b16 %v746
  %v3161 = vunpack.c.h.b16 %v746
  %v3162 = vunpack.c.l.b16 %v747
  %v3163 = vunpack.c.h.b16 %v747
  %v3164 = vunpack.c.l.b16 %v748
  %v3165 = vunpack.c.h.b16 %v748
  %v3166 = vunpack.c.l.b16 %v749
  %v3167 = vunpack.c.h.b16 %v749
  %v3168 = vunpack.c.l.b16 %v750
  %v3169 = vunpack.c.h.b16 %v750
  %v3170 = vunpack.c.l.b16 %v751
  %v3171 = vunpack.c.h.b16 %v751
  %v3172 = vunpack.c.l.b16 %v752
  %v3173 = vunpack.c.h.b16 %v752
  %v3174 = vunpack.c.l.b16 %v753
  %v3175 = vunpack.c.h.b16 %v753
  %v3176 = vunpack.c.l.b16 %v754
  %v3177 = vunpack.c.h.b16 %v754
  %v3178 = vunpack.c.l.b16 %v755
  %v3179 = vunpack.c.h.b16 %v755
  %v3180 = vunpack.c.l.b16 %v756
  %v3181 = vunpack.c.h.b16 %v756
  %v3182 = vunpack.c.l.b16 %v757
  %v3183 = vunpack.c.h.b16 %v757
  %v3184 = vunpack.c.l.b16 %v758
  %v3185 = vunpack.c.h.b16 %v758
  %v3186 = vunpack.c.l.b16 %v759
  %v3187 = vunpack.c.h.b16 %v759
  %v3188 = vunpack.c.l.b16 %v760
  %v3189 = vunpack.c.h.b16 %v760
  %v3190 = vunpack.c.l.b16 %v761
  %v3191 = vunpack.c.h.b16 %v761
  %v3192 = vunpack.c.l.b16 %v762
  %v3193 = vunpack.c.h.b16 %v762
  %v3194 = vunpack.c.l.b16 %v763
  %v3195 = vunpack.c.h.b16 %v763
  %v3196 = vunpack.c.l.b16 %v764
  %v3197 = vunpack.c.h.b16 %v764
  %v3198 = vunpack.c.l.b16 %v765
  %v3199 = vunpack.c.h.b16 %v765
  %v3200 = vunpack.c.l.b16 %v766
  %v3201 = vunpack.c.h.b16 %v766
  %v3202 = vunpack.c.l.b16 %v767
  %v3203 = vunpack.c.h.b16 %v767
  %v3204 = vunpack.c.l.b16 %v768
  %v3205 = vunpack.c.h.b16 %v768
  %v3206 = vunpack.c.l.b16 %v769
  %v3207 = vunpack.c.h.b16 %v769
  %v3208 = vunpack.c.l.b16 %v770
  %v3209 = vunpack.c.h.b16 %v770
  %v3210 = vunpack.c.l.b16 %v771
  %v3211 = vunpack.c.h.b16 %v771
  %v3212 = vunpack.c.l.b16 %v772
  %v3213 = vunpack.c.h.b16 %v772
  %v3214 = vunpack.c.l.b16 %v773
  %v3215 = vunpack.c.h.b16 %v773
  %v3216 = vunpack.c.l.b16 %v774
  %v3217 = vunpack.c.h.b16 %v774
  %v3218 = vunpack.c.l.b16 %v775
  %v3219 = vunpack.c.h.b16 %v775
  %v3220 = vunpack.c.l.b16 %v776
  %v3221 = vunpack.c.h.b16 %v776
  %v3222 = vunpack.c.l.b16 %v777
  %v3223 = vunpack.c.h.b16 %v777
  %v3224 = vunpack.c.l.b16 %v778
  %v3225 = vunpack.c.h.b16 %v778
  %v3226 = vunpack.c.l.b16 %v779
  %v3227 = vunpack.c.h.b16 %v779
  %v3228 = vunpack.c.l.b16 %v780
  %v3229 = vunpack.c.h.b16 %v780
  %v3230 = vunpack.c.l.b16 %v781
  %v3231 = vunpack.c.h.b16 %v781
  %v3232 = vunpack.c.l.b16 %v782
  %v3233 = vunpack.c.h.b16 %v782
  %v3234 = vunpack.c.l.b16 %v783
  %v3235 = vunpack.c.h.b16 %v783
  %v3236 = vunpack.c.l.b16 %v784
  %v3237 = vunpack.c.h.b16 %v784
  %v3238 = vunpack.c.l.b16 %v785
  %v3239 = vunpack.c.h.b16 %v785
  %v3240 = vunpack.c.l.b16 %v786
  %v3241 = vunpack.c.h.b16 %v786
  %v3242 = vunpack.c.l.b16 %v787
  %v3243 = vunpack.c.h.b16 %v787
  %v3244 = vunpack.c.l.b16 %v788
  %v3245 = vunpack.c.h.b16 %v788
  %v3246 = vunpack.c.l.b16 %v789
  %v3247 = vunpack.c.h.b16 %v789
  %v3248 = vunpack.c.l.b16 %v790
  %v3249 = vunpack.c.h.b16 %v790
  %v3250 = vunpack.c.l.b16 %v791
  %v3251 = vunpack.c.h.b16 %v791
  %v3252 = vunpack.c.l.b16 %v792
  %v3253 = vunpack.c.h.b16 %v792
  %v3254 = vunpack.c.l.b16 %v793
  %v3255 = vunpack.c.h.b16 %v793
  %v3256 = vunpack.c.l.b16 %v794
  %v3257 = vunpack.c.h.b16 %v794
  %v3258 = vunpack.c.l.b16 %v795
  %v3259 = vunpack.c.h.b16 %v795
  %v3260 = vunpack.c.l.b16 %v796
  %v3261 = vunpack.c.h.b16 %v796
  %v3262 = vunpack.c.l.b16 %v797
  %v3263 = vunpack.c.h.b16 %v797
  %v3264 = vunpack.c.l.b16 %v798
  %v3265 = vunpack.c.h.b16 %v798
  %v3266 = vunpack.c.l.b16 %v799
  %v3267 = vunpack.c.h.b16 %v799
  %v3268 = vunpack.c.l.b16 %v800
  %v3269 = vunpack.c.h.b16 %v800
  %v3270 = vunpack.c.l.b16 %v801
  %v3271 = vunpack.c.h.b16 %v801
  %v3272 = vunpack.c.l.b16 %v802
  %v3273 = vunpack.c.h.b16 %v802
  %v3274 = vunpack.c.l.b16 %v803
  %v3275 = vunpack.c.h.b16 %v803
  %v3276 = vunpack.c.l.b16 %v804
  %v3277 = vunpack.c.h.b16 %v804
  %v3278 = vunpack.c.l.b16 %v805
  %v3279 = vunpack.c.h.b16 %v805
  %v3280 = vunpack.c.l.b16 %v806
  %v3281 = vunpack.c.h.b16 %v806
  %v3282 = vunpack.c.l.b16 %v807
  %v3283 = vunpack.c.h.b16 %v807
  %v3284 = vunpack.c.l.b16 %v808
  %v3285 = vunpack.c.h.b16 %v808
  %v3286 = vunpack.c.l.b16 %v809
  %v3287 = vunpack.c.h.b16 %v809
  %v3288 = vunpack.c.l.b16 %v810
  %v3289 = vunpack.c.h.b16 %v810
  %v3290 = vunpack.c.l.b16 %v811
  %v3291 = vunpack.c.h.b16 %v811
  %v3292 = vunpack.c.l.b16 %v812
  %v3293 = vunpack.c.h.b16 %v812
  %v3294 = vunpack.c.l.b16 %v813
  %v3295 = vunpack.c.h.b16 %v813
  %v3296 = vunpack.c.l.b16 %v814
  %v3297 = vunpack.c.h.b16 %v814
  %v3298 = vunpack.c.l.b16 %v815
  %v3299 = vunpack.c.h.b16 %v815
  %v3300 = vunpack.c.l.b16 %v816
  %v3301 = vunpack.c.h.b16 %v816
  %v3302 = vunpack.c.l.b16 %v817
  %v3303 = vunpack.c.h.b16 %v817
  %v3304 = vunpack.c.l.b16 %v818
  %v3305 = vunpack.c.h.b16 %v818
  %v3306 = vunpack.c.l.b16 %v819
  %v3307 = vunpack.c.h.b16 %v819
  %v3308 = vunpack.c.l.b16 %v820
  %v3309 = vunpack.c.h.b16 %v820
  %v3310 = vunpack.c.l.b16 %v821
  %v3311 = vunpack.c.h.b16 %v821
  %v3312 = vunpack.c.l.b16 %v822
  %v3313 = vunpack.c.h.b16 %v822
  %v3314 = vunpack.c.l.b16 %v823
  %v3315 = vunpack.c.h.b16 %v823
  %v3316 = vunpack.c.l.b16 %v824
  %v3317 = vunpack.c.h.b16 %v824
  %v3318 = vunpack.c.l.b16 %v825
  %v3319 = vunpack.c.h.b16 %v825
  %v3320 = vunpack.c.l.b16 %v826
  %v3321 = vunpack.c.h.b16 %v826
  %v3322 = vunpack.c.l.b16 %v827
  %v3323 = vunpack.c.h.b16 %v827
  %v3324 = vunpack.c.l.b16 %v828
  %v3325 = vunpack.c.h.b16 %v828
  %v3326 = vunpack.c.l.b16 %v829
  %v3327 = vunpack.c.h.b16 %v829
  %v3328 = vunpack.c.l.b16 %v830
  %v3329 = vunpack.c.h.b16 %v830
  %v3330 = vpack.c.b16 %v1766, %v1762
  %v3331 = vpack.c.b16 %v1767, %v1763
  %v3332 = vpack.c.b16 %v1768, %v1764
  %v3333 = vpack.c.b16 %v1769, %v1765
  %v3334 = vpack.c.b16 %v1774, %v1770
  %v3335 = vpack.c.b16 %v1775, %v1771
  %v3336 = vpack.c.b16 %v1776, %v1772
  %v3337 = vpack.c.b16 %v1777, %v1773
  %v3338 = vpack.c.b16 %v1782, %v1778
  %v3339 = vpack.c.b16 %v1783, %v1779
  %v3340 = vpack.c.b16 %v1784, %v1780
  %v3341 = vpack.c.b16 %v1785, %v1781
  %v3342 = vpack.c.b16 %v1790, %v1786
  %v3343 = vpack.c.b16 %v1791, %v1787
  %v3344 = vpack.c.b16 %v1792, %v1788
  %v3345 = vpack.c.b16 %v1793, %v1789
  %v3346 = vpack.c.b16 %v1798, %v1794
  %v3347 = vpack.c.b16 %v1799, %v1795
  %v3348 = vpack.c.b16 %v1800, %v1796
  %v3349 = vpack.c.b16 %v1801, %v1797
  %v3350 = vpack.c.b16 %v1806, %v1802
  %v3351 = vpack.c.b16 %v1807, %v1803
  %v3352 = vpack.c.b16 %v1808, %v1804
  %v3353 = vpack.c.b16 %v1809, %v1805
  %v3354 = vpack.c.b16 %v1814, %v1810
  %v3355 = vpack.c.b16 %v1815, %v1811
  %v3356 = vpack.c.b16 %v1816, %v1812
  %v3357 = vpack.c.b16 %v1817, %v1813
  %v3358 = vpack.c.b16 %v1822, %v1818
  %v3359 = vpack.c.b16 %v1823, %v1819
  %v3360 = vpack.c.b16 %v1824, %v1820
  %v3361 = vpack.c.b16 %v1825, %v1821
  %v3362 = vpack.c.b16 %v1830, %v1826
  %v3363 = vpack.c.b16 %v1831, %v1827
  %v3364 = vpack.c.b16 %v1832, %v1828
  %v3365 = vpack.c.b16 %v1833, %v1829
  %v3366 = vpack.c.b16 %v1838, %v1834
  %v3367 = vpack.c.b16 %v1839, %v1835
  %v3368 = vpack.c.b16 %v1840, %v1836
  %v3369 = vpack.c.b16 %v1841, %v1837
  %v3370 = vpack.c.b16 %v1846, %v1842
  %v3371 = vpack.c.b16 %v1847, %v1843
  %v3372 = vpack.c.b16 %v1848, %v1844
  %v3373 = vpack.c.b16 %v1849, %v1845
  %v3374 = vpack.c.b16 %v1854, %v1850
  %v3375 = vpack.c.b16 %v1855, %v1851
  %v3376 = vpack.c.b16 %v1856, %v1852
  %v3377 = vpack.c.b16 %v1857, %v1853
  %v3378 = vpack.c.b16 %v1862, %v1858
  %v3379 = vpack.c.b16 %v1863, %v1859
  %v3380 = vpack.c.b16 %v1864, %v1860
  %v3381 = vpack.c.b16 %v1865, %v1861
  %v3382 = vpack.c.b16 %v1870, %v1866
  %v3383 = vpack.c.b16 %v1871, %v1867
  %v3384 = vpack.c.b16 %v1872, %v1868
  %v3385 = vpack.c.b16 %v1873, %v1869
  %v3386 = vpack.c.b16 %v1878, %v1874
  %v3387 = vpack.c.b16 %v1879, %v1875
  %v3388 = vpack.c.b16 %v1880, %v1876
  %v3389 = vpack.c.b16 %v1881, %v1877
  %v3390 = vpack.c.b16 %v1886, %v1882
  %v3391 = vpack.c.b16 %v1887, %v1883
  %v3392 = vpack.c.b16 %v1888, %v1884
  %v3393 = vpack.c.b16 %v1889, %v1885
  %v3394 = vpack.c.b16 %v1894, %v1890
  %v3395 = vpack.c.b16 %v1895, %v1891
  %v3396 = vpack.c.b16 %v1896, %v1892
  %v3397 = vpack.c.b16 %v1897, %v1893
  %v3398 = vpack.c.b16 %v1902, %v1898
  %v3399 = vpack.c.b16 %v1903, %v1899
  %v3400 = vpack.c.b16 %v1904, %v1900
  %v3401 = vpack.c.b16 %v1905, %v1901
  %v3402 = vpack.c.b16 %v1910, %v1906
  %v3403 = vpack.c.b16 %v1911, %v1907
  %v3404 = vpack.c.b16 %v1912, %v1908
  %v3405 = vpack.c.b16 %v1913, %v1909
  %v3406 = vpack.c.b16 %v1918, %v1914
  %v3407 = vpack.c.b16 %v1919, %v1915
  %v3408 = vpack.c.b16 %v1920, %v1916
  %v3409 = vpack.c.b16 %v1921, %v1917
  %v3410 = vpack.c.b16 %v1926, %v1922
  %v3411 = vpack.c.b16 %v1927, %v1923
  %v3412 = vpack.c.b16 %v1928, %v1924
  %v3413 = vpack.c.b16 %v1929, %v1925
  %v3414 = vpack.c.b16 %v1934, %v1930
  %v3415 = vpack.c.b16 %v1935, %v1931
  %v3416 = vpack.c.b16 %v1936, %v1932
  %v3417 = vpack.c.b16 %v1937, %v1933
  %v3418 = vpack.c.b16 %v1942, %v1938
  %v3419 = vpack.c.b16 %v1943, %v1939
  %v3420 = vpack.c.b16 %v1944, %v1940
  %v3421 = vpack.c.b16 %v1945, %v1941
  %v3422 = vpack.c.b16 %v1950, %v1946
  %v3423 = vpack.c.b16 %v1951, %v1947
  %v3424 = vpack.c.b16 %v1952, %v1948
  %v3425 = vpack.c.b16 %v1953, %v1949
  %v3426 = vpack.c.b16 %v1958, %v1954
  %v3427 = vpack.c.b16 %v1959, %v1955
  %v3428 = vpack.c.b16 %v1960, %v1956
  %v3429 = vpack.c.b16 %v1961, %v1957
  %v3430 = vpack.c.b16 %v1966, %v1962
  %v3431 = vpack.c.b16 %v1967, %v1963
  %v3432 = vpack.c.b16 %v1968, %v1964
  %v3433 = vpack.c.b16 %v1969, %v1965
  %v3434 = vpack.c.b16 %v1974, %v1970
  %v3435 = vpack.c.b16 %v1975, %v1971
  %v3436 = vpack.c.b16 %v1976, %v1972
  %v3437 = vpack.c.b16 %v1977, %v1973
  %v3438 = vpack.c.b16 %v1982, %v1978
  %v3439 = vpack.c.b16 %v1983, %v1979
  %v3440 = vpack.c.b16 %v1984, %v1980
  %v3441 = vpack.c.b16 %v1985, %v1981
  %v3442 = vpack.c.b16 %v1990, %v1986
  %v3443 = vpack.c.b16 %v1991, %v1987
  %v3444 = vpack.c.b16 %v1992, %v1988
  %v3445 = vpack.c.b16 %v1993, %v1989
  %v3446 = vpack.c.b16 %v1998, %v1994
  %v3447 = vpack.c.b16 %v1999, %v1995
  %v3448 = vpack.c.b16 %v2000, %v1996
  %v3449 = vpack.c.b16 %v2001, %v1997
  %v3450 = vpack.c.b16 %v2006, %v2002
  %v3451 = vpack.c.b16 %v2007, %v2003
  %v3452 = vpack.c.b16 %v2008, %v2004
  %v3453 = vpack.c.b16 %v2009, %v2005
  %v3454 = vpack.c.b16 %v2014, %v2010
  %v3455 = vpack.c.b16 %v2015, %v2011
  %v3456 = vpack.c.b16 %v2016, %v2012
  %v3457 = vpack.c.b16 %v2017, %v2013
  %v3458 = vpack.c.b16 %v2022, %v2018
  %v3459 = vpack.c.b16 %v2023, %v2019
  %v3460 = vpack.c.b16 %v2024, %v2020
  %v3461 = vpack.c.b16 %v2025, %v2021
  %v3462 = vpack.c.b16 %v2030, %v2026
  %v3463 = vpack.c.b16 %v2031, %v2027
  %v3464 = vpack.c.b16 %v2032, %v2028
  %v3465 = vpack.c.b16 %v2033, %v2029
  %v3466 = vpack.c.b16 %v2038, %v2034
  %v3467 = vpack.c.b16 %v2039, %v2035
  %v3468 = vpack.c.b16 %v2040, %v2036
  %v3469 = vpack.c.b16 %v2041, %v2037
  %v3470 = vpack.c.b16 %v2046, %v2042
  %v3471 = vpack.c.b16 %v2047, %v2043
  %v3472 = vpack.c.b16 %v2048, %v2044
  %v3473 = vpack.c.b16 %v2049, %v2045
  %v3474 = vpack.c.b16 %v2054, %v2050
  %v3475 = vpack.c.b16 %v2055, %v2051
  %v3476 = vpack.c.b16 %v2056, %v2052
  %v3477 = vpack.c.b16 %v2057, %v2053
  %v3478 = vpack.c.b16 %v2062, %v2058
  %v3479 = vpack.c.b16 %v2063, %v2059
  %v3480 = vpack.c.b16 %v2064, %v2060
  %v3481 = vpack.c.b16 %v2065, %v2061
  %v3482 = vpack.c.b16 %v2070, %v2066
  %v3483 = vpack.c.b16 %v2071, %v2067
  %v3484 = vpack.c.b16 %v2072, %v2068
  %v3485 = vpack.c.b16 %v2073, %v2069
  %v3486 = vpack.c.b16 %v2078, %v2074
  %v3487 = vpack.c.b16 %v2079, %v2075
  %v3488 = vpack.c.b16 %v2080, %v2076
  %v3489 = vpack.c.b16 %v2081, %v2077
  %v3490 = vpack.c.b16 %v2086, %v2082
  %v3491 = vpack.c.b16 %v2087, %v2083
  %v3492 = vpack.c.b16 %v2088, %v2084
  %v3493 = vpack.c.b16 %v2089, %v2085
  %v3494 = vpack.c.b16 %v2094, %v2090
  %v3495 = vpack.c.b16 %v2095, %v2091
  %v3496 = vpack.c.b16 %v2096, %v2092
  %v3497 = vpack.c.b16 %v2097, %v2093
  %v3498 = vpack.c.b16 %v2102, %v2098
  %v3499 = vpack.c.b16 %v2103, %v2099
  %v3500 = vpack.c.b16 %v2104, %v2100
  %v3501 = vpack.c.b16 %v2105, %v2101
  %v3502 = vpack.c.b16 %v2110, %v2106
  %v3503 = vpack.c.b16 %v2111, %v2107
  %v3504 = vpack.c.b16 %v2112, %v2108
  %v3505 = vpack.c.b16 %v2113, %v2109
  %v3506 = vpack.c.b16 %v2118, %v2114
  %v3507 = vpack.c.b16 %v2119, %v2115
  %v3508 = vpack.c.b16 %v2120, %v2116
  %v3509 = vpack.c.b16 %v2121, %v2117
  %v3510 = vpack.c.b16 %v2126, %v2122
  %v3511 = vpack.c.b16 %v2127, %v2123
  %v3512 = vpack.c.b16 %v2128, %v2124
  %v3513 = vpack.c.b16 %v2129, %v2125
  %v3514 = vpack.c.b16 %v2134, %v2130
  %v3515 = vpack.c.b16 %v2135, %v2131
  %v3516 = vpack.c.b16 %v2136, %v2132
  %v3517 = vpack.c.b16 %v2137, %v2133
  %v3518 = vpack.c.b16 %v2142, %v2138
  %v3519 = vpack.c.b16 %v2143, %v2139
  %v3520 = vpack.c.b16 %v2144, %v2140
  %v3521 = vpack.c.b16 %v2145, %v2141
  %v3522 = vpack.c.b16 %v2150, %v2146
  %v3523 = vpack.c.b16 %v2151, %v2147
  %v3524 = vpack.c.b16 %v2152, %v2148
  %v3525 = vpack.c.b16 %v2153, %v2149
  %v3526 = vpack.c.b16 %v2158, %v2154
  %v3527 = vpack.c.b16 %v2159, %v2155
  %v3528 = vpack.c.b16 %v2160, %v2156
  %v3529 = vpack.c.b16 %v2161, %v2157
  %v3530 = vpack.c.b16 %v2166, %v2162
  %v3531 = vpack.c.b16 %v2167, %v2163
  %v3532 = vpack.c.b16 %v2168, %v2164
  %v3533 = vpack.c.b16 %v2169, %v2165
  %v3534 = vpack.c.b16 %v2174, %v2170
  %v3535 = vpack.c.b16 %v2175, %v2171
  %v3536 = vpack.c.b16 %v2176, %v2172
  %v3537 = vpack.c.b16 %v2177, %v2173
  %v3538 = vpack.c.b16 %v2182, %v2178
  %v3539 = vpack.c.b16 %v2183, %v2179
  %v3540 = vpack.c.b16 %v2184, %v2180
  %v3541 = vpack.c.b16 %v2185, %v2181
  %v3542 = vpack.c.b16 %v2190, %v2186
  %v3543 = vpack.c.b16 %v2191, %v2187
  %v3544 = vpack.c.b16 %v2192, %v2188
  %v3545 = vpack.c.b16 %v2193, %v2189
  %v3546 = vpack.c.b16 %v2198, %v2194
  %v3547 = vpack.c.b16 %v2199, %v2195
  %v3548 = vpack.c.b16 %v2200, %v2196
  %v3549 = vpack.c.b16 %v2201, %v2197
  %v3550 = vpack.c.b16 %v2206, %v2202
  %v3551 = vpack.c.b16 %v2207, %v2203
  %v3552 = vpack.c.b16 %v2208, %v2204
  %v3553 = vpack.c.b16 %v2209, %v2205
  %v3554 = vpack.c.b16 %v2214, %v2210
  %v3555 = vpack.c.b16 %v2215, %v2211
  %v3556 = vpack.c.b16 %v2216, %v2212
  %v3557 = vpack.c.b16 %v2217, %v2213
  %v3558 = vpack.c.b16 %v2222, %v2218
  %v3559 = vpack.c.b16 %v2223, %v2219
  %v3560 = vpack.c.b16 %v2224, %v2220
  %v3561 = vpack.c.b16 %v2225, %v2221
  %v3562 = vpack.c.b16 %v2230, %v2226
  %v3563 = vpack.c.b16 %v2231, %v2227
  %v3564 = vpack.c.b16 %v2232, %v2228
  %v3565 = vpack.c.b16 %v2233, %v2229
  %v3566 = vpack.c.b16 %v2238, %v2234
  %v3567 = vpack.c.b16 %v2239, %v2235
  %v3568 = vpack.c.b16 %v2240, %v2236
  %v3569 = vpack.c.b16 %v2241, %v2237
  %v3570 = vpack.c.b16 %v2246, %v2242
  %v3571 = vpack.c.b16 %v2247, %v2243
  %v3572 = vpack.c.b16 %v2248, %v2244
  %v3573 = vpack.c.b16 %v2249, %v2245
  %v3574 = vpack.c.b16 %v2254, %v2250
  %v3575 = vpack.c.b16 %v2255, %v2251
  %v3576 = vpack.c.b16 %v2256, %v2252
  %v3577 = vpack.c.b16 %v2257, %v2253
  %v3578 = vpack.c.b16 %v2262, %v2258
  %v3579 = vpack.c.b16 %v2263, %v2259
  %v3580 = vpack.c.b16 %v2264, %v2260
  %v3581 = vpack.c.b16 %v2265, %v2261
  %v3582 = vpack.c.b16 %v2270, %v2266
  %v3583 = vpack.c.b16 %v2271, %v2267
  %v3584 = vpack.c.b16 %v2272, %v2268
  %v3585 = vpack.c.b16 %v2273, %v2269
  %v3586 = vpack.c.b16 %v2278, %v2274
  %v3587 = vpack.c.b16 %v2279, %v2275
  %v3588 = vpack.c.b16 %v2280, %v2276
  %v3589 = vpack.c.b16 %v2281, %v2277
  %v3590 = vpack.c.b16 %v2286, %v2282
  %v3591 = vpack.c.b16 %v2287, %v2283
  %v3592 = vpack.c.b16 %v2288, %v2284
  %v3593 = vpack.c.b16 %v2289, %v2285
  %v3594 = vpack.c.b16 %v2294, %v2290
  %v3595 = vpack.c.b16 %v2295, %v2291
  %v3596 = vpack.c.b16 %v2296, %v2292
  %v3597 = vpack.c.b16 %v2297, %v2293
  %v3598 = vpack.c.b16 %v2302, %v2298
  %v3599 = vpack.c.b16 %v2303, %v2299
  %v3600 = vpack.c.b16 %v2304, %v2300
  %v3601 = vpack.c.b16 %v2305, %v2301
  %v3602 = vpack.c.b16 %v2310, %v2306
  %v3603 = vpack.c.b16 %v2311, %v2307
  %v3604 = vpack.c.b16 %v2312, %v2308
  %v3605 = vpack.c.b16 %v2313, %v2309
  %v3606 = vpack.c.b16 %v2318, %v2314
  %v3607 = vpack.c.b16 %v2319, %v2315
  %v3608 = vpack.c.b16 %v2320, %v2316
  %v3609 = vpack.c.b16 %v2321, %v2317
  %v3610 = vpack.c.b16 %v2326, %v2322
  %v3611 = vpack.c.b16 %v2327, %v2323
  %v3612 = vpack.c.b16 %v2328, %v2324
  %v3613 = vpack.c.b16 %v2329, %v2325
  %v3614 = vpack.c.b16 %v2334, %v2330
  %v3615 = vpack.c.b16 %v2335, %v2331
  %v3616 = vpack.c.b16 %v2336, %v2332
  %v3617 = vpack.c.b16 %v2337, %v2333
  %v3618 = vpack.c.b16 %v2342, %v2338
  %v3619 = vpack.c.b16 %v2343, %v2339
  %v3620 = vpack.c.b16 %v2344, %v2340
  %v3621 = vpack.c.b16 %v2345, %v2341
  %v3622 = vpack.c.b16 %v2350, %v2346
  %v3623 = vpack.c.b16 %v2351, %v2347
  %v3624 = vpack.c.b16 %v2352, %v2348
  %v3625 = vpack.c.b16 %v2353, %v2349
  %v3626 = vpack.c.b16 %v2358, %v2354
  %v3627 = vpack.c.b16 %v2359, %v2355
  %v3628 = vpack.c.b16 %v2360, %v2356
  %v3629 = vpack.c.b16 %v2361, %v2357
  %v3630 = vpack.c.b16 %v2366, %v2362
  %v3631 = vpack.c.b16 %v2367, %v2363
  %v3632 = vpack.c.b16 %v2368, %v2364
  %v3633 = vpack.c.b16 %v2369, %v2365
  %v3634 = vpack.c.b16 %v2374, %v2370
  %v3635 = vpack.c.b16 %v2375, %v2371
  %v3636 = vpack.c.b16 %v2376, %v2372
  %v3637 = vpack.c.b16 %v2377, %v2373
  %v3638 = vpack.c.b16 %v2382, %v2378
  %v3639 = vpack.c.b16 %v2383, %v2379
  %v3640 = vpack.c.b16 %v2384, %v2380
  %v3641 = vpack.c.b16 %v2385, %v2381
  %v3642 = vpack.c.b16 %v2390, %v2386
  %v3643 = vpack.c.b16 %v2391, %v2387
  %v3644 = vpack.c.b16 %v2392, %v2388
  %v3645 = vpack.c.b16 %v2393, %v2389
  %v3646 = vpack.c.b16 %v2398, %v2394
  %v3647 = vpack.c.b16 %v2399, %v2395
  %v3648 = vpack.c.b16 %v2400, %v2396
  %v3649 = vpack.c.b16 %v2401, %v2397
  %v3650 = vpack.c.b16 %v2406, %v2402
  %v3651 = vpack.c.b16 %v2407, %v2403
  %v3652 = vpack.c.b16 %v2408, %v2404
  %v3653 = vpack.c.b16 %v2409, %v2405
  %v3654 = vpack.c.b16 %v2414, %v2410
  %v3655 = vpack.c.b16 %v2415, %v2411
  %v3656 = vpack.c.b16 %v2416, %v2412
  %v3657 = vpack.c.b16 %v2417, %v2413
  %v3658 = vpack.c.b16 %v2422, %v2418
  %v3659 = vpack.c.b16 %v2423, %v2419
  %v3660 = vpack.c.b16 %v2424, %v2420
  %v3661 = vpack.c.b16 %v2425, %v2421
  %v3662 = vpack.c.b16 %v2430, %v2426
  %v3663 = vpack.c.b16 %v2431, %v2427
  %v3664 = vpack.c.b16 %v2432, %v2428
  %v3665 = vpack.c.b16 %v2433, %v2429
  %v3666 = vpack.c.b16 %v2438, %v2434
  %v3667 = vpack.c.b16 %v2439, %v2435
  %v3668 = vpack.c.b16 %v2440, %v2436
  %v3669 = vpack.c.b16 %v2441, %v2437
  %v3670 = vpack.c.b16 %v2446, %v2442
  %v3671 = vpack.c.b16 %v2447, %v2443
  %v3672 = vpack.c.b16 %v2448, %v2444
  %v3673 = vpack.c.b16 %v2449, %v2445
  %v3674 = vpack.c.b16 %v2454, %v2450
  %v3675 = vpack.c.b16 %v2455, %v2451
  %v3676 = vpack.c.b16 %v2456, %v2452
  %v3677 = vpack.c.b16 %v2457, %v2453
  %v3678 = vpack.c.b16 %v2462, %v2458
  %v3679 = vpack.c.b16 %v2463, %v2459
  %v3680 = vpack.c.b16 %v2464, %v2460
  %v3681 = vpack.c.b16 %v2465, %v2461
  %v3682 = vpack.c.b16 %v2470, %v2466
  %v3683 = vpack.c.b16 %v2471, %v2467
  %v3684 = vpack.c.b16 %v2472, %v2468
  %v3685 = vpack.c.b16 %v2473, %v2469
  %v3686 = vpack.c.b16 %v2478, %v2474
  %v3687 = vpack.c.b16 %v2479, %v2475
  %v3688 = vpack.c.b16 %v2480, %v2476
  %v3689 = vpack.c.b16 %v2481, %v2477
  %v3690 = vpack.c.b16 %v2486, %v2482
  %v3691 = vpack.c.b16 %v2487, %v2483
  %v3692 = vpack.c.b16 %v2488, %v2484
  %v3693 = vpack.c.b16 %v2489, %v2485
  %v3694 = vpack.c.b16 %v2494, %v2490
  %v3695 = vpack.c.b16 %v2495, %v2491
  %v3696 = vpack.c.b16 %v2496, %v2492
  %v3697 = vpack.c.b16 %v2497, %v2493
  %v3698 = vpack.c.b16 %v2502, %v2498
  %v3699 = vpack.c.b16 %v2503, %v2499
  %v3700 = vpack.c.b16 %v2504, %v2500
  %v3701 = vpack.c.b16 %v2505, %v2501
  %v3702 = vpack.c.b16 %v2510, %v2506
  %v3703 = vpack.c.b16 %v2511, %v2507
  %v3704 = vpack.c.b16 %v2512, %v2508
  %v3705 = vpack.c.b16 %v2513, %v2509
  %v3706 = vpack.c.b16 %v2518, %v2514
  %v3707 = vpack.c.b16 %v2519, %v2515
  %v3708 = vpack.c.b16 %v2520, %v2516
  %v3709 = vpack.c.b16 %v2521, %v2517
  %v3710 = vpack.c.b16 %v2526, %v2522
  %v3711 = vpack.c.b16 %v2527, %v2523
  %v3712 = vpack.c.b16 %v2528, %v2524
  %v3713 = vpack.c.b16 %v2529, %v2525
  %v3714 = vpack.c.b16 %v2534, %v2530
  %v3715 = vpack.c.b16 %v2535, %v2531
  %v3716 = vpack.c.b16 %v2536, %v2532
  %v3717 = vpack.c.b16 %v2537, %v2533
  %v3718 = vpack.c.b16 %v2542, %v2538
  %v3719 = vpack.c.b16 %v2543, %v2539
  %v3720 = vpack.c.b16 %v2544, %v2540
  %v3721 = vpack.c.b16 %v2545, %v2541
  %v3722 = vpack.c.b16 %v2550, %v2546
  %v3723 = vpack.c.b16 %v2551, %v2547
  %v3724 = vpack.c.b16 %v2552, %v2548
  %v3725 = vpack.c.b16 %v2553, %v2549
  %v3726 = vpack.c.b16 %v2558, %v2554
  %v3727 = vpack.c.b16 %v2559, %v2555
  %v3728 = vpack.c.b16 %v2560, %v2556
  %v3729 = vpack.c.b16 %v2561, %v2557
  %v3730 = vpack.c.b16 %v2566, %v2562
  %v3731 = vpack.c.b16 %v2567, %v2563
  %v3732 = vpack.c.b16 %v2568, %v2564
  %v3733 = vpack.c.b16 %v2569, %v2565
  %v3734 = vpack.c.b16 %v2574, %v2570
  %v3735 = vpack.c.b16 %v2575, %v2571
  %v3736 = vpack.c.b16 %v2576, %v2572
  %v3737 = vpack.c.b16 %v2577, %v2573
  %v3738 = vpack.c.b16 %v2582, %v2578
  %v3739 = vpack.c.b16 %v2583, %v2579
  %v3740 = vpack.c.b16 %v2584, %v2580
  %v3741 = vpack.c.b16 %v2585, %v2581
  %v3742 = vpack.c.b16 %v2590, %v2586
  %v3743 = vpack.c.b16 %v2591, %v2587
  %v3744 = vpack.c.b16 %v2592, %v2588
  %v3745 = vpack.c.b16 %v2593, %v2589
  %v3746 = vpack.c.b16 %v2598, %v2594
  %v3747 = vpack.c.b16 %v2599, %v2595
  %v3748 = vpack.c.b16 %v2600, %v2596
  %v3749 = vpack.c.b16 %v2601, %v2597
  %v3750 = vpack.c.b16 %v2606, %v2602
  %v3751 = vpack.c.b16 %v2607, %v2603
  %v3752 = vpack.c.b16 %v2608, %v2604
  %v3753 = vpack.c.b16 %v2609, %v2605
  %v3754 = vpack.c.b16 %v2614, %v2610
  %v3755 = vpack.c.b16 %v2615, %v2611
  %v3756 = vpack.c.b16 %v2616, %v2612
  %v3757 = vpack.c.b16 %v2617, %v2613
  %v3758 = vpack.c.b16 %v2622, %v2618
  %v3759 = vpack.c.b16 %v2623, %v2619
  %v3760 = vpack.c.b16 %v2624, %v2620
  %v3761 = vpack.c.b16 %v2625, %v2621
  %v3762 = vpack.c.b16 %v2630, %v2626
  %v3763 = vpack.c.b16 %v2631, %v2627
  %v3764 = vpack.c.b16 %v2632, %v2628
  %v3765 = vpack.c.b16 %v2633, %v2629
  %v3766 = vpack.c.b16 %v2638, %v2634
  %v3767 = vpack.c.b16 %v2639, %v2635
  %v3768 = vpack.c.b16 %v2640, %v2636
  %v3769 = vpack.c.b16 %v2641, %v2637
  %v3770 = vpack.c.b16 %v2646, %v2642
  %v3771 = vpack.c.b16 %v2647, %v2643
  %v3772 = vpack.c.b16 %v2648, %v2644
  %v3773 = vpack.c.b16 %v2649, %v2645
  %v3774 = vpack.c.b16 %v2654, %v2650
  %v3775 = vpack.c.b16 %v2655, %v2651
  %v3776 = vpack.c.b16 %v2656, %v2652
  %v3777 = vpack.c.b16 %v2657, %v2653
  %v3778 = vpack.c.b16 %v2662, %v2658
  %v3779 = vpack.c.b16 %v2663, %v2659
  %v3780 = vpack.c.b16 %v2664, %v2660
  %v3781 = vpack.c.b16 %v2665, %v2661
  %v3782 = vpack.c.b16 %v2670, %v2666
  %v3783 = vpack.c.b16 %v2671, %v2667
  %v3784 = vpack.c.b16 %v2672, %v2668
  %v3785 = vpack.c.b16 %v2673, %v2669
  %v3786 = vpack.c.b16 %v2678, %v2674
  %v3787 = vpack.c.b16 %v2679, %v2675
  %v3788 = vpack.c.b16 %v2680, %v2676
  %v3789 = vpack.c.b16 %v2681, %v2677
  %v3790 = vpack.c.b16 %v2686, %v2682
  %v3791 = vpack.c.b16 %v2687, %v2683
  %v3792 = vpack.c.b16 %v2688, %v2684
  %v3793 = vpack.c.b16 %v2689, %v2685
  %v3794 = vpack.c.b16 %v2694, %v2690
  %v3795 = vpack.c.b16 %v2695, %v2691
  %v3796 = vpack.c.b16 %v2696, %v2692
  %v3797 = vpack.c.b16 %v2697, %v2693
  %v3798 = vpack.c.b16 %v2702, %v2698
  %v3799 = vpack.c.b16 %v2703, %v2699
  %v3800 = vpack.c.b16 %v2704, %v2700
  %v3801 = vpack.c.b16 %v2705, %v2701
  %v3802 = vpack.c.b16 %v2710, %v2706
  %v3803 = vpack.c.b16 %v2711, %v2707
  %v3804 = vpack.c.b16 %v2712, %v2708
  %v3805 = vpack.c.b16 %v2713, %v2709
  %v3806 = vpack.c.b16 %v2718, %v2714
  %v3807 = vpack.c.b16 %v2719, %v2715
  %v3808 = vpack.c.b16 %v2720, %v2716
  %v3809 = vpack.c.b16 %v2721, %v2717
  %v3810 = vpack.c.b16 %v2726, %v2722
  %v3811 = vpack.c.b16 %v2727, %v2723
  %v3812 = vpack.c.b16 %v2728, %v2724
  %v3813 = vpack.c.b16 %v2729, %v2725
  %v3814 = vpack.c.b16 %v2734, %v2730
  %v3815 = vpack.c.b16 %v2735, %v2731
  %v3816 = vpack.c.b16 %v2736, %v2732
  %v3817 = vpack.c.b16 %v2737, %v2733
  %v3818 = vpack.c.b16 %v2742, %v2738
  %v3819 = vpack.c.b16 %v2743, %v2739
  %v3820 = vpack.c.b16 %v2744, %v2740
  %v3821 = vpack.c.b16 %v2745, %v2741
  %v3822 = vpack.c.b16 %v2750, %v2746
  %v3823 = vpack.c.b16 %v2751, %v2747
  %v3824 = vpack.c.b16 %v2752, %v2748
  %v3825 = vpack.c.b16 %v2753, %v2749
  %v3826 = vpack.c.b16 %v2758, %v2754
  %v3827 = vpack.c.b16 %v2759, %v2755
  %v3828 = vpack.c.b16 %v2760, %v2756
  %v3829 = vpack.c.b16 %v2761, %v2757
  %v3830 = vpack.c.b16 %v2766, %v2762
  %v3831 = vpack.c.b16 %v2767, %v2763
  %v3832 = vpack.c.b16 %v2768, %v2764
  %v3833 = vpack.c.b16 %v2769, %v2765
  %v3834 = vpack.c.b16 %v2774, %v2770
  %v3835 = vpack.c.b16 %v2775, %v2771
  %v3836 = vpack.c.b16 %v2776, %v2772
  %v3837 = vpack.c.b16 %v2777, %v2773
  %v3838 = vpack.c.b16 %v2782, %v2778
  %v3839 = vpack.c.b16 %v2783, %v2779
  %v3840 = vpack.c.b16 %v2784, %v2780
  %v3841 = vpack.c.b16 %v2785, %v2781
  %v3842 = vpack.c.b16 %v2790, %v2786
  %v3843 = vpack.c.b16 %v2791, %v2787
  %v3844 = vpack.c.b16 %v2792, %v2788
  %v3845 = vpack.c.b16 %v2793, %v2789
  %v3846 = vpack.c.b16 %v2798, %v2794
  %v3847 = vpack.c.b16 %v2799, %v2795
  %v3848 = vpack.c.b16 %v2800, %v2796
  %v3849 = vpack.c.b16 %v2801, %v2797
  %v3850 = vpack.c.b16 %v2806, %v2802
  %v3851 = vpack.c.b16 %v2807, %v2803
  %v3852 = vpack.c.b16 %v2808, %v2804
  %v3853 = vpack.c.b16 %v2809, %v2805
  %v3854 = vpack.c.b16 %v2814, %v2810
  %v3855 = vpack.c.b16 %v2815, %v2811
  %v3856 = vpack.c.b16 %v2816, %v2812
  %v3857 = vpack.c.b16 %v2817, %v2813
  %v3858 = vpack.c.b16 %v2822, %v2818
  %v3859 = vpack.c.b16 %v2823, %v2819
  %v3860 = vpack.c.b16 %v2824, %v2820
  %v3861 = vpack.c.b16 %v2825, %v2821
  %v3862 = vpack.c.b16 %v2830, %v2826
  %v3863 = vpack.c.b16 %v2831, %v2827
  %v3864 = vpack.c.b16 %v2832, %v2828
  %v3865 = vpack.c.b16 %v2833, %v2829
  %v3866 = vpack.c.b16 %v2838, %v2834
  %v3867 = vpack.c.b16 %v2839, %v2835
  %v3868 = vpack.c.b16 %v2840, %v2836
  %v3869 = vpack.c.b16 %v2841, %v2837
  %v3870 = vpack.c.b16 %v2846, %v2842
  %v3871 = vpack.c.b16 %v2847, %v2843
  %v3872 = vpack.c.b16 %v2848, %v2844
  %v3873 = vpack.c.b16 %v2849, %v2845
  %v3874 = vpack.c.b16 %v2854, %v2850
  %v3875 = vpack.c.b16 %v2855, %v2851
  %v3876 = vpack.c.b16 %v2856, %v2852
  %v3877 = vpack.c.b16 %v2857, %v2853
  %v3878 = vpack.c.b16 %v2862, %v2858
  %v3879 = vpack.c.b16 %v2863, %v2859
  %v3880 = vpack.c.b16 %v2864, %v2860
  %v3881 = vpack.c.b16 %v2865, %v2861
  %v3882 = vpack.c.b16 %v2870, %v2866
  %v3883 = vpack.c.b16 %v2871, %v2867
  %v3884 = vpack.c.b16 %v2872, %v2868
  %v3885 = vpack.c.b16 %v2873, %v2869
  %v3886 = vpack.c.b16 %v2878, %v2874
  %v3887 = vpack.c.b16 %v2879, %v2875
  %v3888 = vpack.c.b16 %v2880, %v2876
  %v3889 = vpack.c.b16 %v2881, %v2877
  %v3890 = vpack.c.b16 %v2886, %v2882
  %v3891 = vpack.c.b16 %v2887, %v2883
  %v3892 = vpack.c.b16 %v2888, %v2884
  %v3893 = vpack.c.b16 %v2889, %v2885
  %v3894 = vpack.c.b16 %v2894, %v2890
  %v3895 = vpack.c.b16 %v2895, %v2891
  %v3896 = vpack.c.b16 %v2896, %v2892
  %v3897 = vpack.c.b16 %v2897, %v2893
  %v3898 = vpack.c.b16 %v2902, %v2898
  %v3899 = vpack.c.b16 %v2903, %v2899
  %v3900 = vpack.c.b16 %v2904, %v2900
  %v3901 = vpack.c.b16 %v2905, %v2901
  %v3902 = vpack.c.b16 %v2910, %v2906
  %v3903 = vpack.c.b16 %v2911, %v2907
  %v3904 = vpack.c.b16 %v2912, %v2908
  %v3905 = vpack.c.b16 %v2913, %v2909
  %v3906 = vpack.c.b16 %v2918, %v2914
  %v3907 = vpack.c.b16 %v2919, %v2915
  %v3908 = vpack.c.b16 %v2920, %v2916
  %v3909 = vpack.c.b16 %v2921, %v2917
  %v3910 = vpack.c.b16 %v2926, %v2922
  %v3911 = vpack.c.b16 %v2927, %v2923
  %v3912 = vpack.c.b16 %v2928, %v2924
  %v3913 = vpack.c.b16 %v2929, %v2925
  %v3914 = vpack.c.b16 %v2934, %v2930
  %v3915 = vpack.c.b16 %v2935, %v2931
  %v3916 = vpack.c.b16 %v2936, %v2932
  %v3917 = vpack.c.b16 %v2937, %v2933
  %v3918 = vpack.c.b16 %v2942, %v2938
  %v3919 = vpack.c.b16 %v2943, %v2939
  %v3920 = vpack.c.b16 %v2944, %v2940
  %v3921 = vpack.c.b16 %v2945, %v2941
  %v3922 = vpack.c.b16 %v2950, %v2946
  %v3923 = vpack.c.b16 %v2951, %v2947
  %v3924 = vpack.c.b16 %v2952, %v2948
  %v3925 = vpack.c.b16 %v2953, %v2949
  %v3926 = vpack.c.b16 %v2958, %v2954
  %v3927 = vpack.c.b16 %v2959, %v2955
  %v3928 = vpack.c.b16 %v2960, %v2956
  %v3929 = vpack.c.b16 %v2961, %v2957
  %v3930 = vpack.c.b16 %v2966, %v2962
  %v3931 = vpack.c.b16 %v2967, %v2963
  %v3932 = vpack.c.b16 %v2968, %v2964
  %v3933 = vpack.c.b16 %v2969, %v2965
  %v3934 = vpack.c.b16 %v2974, %v2970
  %v3935 = vpack.c.b16 %v2975, %v2971
  %v3936 = vpack.c.b16 %v2976, %v2972
  %v3937 = vpack.c.b16 %v2977, %v2973
  %v3938 = vpack.c.b16 %v2982, %v2978
  %v3939 = vpack.c.b16 %v2983, %v2979
  %v3940 = vpack.c.b16 %v2984, %v2980
  %v3941 = vpack.c.b16 %v2985, %v2981
  %v3942 = vpack.c.b16 %v2990, %v2986
  %v3943 = vpack.c.b16 %v2991, %v2987
  %v3944 = vpack.c.b16 %v2992, %v2988
  %v3945 = vpack.c.b16 %v2993, %v2989
  %v3946 = vpack.c.b16 %v2998, %v2994
  %v3947 = vpack.c.b16 %v2999, %v2995
  %v3948 = vpack.c.b16 %v3000, %v2996
  %v3949 = vpack.c.b16 %v3001, %v2997
  %v3950 = vpack.c.b16 %v3006, %v3002
  %v3951 = vpack.c.b16 %v3007, %v3003
  %v3952 = vpack.c.b16 %v3008, %v3004
  %v3953 = vpack.c.b16 %v3009, %v3005
  %v3954 = vpack.c.b16 %v3014, %v3010
  %v3955 = vpack.c.b16 %v3015, %v3011
  %v3956 = vpack.c.b16 %v3016, %v3012
  %v3957 = vpack.c.b16 %v3017, %v3013
  %v3958 = vpack.c.b16 %v3022, %v3018
  %v3959 = vpack.c.b16 %v3023, %v3019
  %v3960 = vpack.c.b16 %v3024, %v3020
  %v3961 = vpack.c.b16 %v3025, %v3021
  %v3962 = vpack.c.b16 %v3030, %v3026
  %v3963 = vpack.c.b16 %v3031, %v3027
  %v3964 = vpack.c.b16 %v3032, %v3028
  %v3965 = vpack.c.b16 %v3033, %v3029
  %v3966 = vpack.c.b16 %v3038, %v3034
  %v3967 = vpack.c.b16 %v3039, %v3035
  %v3968 = vpack.c.b16 %v3040, %v3036
  %v3969 = vpack.c.b16 %v3041, %v3037
  %v3970 = vpack.c.b16 %v3046, %v3042
  %v3971 = vpack.c.b16 %v3047, %v3043
  %v3972 = vpack.c.b16 %v3048, %v3044
  %v3973 = vpack.c.b16 %v3049, %v3045
  %v3974 = vpack.c.b16 %v3054, %v3050
  %v3975 = vpack.c.b16 %v3055, %v3051
  %v3976 = vpack.c.b16 %v3056, %v3052
  %v3977 = vpack.c.b16 %v3057, %v3053
  %v3978 = vpack.c.b16 %v3062, %v3058
  %v3979 = vpack.c.b16 %v3063, %v3059
  %v3980 = vpack.c.b16 %v3064, %v3060
  %v3981 = vpack.c.b16 %v3065, %v3061
  %v3982 = vpack.c.b16 %v3070, %v3066
  %v3983 = vpack.c.b16 %v3071, %v3067
  %v3984 = vpack.c.b16 %v3072, %v3068
  %v3985 = vpack.c.b16 %v3073, %v3069
  %v3986 = vpack.c.b16 %v3078, %v3074
  %v3987 = vpack.c.b16 %v3079, %v3075
  %v3988 = vpack.c.b16 %v3080, %v3076
  %v3989 = vpack.c.b16 %v3081, %v3077
  %v3990 = vpack.c.b16 %v3086, %v3082
  %v3991 = vpack.c.b16 %v3087, %v3083
  %v3992 = vpack.c.b16 %v3088, %v3084
  %v3993 = vpack.c.b16 %v3089, %v3085
  %v3994 = vpack.c.b16 %v3094, %v3090
  %v3995 = vpack.c.b16 %v3095, %v3091
  %v3996 = vpack.c.b16 %v3096, %v3092
  %v3997 = vpack.c.b16 %v3097, %v3093
  %v3998 = vpack.c.b16 %v3102, %v3098
  %v3999 = vpack.c.b16 %v3103, %v3099
  %v4000 = vpack.c.b16 %v3104, %v3100
  %v4001 = vpack.c.b16 %v3105, %v3101
  %v4002 = vpack.c.b16 %v3110, %v3106
  %v4003 = vpack.c.b16 %v3111, %v3107
  %v4004 = vpack.c.b16 %v3112, %v3108
  %v4005 = vpack.c.b16 %v3113, %v3109
  %v4006 = vpack.c.b16 %v3118, %v3114
  %v4007 = vpack.c.b16 %v3119, %v3115
  %v4008 = vpack.c.b16 %v3120, %v3116
  %v4009 = vpack.c.b16 %v3121, %v3117
  %v4010 = vpack.c.b16 %v3126, %v3122
  %v4011 = vpack.c.b16 %v3127, %v3123
  %v4012 = vpack.c.b16 %v3128, %v3124
  %v4013 = vpack.c.b16 %v3129, %v3125
  %v4014 = vpack.c.b16 %v3134, %v3130
  %v4015 = vpack.c.b16 %v3135, %v3131
  %v4016 = vpack.c.b16 %v3136, %v3132
  %v4017 = vpack.c.b16 %v3137, %v3133
  %v4018 = vpack.c.b16 %v3142, %v3138
  %v4019 = vpack.c.b16 %v3143, %v3139
  %v4020 = vpack.c.b16 %v3144, %v3140
  %v4021 = vpack.c.b16 %v3145, %v3141
  %v4022 = vpack.c.b16 %v3150, %v3146
  %v4023 = vpack.c.b16 %v3151, %v3147
  %v4024 = vpack.c.b16 %v3152, %v3148
  %v4025 = vpack.c.b16 %v3153, %v3149
  %v4026 = vpack.c.b16 %v3158, %v3154
  %v4027 = vpack.c.b16 %v3159, %v3155
  %v4028 = vpack.c.b16 %v3160, %v3156
  %v4029 = vpack.c.b16 %v3161, %v3157
  %v4030 = vpack.c.b16 %v3166, %v3162
  %v4031 = vpack.c.b16 %v3167, %v3163
  %v4032 = vpack.c.b16 %v3168, %v3164
  %v4033 = vpack.c.b16 %v3169, %v3165
  %v4034 = vpack.c.b16 %v3174, %v3170
  %v4035 = vpack.c.b16 %v3175, %v3171
  %v4036 = vpack.c.b16 %v3176, %v3172
  %v4037 = vpack.c.b16 %v3177, %v3173
  %v4038 = vpack.c.b16 %v3182, %v3178
  %v4039 = vpack.c.b16 %v3183, %v3179
  %v4040 = vpack.c.b16 %v3184, %v3180
  %v4041 = vpack.c.b16 %v3185, %v3181
  %v4042 = vpack.c.b16 %v3190, %v3186
  %v4043 = vpack.c.b16 %v3191, %v3187
  %v4044 = vpack.c.b16 %v3192, %v3188
  %v4045 = vpack.c.b16 %v3193, %v3189
  %v4046 = vpack.c.b16 %v3198, %v3194
  %v4047 = vpack.c.b16 %v3199, %v3195
  %v4048 = vpack.c.b16 %v3200, %v3196
  %v4049 = vpack.c.b16 %v3201, %v3197
  %v4050 = vpack.c.b16 %v3206, %v3202
  %v4051 = vpack.c.b16 %v3207, %v3203
  %v4052 = vpack.c.b16 %v3208, %v3204
  %v4053 = vpack.c.b16 %v3209, %v3205
  %v4054 = vpack.c.b16 %v3214, %v3210
  %v4055 = vpack.c.b16 %v3215, %v3211
  %v4056 = vpack.c.b16 %v3216, %v3212
  %v4057 = vpack.c.b16 %v3217, %v3213
  %v4058 = vpack.c.b16 %v3222, %v3218
  %v4059 = vpack.c.b16 %v3223, %v3219
  %v4060 = vpack.c.b16 %v3224, %v3220
  %v4061 = vpack.c.b16 %v3225, %v3221
  %v4062 = vpack.c.b16 %v3230, %v3226
  %v4063 = vpack.c.b16 %v3231, %v3227
  %v4064 = vpack.c.b16 %v3232, %v3228
  %v4065 = vpack.c.b16 %v3233, %v3229
  %v4066 = vpack.c.b16 %v3238, %v3234
  %v4067 = vpack.c.b16 %v3239, %v3235
  %v4068 = vpack.c.b16 %v3240, %v3236
  %v4069 = vpack.c.b16 %v3241, %v3237
  %v4070 = vpack.c.b16 %v3246, %v3242
  %v4071 = vpack.c.b16 %v3247, %v3243
  %v4072 = vpack.c.b16 %v3248, %v3244
  %v4073 = vpack.c.b16 %v3249, %v3245
  %v4074 = vpack.c.b16 %v3254, %v3250
  %v4075 = vpack.c.b16 %v3255, %v3251
  %v4076 = vpack.c.b16 %v3256, %v3252
  %v4077 = vpack.c.b16 %v3257, %v3253
  %v4078 = vpack.c.b16 %v3262, %v3258
  %v4079 = vpack.c.b16 %v3263, %v3259
  %v4080 = vpack.c.b16 %v3264, %v3260
  %v4081 = vpack.c.b16 %v3265, %v3261
  %v4082 = vpack.c.b16 %v3270, %v3266
  %v4083 = vpack.c.b16 %v3271, %v3267
  %v4084 = vpack.c.b16 %v3272, %v3268
  %v4085 = vpack.c.b16 %v3273, %v3269
  %v4086 = vpack.c.b16 %v3278, %v3274
  %v4087 = vpack.c.b16 %v3279, %v3275
  %v4088 = vpack.c.b16 %v3280, %v3276
  %v4089 = vpack.c.b16 %v3281, %v3277
  %v4090 = vpack.c.b16 %v3286, %v3282
  %v4091 = vpack.c.b16 %v3287, %v3283
  %v4092 = vpack.c.b16 %v3288, %v3284
  %v4093 = vpack.c.b16 %v3289, %v3285
  %v4094 = vpack.c.b16 %v3294, %v3290
  %v4095 = vpack.c.b16 %v3295, %v3291
  %v4096 = vpack.c.b16 %v3296, %v3292
  %v4097 = vpack.c.b16 %v3297, %v3293
  %v4098 = vpack.c.b16 %v3302, %v3298
  %v4099 = vpack.c.b16 %v3303, %v3299
  %v4100 = vpack.c.b16 %v3304, %v3300
  %v4101 = vpack.c.b16 %v3305, %v3301
  %v4102 = vpack.c.b16 %v3310, %v3306
  %v4103 = vpack.c.b16 %v3311, %v3307
  %v4104 = vpack.c.b16 %v3312, %v3308
  %v4105 = vpack.c.b16 %v3313, %v3309
  %v4106 = vpack.c.b16 %v3318, %v3314
  %v4107 = vpack.c.b16 %v3319, %v3315
  %v4108 = vpack.c.b16 %v3320, %v3316
  %v4109 = vpack.c.b16 %v3321, %v3317
  %v4110 = vpack.c.b16 %v3326, %v3322
  %v4111 = vpack.c.b16 %v3327, %v3323
  %v4112 = vpack.c.b16 %v3328, %v3324
  %v4113 = vpack.c.b16 %v3329, %v3325
  %vm4898 = vcmask 523264
  %v4900 = vsel %vm4898, %v953, 0
  %4902 = vmatprep.subr.bf16.mxu0 %v3359
  %4903 = vmatpush1.bf16.msra.mxu0 %v3358
  %4904 = vmatprep.subr.bf16.mxu0 %v3355
  %4905 = vmatpush1.bf16.msra.mxu0 %v3354
  %4906 = vmatprep.subr.bf16.mxu0 %v3351
  %4907 = vmatpush1.bf16.msra.mxu0 %v3350
  %4908 = vmatprep.subr.bf16.mxu0 %v3347
  %4909 = vmatpush1.bf16.msra.mxu0 %v3346
  %4910 = vmatprep.subr.bf16.mxu0 %v3343
  %4911 = vmatpush1.bf16.msra.mxu0 %v3342
  %4912 = vmatprep.subr.bf16.mxu0 %v3339
  %4913 = vmatpush1.bf16.msra.mxu0 %v3338
  %4914 = vmatprep.subr.bf16.mxu0 %v3335
  %4915 = vmatpush1.bf16.msra.mxu0 %v3334
  %4916 = vmatprep.subr.bf16.mxu0 %v3331
  %4917 = vmatpush1.bf16.msra.mxu0 %v3330
  %4918 = vmatprep.subr.bf16.mxu0 %v3391
  %4919 = vmatpush2.bf16.msra.mxu0 %v3390
  %4920 = vmatprep.subr.bf16.mxu0 %v3387
  %4921 = vmatpush2.bf16.msra.mxu0 %v3386
  %4922 = vmatprep.subr.bf16.mxu0 %v3383
  %4923 = vmatpush2.bf16.msra.mxu0 %v3382
  %4924 = vmatprep.subr.bf16.mxu0 %v3379
  %4925 = vmatpush2.bf16.msra.mxu0 %v3378
  %4926 = vmatprep.subr.bf16.mxu0 %v3375
  %4927 = vmatpush2.bf16.msra.mxu0 %v3374
  %4928 = vmatprep.subr.bf16.mxu0 %v3371
  %4929 = vmatpush2.bf16.msra.mxu0 %v3370
  %4930 = vmatprep.subr.bf16.mxu0 %v3367
  %4931 = vmatpush2.bf16.msra.mxu0 %v3366
  %4932 = vmatprep.subr.bf16.mxu0 %v3363
  %4933 = vmatpush2.bf16.msra.mxu0 %v3362
  %4934 = vmatprep.mubr.bf16.mxu0 %v930
  %4935 = vmatmul.mubr.bf16.gmra.mxu0 %v929
  %v4936 = vpop.f32.mrf.mxu0
  %v4937 = vadd.f32 %v836, %v4936
  %v4938 = vpop.f32.mrf.mxu0
  %v4939 = vadd.f32 %v840, %v4938
  %v4940 = vpop.f32.mrf.mxu0
  %v4941 = vadd.f32 %v836, %v4940
  %v4942 = vpop.f32.mrf.mxu0
  %v4943 = vadd.f32 %v840, %v4942
  %4944 = vdwg.mxu0
  %4945 = vmatprep.subr.bf16.mxu0 %v3423
  %4946 = vmatpush1.bf16.msra.mxu0 %v3422
  %4947 = vmatprep.subr.bf16.mxu0 %v3419
  %4948 = vmatpush1.bf16.msra.mxu0 %v3418
  %4949 = vmatprep.subr.bf16.mxu0 %v3415
  %4950 = vmatpush1.bf16.msra.mxu0 %v3414
  %4951 = vmatprep.subr.bf16.mxu0 %v3411
  %4952 = vmatpush1.bf16.msra.mxu0 %v3410
  %4953 = vmatprep.subr.bf16.mxu0 %v3407
  %4954 = vmatpush1.bf16.msra.mxu0 %v3406
  %4955 = vmatprep.subr.bf16.mxu0 %v3403
  %4956 = vmatpush1.bf16.msra.mxu0 %v3402
  %4957 = vmatprep.subr.bf16.mxu0 %v3399
  %4958 = vmatpush1.bf16.msra.mxu0 %v3398
  %4959 = vmatprep.subr.bf16.mxu0 %v3395
  %4960 = vmatpush1.bf16.msra.mxu0 %v3394
  %4961 = vmatprep.subr.bf16.mxu0 %v3455
  %4962 = vmatpush2.bf16.msra.mxu0 %v3454
  %4963 = vmatprep.subr.bf16.mxu0 %v3451
  %4964 = vmatpush2.bf16.msra.mxu0 %v3450
  %4965 = vmatprep.subr.bf16.mxu0 %v3447
  %4966 = vmatpush2.bf16.msra.mxu0 %v3446
  %4967 = vmatprep.subr.bf16.mxu0 %v3443
  %4968 = vmatpush2.bf16.msra.mxu0 %v3442
  %4969 = vmatprep.subr.bf16.mxu0 %v3439
  %4970 = vmatpush2.bf16.msra.mxu0 %v3438
  %4971 = vmatprep.subr.bf16.mxu0 %v3435
  %4972 = vmatpush2.bf16.msra.mxu0 %v3434
  %4973 = vmatprep.subr.bf16.mxu0 %v3431
  %4974 = vmatpush2.bf16.msra.mxu0 %v3430
  %4975 = vmatprep.subr.bf16.mxu0 %v3427
  %4976 = vmatpush2.bf16.msra.mxu0 %v3426
  %4977 = vmatprep.mubr.bf16.mxu0 %v932
  %4978 = vmatmul.mubr.bf16.gmra.mxu0 %v931
  %v4979 = vpop.f32.mrf.mxu0
  %v4980 = vadd.f32 %v4937, %v4979
  %v4981 = vpop.f32.mrf.mxu0
  %v4982 = vadd.f32 %v4939, %v4981
  %v4983 = vpop.f32.mrf.mxu0
  %v4984 = vadd.f32 %v4941, %v4983
  %v4985 = vpop.f32.mrf.mxu0
  %v4986 = vadd.f32 %v4943, %v4985
  %4987 = vdwg.mxu0
  %4988 = vmatprep.subr.bf16.mxu0 %v3487
  %4989 = vmatpush1.bf16.msra.mxu0 %v3486
  %4990 = vmatprep.subr.bf16.mxu0 %v3483
  %4991 = vmatpush1.bf16.msra.mxu0 %v3482
  %4992 = vmatprep.subr.bf16.mxu0 %v3479
  %4993 = vmatpush1.bf16.msra.mxu0 %v3478
  %4994 = vmatprep.subr.bf16.mxu0 %v3475
  %4995 = vmatpush1.bf16.msra.mxu0 %v3474
  %4996 = vmatprep.subr.bf16.mxu0 %v3471
  %4997 = vmatpush1.bf16.msra.mxu0 %v3470
  %4998 = vmatprep.subr.bf16.mxu0 %v3467
  %4999 = vmatpush1.bf16.msra.mxu0 %v3466
  %5000 = vmatprep.subr.bf16.mxu0 %v3463
  %5001 = vmatpush1.bf16.msra.mxu0 %v3462
  %5002 = vmatprep.subr.bf16.mxu0 %v3459
  %5003 = vmatpush1.bf16.msra.mxu0 %v3458
  %5004 = vmatprep.subr.bf16.mxu0 %v3519
  %5005 = vmatpush2.bf16.msra.mxu0 %v3518
  %5006 = vmatprep.subr.bf16.mxu0 %v3515
  %5007 = vmatpush2.bf16.msra.mxu0 %v3514
  %5008 = vmatprep.subr.bf16.mxu0 %v3511
  %5009 = vmatpush2.bf16.msra.mxu0 %v3510
  %5010 = vmatprep.subr.bf16.mxu0 %v3507
  %5011 = vmatpush2.bf16.msra.mxu0 %v3506
  %5012 = vmatprep.subr.bf16.mxu0 %v3503
  %5013 = vmatpush2.bf16.msra.mxu0 %v3502
  %5014 = vmatprep.subr.bf16.mxu0 %v3499
  %5015 = vmatpush2.bf16.msra.mxu0 %v3498
  %5016 = vmatprep.subr.bf16.mxu0 %v3495
  %5017 = vmatpush2.bf16.msra.mxu0 %v3494
  %5018 = vmatprep.subr.bf16.mxu0 %v3491
  %5019 = vmatpush2.bf16.msra.mxu0 %v3490
  %5020 = vmatprep.mubr.bf16.mxu0 %v934
  %5021 = vmatmul.mubr.bf16.gmra.mxu0 %v933
  %v5022 = vpop.f32.mrf.mxu0
  %v5023 = vadd.f32 %v4980, %v5022
  %v5024 = vpop.f32.mrf.mxu0
  %v5025 = vadd.f32 %v4982, %v5024
  %v5026 = vpop.f32.mrf.mxu0
  %v5027 = vadd.f32 %v4984, %v5026
  %v5028 = vpop.f32.mrf.mxu0
  %v5029 = vadd.f32 %v4986, %v5028
  %5030 = vdwg.mxu0
  %5031 = vmatprep.subr.bf16.mxu0 %v3551
  %5032 = vmatpush1.bf16.msra.mxu0 %v3550
  %5033 = vmatprep.subr.bf16.mxu0 %v3547
  %5034 = vmatpush1.bf16.msra.mxu0 %v3546
  %5035 = vmatprep.subr.bf16.mxu0 %v3543
  %5036 = vmatpush1.bf16.msra.mxu0 %v3542
  %5037 = vmatprep.subr.bf16.mxu0 %v3539
  %5038 = vmatpush1.bf16.msra.mxu0 %v3538
  %5039 = vmatprep.subr.bf16.mxu0 %v3535
  %5040 = vmatpush1.bf16.msra.mxu0 %v3534
  %5041 = vmatprep.subr.bf16.mxu0 %v3531
  %5042 = vmatpush1.bf16.msra.mxu0 %v3530
  %5043 = vmatprep.subr.bf16.mxu0 %v3527
  %5044 = vmatpush1.bf16.msra.mxu0 %v3526
  %5045 = vmatprep.subr.bf16.mxu0 %v3523
  %5046 = vmatpush1.bf16.msra.mxu0 %v3522
  %5047 = vmatprep.subr.bf16.mxu0 %v3583
  %5048 = vmatpush2.bf16.msra.mxu0 %v3582
  %5049 = vmatprep.subr.bf16.mxu0 %v3579
  %5050 = vmatpush2.bf16.msra.mxu0 %v3578
  %5051 = vmatprep.subr.bf16.mxu0 %v3575
  %5052 = vmatpush2.bf16.msra.mxu0 %v3574
  %5053 = vmatprep.subr.bf16.mxu0 %v3571
  %5054 = vmatpush2.bf16.msra.mxu0 %v3570
  %5055 = vmatprep.subr.bf16.mxu0 %v3567
  %5056 = vmatpush2.bf16.msra.mxu0 %v3566
  %5057 = vmatprep.subr.bf16.mxu0 %v3563
  %5058 = vmatpush2.bf16.msra.mxu0 %v3562
  %5059 = vmatprep.subr.bf16.mxu0 %v3559
  %5060 = vmatpush2.bf16.msra.mxu0 %v3558
  %5061 = vmatprep.subr.bf16.mxu0 %v3555
  %5062 = vmatpush2.bf16.msra.mxu0 %v3554
  %5063 = vmatprep.mubr.bf16.mxu0 %v936
  %5064 = vmatmul.mubr.bf16.gmra.mxu0 %v935
  %v5065 = vpop.f32.mrf.mxu0
  %v5066 = vadd.f32 %v5023, %v5065
  %v5067 = vpop.f32.mrf.mxu0
  %v5068 = vadd.f32 %v5025, %v5067
  %v5069 = vpop.f32.mrf.mxu0
  %v5070 = vadd.f32 %v5027, %v5069
  %v5071 = vpop.f32.mrf.mxu0
  %v5072 = vadd.f32 %v5029, %v5071
  %5073 = vdwg.mxu0
  %5074 = vmatprep.subr.bf16.mxu0 %v3615
  %5075 = vmatpush1.bf16.msra.mxu0 %v3614
  %5076 = vmatprep.subr.bf16.mxu0 %v3611
  %5077 = vmatpush1.bf16.msra.mxu0 %v3610
  %5078 = vmatprep.subr.bf16.mxu0 %v3607
  %5079 = vmatpush1.bf16.msra.mxu0 %v3606
  %5080 = vmatprep.subr.bf16.mxu0 %v3603
  %5081 = vmatpush1.bf16.msra.mxu0 %v3602
  %5082 = vmatprep.subr.bf16.mxu0 %v3599
  %5083 = vmatpush1.bf16.msra.mxu0 %v3598
  %5084 = vmatprep.subr.bf16.mxu0 %v3595
  %5085 = vmatpush1.bf16.msra.mxu0 %v3594
  %5086 = vmatprep.subr.bf16.mxu0 %v3591
  %5087 = vmatpush1.bf16.msra.mxu0 %v3590
  %5088 = vmatprep.subr.bf16.mxu0 %v3587
  %5089 = vmatpush1.bf16.msra.mxu0 %v3586
  %5090 = vmatprep.subr.bf16.mxu0 %v3647
  %5091 = vmatpush2.bf16.msra.mxu0 %v3646
  %5092 = vmatprep.subr.bf16.mxu0 %v3643
  %5093 = vmatpush2.bf16.msra.mxu0 %v3642
  %5094 = vmatprep.subr.bf16.mxu0 %v3639
  %5095 = vmatpush2.bf16.msra.mxu0 %v3638
  %5096 = vmatprep.subr.bf16.mxu0 %v3635
  %5097 = vmatpush2.bf16.msra.mxu0 %v3634
  %5098 = vmatprep.subr.bf16.mxu0 %v3631
  %5099 = vmatpush2.bf16.msra.mxu0 %v3630
  %5100 = vmatprep.subr.bf16.mxu0 %v3627
  %5101 = vmatpush2.bf16.msra.mxu0 %v3626
  %5102 = vmatprep.subr.bf16.mxu0 %v3623
  %5103 = vmatpush2.bf16.msra.mxu0 %v3622
  %5104 = vmatprep.subr.bf16.mxu0 %v3619
  %5105 = vmatpush2.bf16.msra.mxu0 %v3618
  %5106 = vmatprep.mubr.bf16.mxu0 %v938
  %5107 = vmatmul.mubr.bf16.gmra.mxu0 %v937
  %v5108 = vpop.f32.mrf.mxu0
  %v5109 = vadd.f32 %v5066, %v5108
  %v5110 = vpop.f32.mrf.mxu0
  %v5111 = vadd.f32 %v5068, %v5110
  %v5112 = vpop.f32.mrf.mxu0
  %v5113 = vadd.f32 %v5070, %v5112
  %v5114 = vpop.f32.mrf.mxu0
  %v5115 = vadd.f32 %v5072, %v5114
  %5116 = vdwg.mxu0
  %5117 = vmatprep.subr.bf16.mxu0 %v3679
  %5118 = vmatpush1.bf16.msra.mxu0 %v3678
  %5119 = vmatprep.subr.bf16.mxu0 %v3675
  %5120 = vmatpush1.bf16.msra.mxu0 %v3674
  %5121 = vmatprep.subr.bf16.mxu0 %v3671
  %5122 = vmatpush1.bf16.msra.mxu0 %v3670
  %5123 = vmatprep.subr.bf16.mxu0 %v3667
  %5124 = vmatpush1.bf16.msra.mxu0 %v3666
  %5125 = vmatprep.subr.bf16.mxu0 %v3663
  %5126 = vmatpush1.bf16.msra.mxu0 %v3662
  %5127 = vmatprep.subr.bf16.mxu0 %v3659
  %5128 = vmatpush1.bf16.msra.mxu0 %v3658
  %5129 = vmatprep.subr.bf16.mxu0 %v3655
  %5130 = vmatpush1.bf16.msra.mxu0 %v3654
  %5131 = vmatprep.subr.bf16.mxu0 %v3651
  %5132 = vmatpush1.bf16.msra.mxu0 %v3650
  %5133 = vmatprep.subr.bf16.mxu0 %v3711
  %5134 = vmatpush2.bf16.msra.mxu0 %v3710
  %5135 = vmatprep.subr.bf16.mxu0 %v3707
  %5136 = vmatpush2.bf16.msra.mxu0 %v3706
  %5137 = vmatprep.subr.bf16.mxu0 %v3703
  %5138 = vmatpush2.bf16.msra.mxu0 %v3702
  %5139 = vmatprep.subr.bf16.mxu0 %v3699
  %5140 = vmatpush2.bf16.msra.mxu0 %v3698
  %5141 = vmatprep.subr.bf16.mxu0 %v3695
  %5142 = vmatpush2.bf16.msra.mxu0 %v3694
  %5143 = vmatprep.subr.bf16.mxu0 %v3691
  %5144 = vmatpush2.bf16.msra.mxu0 %v3690
  %5145 = vmatprep.subr.bf16.mxu0 %v3687
  %5146 = vmatpush2.bf16.msra.mxu0 %v3686
  %5147 = vmatprep.subr.bf16.mxu0 %v3683
  %5148 = vmatpush2.bf16.msra.mxu0 %v3682
  %5149 = vmatprep.mubr.bf16.mxu0 %v940
  %5150 = vmatmul.mubr.bf16.gmra.mxu0 %v939
  %v5151 = vpop.f32.mrf.mxu0
  %v5152 = vadd.f32 %v5109, %v5151
  %v5153 = vpop.f32.mrf.mxu0
  %v5154 = vadd.f32 %v5111, %v5153
  %v5155 = vpop.f32.mrf.mxu0
  %v5156 = vadd.f32 %v5113, %v5155
  %v5157 = vpop.f32.mrf.mxu0
  %v5158 = vadd.f32 %v5115, %v5157
  %5159 = vdwg.mxu0
  %5160 = vmatprep.subr.bf16.mxu0 %v3743
  %5161 = vmatpush1.bf16.msra.mxu0 %v3742
  %5162 = vmatprep.subr.bf16.mxu0 %v3739
  %5163 = vmatpush1.bf16.msra.mxu0 %v3738
  %5164 = vmatprep.subr.bf16.mxu0 %v3735
  %5165 = vmatpush1.bf16.msra.mxu0 %v3734
  %5166 = vmatprep.subr.bf16.mxu0 %v3731
  %5167 = vmatpush1.bf16.msra.mxu0 %v3730
  %5168 = vmatprep.subr.bf16.mxu0 %v3727
  %5169 = vmatpush1.bf16.msra.mxu0 %v3726
  %5170 = vmatprep.subr.bf16.mxu0 %v3723
  %5171 = vmatpush1.bf16.msra.mxu0 %v3722
  %5172 = vmatprep.subr.bf16.mxu0 %v3719
  %5173 = vmatpush1.bf16.msra.mxu0 %v3718
  %5174 = vmatprep.subr.bf16.mxu0 %v3715
  %5175 = vmatpush1.bf16.msra.mxu0 %v3714
  %5176 = vmatprep.subr.bf16.mxu0 %v3775
  %5177 = vmatpush2.bf16.msra.mxu0 %v3774
  %5178 = vmatprep.subr.bf16.mxu0 %v3771
  %5179 = vmatpush2.bf16.msra.mxu0 %v3770
  %5180 = vmatprep.subr.bf16.mxu0 %v3767
  %5181 = vmatpush2.bf16.msra.mxu0 %v3766
  %5182 = vmatprep.subr.bf16.mxu0 %v3763
  %5183 = vmatpush2.bf16.msra.mxu0 %v3762
  %5184 = vmatprep.subr.bf16.mxu0 %v3759
  %5185 = vmatpush2.bf16.msra.mxu0 %v3758
  %5186 = vmatprep.subr.bf16.mxu0 %v3755
  %5187 = vmatpush2.bf16.msra.mxu0 %v3754
  %5188 = vmatprep.subr.bf16.mxu0 %v3751
  %5189 = vmatpush2.bf16.msra.mxu0 %v3750
  %5190 = vmatprep.subr.bf16.mxu0 %v3747
  %5191 = vmatpush2.bf16.msra.mxu0 %v3746
  %5192 = vmatprep.mubr.bf16.mxu0 %v942
  %5193 = vmatmul.mubr.bf16.gmra.mxu0 %v941
  %v5194 = vpop.f32.mrf.mxu0
  %v5195 = vadd.f32 %v5152, %v5194
  %v5196 = vpop.f32.mrf.mxu0
  %v5197 = vadd.f32 %v5154, %v5196
  %v5198 = vpop.f32.mrf.mxu0
  %v5199 = vadd.f32 %v5156, %v5198
  %v5200 = vpop.f32.mrf.mxu0
  %v5201 = vadd.f32 %v5158, %v5200
  %5202 = vdwg.mxu0
  %5203 = vmatprep.subr.bf16.mxu0 %v3807
  %5204 = vmatpush1.bf16.msra.mxu0 %v3806
  %5205 = vmatprep.subr.bf16.mxu0 %v3803
  %5206 = vmatpush1.bf16.msra.mxu0 %v3802
  %5207 = vmatprep.subr.bf16.mxu0 %v3799
  %5208 = vmatpush1.bf16.msra.mxu0 %v3798
  %5209 = vmatprep.subr.bf16.mxu0 %v3795
  %5210 = vmatpush1.bf16.msra.mxu0 %v3794
  %5211 = vmatprep.subr.bf16.mxu0 %v3791
  %5212 = vmatpush1.bf16.msra.mxu0 %v3790
  %5213 = vmatprep.subr.bf16.mxu0 %v3787
  %5214 = vmatpush1.bf16.msra.mxu0 %v3786
  %5215 = vmatprep.subr.bf16.mxu0 %v3783
  %5216 = vmatpush1.bf16.msra.mxu0 %v3782
  %5217 = vmatprep.subr.bf16.mxu0 %v3779
  %5218 = vmatpush1.bf16.msra.mxu0 %v3778
  %5219 = vmatprep.subr.bf16.mxu0 %v3839
  %5220 = vmatpush2.bf16.msra.mxu0 %v3838
  %5221 = vmatprep.subr.bf16.mxu0 %v3835
  %5222 = vmatpush2.bf16.msra.mxu0 %v3834
  %5223 = vmatprep.subr.bf16.mxu0 %v3831
  %5224 = vmatpush2.bf16.msra.mxu0 %v3830
  %5225 = vmatprep.subr.bf16.mxu0 %v3827
  %5226 = vmatpush2.bf16.msra.mxu0 %v3826
  %5227 = vmatprep.subr.bf16.mxu0 %v3823
  %5228 = vmatpush2.bf16.msra.mxu0 %v3822
  %5229 = vmatprep.subr.bf16.mxu0 %v3819
  %5230 = vmatpush2.bf16.msra.mxu0 %v3818
  %5231 = vmatprep.subr.bf16.mxu0 %v3815
  %5232 = vmatpush2.bf16.msra.mxu0 %v3814
  %5233 = vmatprep.subr.bf16.mxu0 %v3811
  %5234 = vmatpush2.bf16.msra.mxu0 %v3810
  %5235 = vmatprep.mubr.bf16.mxu0 %v944
  %5236 = vmatmul.mubr.bf16.gmra.mxu0 %v943
  %v5237 = vpop.f32.mrf.mxu0
  %v5238 = vadd.f32 %v5195, %v5237
  %v5239 = vpop.f32.mrf.mxu0
  %v5240 = vadd.f32 %v5197, %v5239
  %v5241 = vpop.f32.mrf.mxu0
  %v5242 = vadd.f32 %v5199, %v5241
  %v5243 = vpop.f32.mrf.mxu0
  %v5244 = vadd.f32 %v5201, %v5243
  %5245 = vdwg.mxu0
  %5246 = vmatprep.subr.bf16.mxu0 %v3871
  %5247 = vmatpush1.bf16.msra.mxu0 %v3870
  %5248 = vmatprep.subr.bf16.mxu0 %v3867
  %5249 = vmatpush1.bf16.msra.mxu0 %v3866
  %5250 = vmatprep.subr.bf16.mxu0 %v3863
  %5251 = vmatpush1.bf16.msra.mxu0 %v3862
  %5252 = vmatprep.subr.bf16.mxu0 %v3859
  %5253 = vmatpush1.bf16.msra.mxu0 %v3858
  %5254 = vmatprep.subr.bf16.mxu0 %v3855
  %5255 = vmatpush1.bf16.msra.mxu0 %v3854
  %5256 = vmatprep.subr.bf16.mxu0 %v3851
  %5257 = vmatpush1.bf16.msra.mxu0 %v3850
  %5258 = vmatprep.subr.bf16.mxu0 %v3847
  %5259 = vmatpush1.bf16.msra.mxu0 %v3846
  %5260 = vmatprep.subr.bf16.mxu0 %v3843
  %5261 = vmatpush1.bf16.msra.mxu0 %v3842
  %5262 = vmatprep.subr.bf16.mxu0 %v3903
  %5263 = vmatpush2.bf16.msra.mxu0 %v3902
  %5264 = vmatprep.subr.bf16.mxu0 %v3899
  %5265 = vmatpush2.bf16.msra.mxu0 %v3898
  %5266 = vmatprep.subr.bf16.mxu0 %v3895
  %5267 = vmatpush2.bf16.msra.mxu0 %v3894
  %5268 = vmatprep.subr.bf16.mxu0 %v3891
  %5269 = vmatpush2.bf16.msra.mxu0 %v3890
  %5270 = vmatprep.subr.bf16.mxu0 %v3887
  %5271 = vmatpush2.bf16.msra.mxu0 %v3886
  %5272 = vmatprep.subr.bf16.mxu0 %v3883
  %5273 = vmatpush2.bf16.msra.mxu0 %v3882
  %5274 = vmatprep.subr.bf16.mxu0 %v3879
  %5275 = vmatpush2.bf16.msra.mxu0 %v3878
  %5276 = vmatprep.subr.bf16.mxu0 %v3875
  %5277 = vmatpush2.bf16.msra.mxu0 %v3874
  %5278 = vmatprep.mubr.bf16.mxu0 %v946
  %5279 = vmatmul.mubr.bf16.gmra.mxu0 %v945
  %v5280 = vpop.f32.mrf.mxu0
  %v5281 = vadd.f32 %v5238, %v5280
  %v5282 = vpop.f32.mrf.mxu0
  %v5283 = vadd.f32 %v5240, %v5282
  %v5284 = vpop.f32.mrf.mxu0
  %v5285 = vadd.f32 %v5242, %v5284
  %v5286 = vpop.f32.mrf.mxu0
  %v5287 = vadd.f32 %v5244, %v5286
  %5288 = vdwg.mxu0
  %5289 = vmatprep.subr.bf16.mxu0 %v3935
  %5290 = vmatpush1.bf16.msra.mxu0 %v3934
  %5291 = vmatprep.subr.bf16.mxu0 %v3931
  %5292 = vmatpush1.bf16.msra.mxu0 %v3930
  %5293 = vmatprep.subr.bf16.mxu0 %v3927
  %5294 = vmatpush1.bf16.msra.mxu0 %v3926
  %5295 = vmatprep.subr.bf16.mxu0 %v3923
  %5296 = vmatpush1.bf16.msra.mxu0 %v3922
  %5297 = vmatprep.subr.bf16.mxu0 %v3919
  %5298 = vmatpush1.bf16.msra.mxu0 %v3918
  %5299 = vmatprep.subr.bf16.mxu0 %v3915
  %5300 = vmatpush1.bf16.msra.mxu0 %v3914
  %5301 = vmatprep.subr.bf16.mxu0 %v3911
  %5302 = vmatpush1.bf16.msra.mxu0 %v3910
  %5303 = vmatprep.subr.bf16.mxu0 %v3907
  %5304 = vmatpush1.bf16.msra.mxu0 %v3906
  %5305 = vmatprep.subr.bf16.mxu0 %v3967
  %5306 = vmatpush2.bf16.msra.mxu0 %v3966
  %5307 = vmatprep.subr.bf16.mxu0 %v3963
  %5308 = vmatpush2.bf16.msra.mxu0 %v3962
  %5309 = vmatprep.subr.bf16.mxu0 %v3959
  %5310 = vmatpush2.bf16.msra.mxu0 %v3958
  %5311 = vmatprep.subr.bf16.mxu0 %v3955
  %5312 = vmatpush2.bf16.msra.mxu0 %v3954
  %5313 = vmatprep.subr.bf16.mxu0 %v3951
  %5314 = vmatpush2.bf16.msra.mxu0 %v3950
  %5315 = vmatprep.subr.bf16.mxu0 %v3947
  %5316 = vmatpush2.bf16.msra.mxu0 %v3946
  %5317 = vmatprep.subr.bf16.mxu0 %v3943
  %5318 = vmatpush2.bf16.msra.mxu0 %v3942
  %5319 = vmatprep.subr.bf16.mxu0 %v3939
  %5320 = vmatpush2.bf16.msra.mxu0 %v3938
  %5321 = vmatprep.mubr.bf16.mxu0 %v948
  %5322 = vmatmul.mubr.bf16.gmra.mxu0 %v947
  %v5323 = vpop.f32.mrf.mxu0
  %v5324 = vadd.f32 %v5281, %v5323
  %v5325 = vpop.f32.mrf.mxu0
  %v5326 = vadd.f32 %v5283, %v5325
  %v5327 = vpop.f32.mrf.mxu0
  %v5328 = vadd.f32 %v5285, %v5327
  %v5329 = vpop.f32.mrf.mxu0
  %v5330 = vadd.f32 %v5287, %v5329
  %5331 = vdwg.mxu0
  %5332 = vmatprep.subr.bf16.mxu0 %v3999
  %5333 = vmatpush1.bf16.msra.mxu0 %v3998
  %5334 = vmatprep.subr.bf16.mxu0 %v3995
  %5335 = vmatpush1.bf16.msra.mxu0 %v3994
  %5336 = vmatprep.subr.bf16.mxu0 %v3991
  %5337 = vmatpush1.bf16.msra.mxu0 %v3990
  %5338 = vmatprep.subr.bf16.mxu0 %v3987
  %5339 = vmatpush1.bf16.msra.mxu0 %v3986
  %5340 = vmatprep.subr.bf16.mxu0 %v3983
  %5341 = vmatpush1.bf16.msra.mxu0 %v3982
  %5342 = vmatprep.subr.bf16.mxu0 %v3979
  %5343 = vmatpush1.bf16.msra.mxu0 %v3978
  %5344 = vmatprep.subr.bf16.mxu0 %v3975
  %5345 = vmatpush1.bf16.msra.mxu0 %v3974
  %5346 = vmatprep.subr.bf16.mxu0 %v3971
  %5347 = vmatpush1.bf16.msra.mxu0 %v3970
  %5348 = vmatprep.subr.bf16.mxu0 %v4031
  %5349 = vmatpush2.bf16.msra.mxu0 %v4030
  %5350 = vmatprep.subr.bf16.mxu0 %v4027
  %5351 = vmatpush2.bf16.msra.mxu0 %v4026
  %5352 = vmatprep.subr.bf16.mxu0 %v4023
  %5353 = vmatpush2.bf16.msra.mxu0 %v4022
  %5354 = vmatprep.subr.bf16.mxu0 %v4019
  %5355 = vmatpush2.bf16.msra.mxu0 %v4018
  %5356 = vmatprep.subr.bf16.mxu0 %v4015
  %5357 = vmatpush2.bf16.msra.mxu0 %v4014
  %5358 = vmatprep.subr.bf16.mxu0 %v4011
  %5359 = vmatpush2.bf16.msra.mxu0 %v4010
  %5360 = vmatprep.subr.bf16.mxu0 %v4007
  %5361 = vmatpush2.bf16.msra.mxu0 %v4006
  %5362 = vmatprep.subr.bf16.mxu0 %v4003
  %5363 = vmatpush2.bf16.msra.mxu0 %v4002
  %5364 = vmatprep.mubr.bf16.mxu0 %v950
  %5365 = vmatmul.mubr.bf16.gmra.mxu0 %v949
  %v5366 = vpop.f32.mrf.mxu0
  %v5367 = vadd.f32 %v5324, %v5366
  %v5368 = vpop.f32.mrf.mxu0
  %v5369 = vadd.f32 %v5326, %v5368
  %v5370 = vpop.f32.mrf.mxu0
  %v5371 = vadd.f32 %v5328, %v5370
  %v5372 = vpop.f32.mrf.mxu0
  %v5373 = vadd.f32 %v5330, %v5372
  %5374 = vdwg.mxu0
  %5375 = vmatprep.subr.bf16.mxu0 %v4063
  %5376 = vmatpush1.bf16.msra.mxu0 %v4062
  %5377 = vmatprep.subr.bf16.mxu0 %v4059
  %5378 = vmatpush1.bf16.msra.mxu0 %v4058
  %5379 = vmatprep.subr.bf16.mxu0 %v4055
  %5380 = vmatpush1.bf16.msra.mxu0 %v4054
  %5381 = vmatprep.subr.bf16.mxu0 %v4051
  %5382 = vmatpush1.bf16.msra.mxu0 %v4050
  %5383 = vmatprep.subr.bf16.mxu0 %v4047
  %5384 = vmatpush1.bf16.msra.mxu0 %v4046
  %5385 = vmatprep.subr.bf16.mxu0 %v4043
  %5386 = vmatpush1.bf16.msra.mxu0 %v4042
  %5387 = vmatprep.subr.bf16.mxu0 %v4039
  %5388 = vmatpush1.bf16.msra.mxu0 %v4038
  %5389 = vmatprep.subr.bf16.mxu0 %v4035
  %5390 = vmatpush1.bf16.msra.mxu0 %v4034
  %5391 = vmatprep.subr.bf16.mxu0 %v4095
  %5392 = vmatpush2.bf16.msra.mxu0 %v4094
  %5393 = vmatprep.subr.bf16.mxu0 %v4091
  %5394 = vmatpush2.bf16.msra.mxu0 %v4090
  %5395 = vmatprep.subr.bf16.mxu0 %v4087
  %5396 = vmatpush2.bf16.msra.mxu0 %v4086
  %5397 = vmatprep.subr.bf16.mxu0 %v4083
  %5398 = vmatpush2.bf16.msra.mxu0 %v4082
  %5399 = vmatprep.subr.bf16.mxu0 %v4079
  %5400 = vmatpush2.bf16.msra.mxu0 %v4078
  %5401 = vmatprep.subr.bf16.mxu0 %v4075
  %5402 = vmatpush2.bf16.msra.mxu0 %v4074
  %5403 = vmatprep.subr.bf16.mxu0 %v4071
  %5404 = vmatpush2.bf16.msra.mxu0 %v4070
  %5405 = vmatprep.subr.bf16.mxu0 %v4067
  %5406 = vmatpush2.bf16.msra.mxu0 %v4066
  %5407 = vmatprep.mubr.bf16.mxu0 %v952
  %5408 = vmatmul.mubr.bf16.gmra.mxu0 %v951
  %v5409 = vpop.f32.mrf.mxu0
  %v5410 = vadd.f32 %v5367, %v5409
  %v5411 = vpop.f32.mrf.mxu0
  %v5412 = vadd.f32 %v5369, %v5411
  %v5413 = vpop.f32.mrf.mxu0
  %v5414 = vadd.f32 %v5371, %v5413
  %v5415 = vpop.f32.mrf.mxu0
  %v5416 = vadd.f32 %v5373, %v5415
  %5417 = vdwg.mxu0
  %5418 = vmatprep.subr.bf16.mxu0 0
  %5419 = vmatpush1.bf16.msra.mxu0 0
  %5420 = vmatprep.subr.bf16.mxu0 0
  %5421 = vmatpush1.bf16.msra.mxu0 0
  %5422 = vmatprep.subr.bf16.mxu0 0
  %5423 = vmatpush1.bf16.msra.mxu0 0
  %5424 = vmatprep.subr.bf16.mxu0 0
  %5425 = vmatpush1.bf16.msra.mxu0 0
  %5426 = vmatprep.subr.bf16.mxu0 %v4111
  %5427 = vmatpush1.bf16.msra.mxu0 %v4110
  %5428 = vmatprep.subr.bf16.mxu0 %v4107
  %5429 = vmatpush1.bf16.msra.mxu0 %v4106
  %5430 = vmatprep.subr.bf16.mxu0 %v4103
  %5431 = vmatpush1.bf16.msra.mxu0 %v4102
  %5432 = vmatprep.subr.bf16.mxu0 %v4099
  %5433 = vmatpush1.bf16.msra.mxu0 %v4098
  %5434 = vmatprep.subr.bf16.mxu0 0
  %5435 = vmatpush2.bf16.msra.mxu0 0
  %5436 = vmatprep.subr.bf16.mxu0 0
  %5437 = vmatpush2.bf16.msra.mxu0 0
  %5438 = vmatprep.subr.bf16.mxu0 0
  %5439 = vmatpush2.bf16.msra.mxu0 0
  %5440 = vmatprep.subr.bf16.mxu0 0
  %5441 = vmatpush2.bf16.msra.mxu0 0
  %5442 = vmatprep.subr.bf16.mxu0 0
  %5443 = vmatpush2.bf16.msra.mxu0 0
  %5444 = vmatprep.subr.bf16.mxu0 0
  %5445 = vmatpush2.bf16.msra.mxu0 0
  %5446 = vmatprep.subr.bf16.mxu0 0
  %5447 = vmatpush2.bf16.msra.mxu0 0
  %5448 = vmatprep.subr.bf16.mxu0 0
  %5449 = vmatpush2.bf16.msra.mxu0 0
  %5450 = vmatprep.mubr.bf16.mxu0 0
  %5451 = vmatmul.mubr.bf16.gmra.mxu0 %v4900
  %v5452 = vpop.f32.mrf.mxu0
  %v5453 = vadd.f32 %v5410, %v5452
  %v5454 = vpop.f32.mrf.mxu0
  %v5455 = vadd.f32 %v5412, %v5454
  %v5456 = vpop.f32.mrf.mxu0
  %v5457 = vadd.f32 %v5414, %v5456
  %v5458 = vpop.f32.mrf.mxu0
  %v5459 = vadd.f32 %v5416, %v5458
  %5460 = vdwg.mxu0
  %5461 = vmatprep.subr.bf16.mxu0 %v3361
  %5462 = vmatpush1.bf16.msra.mxu0 %v3360
  %5463 = vmatprep.subr.bf16.mxu0 %v3357
  %5464 = vmatpush1.bf16.msra.mxu0 %v3356
  %5465 = vmatprep.subr.bf16.mxu0 %v3353
  %5466 = vmatpush1.bf16.msra.mxu0 %v3352
  %5467 = vmatprep.subr.bf16.mxu0 %v3349
  %5468 = vmatpush1.bf16.msra.mxu0 %v3348
  %5469 = vmatprep.subr.bf16.mxu0 %v3345
  %5470 = vmatpush1.bf16.msra.mxu0 %v3344
  %5471 = vmatprep.subr.bf16.mxu0 %v3341
  %5472 = vmatpush1.bf16.msra.mxu0 %v3340
  %5473 = vmatprep.subr.bf16.mxu0 %v3337
  %5474 = vmatpush1.bf16.msra.mxu0 %v3336
  %5475 = vmatprep.subr.bf16.mxu0 %v3333
  %5476 = vmatpush1.bf16.msra.mxu0 %v3332
  %5477 = vmatprep.subr.bf16.mxu0 %v3393
  %5478 = vmatpush2.bf16.msra.mxu0 %v3392
  %5479 = vmatprep.subr.bf16.mxu0 %v3389
  %5480 = vmatpush2.bf16.msra.mxu0 %v3388
  %5481 = vmatprep.subr.bf16.mxu0 %v3385
  %5482 = vmatpush2.bf16.msra.mxu0 %v3384
  %5483 = vmatprep.subr.bf16.mxu0 %v3381
  %5484 = vmatpush2.bf16.msra.mxu0 %v3380
  %5485 = vmatprep.subr.bf16.mxu0 %v3377
  %5486 = vmatpush2.bf16.msra.mxu0 %v3376
  %5487 = vmatprep.subr.bf16.mxu0 %v3373
  %5488 = vmatpush2.bf16.msra.mxu0 %v3372
  %5489 = vmatprep.subr.bf16.mxu0 %v3369
  %5490 = vmatpush2.bf16.msra.mxu0 %v3368
  %5491 = vmatprep.subr.bf16.mxu0 %v3365
  %5492 = vmatpush2.bf16.msra.mxu0 %v3364
  %5493 = vmatprep.mubr.bf16.mxu0 %v930
  %5494 = vmatmul.mubr.bf16.gmra.mxu0 %v929
  %v5495 = vpop.f32.mrf.mxu0
  %v5496 = vadd.f32 %v844, %v5495
  %v5497 = vpop.f32.mrf.mxu0
  %v5498 = vadd.f32 %v848, %v5497
  %v5499 = vpop.f32.mrf.mxu0
  %v5500 = vadd.f32 %v844, %v5499
  %v5501 = vpop.f32.mrf.mxu0
  %v5502 = vadd.f32 %v848, %v5501
  %5503 = vdwg.mxu0
  %5504 = vmatprep.subr.bf16.mxu0 %v3425
  %5505 = vmatpush1.bf16.msra.mxu0 %v3424
  %5506 = vmatprep.subr.bf16.mxu0 %v3421
  %5507 = vmatpush1.bf16.msra.mxu0 %v3420
  %5508 = vmatprep.subr.bf16.mxu0 %v3417
  %5509 = vmatpush1.bf16.msra.mxu0 %v3416
  %5510 = vmatprep.subr.bf16.mxu0 %v3413
  %5511 = vmatpush1.bf16.msra.mxu0 %v3412
  %5512 = vmatprep.subr.bf16.mxu0 %v3409
  %5513 = vmatpush1.bf16.msra.mxu0 %v3408
  %5514 = vmatprep.subr.bf16.mxu0 %v3405
  %5515 = vmatpush1.bf16.msra.mxu0 %v3404
  %5516 = vmatprep.subr.bf16.mxu0 %v3401
  %5517 = vmatpush1.bf16.msra.mxu0 %v3400
  %5518 = vmatprep.subr.bf16.mxu0 %v3397
  %5519 = vmatpush1.bf16.msra.mxu0 %v3396
  %5520 = vmatprep.subr.bf16.mxu0 %v3457
  %5521 = vmatpush2.bf16.msra.mxu0 %v3456
  %5522 = vmatprep.subr.bf16.mxu0 %v3453
  %5523 = vmatpush2.bf16.msra.mxu0 %v3452
  %5524 = vmatprep.subr.bf16.mxu0 %v3449
  %5525 = vmatpush2.bf16.msra.mxu0 %v3448
  %5526 = vmatprep.subr.bf16.mxu0 %v3445
  %5527 = vmatpush2.bf16.msra.mxu0 %v3444
  %5528 = vmatprep.subr.bf16.mxu0 %v3441
  %5529 = vmatpush2.bf16.msra.mxu0 %v3440
  %5530 = vmatprep.subr.bf16.mxu0 %v3437
  %5531 = vmatpush2.bf16.msra.mxu0 %v3436
  %5532 = vmatprep.subr.bf16.mxu0 %v3433
  %5533 = vmatpush2.bf16.msra.mxu0 %v3432
  %5534 = vmatprep.subr.bf16.mxu0 %v3429
  %5535 = vmatpush2.bf16.msra.mxu0 %v3428
  %5536 = vmatprep.mubr.bf16.mxu0 %v932
  %5537 = vmatmul.mubr.bf16.gmra.mxu0 %v931
  %v5538 = vpop.f32.mrf.mxu0
  %v5539 = vadd.f32 %v5496, %v5538
  %v5540 = vpop.f32.mrf.mxu0
  %v5541 = vadd.f32 %v5498, %v5540
  %v5542 = vpop.f32.mrf.mxu0
  %v5543 = vadd.f32 %v5500, %v5542
  %v5544 = vpop.f32.mrf.mxu0
  %v5545 = vadd.f32 %v5502, %v5544
  %5546 = vdwg.mxu0
  %5547 = vmatprep.subr.bf16.mxu0 %v3489
  %5548 = vmatpush1.bf16.msra.mxu0 %v3488
  %5549 = vmatprep.subr.bf16.mxu0 %v3485
  %5550 = vmatpush1.bf16.msra.mxu0 %v3484
  %5551 = vmatprep.subr.bf16.mxu0 %v3481
  %5552 = vmatpush1.bf16.msra.mxu0 %v3480
  %5553 = vmatprep.subr.bf16.mxu0 %v3477
  %5554 = vmatpush1.bf16.msra.mxu0 %v3476
  %5555 = vmatprep.subr.bf16.mxu0 %v3473
  %5556 = vmatpush1.bf16.msra.mxu0 %v3472
  %5557 = vmatprep.subr.bf16.mxu0 %v3469
  %5558 = vmatpush1.bf16.msra.mxu0 %v3468
  %5559 = vmatprep.subr.bf16.mxu0 %v3465
  %5560 = vmatpush1.bf16.msra.mxu0 %v3464
  %5561 = vmatprep.subr.bf16.mxu0 %v3461
  %5562 = vmatpush1.bf16.msra.mxu0 %v3460
  %5563 = vmatprep.subr.bf16.mxu0 %v3521
  %5564 = vmatpush2.bf16.msra.mxu0 %v3520
  %5565 = vmatprep.subr.bf16.mxu0 %v3517
  %5566 = vmatpush2.bf16.msra.mxu0 %v3516
  %5567 = vmatprep.subr.bf16.mxu0 %v3513
  %5568 = vmatpush2.bf16.msra.mxu0 %v3512
  %5569 = vmatprep.subr.bf16.mxu0 %v3509
  %5570 = vmatpush2.bf16.msra.mxu0 %v3508
  %5571 = vmatprep.subr.bf16.mxu0 %v3505
  %5572 = vmatpush2.bf16.msra.mxu0 %v3504
  %5573 = vmatprep.subr.bf16.mxu0 %v3501
  %5574 = vmatpush2.bf16.msra.mxu0 %v3500
  %5575 = vmatprep.subr.bf16.mxu0 %v3497
  %5576 = vmatpush2.bf16.msra.mxu0 %v3496
  %5577 = vmatprep.subr.bf16.mxu0 %v3493
  %5578 = vmatpush2.bf16.msra.mxu0 %v3492
  %5579 = vmatprep.mubr.bf16.mxu0 %v934
  %5580 = vmatmul.mubr.bf16.gmra.mxu0 %v933
  %v5581 = vpop.f32.mrf.mxu0
  %v5582 = vadd.f32 %v5539, %v5581
  %v5583 = vpop.f32.mrf.mxu0
  %v5584 = vadd.f32 %v5541, %v5583
  %v5585 = vpop.f32.mrf.mxu0
  %v5586 = vadd.f32 %v5543, %v5585
  %v5587 = vpop.f32.mrf.mxu0
  %v5588 = vadd.f32 %v5545, %v5587
  %5589 = vdwg.mxu0
  %5590 = vmatprep.subr.bf16.mxu0 %v3553
  %5591 = vmatpush1.bf16.msra.mxu0 %v3552
  %5592 = vmatprep.subr.bf16.mxu0 %v3549
  %5593 = vmatpush1.bf16.msra.mxu0 %v3548
  %5594 = vmatprep.subr.bf16.mxu0 %v3545
  %5595 = vmatpush1.bf16.msra.mxu0 %v3544
  %5596 = vmatprep.subr.bf16.mxu0 %v3541
  %5597 = vmatpush1.bf16.msra.mxu0 %v3540
  %5598 = vmatprep.subr.bf16.mxu0 %v3537
  %5599 = vmatpush1.bf16.msra.mxu0 %v3536
  %5600 = vmatprep.subr.bf16.mxu0 %v3533
  %5601 = vmatpush1.bf16.msra.mxu0 %v3532
  %5602 = vmatprep.subr.bf16.mxu0 %v3529
  %5603 = vmatpush1.bf16.msra.mxu0 %v3528
  %5604 = vmatprep.subr.bf16.mxu0 %v3525
  %5605 = vmatpush1.bf16.msra.mxu0 %v3524
  %5606 = vmatprep.subr.bf16.mxu0 %v3585
  %5607 = vmatpush2.bf16.msra.mxu0 %v3584
  %5608 = vmatprep.subr.bf16.mxu0 %v3581
  %5609 = vmatpush2.bf16.msra.mxu0 %v3580
  %5610 = vmatprep.subr.bf16.mxu0 %v3577
  %5611 = vmatpush2.bf16.msra.mxu0 %v3576
  %5612 = vmatprep.subr.bf16.mxu0 %v3573
  %5613 = vmatpush2.bf16.msra.mxu0 %v3572
  %5614 = vmatprep.subr.bf16.mxu0 %v3569
  %5615 = vmatpush2.bf16.msra.mxu0 %v3568
  %5616 = vmatprep.subr.bf16.mxu0 %v3565
  %5617 = vmatpush2.bf16.msra.mxu0 %v3564
  %5618 = vmatprep.subr.bf16.mxu0 %v3561
  %5619 = vmatpush2.bf16.msra.mxu0 %v3560
  %5620 = vmatprep.subr.bf16.mxu0 %v3557
  %5621 = vmatpush2.bf16.msra.mxu0 %v3556
  %5622 = vmatprep.mubr.bf16.mxu0 %v936
  %5623 = vmatmul.mubr.bf16.gmra.mxu0 %v935
  %v5624 = vpop.f32.mrf.mxu0
  %v5625 = vadd.f32 %v5582, %v5624
  %v5626 = vpop.f32.mrf.mxu0
  %v5627 = vadd.f32 %v5584, %v5626
  %v5628 = vpop.f32.mrf.mxu0
  %v5629 = vadd.f32 %v5586, %v5628
  %v5630 = vpop.f32.mrf.mxu0
  %v5631 = vadd.f32 %v5588, %v5630
  %5632 = vdwg.mxu0
  %5633 = vmatprep.subr.bf16.mxu0 %v3617
  %5634 = vmatpush1.bf16.msra.mxu0 %v3616
  %5635 = vmatprep.subr.bf16.mxu0 %v3613
  %5636 = vmatpush1.bf16.msra.mxu0 %v3612
  %5637 = vmatprep.subr.bf16.mxu0 %v3609
  %5638 = vmatpush1.bf16.msra.mxu0 %v3608
  %5639 = vmatprep.subr.bf16.mxu0 %v3605
  %5640 = vmatpush1.bf16.msra.mxu0 %v3604
  %5641 = vmatprep.subr.bf16.mxu0 %v3601
  %5642 = vmatpush1.bf16.msra.mxu0 %v3600
  %5643 = vmatprep.subr.bf16.mxu0 %v3597
  %5644 = vmatpush1.bf16.msra.mxu0 %v3596
  %5645 = vmatprep.subr.bf16.mxu0 %v3593
  %5646 = vmatpush1.bf16.msra.mxu0 %v3592
  %5647 = vmatprep.subr.bf16.mxu0 %v3589
  %5648 = vmatpush1.bf16.msra.mxu0 %v3588
  %5649 = vmatprep.subr.bf16.mxu0 %v3649
  %5650 = vmatpush2.bf16.msra.mxu0 %v3648
  %5651 = vmatprep.subr.bf16.mxu0 %v3645
  %5652 = vmatpush2.bf16.msra.mxu0 %v3644
  %5653 = vmatprep.subr.bf16.mxu0 %v3641
  %5654 = vmatpush2.bf16.msra.mxu0 %v3640
  %5655 = vmatprep.subr.bf16.mxu0 %v3637
  %5656 = vmatpush2.bf16.msra.mxu0 %v3636
  %5657 = vmatprep.subr.bf16.mxu0 %v3633
  %5658 = vmatpush2.bf16.msra.mxu0 %v3632
  %5659 = vmatprep.subr.bf16.mxu0 %v3629
  %5660 = vmatpush2.bf16.msra.mxu0 %v3628
  %5661 = vmatprep.subr.bf16.mxu0 %v3625
  %5662 = vmatpush2.bf16.msra.mxu0 %v3624
  %5663 = vmatprep.subr.bf16.mxu0 %v3621
  %5664 = vmatpush2.bf16.msra.mxu0 %v3620
  %5665 = vmatprep.mubr.bf16.mxu0 %v938
  %5666 = vmatmul.mubr.bf16.gmra.mxu0 %v937
  %v5667 = vpop.f32.mrf.mxu0
  %v5668 = vadd.f32 %v5625, %v5667
  %v5669 = vpop.f32.mrf.mxu0
  %v5670 = vadd.f32 %v5627, %v5669
  %v5671 = vpop.f32.mrf.mxu0
  %v5672 = vadd.f32 %v5629, %v5671
  %v5673 = vpop.f32.mrf.mxu0
  %v5674 = vadd.f32 %v5631, %v5673
  %5675 = vdwg.mxu0
  %5676 = vmatprep.subr.bf16.mxu0 %v3681
  %5677 = vmatpush1.bf16.msra.mxu0 %v3680
  %5678 = vmatprep.subr.bf16.mxu0 %v3677
  %5679 = vmatpush1.bf16.msra.mxu0 %v3676
  %5680 = vmatprep.subr.bf16.mxu0 %v3673
  %5681 = vmatpush1.bf16.msra.mxu0 %v3672
  %5682 = vmatprep.subr.bf16.mxu0 %v3669
  %5683 = vmatpush1.bf16.msra.mxu0 %v3668
  %5684 = vmatprep.subr.bf16.mxu0 %v3665
  %5685 = vmatpush1.bf16.msra.mxu0 %v3664
  %5686 = vmatprep.subr.bf16.mxu0 %v3661
  %5687 = vmatpush1.bf16.msra.mxu0 %v3660
  %5688 = vmatprep.subr.bf16.mxu0 %v3657
  %5689 = vmatpush1.bf16.msra.mxu0 %v3656
  %5690 = vmatprep.subr.bf16.mxu0 %v3653
  %5691 = vmatpush1.bf16.msra.mxu0 %v3652
  %5692 = vmatprep.subr.bf16.mxu0 %v3713
  %5693 = vmatpush2.bf16.msra.mxu0 %v3712
  %5694 = vmatprep.subr.bf16.mxu0 %v3709
  %5695 = vmatpush2.bf16.msra.mxu0 %v3708
  %5696 = vmatprep.subr.bf16.mxu0 %v3705
  %5697 = vmatpush2.bf16.msra.mxu0 %v3704
  %5698 = vmatprep.subr.bf16.mxu0 %v3701
  %5699 = vmatpush2.bf16.msra.mxu0 %v3700
  %5700 = vmatprep.subr.bf16.mxu0 %v3697
  %5701 = vmatpush2.bf16.msra.mxu0 %v3696
  %5702 = vmatprep.subr.bf16.mxu0 %v3693
  %5703 = vmatpush2.bf16.msra.mxu0 %v3692
  %5704 = vmatprep.subr.bf16.mxu0 %v3689
  %5705 = vmatpush2.bf16.msra.mxu0 %v3688
  %5706 = vmatprep.subr.bf16.mxu0 %v3685
  %5707 = vmatpush2.bf16.msra.mxu0 %v3684
  %5708 = vmatprep.mubr.bf16.mxu0 %v940
  %5709 = vmatmul.mubr.bf16.gmra.mxu0 %v939
  %v5710 = vpop.f32.mrf.mxu0
  %v5711 = vadd.f32 %v5668, %v5710
  %v5712 = vpop.f32.mrf.mxu0
  %v5713 = vadd.f32 %v5670, %v5712
  %v5714 = vpop.f32.mrf.mxu0
  %v5715 = vadd.f32 %v5672, %v5714
  %v5716 = vpop.f32.mrf.mxu0
  %v5717 = vadd.f32 %v5674, %v5716
  %5718 = vdwg.mxu0
  %5719 = vmatprep.subr.bf16.mxu0 %v3745
  %5720 = vmatpush1.bf16.msra.mxu0 %v3744
  %5721 = vmatprep.subr.bf16.mxu0 %v3741
  %5722 = vmatpush1.bf16.msra.mxu0 %v3740
  %5723 = vmatprep.subr.bf16.mxu0 %v3737
  %5724 = vmatpush1.bf16.msra.mxu0 %v3736
  %5725 = vmatprep.subr.bf16.mxu0 %v3733
  %5726 = vmatpush1.bf16.msra.mxu0 %v3732
  %5727 = vmatprep.subr.bf16.mxu0 %v3729
  %5728 = vmatpush1.bf16.msra.mxu0 %v3728
  %5729 = vmatprep.subr.bf16.mxu0 %v3725
  %5730 = vmatpush1.bf16.msra.mxu0 %v3724
  %5731 = vmatprep.subr.bf16.mxu0 %v3721
  %5732 = vmatpush1.bf16.msra.mxu0 %v3720
  %5733 = vmatprep.subr.bf16.mxu0 %v3717
  %5734 = vmatpush1.bf16.msra.mxu0 %v3716
  %5735 = vmatprep.subr.bf16.mxu0 %v3777
  %5736 = vmatpush2.bf16.msra.mxu0 %v3776
  %5737 = vmatprep.subr.bf16.mxu0 %v3773
  %5738 = vmatpush2.bf16.msra.mxu0 %v3772
  %5739 = vmatprep.subr.bf16.mxu0 %v3769
  %5740 = vmatpush2.bf16.msra.mxu0 %v3768
  %5741 = vmatprep.subr.bf16.mxu0 %v3765
  %5742 = vmatpush2.bf16.msra.mxu0 %v3764
  %5743 = vmatprep.subr.bf16.mxu0 %v3761
  %5744 = vmatpush2.bf16.msra.mxu0 %v3760
  %5745 = vmatprep.subr.bf16.mxu0 %v3757
  %5746 = vmatpush2.bf16.msra.mxu0 %v3756
  %5747 = vmatprep.subr.bf16.mxu0 %v3753
  %5748 = vmatpush2.bf16.msra.mxu0 %v3752
  %5749 = vmatprep.subr.bf16.mxu0 %v3749
  %5750 = vmatpush2.bf16.msra.mxu0 %v3748
  %5751 = vmatprep.mubr.bf16.mxu0 %v942
  %5752 = vmatmul.mubr.bf16.gmra.mxu0 %v941
  %v5753 = vpop.f32.mrf.mxu0
  %v5754 = vadd.f32 %v5711, %v5753
  %v5755 = vpop.f32.mrf.mxu0
  %v5756 = vadd.f32 %v5713, %v5755
  %v5757 = vpop.f32.mrf.mxu0
  %v5758 = vadd.f32 %v5715, %v5757
  %v5759 = vpop.f32.mrf.mxu0
  %v5760 = vadd.f32 %v5717, %v5759
  %5761 = vdwg.mxu0
  %5762 = vmatprep.subr.bf16.mxu0 %v3809
  %5763 = vmatpush1.bf16.msra.mxu0 %v3808
  %5764 = vmatprep.subr.bf16.mxu0 %v3805
  %5765 = vmatpush1.bf16.msra.mxu0 %v3804
  %5766 = vmatprep.subr.bf16.mxu0 %v3801
  %5767 = vmatpush1.bf16.msra.mxu0 %v3800
  %5768 = vmatprep.subr.bf16.mxu0 %v3797
  %5769 = vmatpush1.bf16.msra.mxu0 %v3796
  %5770 = vmatprep.subr.bf16.mxu0 %v3793
  %5771 = vmatpush1.bf16.msra.mxu0 %v3792
  %5772 = vmatprep.subr.bf16.mxu0 %v3789
  %5773 = vmatpush1.bf16.msra.mxu0 %v3788
  %5774 = vmatprep.subr.bf16.mxu0 %v3785
  %5775 = vmatpush1.bf16.msra.mxu0 %v3784
  %5776 = vmatprep.subr.bf16.mxu0 %v3781
  %5777 = vmatpush1.bf16.msra.mxu0 %v3780
  %5778 = vmatprep.subr.bf16.mxu0 %v3841
  %5779 = vmatpush2.bf16.msra.mxu0 %v3840
  %5780 = vmatprep.subr.bf16.mxu0 %v3837
  %5781 = vmatpush2.bf16.msra.mxu0 %v3836
  %5782 = vmatprep.subr.bf16.mxu0 %v3833
  %5783 = vmatpush2.bf16.msra.mxu0 %v3832
  %5784 = vmatprep.subr.bf16.mxu0 %v3829
  %5785 = vmatpush2.bf16.msra.mxu0 %v3828
  %5786 = vmatprep.subr.bf16.mxu0 %v3825
  %5787 = vmatpush2.bf16.msra.mxu0 %v3824
  %5788 = vmatprep.subr.bf16.mxu0 %v3821
  %5789 = vmatpush2.bf16.msra.mxu0 %v3820
  %5790 = vmatprep.subr.bf16.mxu0 %v3817
  %5791 = vmatpush2.bf16.msra.mxu0 %v3816
  %5792 = vmatprep.subr.bf16.mxu0 %v3813
  %5793 = vmatpush2.bf16.msra.mxu0 %v3812
  %5794 = vmatprep.mubr.bf16.mxu0 %v944
  %5795 = vmatmul.mubr.bf16.gmra.mxu0 %v943
  %v5796 = vpop.f32.mrf.mxu0
  %v5797 = vadd.f32 %v5754, %v5796
  %v5798 = vpop.f32.mrf.mxu0
  %v5799 = vadd.f32 %v5756, %v5798
  %v5800 = vpop.f32.mrf.mxu0
  %v5801 = vadd.f32 %v5758, %v5800
  %v5802 = vpop.f32.mrf.mxu0
  %v5803 = vadd.f32 %v5760, %v5802
  %5804 = vdwg.mxu0
  %5805 = vmatprep.subr.bf16.mxu0 %v3873
  %5806 = vmatpush1.bf16.msra.mxu0 %v3872
  %5807 = vmatprep.subr.bf16.mxu0 %v3869
  %5808 = vmatpush1.bf16.msra.mxu0 %v3868
  %5809 = vmatprep.subr.bf16.mxu0 %v3865
  %5810 = vmatpush1.bf16.msra.mxu0 %v3864
  %5811 = vmatprep.subr.bf16.mxu0 %v3861
  %5812 = vmatpush1.bf16.msra.mxu0 %v3860
  %5813 = vmatprep.subr.bf16.mxu0 %v3857
  %5814 = vmatpush1.bf16.msra.mxu0 %v3856
  %5815 = vmatprep.subr.bf16.mxu0 %v3853
  %5816 = vmatpush1.bf16.msra.mxu0 %v3852
  %5817 = vmatprep.subr.bf16.mxu0 %v3849
  %5818 = vmatpush1.bf16.msra.mxu0 %v3848
  %5819 = vmatprep.subr.bf16.mxu0 %v3845
  %5820 = vmatpush1.bf16.msra.mxu0 %v3844
  %5821 = vmatprep.subr.bf16.mxu0 %v3905
  %5822 = vmatpush2.bf16.msra.mxu0 %v3904
  %5823 = vmatprep.subr.bf16.mxu0 %v3901
  %5824 = vmatpush2.bf16.msra.mxu0 %v3900
  %5825 = vmatprep.subr.bf16.mxu0 %v3897
  %5826 = vmatpush2.bf16.msra.mxu0 %v3896
  %5827 = vmatprep.subr.bf16.mxu0 %v3893
  %5828 = vmatpush2.bf16.msra.mxu0 %v3892
  %5829 = vmatprep.subr.bf16.mxu0 %v3889
  %5830 = vmatpush2.bf16.msra.mxu0 %v3888
  %5831 = vmatprep.subr.bf16.mxu0 %v3885
  %5832 = vmatpush2.bf16.msra.mxu0 %v3884
  %5833 = vmatprep.subr.bf16.mxu0 %v3881
  %5834 = vmatpush2.bf16.msra.mxu0 %v3880
  %5835 = vmatprep.subr.bf16.mxu0 %v3877
  %5836 = vmatpush2.bf16.msra.mxu0 %v3876
  %5837 = vmatprep.mubr.bf16.mxu0 %v946
  %5838 = vmatmul.mubr.bf16.gmra.mxu0 %v945
  %v5839 = vpop.f32.mrf.mxu0
  %v5840 = vadd.f32 %v5797, %v5839
  %v5841 = vpop.f32.mrf.mxu0
  %v5842 = vadd.f32 %v5799, %v5841
  %v5843 = vpop.f32.mrf.mxu0
  %v5844 = vadd.f32 %v5801, %v5843
  %v5845 = vpop.f32.mrf.mxu0
  %v5846 = vadd.f32 %v5803, %v5845
  %5847 = vdwg.mxu0
  %5848 = vmatprep.subr.bf16.mxu0 %v3937
  %5849 = vmatpush1.bf16.msra.mxu0 %v3936
  %5850 = vmatprep.subr.bf16.mxu0 %v3933
  %5851 = vmatpush1.bf16.msra.mxu0 %v3932
  %5852 = vmatprep.subr.bf16.mxu0 %v3929
  %5853 = vmatpush1.bf16.msra.mxu0 %v3928
  %5854 = vmatprep.subr.bf16.mxu0 %v3925
  %5855 = vmatpush1.bf16.msra.mxu0 %v3924
  %5856 = vmatprep.subr.bf16.mxu0 %v3921
  %5857 = vmatpush1.bf16.msra.mxu0 %v3920
  %5858 = vmatprep.subr.bf16.mxu0 %v3917
  %5859 = vmatpush1.bf16.msra.mxu0 %v3916
  %5860 = vmatprep.subr.bf16.mxu0 %v3913
  %5861 = vmatpush1.bf16.msra.mxu0 %v3912
  %5862 = vmatprep.subr.bf16.mxu0 %v3909
  %5863 = vmatpush1.bf16.msra.mxu0 %v3908
  %5864 = vmatprep.subr.bf16.mxu0 %v3969
  %5865 = vmatpush2.bf16.msra.mxu0 %v3968
  %5866 = vmatprep.subr.bf16.mxu0 %v3965
  %5867 = vmatpush2.bf16.msra.mxu0 %v3964
  %5868 = vmatprep.subr.bf16.mxu0 %v3961
  %5869 = vmatpush2.bf16.msra.mxu0 %v3960
  %5870 = vmatprep.subr.bf16.mxu0 %v3957
  %5871 = vmatpush2.bf16.msra.mxu0 %v3956
  %5872 = vmatprep.subr.bf16.mxu0 %v3953
  %5873 = vmatpush2.bf16.msra.mxu0 %v3952
  %5874 = vmatprep.subr.bf16.mxu0 %v3949
  %5875 = vmatpush2.bf16.msra.mxu0 %v3948
  %5876 = vmatprep.subr.bf16.mxu0 %v3945
  %5877 = vmatpush2.bf16.msra.mxu0 %v3944
  %5878 = vmatprep.subr.bf16.mxu0 %v3941
  %5879 = vmatpush2.bf16.msra.mxu0 %v3940
  %5880 = vmatprep.mubr.bf16.mxu0 %v948
  %5881 = vmatmul.mubr.bf16.gmra.mxu0 %v947
  %v5882 = vpop.f32.mrf.mxu0
  %v5883 = vadd.f32 %v5840, %v5882
  %v5884 = vpop.f32.mrf.mxu0
  %v5885 = vadd.f32 %v5842, %v5884
  %v5886 = vpop.f32.mrf.mxu0
  %v5887 = vadd.f32 %v5844, %v5886
  %v5888 = vpop.f32.mrf.mxu0
  %v5889 = vadd.f32 %v5846, %v5888
  %5890 = vdwg.mxu0
  %5891 = vmatprep.subr.bf16.mxu0 %v4001
  %5892 = vmatpush1.bf16.msra.mxu0 %v4000
  %5893 = vmatprep.subr.bf16.mxu0 %v3997
  %5894 = vmatpush1.bf16.msra.mxu0 %v3996
  %5895 = vmatprep.subr.bf16.mxu0 %v3993
  %5896 = vmatpush1.bf16.msra.mxu0 %v3992
  %5897 = vmatprep.subr.bf16.mxu0 %v3989
  %5898 = vmatpush1.bf16.msra.mxu0 %v3988
  %5899 = vmatprep.subr.bf16.mxu0 %v3985
  %5900 = vmatpush1.bf16.msra.mxu0 %v3984
  %5901 = vmatprep.subr.bf16.mxu0 %v3981
  %5902 = vmatpush1.bf16.msra.mxu0 %v3980
  %5903 = vmatprep.subr.bf16.mxu0 %v3977
  %5904 = vmatpush1.bf16.msra.mxu0 %v3976
  %5905 = vmatprep.subr.bf16.mxu0 %v3973
  %5906 = vmatpush1.bf16.msra.mxu0 %v3972
  %5907 = vmatprep.subr.bf16.mxu0 %v4033
  %5908 = vmatpush2.bf16.msra.mxu0 %v4032
  %5909 = vmatprep.subr.bf16.mxu0 %v4029
  %5910 = vmatpush2.bf16.msra.mxu0 %v4028
  %5911 = vmatprep.subr.bf16.mxu0 %v4025
  %5912 = vmatpush2.bf16.msra.mxu0 %v4024
  %5913 = vmatprep.subr.bf16.mxu0 %v4021
  %5914 = vmatpush2.bf16.msra.mxu0 %v4020
  %5915 = vmatprep.subr.bf16.mxu0 %v4017
  %5916 = vmatpush2.bf16.msra.mxu0 %v4016
  %5917 = vmatprep.subr.bf16.mxu0 %v4013
  %5918 = vmatpush2.bf16.msra.mxu0 %v4012
  %5919 = vmatprep.subr.bf16.mxu0 %v4009
  %5920 = vmatpush2.bf16.msra.mxu0 %v4008
  %5921 = vmatprep.subr.bf16.mxu0 %v4005
  %5922 = vmatpush2.bf16.msra.mxu0 %v4004
  %5923 = vmatprep.mubr.bf16.mxu0 %v950
  %5924 = vmatmul.mubr.bf16.gmra.mxu0 %v949
  %v5925 = vpop.f32.mrf.mxu0
  %v5926 = vadd.f32 %v5883, %v5925
  %v5927 = vpop.f32.mrf.mxu0
  %v5928 = vadd.f32 %v5885, %v5927
  %v5929 = vpop.f32.mrf.mxu0
  %v5930 = vadd.f32 %v5887, %v5929
  %v5931 = vpop.f32.mrf.mxu0
  %v5932 = vadd.f32 %v5889, %v5931
  %5933 = vdwg.mxu0
  %5934 = vmatprep.subr.bf16.mxu0 %v4065
  %5935 = vmatpush1.bf16.msra.mxu0 %v4064
  %5936 = vmatprep.subr.bf16.mxu0 %v4061
  %5937 = vmatpush1.bf16.msra.mxu0 %v4060
  %5938 = vmatprep.subr.bf16.mxu0 %v4057
  %5939 = vmatpush1.bf16.msra.mxu0 %v4056
  %5940 = vmatprep.subr.bf16.mxu0 %v4053
  %5941 = vmatpush1.bf16.msra.mxu0 %v4052
  %5942 = vmatprep.subr.bf16.mxu0 %v4049
  %5943 = vmatpush1.bf16.msra.mxu0 %v4048
  %5944 = vmatprep.subr.bf16.mxu0 %v4045
  %5945 = vmatpush1.bf16.msra.mxu0 %v4044
  %5946 = vmatprep.subr.bf16.mxu0 %v4041
  %5947 = vmatpush1.bf16.msra.mxu0 %v4040
  %5948 = vmatprep.subr.bf16.mxu0 %v4037
  %5949 = vmatpush1.bf16.msra.mxu0 %v4036
  %5950 = vmatprep.subr.bf16.mxu0 %v4097
  %5951 = vmatpush2.bf16.msra.mxu0 %v4096
  %5952 = vmatprep.subr.bf16.mxu0 %v4093
  %5953 = vmatpush2.bf16.msra.mxu0 %v4092
  %5954 = vmatprep.subr.bf16.mxu0 %v4089
  %5955 = vmatpush2.bf16.msra.mxu0 %v4088
  %5956 = vmatprep.subr.bf16.mxu0 %v4085
  %5957 = vmatpush2.bf16.msra.mxu0 %v4084
  %5958 = vmatprep.subr.bf16.mxu0 %v4081
  %5959 = vmatpush2.bf16.msra.mxu0 %v4080
  %5960 = vmatprep.subr.bf16.mxu0 %v4077
  %5961 = vmatpush2.bf16.msra.mxu0 %v4076
  %5962 = vmatprep.subr.bf16.mxu0 %v4073
  %5963 = vmatpush2.bf16.msra.mxu0 %v4072
  %5964 = vmatprep.subr.bf16.mxu0 %v4069
  %5965 = vmatpush2.bf16.msra.mxu0 %v4068
  %5966 = vmatprep.mubr.bf16.mxu0 %v952
  %5967 = vmatmul.mubr.bf16.gmra.mxu0 %v951
  %v5968 = vpop.f32.mrf.mxu0
  %v5969 = vadd.f32 %v5926, %v5968
  %v5970 = vpop.f32.mrf.mxu0
  %v5971 = vadd.f32 %v5928, %v5970
  %v5972 = vpop.f32.mrf.mxu0
  %v5973 = vadd.f32 %v5930, %v5972
  %v5974 = vpop.f32.mrf.mxu0
  %v5975 = vadd.f32 %v5932, %v5974
  %5976 = vdwg.mxu0
  %5977 = vmatprep.subr.bf16.mxu0 0
  %5978 = vmatpush1.bf16.msra.mxu0 0
  %5979 = vmatprep.subr.bf16.mxu0 0
  %5980 = vmatpush1.bf16.msra.mxu0 0
  %5981 = vmatprep.subr.bf16.mxu0 0
  %5982 = vmatpush1.bf16.msra.mxu0 0
  %5983 = vmatprep.subr.bf16.mxu0 0
  %5984 = vmatpush1.bf16.msra.mxu0 0
  %5985 = vmatprep.subr.bf16.mxu0 %v4113
  %5986 = vmatpush1.bf16.msra.mxu0 %v4112
  %5987 = vmatprep.subr.bf16.mxu0 %v4109
  %5988 = vmatpush1.bf16.msra.mxu0 %v4108
  %5989 = vmatprep.subr.bf16.mxu0 %v4105
  %5990 = vmatpush1.bf16.msra.mxu0 %v4104
  %5991 = vmatprep.subr.bf16.mxu0 %v4101
  %5992 = vmatpush1.bf16.msra.mxu0 %v4100
  %5993 = vmatprep.subr.bf16.mxu0 0
  %5994 = vmatpush2.bf16.msra.mxu0 0
  %5995 = vmatprep.subr.bf16.mxu0 0
  %5996 = vmatpush2.bf16.msra.mxu0 0
  %5997 = vmatprep.subr.bf16.mxu0 0
  %5998 = vmatpush2.bf16.msra.mxu0 0
  %5999 = vmatprep.subr.bf16.mxu0 0
  %6000 = vmatpush2.bf16.msra.mxu0 0
  %6001 = vmatprep.subr.bf16.mxu0 0
  %6002 = vmatpush2.bf16.msra.mxu0 0
  %6003 = vmatprep.subr.bf16.mxu0 0
  %6004 = vmatpush2.bf16.msra.mxu0 0
  %6005 = vmatprep.subr.bf16.mxu0 0
  %6006 = vmatpush2.bf16.msra.mxu0 0
  %6007 = vmatprep.subr.bf16.mxu0 0
  %6008 = vmatpush2.bf16.msra.mxu0 0
  %6009 = vmatprep.mubr.bf16.mxu0 0
  %6010 = vmatmul.mubr.bf16.gmra.mxu0 %v4900
  %v6011 = vpop.f32.mrf.mxu0
  %v6012 = vadd.f32 %v5969, %v6011
  %v6013 = vpop.f32.mrf.mxu0
  %v6014 = vadd.f32 %v5971, %v6013
  %v6015 = vpop.f32.mrf.mxu0
  %v6016 = vadd.f32 %v5973, %v6015
  %v6017 = vpop.f32.mrf.mxu0
  %v6018 = vadd.f32 %v5975, %v6017
  %6019 = vdwg.mxu0
  %v6020 = vmax.f32 %v5453, 0.0
  %v6021 = vmax.f32 %v5455, 0.0
  %v6022 = vmax.f32 %v6012, 0.0
  %v6023 = vmax.f32 %v6014, 0.0
  %v6024 = vmax.f32 %v5457, 0.0
  %v6025 = vmax.f32 %v5459, 0.0
  %v6026 = vmax.f32 %v6016, 0.0
  %v6027 = vmax.f32 %v6018, 0.0
  %v6028 = vpack.c.bf16 %v6024, %v6020
  %v6029 = vpack.c.bf16 %v6025, %v6021
  %v6030 = vpack.c.bf16 %v6026, %v6022
  %v6031 = vpack.c.bf16 %v6027, %v6023
  %v6032 = vld [vmem:[%s3] sm:$0xf]
  %v6033 = vld [vmem:[%s3 + $0x4] sm:$0xf]
  %v6034 = vld [vmem:[%s3 + $0x8] sm:$0xf]
  %v6035 = vld [vmem:[%s3 + $0xc] sm:$0xf]
  %v6036 = vld [vmem:[%s3 + $0x10] sm:$0xf]
  %v6037 = vld [vmem:[%s3 + $0x14] sm:$0xf]
  %v6038 = vld [vmem:[%s3 + $0x18] sm:$0xf]
  %v6039 = vld [vmem:[%s3 + $0x1c] sm:$0xf]
  %v6040 = vld [vmem:[%s3 + $0x20] sm:$0xf]
  %v6041 = vld [vmem:[%s3 + $0x24] sm:$0xf]
  %v6042 = vld [vmem:[%s3 + $0x28] sm:$0xf]
  %v6043 = vld [vmem:[%s3 + $0x2c] sm:$0xf]
  %v6044 = vld [vmem:[%s3 + $0x30] sm:$0xf]
  %v6045 = vld [vmem:[%s3 + $0x34] sm:$0xf]
  %v6046 = vld [vmem:[%s3 + $0x38] sm:$0xf]
  %v6047 = vld [vmem:[%s3 + $0x3c] sm:$0xf]
  %v6048 = vld [vmem:[%s3 + $0x40] sm:$0xf]
  %v6049 = vld [vmem:[%s3 + $0x44] sm:$0xf]
  %v6050 = vld [vmem:[%s3 + $0x48] sm:$0xf]
  %v6051 = vld [vmem:[%s3 + $0x4c] sm:$0xf]
  %v6052 = vld [vmem:[%s3 + $0x50] sm:$0xf]
  %v6053 = vld [vmem:[%s3 + $0x54] sm:$0xf]
  %v6054 = vld [vmem:[%s3 + $0x58] sm:$0xf]
  %v6055 = vld [vmem:[%s3 + $0x5c] sm:$0xf]
  %v6056 = vld [vmem:[%s3 + $0x60] sm:$0xf]
  %v6057 = vld [vmem:[%s3 + $0x64] sm:$0xf]
  %v6058 = vld [vmem:[%s3 + $0x68] sm:$0xf]
  %v6059 = vld [vmem:[%s3 + $0x6c] sm:$0xf]
  %v6060 = vld [vmem:[%s3 + $0x70] sm:$0xf]
  %v6061 = vld [vmem:[%s3 + $0x74] sm:$0xf]
  %v6062 = vld [vmem:[%s3 + $0x78] sm:$0xf]
  %v6063 = vld [vmem:[%s3 + $0x7c] sm:$0xf]
  %v6064 = vld [vmem:[%s3 + $0x80] sm:$0xf]
  %v6065 = vld [vmem:[%s3 + $0x84] sm:$0xf]
  %v6066 = vld [vmem:[%s3 + $0x88] sm:$0xf]
  %v6067 = vld [vmem:[%s3 + $0x8c] sm:$0xf]
  %v6068 = vld [vmem:[%s3 + $0x90] sm:$0xf]
  %v6069 = vld [vmem:[%s3 + $0x94] sm:$0xf]
  %v6070 = vld [vmem:[%s3 + $0x98] sm:$0xf]
  %v6071 = vld [vmem:[%s3 + $0x9c] sm:$0xf]
  %v6072 = vld [vmem:[%s3 + $0xa0] sm:$0xf]
  %v6073 = vld [vmem:[%s3 + $0xa4] sm:$0xf]
  %v6074 = vld [vmem:[%s3 + $0xa8] sm:$0xf]
  %v6075 = vld [vmem:[%s3 + $0xac] sm:$0xf]
  %v6076 = vld [vmem:[%s3 + $0xb0] sm:$0xf]
  %v6077 = vld [vmem:[%s3 + $0xb4] sm:$0xf]
  %v6078 = vld [vmem:[%s3 + $0xb8] sm:$0xf]
  %v6079 = vld [vmem:[%s3 + $0xbc] sm:$0xf]
  %v6080 = vld [vmem:[%s3 + $0xc0] sm:$0xf]
  %v6081 = vld [vmem:[%s3 + $0xc4] sm:$0xf]
  %v6082 = vld [vmem:[%s3 + $0xc8] sm:$0xf]
  %v6083 = vld [vmem:[%s3 + $0xcc] sm:$0xf]
  %v6084 = vld [vmem:[%s3 + $0xd0] sm:$0xf]
  %v6085 = vld [vmem:[%s3 + $0xd4] sm:$0xf]
  %v6086 = vld [vmem:[%s3 + $0xd8] sm:$0xf]
  %v6087 = vld [vmem:[%s3 + $0xdc] sm:$0xf]
  %v6088 = vld [vmem:[%s3 + $0xe0] sm:$0xf]
  %v6089 = vld [vmem:[%s3 + $0xe4] sm:$0xf]
  %v6090 = vld [vmem:[%s3 + $0xe8] sm:$0xf]
  %v6091 = vld [vmem:[%s3 + $0xec] sm:$0xf]
  %v6092 = vld [vmem:[%s3 + $0xf0] sm:$0xf]
  %v6093 = vld [vmem:[%s3 + $0xf4] sm:$0xf]
  %v6094 = vld [vmem:[%s3 + $0xf8] sm:$0xf]
  %v6095 = vld [vmem:[%s3 + $0xfc] sm:$0xf]
  %v6096 = vld [vmem:[%s4] sm:$0x1]
  %v6098 = vlaneseq
  %v6099 = vshrl.u32 %v6098, 7
  %v6100 = vsub.s32 0, %v6099
  %v6101 = vrot.slane %v6096, %v6100
  %v6167 = vunpack.c.l.b16 %v6032
  %v6168 = vunpack.c.l.b16 %v6033
  %v6169 = vunpack.c.l.b16 %v6034
  %v6170 = vunpack.c.l.b16 %v6035
  %v6171 = vunpack.c.l.b16 %v6036
  %v6172 = vunpack.c.l.b16 %v6037
  %v6173 = vunpack.c.l.b16 %v6038
  %v6174 = vunpack.c.l.b16 %v6039
  %v6175 = vunpack.c.l.b16 %v6040
  %v6176 = vunpack.c.l.b16 %v6041
  %v6177 = vunpack.c.l.b16 %v6042
  %v6178 = vunpack.c.l.b16 %v6043
  %v6179 = vunpack.c.l.b16 %v6044
  %v6180 = vunpack.c.l.b16 %v6045
  %v6181 = vunpack.c.l.b16 %v6046
  %v6182 = vunpack.c.l.b16 %v6047
  %v6183 = vunpack.c.l.b16 %v6048
  %v6184 = vunpack.c.l.b16 %v6049
  %v6185 = vunpack.c.l.b16 %v6050
  %v6186 = vunpack.c.l.b16 %v6051
  %v6187 = vunpack.c.l.b16 %v6052
  %v6188 = vunpack.c.l.b16 %v6053
  %v6189 = vunpack.c.l.b16 %v6054
  %v6190 = vunpack.c.l.b16 %v6055
  %v6191 = vunpack.c.l.b16 %v6056
  %v6192 = vunpack.c.l.b16 %v6057
  %v6193 = vunpack.c.l.b16 %v6058
  %v6194 = vunpack.c.l.b16 %v6059
  %v6195 = vunpack.c.l.b16 %v6060
  %v6196 = vunpack.c.l.b16 %v6061
  %v6197 = vunpack.c.l.b16 %v6062
  %v6198 = vunpack.c.l.b16 %v6063
  %v6199 = vunpack.c.l.b16 %v6064
  %v6200 = vunpack.c.l.b16 %v6065
  %v6201 = vunpack.c.l.b16 %v6066
  %v6202 = vunpack.c.l.b16 %v6067
  %v6203 = vunpack.c.l.b16 %v6068
  %v6204 = vunpack.c.l.b16 %v6069
  %v6205 = vunpack.c.l.b16 %v6070
  %v6206 = vunpack.c.l.b16 %v6071
  %v6207 = vunpack.c.l.b16 %v6072
  %v6208 = vunpack.c.l.b16 %v6073
  %v6209 = vunpack.c.l.b16 %v6074
  %v6210 = vunpack.c.l.b16 %v6075
  %v6211 = vunpack.c.l.b16 %v6076
  %v6212 = vunpack.c.l.b16 %v6077
  %v6213 = vunpack.c.l.b16 %v6078
  %v6214 = vunpack.c.l.b16 %v6079
  %v6215 = vunpack.c.l.b16 %v6080
  %v6216 = vunpack.c.l.b16 %v6081
  %v6217 = vunpack.c.l.b16 %v6082
  %v6218 = vunpack.c.l.b16 %v6083
  %v6219 = vunpack.c.l.b16 %v6084
  %v6220 = vunpack.c.l.b16 %v6085
  %v6221 = vunpack.c.l.b16 %v6086
  %v6222 = vunpack.c.l.b16 %v6087
  %v6223 = vunpack.c.l.b16 %v6088
  %v6224 = vunpack.c.l.b16 %v6089
  %v6225 = vunpack.c.l.b16 %v6090
  %v6226 = vunpack.c.l.b16 %v6091
  %v6227 = vunpack.c.l.b16 %v6092
  %v6228 = vunpack.c.l.b16 %v6093
  %v6229 = vunpack.c.l.b16 %v6094
  %v6230 = vunpack.c.l.b16 %v6095
  %v6231 = vpack.c.b16 %v6168, %v6167
  %v6232 = vpack.c.b16 %v6170, %v6169
  %v6233 = vpack.c.b16 %v6172, %v6171
  %v6234 = vpack.c.b16 %v6174, %v6173
  %v6235 = vpack.c.b16 %v6176, %v6175
  %v6236 = vpack.c.b16 %v6178, %v6177
  %v6237 = vpack.c.b16 %v6180, %v6179
  %v6238 = vpack.c.b16 %v6182, %v6181
  %v6239 = vpack.c.b16 %v6184, %v6183
  %v6240 = vpack.c.b16 %v6186, %v6185
  %v6241 = vpack.c.b16 %v6188, %v6187
  %v6242 = vpack.c.b16 %v6190, %v6189
  %v6243 = vpack.c.b16 %v6192, %v6191
  %v6244 = vpack.c.b16 %v6194, %v6193
  %v6245 = vpack.c.b16 %v6196, %v6195
  %v6246 = vpack.c.b16 %v6198, %v6197
  %v6247 = vpack.c.b16 %v6200, %v6199
  %v6248 = vpack.c.b16 %v6202, %v6201
  %v6249 = vpack.c.b16 %v6204, %v6203
  %v6250 = vpack.c.b16 %v6206, %v6205
  %v6251 = vpack.c.b16 %v6208, %v6207
  %v6252 = vpack.c.b16 %v6210, %v6209
  %v6253 = vpack.c.b16 %v6212, %v6211
  %v6254 = vpack.c.b16 %v6214, %v6213
  %v6255 = vpack.c.b16 %v6216, %v6215
  %v6256 = vpack.c.b16 %v6218, %v6217
  %v6257 = vpack.c.b16 %v6220, %v6219
  %v6258 = vpack.c.b16 %v6222, %v6221
  %v6259 = vpack.c.b16 %v6224, %v6223
  %v6260 = vpack.c.b16 %v6226, %v6225
  %v6261 = vpack.c.b16 %v6228, %v6227
  %v6262 = vpack.c.b16 %v6230, %v6229
  %6295 = vmatprep.subr.bf16.mxu0 0
  %6296 = vmatpush1.bf16.msra.mxu0 %v6238
  %6297 = vmatprep.subr.bf16.mxu0 0
  %6298 = vmatpush1.bf16.msra.mxu0 %v6237
  %6299 = vmatprep.subr.bf16.mxu0 0
  %6300 = vmatpush1.bf16.msra.mxu0 %v6236
  %6301 = vmatprep.subr.bf16.mxu0 0
  %6302 = vmatpush1.bf16.msra.mxu0 %v6235
  %6303 = vmatprep.subr.bf16.mxu0 0
  %6304 = vmatpush1.bf16.msra.mxu0 %v6234
  %6305 = vmatprep.subr.bf16.mxu0 0
  %6306 = vmatpush1.bf16.msra.mxu0 %v6233
  %6307 = vmatprep.subr.bf16.mxu0 0
  %6308 = vmatpush1.bf16.msra.mxu0 %v6232
  %6309 = vmatprep.subr.bf16.mxu0 0
  %6310 = vmatpush1.bf16.msra.mxu0 %v6231
  %6311 = vmatprep.subr.bf16.mxu0 0
  %6312 = vmatpush2.bf16.msra.mxu0 %v6246
  %6313 = vmatprep.subr.bf16.mxu0 0
  %6314 = vmatpush2.bf16.msra.mxu0 %v6245
  %6315 = vmatprep.subr.bf16.mxu0 0
  %6316 = vmatpush2.bf16.msra.mxu0 %v6244
  %6317 = vmatprep.subr.bf16.mxu0 0
  %6318 = vmatpush2.bf16.msra.mxu0 %v6243
  %6319 = vmatprep.subr.bf16.mxu0 0
  %6320 = vmatpush2.bf16.msra.mxu0 %v6242
  %6321 = vmatprep.subr.bf16.mxu0 0
  %6322 = vmatpush2.bf16.msra.mxu0 %v6241
  %6323 = vmatprep.subr.bf16.mxu0 0
  %6324 = vmatpush2.bf16.msra.mxu0 %v6240
  %6325 = vmatprep.subr.bf16.mxu0 0
  %6326 = vmatpush2.bf16.msra.mxu0 %v6239
  %6327 = vmatprep.mubr.bf16.mxu0 %v6029
  %6328 = vmatmul.mubr.bf16.gmra.mxu0 %v6028
  %v6329 = vpop.f32.mrf.mxu0
  %v6330 = vadd.f32 %v6101, %v6329
  %v6331 = vpop.f32.mrf.mxu0
  %v6332 = vpop.f32.mrf.mxu0
  %v6333 = vadd.f32 %v6101, %v6332
  %v6334 = vpop.f32.mrf.mxu0
  %6335 = vdwg.mxu0
  %6336 = vmatprep.subr.bf16.mxu0 0
  %6337 = vmatpush1.bf16.msra.mxu0 %v6254
  %6338 = vmatprep.subr.bf16.mxu0 0
  %6339 = vmatpush1.bf16.msra.mxu0 %v6253
  %6340 = vmatprep.subr.bf16.mxu0 0
  %6341 = vmatpush1.bf16.msra.mxu0 %v6252
  %6342 = vmatprep.subr.bf16.mxu0 0
  %6343 = vmatpush1.bf16.msra.mxu0 %v6251
  %6344 = vmatprep.subr.bf16.mxu0 0
  %6345 = vmatpush1.bf16.msra.mxu0 %v6250
  %6346 = vmatprep.subr.bf16.mxu0 0
  %6347 = vmatpush1.bf16.msra.mxu0 %v6249
  %6348 = vmatprep.subr.bf16.mxu0 0
  %6349 = vmatpush1.bf16.msra.mxu0 %v6248
  %6350 = vmatprep.subr.bf16.mxu0 0
  %6351 = vmatpush1.bf16.msra.mxu0 %v6247
  %6352 = vmatprep.subr.bf16.mxu0 0
  %6353 = vmatpush2.bf16.msra.mxu0 %v6262
  %6354 = vmatprep.subr.bf16.mxu0 0
  %6355 = vmatpush2.bf16.msra.mxu0 %v6261
  %6356 = vmatprep.subr.bf16.mxu0 0
  %6357 = vmatpush2.bf16.msra.mxu0 %v6260
  %6358 = vmatprep.subr.bf16.mxu0 0
  %6359 = vmatpush2.bf16.msra.mxu0 %v6259
  %6360 = vmatprep.subr.bf16.mxu0 0
  %6361 = vmatpush2.bf16.msra.mxu0 %v6258
  %6362 = vmatprep.subr.bf16.mxu0 0
  %6363 = vmatpush2.bf16.msra.mxu0 %v6257
  %6364 = vmatprep.subr.bf16.mxu0 0
  %6365 = vmatpush2.bf16.msra.mxu0 %v6256
  %6366 = vmatprep.subr.bf16.mxu0 0
  %6367 = vmatpush2.bf16.msra.mxu0 %v6255
  %6368 = vmatprep.mubr.bf16.mxu0 %v6031
  %6369 = vmatmul.mubr.bf16.gmra.mxu0 %v6030
  %v6370 = vpop.f32.mrf.mxu0
  %v6371 = vadd.f32 %v6330, %v6370
  %v6372 = vpop.f32.mrf.mxu0
  %v6373 = vpop.f32.mrf.mxu0
  %v6374 = vadd.f32 %v6333, %v6373
  %v6375 = vpop.f32.mrf.mxu0
  %6376 = vdwg.mxu0
  %vm6377 = vcmask 48128
  %6378 = vst.msk [vmem:[%s5] sm:$0xff] %vm6377, %v6371
  %6379 = vst.msk [vmem:[%s5 + $0x8] sm:$0xff] %vm6377, %v6374
  // Predicated region
  $region22: #{critic_forward.5} parent=0 // pred_check
    _
  $region23: #{critic_forward.5} parent=0 // pred_check_branch
    %6381 = sbr.rel (0) target = $region25
  $region24: #{critic_forward.5} parent=0 // pred_region
    _
  $region25: #{critic_forward.5} parent=0 // pred_fallthru
    _
  // Predicated region
  $region26: #{critic_forward.5} parent=0 // pred_check
    _
  $region27: #{critic_forward.5} parent=0 // pred_check_branch
    %6383 = sbr.rel (0) target = $region29
  $region28: #{critic_forward.5} parent=0 // pred_region
    _
  $region29: #{critic_forward.5} parent=0 // pred_fallthru
    _

</llo_original>
